<compile_context>
chip_gen: v7x
topology: tpu7x:2x2x1
jax: 0.10.0
libtpu: 0.0.40
codegen_flags: <defaults>
</compile_context>

<pallas_src>
import functools
import math

import jax
import jax.numpy as jnp
from jax.experimental import pallas as pl
from jax.experimental.pallas import tpu as pltpu


def _round_up(x, m):
    return ((x + m - 1) // m) * m


def _resize_conv_kernel(xm_ref, xh_ref, w_ref, b_ref, o_ref, kscr_ref, *, offsets, tl):
    """One (batch, spatial-tile) block of the conv-as-single-stacked-GEMM.

    xm_ref  : (1, Cin, TL)   bf16 -- main lane tile j of the flattened padded input.
    xh_ref  : (1, Cin, HALO) bf16 -- halo: the first HALO lanes after the main tile.
    w_ref   : (Cout_p, Kpad) bf16 -- weights with all 27 taps folded into K (= 27*Cin).
    b_ref   : (Cout_p, 1)    f32  -- bias (zero-padded rows).
    o_ref   : (1, Cout_p, TL) f32 -- output tile, channels on sublanes, lanes = flat pos.
    kscr_ref: (Kpad, TL)     bf16 -- VMEM scratch holding the stacked tap windows.
    """
    cin = xm_ref.shape[1]
    nk = len(offsets) * cin
    kpad = kscr_ref.shape[0]

    # (Cin, TL + HALO): both pieces are multiples of 128 lanes, so the concat sits on
    # vreg boundaries.
    xcat = jnp.concatenate([xm_ref[0], xh_ref[0]], axis=-1)

    # Stack the 27 shifted tap windows along the contraction (sublane) axis. Offsets are
    # Python ints, so every slice/store below is static.
    for t, off in enumerate(offsets):
        kscr_ref[pl.ds(t * cin, cin), :] = xcat[:, off:off + tl]

    # K padding rows must be well-defined zeros (zero weight columns times possible NaN
    # garbage in uninitialized scratch would poison the accumulator).
    if kpad > nk:
        kscr_ref[pl.ds(nk, kpad - nk), :] = jnp.zeros((kpad - nk, tl), jnp.bfloat16)

    # Single (Cout_p, Kpad) @ (Kpad, TL) MXU contraction, f32 accumulation, bias epilogue.
    acc = jnp.dot(w_ref[...], kscr_ref[...], preferred_element_type=jnp.float32)
    o_ref[0] = (acc + b_ref[...]).astype(o_ref.dtype)


def resize_conv_nearest(x, w, b, *, tile_lanes=8192):
    """Forward pass of ResizeConv: nearest x2 upsample then Conv3d(k=3, s=1, p=1)+bias.

    x: (N, Cin, D, H, W) f32, w: (Cout, Cin, 3, 3, 3), b: (Cout,)
    returns: (N, Cout, 2D, 2H, 2W) f32
    """
    n, cin, d, h, wd = x.shape
    cout = w.shape[0]
    do, ho, wo = 2 * d, 2 * h, 2 * wd
    dp, hp, wp = do + 2, ho + 2, wo + 2

    # Tap (kd,kh,kw) -> constant element offset along the flattened (Dp,Hp,Wp) lane axis.
    offsets = tuple(kd * hp * wp + kh * wp + kw
                    for kd in range(3) for kh in range(3) for kw in range(3))
    off_max = offsets[-1]

    # Halo = smallest 128-multiple covering the largest tap offset; main tile TL is a
    # multiple of the halo so the halo BlockSpec can address lane (j+1)*TL exactly.
    halo = _round_up(off_max, 128)
    tl = max(tile_lanes // halo, 1) * halo
    ratio = tl // halo

    l_valid = do * hp * wp                      # covers every kept output flat index
    n_tiles = pl.cdiv(l_valid, tl)
    l_need = n_tiles * tl + halo                # main tiles + trailing halo block

    # ---- nearest x2 upsample, conv zero padding and tail padding in a single pad.
    #      bf16 stream: halves HBM bytes for the (already 8x) materialized tensor.
    xb = x.astype(jnp.bfloat16)
    xu = jnp.broadcast_to(xb[:, :, :, None, :, None, :, None],
                          (n, cin, d, 2, h, 2, wd, 2)).reshape(n, cin, do, ho, wo)
    extra_d = max(0, -(-(l_need - dp * hp * wp) // (hp * wp)))   # ceil div
    xp = jnp.pad(xu, ((0, 0), (0, 0), (1, 1 + extra_d), (1, 1), (1, 1)))
    xf = xp.reshape(n, cin, -1)                 # flat length >= l_need, zero-padded tail

    # ---- weights: fold the 27 taps into the contraction dim.
    #      K index = t*Cin + c, matching the scratch row layout in the kernel.
    cout_p = _round_up(cout, 8)
    k = 27 * cin
    kpad = _round_up(k, 16)                     # bf16 sublane packing
    wk = jnp.transpose(w.reshape(cout, cin, 27), (0, 2, 1)).reshape(cout, k)
    wk = jnp.pad(wk, ((0, cout_p - cout), (0, kpad - k))).astype(jnp.bfloat16)
    bp = jnp.pad(b, (0, cout_p - cout)).reshape(cout_p, 1).astype(jnp.float32)

    kernel = functools.partial(_resize_conv_kernel, offsets=offsets, tl=tl)
    y = pl.pallas_call(
        kernel,
        out_shape=jax.ShapeDtypeStruct((n, cout_p, n_tiles * tl), jnp.float32),
        grid_spec=pltpu.PrefetchScalarGridSpec(
            num_scalar_prefetch=0,
            grid=(n, n_tiles),
            in_specs=[
                # main tile j
                pl.BlockSpec((1, cin, tl), lambda bi, j: (bi, 0, j)),
                # halo: first `halo` lanes after the main tile (no full double-feed)
                pl.BlockSpec((1, cin, halo), lambda bi, j: (bi, 0, (j + 1) * ratio)),
                pl.BlockSpec((cout_p, kpad), lambda bi, j: (0, 0)),
                pl.BlockSpec((cout_p, 1), lambda bi, j: (0, 0)),
            ],
            out_specs=pl.BlockSpec((1, cout_p, tl), lambda bi, j: (bi, 0, j)),
            scratch_shapes=[pltpu.VMEM((kpad, tl), jnp.bfloat16)],
        ),
        compiler_params=pltpu.CompilerParams(
            dimension_semantics=("parallel", "parallel")),
    )(xf, xf, wk, bp)

    # ---- strip conv-padding rows/cols, the flat tail and the Cout padding. Flat
    #      positions with oh>=ho, ow>=wo or beyond do*hp*wp hold garbage by design and
    #      MUST be sliced off here (channels are already leading -> no transpose).
    y = y[:, :cout, :do * hp * wp].reshape(n, cout, do, hp, wp)[:, :, :, :ho, :wo]
    return y


def _reference(x, w, b):
    """Pure-JAX reference: nearest x2 upsample + Conv3d(k=3, s=1, p=1) + bias."""
    n, c, d, h, wd = x.shape
    xu = jnp.broadcast_to(x[:, :, :, None, :, None, :, None],
                          (n, c, d, 2, h, 2, wd, 2)).reshape(n, c, 2 * d, 2 * h, 2 * wd)
    y = jax.lax.conv_general_dilated(
        xu, w, window_strides=(1, 1, 1), padding=((1, 1), (1, 1), (1, 1)),
        dimension_numbers=("NCDHW", "OIDHW", "NCDHW"),
        precision=jax.lax.Precision.HIGHEST)
    return y + b[None, :, None, None, None]


if __name__ == "__main__":
    in_ch, out_ch, spatial, batch = 4, 8, 16, 2

    key = jax.random.PRNGKey(0)
    kx, kw_, kb = jax.random.split(key, 3)
    x = jax.random.normal(kx, (batch, in_ch, spatial, spatial, spatial), jnp.float32)
    fan_in = in_ch * 27
    w = jax.random.normal(kw_, (out_ch, in_ch, 3, 3, 3), jnp.float32) / math.sqrt(fan_in)
    b = 0.1 * jax.random.normal(kb, (out_ch,), jnp.float32)

    fwd = jax.jit(resize_conv_nearest)
    out = jax.block_until_ready(fwd(x, w, b))

    assert out.shape == (batch, out_ch, 2 * spatial, 2 * spatial, 2 * spatial), out.shape
    assert bool(jnp.all(jnp.isfinite(out)))

    ref = jax.block_until_ready(_reference(x, w, b))
    max_err = float(jnp.max(jnp.abs(out - ref)))
    assert max_err < 0.2, f"max abs err vs reference too large: {max_err}"

    print("KERNEL_OK")
</pallas_src>

<mosaic_0001>
module attributes {stable_mosaic.version = 11 : i64} {
  func.func @_resize_conv_kernel(%arg0: i32, %arg1: i32, %arg2: memref<1x4x7296xbf16, #tpu.memory_space<vmem>>, %arg3: memref<1x4x2432xbf16, #tpu.memory_space<vmem>>, %arg4: memref<8x112xbf16, #tpu.memory_space<vmem>>, %arg5: memref<8x1xf32, #tpu.memory_space<vmem>>, %arg6: memref<1x8x7296xf32, #tpu.memory_space<vmem>>, %arg7: memref<112x7296xbf16, #tpu.memory_space<vmem>>) attributes {dimension_semantics = [#tpu.dimension_semantics<parallel>, #tpu.dimension_semantics<parallel>], iteration_bounds = array<i64: 2, 6>, scalar_prefetch = 0 : i64, scratch_operands = 1 : i64, tpu.core_type = #tpu.core_type<tc>, window_params = [{transform_indices = @transform_0, window_bounds = array<i64: 1, 4, 7296>}, {transform_indices = @transform_1, window_bounds = array<i64: 1, 4, 2432>}, {pipeline_mode = #tpu.pipeline_mode<synchronous>, transform_indices = @transform_2, window_bounds = array<i64: 8, 112>}, {pipeline_mode = #tpu.pipeline_mode<synchronous>, transform_indices = @transform_3, window_bounds = array<i64: 8, 1>}, {transform_indices = @transform_4, window_bounds = array<i64: 1, 8, 7296>}]} {
    %c0 = arith.constant 0 : index
    %c0_0 = arith.constant 0 : index
    %c0_1 = arith.constant 0 : index
    %0 = vector.load %arg2[%c0, %c0_0, %c0_1] : memref<1x4x7296xbf16, #tpu.memory_space<vmem>>, vector<1x4x7296xbf16>
    %1 = vector.shape_cast %0 : vector<1x4x7296xbf16> to vector<4x7296xbf16>
    %c0_2 = arith.constant 0 : index
    %c0_3 = arith.constant 0 : index
    %c0_4 = arith.constant 0 : index
    %2 = vector.load %arg3[%c0_2, %c0_3, %c0_4] : memref<1x4x2432xbf16, #tpu.memory_space<vmem>>, vector<1x4x2432xbf16>
    %3 = vector.shape_cast %2 : vector<1x4x2432xbf16> to vector<4x2432xbf16>
    %4 = tpu.concatenate %1, %3 in 1 : vector<4x7296xbf16>, vector<4x2432xbf16> -> vector<4x9728xbf16>
    %5 = vector.extract_strided_slice %4 {offsets = [0, 0], sizes = [4, 7296], strides = [1, 1]} : vector<4x9728xbf16> to vector<4x7296xbf16>
    %c0_5 = arith.constant 0 : index
    %c0_6 = arith.constant 0 : index
    %6 = vector.load %arg7[%c0_5, %c0_6] : memref<112x7296xbf16, #tpu.memory_space<vmem>>, vector<4x7296xbf16>
    tpu.vector_store %arg7[%c0_5, %c0_6], %5 {strides = array<i32>} : memref<112x7296xbf16, #tpu.memory_space<vmem>>, vector<4x7296xbf16>,
    %7 = vector.extract_strided_slice %4 {offsets = [0, 1], sizes = [4, 7296], strides = [1, 1]} : vector<4x9728xbf16> to vector<4x7296xbf16>
    %c4 = arith.constant 4 : index
    %c0_7 = arith.constant 0 : index
    %8 = vector.load %arg7[%c4, %c0_7] : memref<112x7296xbf16, #tpu.memory_space<vmem>>, vector<4x7296xbf16>
    tpu.vector_store %arg7[%c4, %c0_7], %7 {strides = array<i32>} : memref<112x7296xbf16, #tpu.memory_space<vmem>>, vector<4x7296xbf16>,
    %9 = vector.extract_strided_slice %4 {offsets = [0, 2], sizes = [4, 7296], strides = [1, 1]} : vector<4x9728xbf16> to vector<4x7296xbf16>
    %c8 = arith.constant 8 : index
    %c0_8 = arith.constant 0 : index
    %10 = vector.load %arg7[%c8, %c0_8] : memref<112x7296xbf16, #tpu.memory_space<vmem>>, vector<4x7296xbf16>
    tpu.vector_store %arg7[%c8, %c0_8], %9 {strides = array<i32>} : memref<112x7296xbf16, #tpu.memory_space<vmem>>, vector<4x7296xbf16>,
    %11 = vector.extract_strided_slice %4 {offsets = [0, 34], sizes = [4, 7296], strides = [1, 1]} : vector<4x9728xbf16> to vector<4x7296xbf16>
    %c12 = arith.constant 12 : index
    %c0_9 = arith.constant 0 : index
    %12 = vector.load %arg7[%c12, %c0_9] : memref<112x7296xbf16, #tpu.memory_space<vmem>>, vector<4x7296xbf16>
    tpu.vector_store %arg7[%c12, %c0_9], %11 {strides = array<i32>} : memref<112x7296xbf16, #tpu.memory_space<vmem>>, vector<4x7296xbf16>,
    %13 = vector.extract_strided_slice %4 {offsets = [0, 35], sizes = [4, 7296], strides = [1, 1]} : vector<4x9728xbf16> to vector<4x7296xbf16>
    %c16 = arith.constant 16 : index
    %c0_10 = arith.constant 0 : index
    %14 = vector.load %arg7[%c16, %c0_10] : memref<112x7296xbf16, #tpu.memory_space<vmem>>, vector<4x7296xbf16>
    tpu.vector_store %arg7[%c16, %c0_10], %13 {strides = array<i32>} : memref<112x7296xbf16, #tpu.memory_space<vmem>>, vector<4x7296xbf16>,
    %15 = vector.extract_strided_slice %4 {offsets = [0, 36], sizes = [4, 7296], strides = [1, 1]} : vector<4x9728xbf16> to vector<4x7296xbf16>
    %c20 = arith.constant 20 : index
    %c0_11 = arith.constant 0 : index
    %16 = vector.load %arg7[%c20, %c0_11] : memref<112x7296xbf16, #tpu.memory_space<vmem>>, vector<4x7296xbf16>
    tpu.vector_store %arg7[%c20, %c0_11], %15 {strides = array<i32>} : memref<112x7296xbf16, #tpu.memory_space<vmem>>, vector<4x7296xbf16>,
    %17 = vector.extract_strided_slice %4 {offsets = [0, 68], sizes = [4, 7296], strides = [1, 1]} : vector<4x9728xbf16> to vector<4x7296xbf16>
    %c24 = arith.constant 24 : index
    %c0_12 = arith.constant 0 : index
    %18 = vector.load %arg7[%c24, %c0_12] : memref<112x7296xbf16, #tpu.memory_space<vmem>>, vector<4x7296xbf16>
    tpu.vector_store %arg7[%c24, %c0_12], %17 {strides = array<i32>} : memref<112x7296xbf16, #tpu.memory_space<vmem>>, vector<4x7296xbf16>,
    %19 = vector.extract_strided_slice %4 {offsets = [0, 69], sizes = [4, 7296], strides = [1, 1]} : vector<4x9728xbf16> to vector<4x7296xbf16>
    %c28 = arith.constant 28 : index
    %c0_13 = arith.constant 0 : index
    %20 = vector.load %arg7[%c28, %c0_13] : memref<112x7296xbf16, #tpu.memory_space<vmem>>, vector<4x7296xbf16>
    tpu.vector_store %arg7[%c28, %c0_13], %19 {strides = array<i32>} : memref<112x7296xbf16, #tpu.memory_space<vmem>>, vector<4x7296xbf16>,
    %21 = vector.extract_strided_slice %4 {offsets = [0, 70], sizes = [4, 7296], strides = [1, 1]} : vector<4x9728xbf16> to vector<4x7296xbf16>
    %c32 = arith.constant 32 : index
    %c0_14 = arith.constant 0 : index
    %22 = vector.load %arg7[%c32, %c0_14] : memref<112x7296xbf16, #tpu.memory_space<vmem>>, vector<4x7296xbf16>
    tpu.vector_store %arg7[%c32, %c0_14], %21 {strides = array<i32>} : memref<112x7296xbf16, #tpu.memory_space<vmem>>, vector<4x7296xbf16>,
    %23 = vector.extract_strided_slice %4 {offsets = [0, 1156], sizes = [4, 7296], strides = [1, 1]} : vector<4x9728xbf16> to vector<4x7296xbf16>
    %c36 = arith.constant 36 : index
    %c0_15 = arith.constant 0 : index
    %24 = vector.load %arg7[%c36, %c0_15] : memref<112x7296xbf16, #tpu.memory_space<vmem>>, vector<4x7296xbf16>
    tpu.vector_store %arg7[%c36, %c0_15], %23 {strides = array<i32>} : memref<112x7296xbf16, #tpu.memory_space<vmem>>, vector<4x7296xbf16>,
    %25 = vector.extract_strided_slice %4 {offsets = [0, 1157], sizes = [4, 7296], strides = [1, 1]} : vector<4x9728xbf16> to vector<4x7296xbf16>
    %c40 = arith.constant 40 : index
    %c0_16 = arith.constant 0 : index
    %26 = vector.load %arg7[%c40, %c0_16] : memref<112x7296xbf16, #tpu.memory_space<vmem>>, vector<4x7296xbf16>
    tpu.vector_store %arg7[%c40, %c0_16], %25 {strides = array<i32>} : memref<112x7296xbf16, #tpu.memory_space<vmem>>, vector<4x7296xbf16>,
    %27 = vector.extract_strided_slice %4 {offsets = [0, 1158], sizes = [4, 7296], strides = [1, 1]} : vector<4x9728xbf16> to vector<4x7296xbf16>
    %c44 = arith.constant 44 : index
    %c0_17 = arith.constant 0 : index
    %28 = vector.load %arg7[%c44, %c0_17] : memref<112x7296xbf16, #tpu.memory_space<vmem>>, vector<4x7296xbf16>
    tpu.vector_store %arg7[%c44, %c0_17], %27 {strides = array<i32>} : memref<112x7296xbf16, #tpu.memory_space<vmem>>, vector<4x7296xbf16>,
    %29 = vector.extract_strided_slice %4 {offsets = [0, 1190], sizes = [4, 7296], strides = [1, 1]} : vector<4x9728xbf16> to vector<4x7296xbf16>
    %c48 = arith.constant 48 : index
    %c0_18 = arith.constant 0 : index
    %30 = vector.load %arg7[%c48, %c0_18] : memref<112x7296xbf16, #tpu.memory_space<vmem>>, vector<4x7296xbf16>
    tpu.vector_store %arg7[%c48, %c0_18], %29 {strides = array<i32>} : memref<112x7296xbf16, #tpu.memory_space<vmem>>, vector<4x7296xbf16>,
    %31 = vector.extract_strided_slice %4 {offsets = [0, 1191], sizes = [4, 7296], strides = [1, 1]} : vector<4x9728xbf16> to vector<4x7296xbf16>
    %c52 = arith.constant 52 : index
    %c0_19 = arith.constant 0 : index
    %32 = vector.load %arg7[%c52, %c0_19] : memref<112x7296xbf16, #tpu.memory_space<vmem>>, vector<4x7296xbf16>
    tpu.vector_store %arg7[%c52, %c0_19], %31 {strides = array<i32>} : memref<112x7296xbf16, #tpu.memory_space<vmem>>, vector<4x7296xbf16>,
    %33 = vector.extract_strided_slice %4 {offsets = [0, 1192], sizes = [4, 7296], strides = [1, 1]} : vector<4x9728xbf16> to vector<4x7296xbf16>
    %c56 = arith.constant 56 : index
    %c0_20 = arith.constant 0 : index
    %34 = vector.load %arg7[%c56, %c0_20] : memref<112x7296xbf16, #tpu.memory_space<vmem>>, vector<4x7296xbf16>
    tpu.vector_store %arg7[%c56, %c0_20], %33 {strides = array<i32>} : memref<112x7296xbf16, #tpu.memory_space<vmem>>, vector<4x7296xbf16>,
    %35 = vector.extract_strided_slice %4 {offsets = [0, 1224], sizes = [4, 7296], strides = [1, 1]} : vector<4x9728xbf16> to vector<4x7296xbf16>
    %c60 = arith.constant 60 : index
    %c0_21 = arith.constant 0 : index
    %36 = vector.load %arg7[%c60, %c0_21] : memref<112x7296xbf16, #tpu.memory_space<vmem>>, vector<4x7296xbf16>
    tpu.vector_store %arg7[%c60, %c0_21], %35 {strides = array<i32>} : memref<112x7296xbf16, #tpu.memory_space<vmem>>, vector<4x7296xbf16>,
    %37 = vector.extract_strided_slice %4 {offsets = [0, 1225], sizes = [4, 7296], strides = [1, 1]} : vector<4x9728xbf16> to vector<4x7296xbf16>
    %c64 = arith.constant 64 : index
    %c0_22 = arith.constant 0 : index
    %38 = vector.load %arg7[%c64, %c0_22] : memref<112x7296xbf16, #tpu.memory_space<vmem>>, vector<4x7296xbf16>
    tpu.vector_store %arg7[%c64, %c0_22], %37 {strides = array<i32>} : memref<112x7296xbf16, #tpu.memory_space<vmem>>, vector<4x7296xbf16>,
    %39 = vector.extract_strided_slice %4 {offsets = [0, 1226], sizes = [4, 7296], strides = [1, 1]} : vector<4x9728xbf16> to vector<4x7296xbf16>
    %c68 = arith.constant 68 : index
    %c0_23 = arith.constant 0 : index
    %40 = vector.load %arg7[%c68, %c0_23] : memref<112x7296xbf16, #tpu.memory_space<vmem>>, vector<4x7296xbf16>
    tpu.vector_store %arg7[%c68, %c0_23], %39 {strides = array<i32>} : memref<112x7296xbf16, #tpu.memory_space<vmem>>, vector<4x7296xbf16>,
    %41 = vector.extract_strided_slice %4 {offsets = [0, 2312], sizes = [4, 7296], strides = [1, 1]} : vector<4x9728xbf16> to vector<4x7296xbf16>
    %c72 = arith.constant 72 : index
    %c0_24 = arith.constant 0 : index
    %42 = vector.load %arg7[%c72, %c0_24] : memref<112x7296xbf16, #tpu.memory_space<vmem>>, vector<4x7296xbf16>
    tpu.vector_store %arg7[%c72, %c0_24], %41 {strides = array<i32>} : memref<112x7296xbf16, #tpu.memory_space<vmem>>, vector<4x7296xbf16>,
    %43 = vector.extract_strided_slice %4 {offsets = [0, 2313], sizes = [4, 7296], strides = [1, 1]} : vector<4x9728xbf16> to vector<4x7296xbf16>
    %c76 = arith.constant 76 : index
    %c0_25 = arith.constant 0 : index
    %44 = vector.load %arg7[%c76, %c0_25] : memref<112x7296xbf16, #tpu.memory_space<vmem>>, vector<4x7296xbf16>
    tpu.vector_store %arg7[%c76, %c0_25], %43 {strides = array<i32>} : memref<112x7296xbf16, #tpu.memory_space<vmem>>, vector<4x7296xbf16>,
    %45 = vector.extract_strided_slice %4 {offsets = [0, 2314], sizes = [4, 7296], strides = [1, 1]} : vector<4x9728xbf16> to vector<4x7296xbf16>
    %c80 = arith.constant 80 : index
    %c0_26 = arith.constant 0 : index
    %46 = vector.load %arg7[%c80, %c0_26] : memref<112x7296xbf16, #tpu.memory_space<vmem>>, vector<4x7296xbf16>
    tpu.vector_store %arg7[%c80, %c0_26], %45 {strides = array<i32>} : memref<112x7296xbf16, #tpu.memory_space<vmem>>, vector<4x7296xbf16>,
    %47 = vector.extract_strided_slice %4 {offsets = [0, 2346], sizes = [4, 7296], strides = [1, 1]} : vector<4x9728xbf16> to vector<4x7296xbf16>
    %c84 = arith.constant 84 : index
    %c0_27 = arith.constant 0 : index
    %48 = vector.load %arg7[%c84, %c0_27] : memref<112x7296xbf16, #tpu.memory_space<vmem>>, vector<4x7296xbf16>
    tpu.vector_store %arg7[%c84, %c0_27], %47 {strides = array<i32>} : memref<112x7296xbf16, #tpu.memory_space<vmem>>, vector<4x7296xbf16>,
    %49 = vector.extract_strided_slice %4 {offsets = [0, 2347], sizes = [4, 7296], strides = [1, 1]} : vector<4x9728xbf16> to vector<4x7296xbf16>
    %c88 = arith.constant 88 : index
    %c0_28 = arith.constant 0 : index
    %50 = vector.load %arg7[%c88, %c0_28] : memref<112x7296xbf16, #tpu.memory_space<vmem>>, vector<4x7296xbf16>
    tpu.vector_store %arg7[%c88, %c0_28], %49 {strides = array<i32>} : memref<112x7296xbf16, #tpu.memory_space<vmem>>, vector<4x7296xbf16>,
    %51 = vector.extract_strided_slice %4 {offsets = [0, 2348], sizes = [4, 7296], strides = [1, 1]} : vector<4x9728xbf16> to vector<4x7296xbf16>
    %c92 = arith.constant 92 : index
    %c0_29 = arith.constant 0 : index
    %52 = vector.load %arg7[%c92, %c0_29] : memref<112x7296xbf16, #tpu.memory_space<vmem>>, vector<4x7296xbf16>
    tpu.vector_store %arg7[%c92, %c0_29], %51 {strides = array<i32>} : memref<112x7296xbf16, #tpu.memory_space<vmem>>, vector<4x7296xbf16>,
    %53 = vector.extract_strided_slice %4 {offsets = [0, 2380], sizes = [4, 7296], strides = [1, 1]} : vector<4x9728xbf16> to vector<4x7296xbf16>
    %c96 = arith.constant 96 : index
    %c0_30 = arith.constant 0 : index
    %54 = vector.load %arg7[%c96, %c0_30] : memref<112x7296xbf16, #tpu.memory_space<vmem>>, vector<4x7296xbf16>
    tpu.vector_store %arg7[%c96, %c0_30], %53 {strides = array<i32>} : memref<112x7296xbf16, #tpu.memory_space<vmem>>, vector<4x7296xbf16>,
    %55 = vector.extract_strided_slice %4 {offsets = [0, 2381], sizes = [4, 7296], strides = [1, 1]} : vector<4x9728xbf16> to vector<4x7296xbf16>
    %c100 = arith.constant 100 : index
    %c0_31 = arith.constant 0 : index
    %56 = vector.load %arg7[%c100, %c0_31] : memref<112x7296xbf16, #tpu.memory_space<vmem>>, vector<4x7296xbf16>
    tpu.vector_store %arg7[%c100, %c0_31], %55 {strides = array<i32>} : memref<112x7296xbf16, #tpu.memory_space<vmem>>, vector<4x7296xbf16>,
    %57 = vector.extract_strided_slice %4 {offsets = [0, 2382], sizes = [4, 7296], strides = [1, 1]} : vector<4x9728xbf16> to vector<4x7296xbf16>
    %c104 = arith.constant 104 : index
    %c0_32 = arith.constant 0 : index
    %58 = vector.load %arg7[%c104, %c0_32] : memref<112x7296xbf16, #tpu.memory_space<vmem>>, vector<4x7296xbf16>
    tpu.vector_store %arg7[%c104, %c0_32], %57 {strides = array<i32>} : memref<112x7296xbf16, #tpu.memory_space<vmem>>, vector<4x7296xbf16>,
    %cst = arith.constant 0.000000e+00 : bf16
    %59 = vector.broadcast %cst : bf16 to vector<4x7296xbf16>
    %c108 = arith.constant 108 : index
    %c0_33 = arith.constant 0 : index
    %60 = vector.load %arg7[%c108, %c0_33] : memref<112x7296xbf16, #tpu.memory_space<vmem>>, vector<4x7296xbf16>
    tpu.vector_store %arg7[%c108, %c0_33], %59 {strides = array<i32>} : memref<112x7296xbf16, #tpu.memory_space<vmem>>, vector<4x7296xbf16>,
    %c0_34 = arith.constant 0 : index
    %c0_35 = arith.constant 0 : index
    %61 = vector.load %arg4[%c0_34, %c0_35] : memref<8x112xbf16, #tpu.memory_space<vmem>>, vector<8x112xbf16>
    %c0_36 = arith.constant 0 : index
    %c0_37 = arith.constant 0 : index
    %62 = vector.load %arg7[%c0_36, %c0_37] : memref<112x7296xbf16, #tpu.memory_space<vmem>>, vector<112x7296xbf16>
    %cst_38 = arith.constant dense<0.000000e+00> : vector<8x7296xf32>
    %63 = tpu.matmul %61, %62, %cst_38 {dimension_numbers = #tpu.dot_dimension_numbers<[1], [0], [0], [1], [0, 0, 1, 1], [], []>} : vector<8x112xbf16>, vector<112x7296xbf16>, vector<8x7296xf32> -> vector<8x7296xf32>
    %c0_39 = arith.constant 0 : index
    %c0_40 = arith.constant 0 : index
    %64 = vector.load %arg5[%c0_39, %c0_40] : memref<8x1xf32, #tpu.memory_space<vmem>>, vector<8x1xf32>
    %65 = vector.broadcast %64 : vector<8x1xf32> to vector<8x7296xf32>
    %66 = arith.addf %63, %65 : vector<8x7296xf32>
    %c0_41 = arith.constant 0 : index
    %c0_42 = arith.constant 0 : index
    %c0_43 = arith.constant 0 : index
    %67 = vector.load %arg6[%c0_41, %c0_42, %c0_43] : memref<1x8x7296xf32, #tpu.memory_space<vmem>>, vector<1x8x7296xf32>
    %68 = vector.shape_cast %67 : vector<1x8x7296xf32> to vector<8x7296xf32>
    %69 = vector.shape_cast %66 : vector<8x7296xf32> to vector<1x8x7296xf32>
    tpu.vector_store %arg6[%c0_41, %c0_42, %c0_43], %69 {strides = array<i32>} : memref<1x8x7296xf32, #tpu.memory_space<vmem>>, vector<1x8x7296xf32>,
    return
  }
  func.func @transform_0(%arg0: i32, %arg1: i32) -> (i32, i32, i32) {
    %c0_i32 = arith.constant 0 : i32
    %c0_i32_0 = arith.constant 0 : i32
    return %arg0, %c0_i32, %arg1 : i32, i32, i32
  }
  func.func @transform_1(%arg0: i32, %arg1: i32) -> (i32, i32, i32) {
    %c1_i32 = arith.constant 1 : i32
    %0 = arith.addi %arg1, %c1_i32 : i32
    %c3_i32 = arith.constant 3 : i32
    %1 = arith.muli %0, %c3_i32 : i32
    %c0_i32 = arith.constant 0 : i32
    %c0_i32_0 = arith.constant 0 : i32
    return %arg0, %c0_i32, %1 : i32, i32, i32
  }
  func.func @transform_2(%arg0: i32, %arg1: i32) -> (i32, i32) {
    %c0_i32 = arith.constant 0 : i32
    %c0_i32_0 = arith.constant 0 : i32
    %c0_i32_1 = arith.constant 0 : i32
    return %c0_i32, %c0_i32_0 : i32, i32
  }
  func.func @transform_3(%arg0: i32, %arg1: i32) -> (i32, i32) {
    %c0_i32 = arith.constant 0 : i32
    %c0_i32_0 = arith.constant 0 : i32
    %c0_i32_1 = arith.constant 0 : i32
    return %c0_i32, %c0_i32_0 : i32, i32
  }
  func.func @transform_4(%arg0: i32, %arg1: i32) -> (i32, i32, i32) {
    %c0_i32 = arith.constant 0 : i32
    %c0_i32_0 = arith.constant 0 : i32
    return %arg0, %c0_i32, %arg1 : i32, i32, i32
  }
}

</mosaic_0001>

<llo_original>
// kernel: resize_conv_nearest.1
$region0: #{resize_conv_nearest.1}
  #allocation0 [shape = 'u32[]', space=smem, size = 0x4, offset = 0x4, fixed_abs, tag = 'smem constant byte address 0x4 - core index']
  #allocation1 [shape = 'u32[144,128]{1,0:T(1,128)}', space=vmem, size = 0x12000, scoped, tag = 'internal scratch']
  #allocation2 [shape = 'bf16[112,7296]{1,0:T(16,128)(2,1)}', space=vmem, size = 0x18f000, scoped, tag = 'scratch operand']
  %s0 = inlined_call_operand.vmem [shape: bf16[2,4,46240], index: 0, kind: input, shape index: {}, may-alias: {0,1}]
  %s1 = inlined_call_operand.vmem [shape: bf16[2,4,46240], index: 1, kind: input, shape index: {}, may-alias: {0,1}]
  %s2 = inlined_call_operand.vmem [shape: bf16[8,112], index: 2, kind: input, shape index: {}]
  %s3 = inlined_call_operand.vmem [shape: f32[8,1], index: 3, kind: input, shape index: {}]
  %s4 = inlined_call_operand.vmem [shape: f32[2,8,43776], index: 4, kind: output, shape index: {}]
  %s5 = sld [smem:[#allocation0]]
  $region49: #{resize_conv_nearest.1} parent=0
    _
  %s7 = ssub.s32 1, %s5
  %s8 = scalar_select 0, %s7, %s5
  loop: start=0, step=1, limit=14
  $region2: #{resize_conv_nearest.1} parent=0 // loop_pre_header
    _
  $region3: #{resize_conv_nearest.1} parent=0 // loop_header
    %s10 = sphi 0, %s14
    %p11 = scmp.ge.s32.totalorder %s10, 14
    %s17 = sphi 0, %s29
    %s18 = sphi 0, %s25
    %s19 = sphi 0, %s17
    %s20 = sphi 0, %s18
    %s21 = sphi 0, %s19
    %s22 = sphi 0, %s20
    %s34 = sphi 0, %s36
    %s37 = sphi 0, %s34
    %s38 = sphi 0, %s37
    %s54 = sphi 0, %s38
    %s66 = sphi 0, %s68
    %s69 = sphi 0, %s66
    %s70 = sphi 0, %s69
    %s86 = sphi 0, %s70
    %s90 = sphi 0, %s90
    %s92 = sphi 0, %s90
    %s93 = sphi 0, %s92
    %s107 = sphi 0, %s93
    %s111 = sphi 0, %s111
    %s113 = sphi 0, %s111
    %s114 = sphi 0, %s113
    %s128 = sphi 0, %s114
    %s136 = sphi 0, %s138
    %s139 = sphi 0, %s136
    %s140 = sphi 0, %s139
    %s156 = sphi 0, %s140
  $region4: #{resize_conv_nearest.1} parent=0 // loop_header_branch
    %13 = sbr.rel (%p11) target = $region8
  $region5: #{resize_conv_nearest.1} parent=0 // loop_body
    %s15 = ssub.s32 %s10, 1
    %s16 = ssub.s32 %s10, 2
    %s23 = sadd.s32 1, %s18
    %p24 = scmp.ge.s32.totalorder %s23, 6
    %s25 = scalar_select %p24, 0, %s23
    %s26 = sadd.s32 1, %s17
    %s27 = scalar_select %p24, %s26, %s17
    %p28 = scmp.ge.s32.totalorder %s27, 2
    %s29 = scalar_select %p28, 0, %s27
    %s30 = ssub.s32 %s17, %s29
    %s31 = ssub.s32 %s18, %s25
    %s32 = sor.u32 %s30, %s31
    %p33 = scmp.eq.s32.totalorder %s32, 0
    %s35 = sadd.s32 %s34, 1
    %s36 = scalar_select %p33, %s34, %s35
    %p39 = pneg %p33
    %p40 = scmp.eq.s32.totalorder %s10, 11
    %p41 = por %p39, %p40
    %p42 = scmp.ne.s32.totalorder %s34, %s37
    %p43 = scmp.eq.s32.totalorder %s10, 0
    %p44 = por %p42, %p43
    %p45 = scmp.ne.s32.totalorder %s34, %s37
    %p46 = scmp.eq.s32.totalorder %s15, 11
    %p47 = por %p45, %p46
    %p48 = scmp.ne.s32.totalorder %s37, %s38
    %p49 = scmp.eq.s32.totalorder %s15, 0
    %p50 = por %p48, %p49
    %p51 = scmp.ne.s32.totalorder %s37, %s38
    %p52 = scmp.eq.s32.totalorder %s16, 11
    %p53 = por %p51, %p52
    %p55 = scmp.ne.s32.totalorder %s38, %s54
    %p56 = scmp.eq.s32.totalorder %s16, 0
    %p57 = por %p55, %p56
    %s58 = sadd.s32 %s18, 1
    %s59 = smul.u32 %s58, 3
    %s60 = sadd.s32 %s25, 1
    %s61 = smul.u32 %s60, 3
    %s62 = ssub.s32 %s17, %s29
    %s63 = ssub.s32 %s59, %s61
    %s64 = sor.u32 %s62, %s63
    %p65 = scmp.eq.s32.totalorder %s64, 0
    %s67 = sadd.s32 %s66, 1
    %s68 = scalar_select %p65, %s66, %s67
    %p71 = pneg %p65
    %p72 = scmp.eq.s32.totalorder %s10, 11
    %p73 = por %p71, %p72
    %p74 = scmp.ne.s32.totalorder %s66, %s69
    %p75 = scmp.eq.s32.totalorder %s10, 0
    %p76 = por %p74, %p75
    %p77 = scmp.ne.s32.totalorder %s66, %s69
    %p78 = scmp.eq.s32.totalorder %s15, 11
    %p79 = por %p77, %p78
    %p80 = scmp.ne.s32.totalorder %s69, %s70
    %p81 = scmp.eq.s32.totalorder %s15, 0
    %p82 = por %p80, %p81
    %p83 = scmp.ne.s32.totalorder %s69, %s70
    %p84 = scmp.eq.s32.totalorder %s16, 11
    %p85 = por %p83, %p84
    %p87 = scmp.ne.s32.totalorder %s70, %s86
    %p88 = scmp.eq.s32.totalorder %s16, 0
    %p89 = por %p87, %p88
    %s91 = sadd.s32 %s90, 1
    %p94 = scmp.eq.s32.totalorder %s10, 11
    %p95 = scmp.ne.s32.totalorder %s90, %s92
    %p96 = scmp.eq.s32.totalorder %s10, 0
    %p97 = por %p95, %p96
    %p98 = scmp.ne.s32.totalorder %s90, %s92
    %p99 = scmp.eq.s32.totalorder %s15, 11
    %p100 = por %p98, %p99
    %p101 = scmp.ne.s32.totalorder %s92, %s93
    %p102 = scmp.eq.s32.totalorder %s15, 0
    %p103 = por %p101, %p102
    %p104 = scmp.ne.s32.totalorder %s92, %s93
    %p105 = scmp.eq.s32.totalorder %s16, 11
    %p106 = por %p104, %p105
    %p108 = scmp.ne.s32.totalorder %s93, %s107
    %p109 = scmp.eq.s32.totalorder %s16, 0
    %p110 = por %p108, %p109
    %s112 = sadd.s32 %s111, 1
    %p115 = scmp.eq.s32.totalorder %s10, 11
    %p116 = scmp.ne.s32.totalorder %s111, %s113
    %p117 = scmp.eq.s32.totalorder %s10, 0
    %p118 = por %p116, %p117
    %p119 = scmp.ne.s32.totalorder %s111, %s113
    %p120 = scmp.eq.s32.totalorder %s15, 11
    %p121 = por %p119, %p120
    %p122 = scmp.ne.s32.totalorder %s113, %s114
    %p123 = scmp.eq.s32.totalorder %s15, 0
    %p124 = por %p122, %p123
    %p125 = scmp.ne.s32.totalorder %s113, %s114
    %p126 = scmp.eq.s32.totalorder %s16, 11
    %p127 = por %p125, %p126
    %p129 = scmp.ne.s32.totalorder %s114, %s128
    %p130 = scmp.eq.s32.totalorder %s16, 0
    %p131 = por %p129, %p130
    %s132 = ssub.s32 %s17, %s29
    %s133 = ssub.s32 %s18, %s25
    %s134 = sor.u32 %s132, %s133
    %p135 = scmp.eq.s32.totalorder %s134, 0
    %s137 = sadd.s32 %s136, 1
    %s138 = scalar_select %p135, %s136, %s137
    %p141 = pneg %p135
    %p142 = scmp.eq.s32.totalorder %s10, 11
    %p143 = por %p141, %p142
    %p144 = scmp.ne.s32.totalorder %s136, %s139
    %p145 = scmp.eq.s32.totalorder %s10, 0
    %p146 = por %p144, %p145
    %p147 = scmp.ne.s32.totalorder %s136, %s139
    %p148 = scmp.eq.s32.totalorder %s15, 11
    %p149 = por %p147, %p148
    %p150 = scmp.ne.s32.totalorder %s139, %s140
    %p151 = scmp.eq.s32.totalorder %s15, 0
    %p152 = por %p150, %p151
    %p153 = scmp.ne.s32.totalorder %s139, %s140
    %p154 = scmp.eq.s32.totalorder %s16, 11
    %p155 = por %p153, %p154
    %p157 = scmp.ne.s32.totalorder %s140, %s156
    %p158 = scmp.eq.s32.totalorder %s16, 0
    %p159 = por %p157, %p158
    %p160 = scmp.le.s32.totalorder 1, %s10
    %p161 = scmp.lt.s32.totalorder %s10, 13
    %p162 = pnand %p160, %p161
    %p163 = pneg %p162
    // Predicated region
    $region9: #{resize_conv_nearest.1} parent=5 // pred_check
      _
    $region10: #{resize_conv_nearest.1} parent=5 // pred_check_branch
      %165 = sbr.rel (%p162) target = $region12
    $region11: #{resize_conv_nearest.1} parent=5 // pred_region
      %s166 = ssub.s32 %s10, 1
      // Predicated region
      $region13: #{resize_conv_nearest.1} parent=11 // pred_check
        %p167 = pneg %p103
      $region14: #{resize_conv_nearest.1} parent=11 // pred_check_branch
        %169 = sbr.rel (%p167) target = $region16
      $region15: #{resize_conv_nearest.1} parent=11 // pred_region
        _
      $region16: #{resize_conv_nearest.1} parent=11 // pred_fallthru
        _
      // Predicated region
      $region17: #{resize_conv_nearest.1} parent=11 // pred_check
        %p170 = pneg %p124
      $region18: #{resize_conv_nearest.1} parent=11 // pred_check_branch
        %172 = sbr.rel (%p170) target = $region20
      $region19: #{resize_conv_nearest.1} parent=11 // pred_region
        _
      $region20: #{resize_conv_nearest.1} parent=11 // pred_fallthru
        _
    $region12: #{resize_conv_nearest.1} parent=5 // pred_fallthru
      _
    %p173 = scmp.lt.s32.totalorder %s10, 12
    // Predicated region
    $region21: #{resize_conv_nearest.1} parent=5 // pred_check
      %p174 = pneg %p173
    $region22: #{resize_conv_nearest.1} parent=5 // pred_check_branch
      %176 = sbr.rel (%p174) target = $region24
    $region23: #{resize_conv_nearest.1} parent=5 // pred_region
      // Predicated region
      $region25: #{resize_conv_nearest.1} parent=23 // pred_check
        %p177 = pneg %p44
      $region26: #{resize_conv_nearest.1} parent=23 // pred_check_branch
        %179 = sbr.rel (%p177) target = $region28
      $region27: #{resize_conv_nearest.1} parent=23 // pred_region
        %s180 = smul.u32 57, %s18
        %s181 = ssub.s32 362, %s180
        %p182 = scmp.lt.s32.totalorder %s181, 57
        %s183 = scalar_select %p182, %s181, 57
        %s184 = smul.u32 32, %s183
        %p185 = scmp.lt.s32.totalorder %s17, 1
        %s186 = scalar_select %p185, %s17, 1
        %p187 = scmp.lt.s32.totalorder %s180, 361
        %s188 = scalar_select %p187, %s180, 361
        %s189 = smul.addr %s186, 362
        %s190 = sadd.s32 %s188, %s189
        %s191 = smul.addr %s190, 2
        %s192 = scalar_lea.vmem %s0, %s191
        %s193 = smul.u32 57, %s18
        %s194 = ssub.s32 362, %s193
        %p195 = scmp.lt.s32.totalorder %s194, 57
        %s196 = scalar_select %p195, %s194, 57
        %s197 = smul.u32 32, %s196
      $region28: #{resize_conv_nearest.1} parent=23 // pred_fallthru
        _
      // Predicated region
      $region29: #{resize_conv_nearest.1} parent=23 // pred_check
        %p198 = pneg %p76
      $region30: #{resize_conv_nearest.1} parent=23 // pred_check_branch
        %200 = sbr.rel (%p198) target = $region32
      $region31: #{resize_conv_nearest.1} parent=23 // pred_region
        %s201 = sadd.s32 %s18, 1
        %s202 = smul.u32 %s201, 3
        %s203 = smul.u32 19, %s202
        %s204 = ssub.s32 362, %s203
        %p205 = scmp.lt.s32.totalorder %s204, 19
        %s206 = scalar_select %p205, %s204, 19
        %s207 = smul.u32 32, %s206
        %p208 = scmp.lt.s32.totalorder %s17, 1
        %s209 = scalar_select %p208, %s17, 1
        %p210 = scmp.lt.s32.totalorder %s203, 361
        %s211 = scalar_select %p210, %s203, 361
        %s212 = smul.addr %s209, 362
        %s213 = sadd.s32 %s211, %s212
        %s214 = smul.addr %s213, 2
        %s215 = scalar_lea.vmem %s1, %s214
        %s216 = sadd.s32 %s18, 1
        %s217 = smul.u32 %s216, 3
        %s218 = smul.u32 19, %s217
        %s219 = ssub.s32 362, %s218
        %p220 = scmp.lt.s32.totalorder %s219, 19
        %s221 = scalar_select %p220, %s219, 19
        %s222 = smul.u32 32, %s221
      $region32: #{resize_conv_nearest.1} parent=23 // pred_fallthru
        _
    $region24: #{resize_conv_nearest.1} parent=5 // pred_fallthru
      _
    %p223 = scmp.le.s32.totalorder 1, %s10
    %p224 = scmp.lt.s32.totalorder %s10, 13
    %p225 = pnand %p223, %p224
    %p226 = pneg %p225
    // Predicated region
    $region33: #{resize_conv_nearest.1} parent=5 // pred_check
      _
    $region34: #{resize_conv_nearest.1} parent=5 // pred_check_branch
      %228 = sbr.rel (%p225) target = $region36
    $region35: #{resize_conv_nearest.1} parent=5 // pred_region
      %s229 = ssub.s32 %s10, 1
      %s230 = smul.u32 57, %s20
      %s231 = ssub.s32 362, %s230
      %p232 = scmp.lt.s32.totalorder %s231, 57
      %s233 = scalar_select %p232, %s231, 57
      %s234 = smul.u32 32, %s233
      %p235 = scmp.lt.s32.totalorder %s19, 1
      %s236 = scalar_select %p235, %s19, 1
      %p237 = scmp.lt.s32.totalorder %s230, 361
      %s238 = scalar_select %p237, %s230, 361
      %s239 = smul.addr %s236, 362
      %s240 = sadd.s32 %s238, %s239
      %s241 = smul.addr %s240, 2
      %s242 = scalar_lea.vmem %s0, %s241
      %p243 = pneg %p50
      %p244 = pneg %p47
      %s245 = sadd.s32 %s20, 1
      %s246 = smul.u32 %s245, 3
      %s247 = smul.u32 19, %s246
      %s248 = ssub.s32 362, %s247
      %p249 = scmp.lt.s32.totalorder %s248, 19
      %s250 = scalar_select %p249, %s248, 19
      %s251 = smul.u32 32, %s250
      %p252 = scmp.lt.s32.totalorder %s19, 1
      %s253 = scalar_select %p252, %s19, 1
      %p254 = scmp.lt.s32.totalorder %s247, 361
      %s255 = scalar_select %p254, %s247, 361
      %s256 = smul.addr %s253, 362
      %s257 = sadd.s32 %s255, %s256
      %s258 = smul.addr %s257, 2
      %s259 = scalar_lea.vmem %s1, %s258
      %p260 = pneg %p82
      %p261 = pneg %p79
      %p262 = pneg %p103
      %p263 = pneg %p100
      %p264 = pneg %p124
      %p265 = pneg %p121
      %p266 = pneg %p152
      %p267 = pneg %p149
      %s268 = smul.u32 57, %s20
      %p269 = scmp.lt.s32.totalorder %s19, 1
      %s270 = scalar_select %p269, %s19, 1
      %p271 = scmp.lt.s32.totalorder %s268, 341
      %s272 = scalar_select %p271, %s268, 341
      %s273 = smul.addr %s270, 342
      %s274 = sadd.s32 %s272, %s273
      %s275 = smul.addr %s274, 8
      %s276 = scalar_lea.vmem %s4, %s275
      %s277 = smul.u32 57, %s20
      %s278 = ssub.s32 362, %s277
      %p279 = scmp.lt.s32.totalorder %s278, 57
      %s280 = scalar_select %p279, %s278, 57
      %s281 = smul.u32 32, %s280
      %p282 = scmp.lt.s32.totalorder %s19, 1
      %s283 = scalar_select %p282, %s19, 1
      %p284 = scmp.lt.s32.totalorder %s277, 361
      %s285 = scalar_select %p284, %s277, 361
      %s286 = smul.addr %s283, 362
      %s287 = sadd.s32 %s285, %s286
      %s288 = smul.addr %s287, 2
      %s289 = scalar_lea.vmem %s0, %s288
      %s290 = smul.u32 57, %s20
      %s291 = ssub.s32 362, %s290
      %p292 = scmp.lt.s32.totalorder %s291, 57
      %s293 = scalar_select %p292, %s291, 57
      %s294 = smul.u32 32, %s293
      %s295 = sadd.s32 %s20, 1
      %s296 = smul.u32 %s295, 3
      %s297 = smul.u32 19, %s296
      %s298 = ssub.s32 362, %s297
      %p299 = scmp.lt.s32.totalorder %s298, 19
      %s300 = scalar_select %p299, %s298, 19
      %s301 = smul.u32 32, %s300
      %p302 = scmp.lt.s32.totalorder %s19, 1
      %s303 = scalar_select %p302, %s19, 1
      %p304 = scmp.lt.s32.totalorder %s297, 361
      %s305 = scalar_select %p304, %s297, 361
      %s306 = smul.addr %s303, 362
      %s307 = sadd.s32 %s305, %s306
      %s308 = smul.addr %s307, 2
      %s309 = scalar_lea.vmem %s1, %s308
      %s310 = sadd.s32 %s20, 1
      %s311 = smul.u32 %s310, 3
      %s312 = smul.u32 19, %s311
      %s313 = ssub.s32 362, %s312
      %p314 = scmp.lt.s32.totalorder %s313, 19
      %s315 = scalar_select %p314, %s313, 19
      %s316 = smul.u32 32, %s315
      %s317 = smul.u32 57, %s20
      %p318 = scmp.lt.s32.totalorder %s19, 1
      %s319 = scalar_select %p318, %s19, 1
      %p320 = scmp.lt.s32.totalorder %s317, 341
      %s321 = scalar_select %p320, %s317, 341
      %s322 = smul.addr %s319, 342
      %s323 = sadd.s32 %s321, %s322
      %s324 = smul.addr %s323, 8
      %s325 = scalar_lea.vmem %s4, %s324
      %s326 = smul.u32 57, %s20
      %v328 = vld [vmem:[%s289] sm:$0xff]
      %v329 = vld [vmem:[%s289 + $0x8] sm:$0xff]
      %v330 = vld [vmem:[%s289 + $0x10] sm:$0xff]
      %v331 = vld [vmem:[%s289 + $0x18] sm:$0xff]
      %v332 = vld [vmem:[%s289 + $0x20] sm:$0xff]
      %v333 = vld [vmem:[%s289 + $0x28] sm:$0xff]
      %v334 = vld [vmem:[%s289 + $0x30] sm:$0xff]
      %v335 = vld [vmem:[%s289 + $0x38] sm:$0xff]
      %v336 = vld [vmem:[%s289 + $0x40] sm:$0xff]
      %v337 = vld [vmem:[%s289 + $0x48] sm:$0xff]
      %v338 = vld [vmem:[%s289 + $0x50] sm:$0xff]
      %v339 = vld [vmem:[%s289 + $0x58] sm:$0xff]
      %v340 = vld [vmem:[%s289 + $0x60] sm:$0xff]
      %v341 = vld [vmem:[%s289 + $0x68] sm:$0xff]
      %v342 = vld [vmem:[%s289 + $0x70] sm:$0x3]
      %v343 = vld [vmem:[%s309] sm:$0xff]
      %v344 = vld [vmem:[%s309 + $0x8] sm:$0xff]
      %v345 = vld [vmem:[%s309 + $0x10] sm:$0xff]
      %v346 = vld [vmem:[%s309 + $0x18] sm:$0xff]
      %v347 = vld [vmem:[%s309 + $0x20] sm:$0x3f]
      %v363 = vcombine.high %v328, %v328
      %v365 = vunpack.c.l.s4 1983009808
      %v366 = vunpack.c.0.s8 %v365
      %v367 = vlaneseq
      %v368 = vshrl.u32 %v367, 7
      %v369 = vsub.s32 %v366, %v368
      %v370 = vrot.slane %v328, %v369
      %v372 = vunpack.c.l.s4 1983009808
      %v373 = vunpack.c.0.s8 %v372
      %v374 = vlaneseq
      %v375 = vshrl.u32 %v374, 7
      %v376 = vsub.s32 %v373, %v375
      %v377 = vrot.slane %v363, %v376
      %v378 = vcombine.high %v370, %v370
      %v379 = vcombine.high %v377, %v377
      %v380 = vcombine.high %v329, %v329
      %v382 = vunpack.c.l.s4 1983009808
      %v383 = vunpack.c.0.s8 %v382
      %v384 = vlaneseq
      %v385 = vshrl.u32 %v384, 7
      %v386 = vsub.s32 %v383, %v385
      %v387 = vrot.slane %v329, %v386
      %v389 = vunpack.c.l.s4 1983009808
      %v390 = vunpack.c.0.s8 %v389
      %v391 = vlaneseq
      %v392 = vshrl.u32 %v391, 7
      %v393 = vsub.s32 %v390, %v392
      %v394 = vrot.slane %v380, %v393
      %v395 = vcombine.high %v387, %v387
      %v396 = vcombine.high %v394, %v394
      %v397 = vcombine.high %v330, %v330
      %v399 = vunpack.c.l.s4 1983009808
      %v400 = vunpack.c.0.s8 %v399
      %v401 = vlaneseq
      %v402 = vshrl.u32 %v401, 7
      %v403 = vsub.s32 %v400, %v402
      %v404 = vrot.slane %v330, %v403
      %v406 = vunpack.c.l.s4 1983009808
      %v407 = vunpack.c.0.s8 %v406
      %v408 = vlaneseq
      %v409 = vshrl.u32 %v408, 7
      %v410 = vsub.s32 %v407, %v409
      %v411 = vrot.slane %v397, %v410
      %v412 = vcombine.high %v404, %v404
      %v413 = vcombine.high %v411, %v411
      %v414 = vcombine.high %v331, %v331
      %v416 = vunpack.c.l.s4 1983009808
      %v417 = vunpack.c.0.s8 %v416
      %v418 = vlaneseq
      %v419 = vshrl.u32 %v418, 7
      %v420 = vsub.s32 %v417, %v419
      %v421 = vrot.slane %v331, %v420
      %v423 = vunpack.c.l.s4 1983009808
      %v424 = vunpack.c.0.s8 %v423
      %v425 = vlaneseq
      %v426 = vshrl.u32 %v425, 7
      %v427 = vsub.s32 %v424, %v426
      %v428 = vrot.slane %v414, %v427
      %v429 = vcombine.high %v421, %v421
      %v430 = vcombine.high %v428, %v428
      %v431 = vcombine.high %v332, %v332
      %v433 = vunpack.c.l.s4 1983009808
      %v434 = vunpack.c.0.s8 %v433
      %v435 = vlaneseq
      %v436 = vshrl.u32 %v435, 7
      %v437 = vsub.s32 %v434, %v436
      %v438 = vrot.slane %v332, %v437
      %v440 = vunpack.c.l.s4 1983009808
      %v441 = vunpack.c.0.s8 %v440
      %v442 = vlaneseq
      %v443 = vshrl.u32 %v442, 7
      %v444 = vsub.s32 %v441, %v443
      %v445 = vrot.slane %v431, %v444
      %v446 = vcombine.high %v438, %v438
      %v447 = vcombine.high %v445, %v445
      %v448 = vcombine.high %v333, %v333
      %v450 = vunpack.c.l.s4 1983009808
      %v451 = vunpack.c.0.s8 %v450
      %v452 = vlaneseq
      %v453 = vshrl.u32 %v452, 7
      %v454 = vsub.s32 %v451, %v453
      %v455 = vrot.slane %v333, %v454
      %v457 = vunpack.c.l.s4 1983009808
      %v458 = vunpack.c.0.s8 %v457
      %v459 = vlaneseq
      %v460 = vshrl.u32 %v459, 7
      %v461 = vsub.s32 %v458, %v460
      %v462 = vrot.slane %v448, %v461
      %v463 = vcombine.high %v455, %v455
      %v464 = vcombine.high %v462, %v462
      %v465 = vcombine.high %v334, %v334
      %v467 = vunpack.c.l.s4 1983009808
      %v468 = vunpack.c.0.s8 %v467
      %v469 = vlaneseq
      %v470 = vshrl.u32 %v469, 7
      %v471 = vsub.s32 %v468, %v470
      %v472 = vrot.slane %v334, %v471
      %v474 = vunpack.c.l.s4 1983009808
      %v475 = vunpack.c.0.s8 %v474
      %v476 = vlaneseq
      %v477 = vshrl.u32 %v476, 7
      %v478 = vsub.s32 %v475, %v477
      %v479 = vrot.slane %v465, %v478
      %v480 = vcombine.high %v472, %v472
      %v481 = vcombine.high %v479, %v479
      %v482 = vcombine.high %v335, %v335
      %v484 = vunpack.c.l.s4 1983009808
      %v485 = vunpack.c.0.s8 %v484
      %v486 = vlaneseq
      %v487 = vshrl.u32 %v486, 7
      %v488 = vsub.s32 %v485, %v487
      %v489 = vrot.slane %v335, %v488
      %v491 = vunpack.c.l.s4 1983009808
      %v492 = vunpack.c.0.s8 %v491
      %v493 = vlaneseq
      %v494 = vshrl.u32 %v493, 7
      %v495 = vsub.s32 %v492, %v494
      %v496 = vrot.slane %v482, %v495
      %v497 = vcombine.high %v489, %v489
      %v498 = vcombine.high %v496, %v496
      %v499 = vcombine.high %v336, %v336
      %v501 = vunpack.c.l.s4 1983009808
      %v502 = vunpack.c.0.s8 %v501
      %v503 = vlaneseq
      %v504 = vshrl.u32 %v503, 7
      %v505 = vsub.s32 %v502, %v504
      %v506 = vrot.slane %v336, %v505
      %v508 = vunpack.c.l.s4 1983009808
      %v509 = vunpack.c.0.s8 %v508
      %v510 = vlaneseq
      %v511 = vshrl.u32 %v510, 7
      %v512 = vsub.s32 %v509, %v511
      %v513 = vrot.slane %v499, %v512
      %v514 = vcombine.high %v506, %v506
      %v515 = vcombine.high %v513, %v513
      %v516 = vcombine.high %v337, %v337
      %v518 = vunpack.c.l.s4 1983009808
      %v519 = vunpack.c.0.s8 %v518
      %v520 = vlaneseq
      %v521 = vshrl.u32 %v520, 7
      %v522 = vsub.s32 %v519, %v521
      %v523 = vrot.slane %v337, %v522
      %v525 = vunpack.c.l.s4 1983009808
      %v526 = vunpack.c.0.s8 %v525
      %v527 = vlaneseq
      %v528 = vshrl.u32 %v527, 7
      %v529 = vsub.s32 %v526, %v528
      %v530 = vrot.slane %v516, %v529
      %v531 = vcombine.high %v523, %v523
      %v532 = vcombine.high %v530, %v530
      %v533 = vcombine.high %v338, %v338
      %v535 = vunpack.c.l.s4 1983009808
      %v536 = vunpack.c.0.s8 %v535
      %v537 = vlaneseq
      %v538 = vshrl.u32 %v537, 7
      %v539 = vsub.s32 %v536, %v538
      %v540 = vrot.slane %v338, %v539
      %v542 = vunpack.c.l.s4 1983009808
      %v543 = vunpack.c.0.s8 %v542
      %v544 = vlaneseq
      %v545 = vshrl.u32 %v544, 7
      %v546 = vsub.s32 %v543, %v545
      %v547 = vrot.slane %v533, %v546
      %v548 = vcombine.high %v540, %v540
      %v549 = vcombine.high %v547, %v547
      %v550 = vcombine.high %v339, %v339
      %v552 = vunpack.c.l.s4 1983009808
      %v553 = vunpack.c.0.s8 %v552
      %v554 = vlaneseq
      %v555 = vshrl.u32 %v554, 7
      %v556 = vsub.s32 %v553, %v555
      %v557 = vrot.slane %v339, %v556
      %v559 = vunpack.c.l.s4 1983009808
      %v560 = vunpack.c.0.s8 %v559
      %v561 = vlaneseq
      %v562 = vshrl.u32 %v561, 7
      %v563 = vsub.s32 %v560, %v562
      %v564 = vrot.slane %v550, %v563
      %v565 = vcombine.high %v557, %v557
      %v566 = vcombine.high %v564, %v564
      %v567 = vcombine.high %v340, %v340
      %v569 = vunpack.c.l.s4 1983009808
      %v570 = vunpack.c.0.s8 %v569
      %v571 = vlaneseq
      %v572 = vshrl.u32 %v571, 7
      %v573 = vsub.s32 %v570, %v572
      %v574 = vrot.slane %v340, %v573
      %v576 = vunpack.c.l.s4 1983009808
      %v577 = vunpack.c.0.s8 %v576
      %v578 = vlaneseq
      %v579 = vshrl.u32 %v578, 7
      %v580 = vsub.s32 %v577, %v579
      %v581 = vrot.slane %v567, %v580
      %v582 = vcombine.high %v574, %v574
      %v583 = vcombine.high %v581, %v581
      %v584 = vcombine.high %v341, %v341
      %v586 = vunpack.c.l.s4 1983009808
      %v587 = vunpack.c.0.s8 %v586
      %v588 = vlaneseq
      %v589 = vshrl.u32 %v588, 7
      %v590 = vsub.s32 %v587, %v589
      %v591 = vrot.slane %v341, %v590
      %v593 = vunpack.c.l.s4 1983009808
      %v594 = vunpack.c.0.s8 %v593
      %v595 = vlaneseq
      %v596 = vshrl.u32 %v595, 7
      %v597 = vsub.s32 %v594, %v596
      %v598 = vrot.slane %v584, %v597
      %v599 = vcombine.high %v591, %v591
      %v600 = vcombine.high %v598, %v598
      %v602 = vunpack.c.l.s4 1983009808
      %v603 = vunpack.c.0.s8 %v602
      %v604 = vlaneseq
      %v605 = vshrl.u32 %v604, 7
      %v606 = vsub.s32 %v603, %v605
      %v607 = vrot.slane %v342, %v606
      %v670 = vcombine.high %v343, %v343
      %v672 = vunpack.c.l.s4 1983009808
      %v673 = vunpack.c.0.s8 %v672
      %v674 = vlaneseq
      %v675 = vshrl.u32 %v674, 7
      %v676 = vsub.s32 %v673, %v675
      %v677 = vrot.slane %v343, %v676
      %v679 = vunpack.c.l.s4 1983009808
      %v680 = vunpack.c.0.s8 %v679
      %v681 = vlaneseq
      %v682 = vshrl.u32 %v681, 7
      %v683 = vsub.s32 %v680, %v682
      %v684 = vrot.slane %v670, %v683
      %v685 = vcombine.high %v677, %v677
      %v686 = vcombine.high %v684, %v684
      %v687 = vcombine.high %v344, %v344
      %v689 = vunpack.c.l.s4 1983009808
      %v690 = vunpack.c.0.s8 %v689
      %v691 = vlaneseq
      %v692 = vshrl.u32 %v691, 7
      %v693 = vsub.s32 %v690, %v692
      %v694 = vrot.slane %v344, %v693
      %v696 = vunpack.c.l.s4 1983009808
      %v697 = vunpack.c.0.s8 %v696
      %v698 = vlaneseq
      %v699 = vshrl.u32 %v698, 7
      %v700 = vsub.s32 %v697, %v699
      %v701 = vrot.slane %v687, %v700
      %v702 = vcombine.high %v694, %v694
      %v703 = vcombine.high %v701, %v701
      %v704 = vcombine.high %v345, %v345
      %v706 = vunpack.c.l.s4 1983009808
      %v707 = vunpack.c.0.s8 %v706
      %v708 = vlaneseq
      %v709 = vshrl.u32 %v708, 7
      %v710 = vsub.s32 %v707, %v709
      %v711 = vrot.slane %v345, %v710
      %v713 = vunpack.c.l.s4 1983009808
      %v714 = vunpack.c.0.s8 %v713
      %v715 = vlaneseq
      %v716 = vshrl.u32 %v715, 7
      %v717 = vsub.s32 %v714, %v716
      %v718 = vrot.slane %v704, %v717
      %v719 = vcombine.high %v711, %v711
      %v720 = vcombine.high %v718, %v718
      %v721 = vcombine.high %v346, %v346
      %v723 = vunpack.c.l.s4 1983009808
      %v724 = vunpack.c.0.s8 %v723
      %v725 = vlaneseq
      %v726 = vshrl.u32 %v725, 7
      %v727 = vsub.s32 %v724, %v726
      %v728 = vrot.slane %v346, %v727
      %v730 = vunpack.c.l.s4 1983009808
      %v731 = vunpack.c.0.s8 %v730
      %v732 = vlaneseq
      %v733 = vshrl.u32 %v732, 7
      %v734 = vsub.s32 %v731, %v733
      %v735 = vrot.slane %v721, %v734
      %v736 = vcombine.high %v728, %v728
      %v737 = vcombine.high %v735, %v735
      %v738 = vcombine.high %v347, %v347
      %v740 = vunpack.c.l.s4 1983009808
      %v741 = vunpack.c.0.s8 %v740
      %v742 = vlaneseq
      %v743 = vshrl.u32 %v742, 7
      %v744 = vsub.s32 %v741, %v743
      %v745 = vrot.slane %v347, %v744
      %v747 = vunpack.c.l.s4 1983009808
      %v748 = vunpack.c.0.s8 %v747
      %v749 = vlaneseq
      %v750 = vshrl.u32 %v749, 7
      %v751 = vsub.s32 %v748, %v750
      %v752 = vrot.slane %v738, %v751
      %v753 = vcombine.high %v745, %v745
      %754 = vst [vmem:[#allocation2] sm:$0x3] %v370
      %755 = vst [vmem:[#allocation2 + $0x8] sm:$0x3] %v378
      %756 = vst [vmem:[#allocation2 + $0x10] sm:$0x3] %v377
      %757 = vst [vmem:[#allocation2 + $0x18] sm:$0x3] %v379
      %758 = vst [vmem:[#allocation2 + $0x20] sm:$0x3] %v387
      %759 = vst [vmem:[#allocation2 + $0x28] sm:$0x3] %v395
      %760 = vst [vmem:[#allocation2 + $0x30] sm:$0x3] %v394
      %761 = vst [vmem:[#allocation2 + $0x38] sm:$0x3] %v396
      %762 = vst [vmem:[#allocation2 + $0x40] sm:$0x3] %v404
      %763 = vst [vmem:[#allocation2 + $0x48] sm:$0x3] %v412
      %764 = vst [vmem:[#allocation2 + $0x50] sm:$0x3] %v411
      %765 = vst [vmem:[#allocation2 + $0x58] sm:$0x3] %v413
      %766 = vst [vmem:[#allocation2 + $0x60] sm:$0x3] %v421
      %767 = vst [vmem:[#allocation2 + $0x68] sm:$0x3] %v429
      %768 = vst [vmem:[#allocation2 + $0x70] sm:$0x3] %v428
      %769 = vst [vmem:[#allocation2 + $0x78] sm:$0x3] %v430
      %770 = vst [vmem:[#allocation2 + $0x80] sm:$0x3] %v438
      %771 = vst [vmem:[#allocation2 + $0x88] sm:$0x3] %v446
      %772 = vst [vmem:[#allocation2 + $0x90] sm:$0x3] %v445
      %773 = vst [vmem:[#allocation2 + $0x98] sm:$0x3] %v447
      %774 = vst [vmem:[#allocation2 + $0xa0] sm:$0x3] %v455
      %775 = vst [vmem:[#allocation2 + $0xa8] sm:$0x3] %v463
      %776 = vst [vmem:[#allocation2 + $0xb0] sm:$0x3] %v462
      %777 = vst [vmem:[#allocation2 + $0xb8] sm:$0x3] %v464
      %778 = vst [vmem:[#allocation2 + $0xc0] sm:$0x3] %v472
      %779 = vst [vmem:[#allocation2 + $0xc8] sm:$0x3] %v480
      %780 = vst [vmem:[#allocation2 + $0xd0] sm:$0x3] %v479
      %781 = vst [vmem:[#allocation2 + $0xd8] sm:$0x3] %v481
      %782 = vst [vmem:[#allocation2 + $0xe0] sm:$0x3] %v489
      %783 = vst [vmem:[#allocation2 + $0xe8] sm:$0x3] %v497
      %784 = vst [vmem:[#allocation2 + $0xf0] sm:$0x3] %v496
      %785 = vst [vmem:[#allocation2 + $0xf8] sm:$0x3] %v498
      %786 = vst [vmem:[#allocation2 + $0x100] sm:$0x3] %v506
      %787 = vst [vmem:[#allocation2 + $0x108] sm:$0x3] %v514
      %788 = vst [vmem:[#allocation2 + $0x110] sm:$0x3] %v513
      %789 = vst [vmem:[#allocation2 + $0x118] sm:$0x3] %v515
      %790 = vst [vmem:[#allocation2 + $0x120] sm:$0x3] %v523
      %791 = vst [vmem:[#allocation2 + $0x128] sm:$0x3] %v531
      %792 = vst [vmem:[#allocation2 + $0x130] sm:$0x3] %v530
      %793 = vst [vmem:[#allocation2 + $0x138] sm:$0x3] %v532
      %794 = vst [vmem:[#allocation2 + $0x140] sm:$0x3] %v540
      %795 = vst [vmem:[#allocation2 + $0x148] sm:$0x3] %v548
      %796 = vst [vmem:[#allocation2 + $0x150] sm:$0x3] %v547
      %797 = vst [vmem:[#allocation2 + $0x158] sm:$0x3] %v549
      %798 = vst [vmem:[#allocation2 + $0x160] sm:$0x3] %v557
      %799 = vst [vmem:[#allocation2 + $0x168] sm:$0x3] %v565
      %800 = vst [vmem:[#allocation2 + $0x170] sm:$0x3] %v564
      %801 = vst [vmem:[#allocation2 + $0x178] sm:$0x3] %v566
      %802 = vst [vmem:[#allocation2 + $0x180] sm:$0x3] %v574
      %803 = vst [vmem:[#allocation2 + $0x188] sm:$0x3] %v582
      %804 = vst [vmem:[#allocation2 + $0x190] sm:$0x3] %v581
      %805 = vst [vmem:[#allocation2 + $0x198] sm:$0x3] %v583
      %806 = vst [vmem:[#allocation2 + $0x1a0] sm:$0x3] %v591
      %807 = vst [vmem:[#allocation2 + $0x1a8] sm:$0x3] %v599
      %808 = vst [vmem:[#allocation2 + $0x1b0] sm:$0x3] %v598
      %809 = vst [vmem:[#allocation2 + $0x1b8] sm:$0x3] %v600
      %810 = vst [vmem:[#allocation2 + $0x1c0] sm:$0x3] %v607
      %v811 = vrot.slane %v370, 6
      %v812 = vrot.slane %v378, 6
      %v813 = vrot.slane %v377, 6
      %v814 = vrot.slane %v379, 6
      %v815 = vrot.slane %v387, 6
      %v816 = vrot.slane %v395, 6
      %v817 = vrot.slane %v394, 6
      %v818 = vrot.slane %v396, 6
      %v819 = vrot.slane %v404, 6
      %v820 = vrot.slane %v412, 6
      %v821 = vrot.slane %v411, 6
      %v822 = vrot.slane %v413, 6
      %v823 = vrot.slane %v421, 6
      %v824 = vrot.slane %v429, 6
      %v825 = vrot.slane %v428, 6
      %v826 = vrot.slane %v430, 6
      %v827 = vrot.slane %v438, 6
      %v828 = vrot.slane %v446, 6
      %v829 = vrot.slane %v445, 6
      %v830 = vrot.slane %v447, 6
      %v831 = vrot.slane %v455, 6
      %v832 = vrot.slane %v463, 6
      %v833 = vrot.slane %v462, 6
      %v834 = vrot.slane %v464, 6
      %v835 = vrot.slane %v472, 6
      %v836 = vrot.slane %v480, 6
      %v837 = vrot.slane %v479, 6
      %v838 = vrot.slane %v481, 6
      %v839 = vrot.slane %v489, 6
      %v840 = vrot.slane %v497, 6
      %v841 = vrot.slane %v496, 6
      %v842 = vrot.slane %v498, 6
      %v843 = vrot.slane %v506, 6
      %v844 = vrot.slane %v514, 6
      %v845 = vrot.slane %v513, 6
      %v846 = vrot.slane %v515, 6
      %v847 = vrot.slane %v523, 6
      %v848 = vrot.slane %v531, 6
      %v849 = vrot.slane %v530, 6
      %v850 = vrot.slane %v532, 6
      %v851 = vrot.slane %v540, 6
      %v852 = vrot.slane %v548, 6
      %v853 = vrot.slane %v547, 6
      %v854 = vrot.slane %v549, 6
      %v855 = vrot.slane %v557, 6
      %v856 = vrot.slane %v565, 6
      %v857 = vrot.slane %v564, 6
      %v858 = vrot.slane %v566, 6
      %v859 = vrot.slane %v574, 6
      %v860 = vrot.slane %v582, 6
      %v861 = vrot.slane %v581, 6
      %v862 = vrot.slane %v583, 6
      %v863 = vrot.slane %v591, 6
      %v864 = vrot.slane %v599, 6
      %v865 = vrot.slane %v598, 6
      %v866 = vrot.slane %v600, 6
      %v867 = vrot.slane %v607, 6
      %v868 = vrot.slane %v677, 6
      %869 = vrot.lane.b32.xlu0 %v811, 127
      %v870 = vpop.permute.xlu0 %869
      %871 = vrot.lane.b32.xlu0 %v812, 127
      %v872 = vpop.permute.xlu0 %871
      %873 = vrot.lane.b32.xlu0 %v813, 127
      %v874 = vpop.permute.xlu0 %873
      %875 = vrot.lane.b32.xlu0 %v814, 127
      %v876 = vpop.permute.xlu0 %875
      %877 = vrot.lane.b32.xlu0 %v815, 127
      %v878 = vpop.permute.xlu0 %877
      %879 = vrot.lane.b32.xlu0 %v816, 127
      %v880 = vpop.permute.xlu0 %879
      %881 = vrot.lane.b32.xlu0 %v817, 127
      %v882 = vpop.permute.xlu0 %881
      %883 = vrot.lane.b32.xlu0 %v818, 127
      %v884 = vpop.permute.xlu0 %883
      %885 = vrot.lane.b32.xlu0 %v819, 127
      %v886 = vpop.permute.xlu0 %885
      %887 = vrot.lane.b32.xlu0 %v820, 127
      %v888 = vpop.permute.xlu0 %887
      %889 = vrot.lane.b32.xlu0 %v821, 127
      %v890 = vpop.permute.xlu0 %889
      %891 = vrot.lane.b32.xlu0 %v822, 127
      %v892 = vpop.permute.xlu0 %891
      %893 = vrot.lane.b32.xlu0 %v823, 127
      %v894 = vpop.permute.xlu0 %893
      %895 = vrot.lane.b32.xlu0 %v824, 127
      %v896 = vpop.permute.xlu0 %895
      %897 = vrot.lane.b32.xlu0 %v825, 127
      %v898 = vpop.permute.xlu0 %897
      %899 = vrot.lane.b32.xlu0 %v826, 127
      %v900 = vpop.permute.xlu0 %899
      %901 = vrot.lane.b32.xlu0 %v827, 127
      %v902 = vpop.permute.xlu0 %901
      %903 = vrot.lane.b32.xlu0 %v828, 127
      %v904 = vpop.permute.xlu0 %903
      %905 = vrot.lane.b32.xlu0 %v829, 127
      %v906 = vpop.permute.xlu0 %905
      %907 = vrot.lane.b32.xlu0 %v830, 127
      %v908 = vpop.permute.xlu0 %907
      %909 = vrot.lane.b32.xlu0 %v831, 127
      %v910 = vpop.permute.xlu0 %909
      %911 = vrot.lane.b32.xlu0 %v832, 127
      %v912 = vpop.permute.xlu0 %911
      %913 = vrot.lane.b32.xlu0 %v833, 127
      %v914 = vpop.permute.xlu0 %913
      %915 = vrot.lane.b32.xlu0 %v834, 127
      %v916 = vpop.permute.xlu0 %915
      %917 = vrot.lane.b32.xlu0 %v835, 127
      %v918 = vpop.permute.xlu0 %917
      %919 = vrot.lane.b32.xlu0 %v836, 127
      %v920 = vpop.permute.xlu0 %919
      %921 = vrot.lane.b32.xlu0 %v837, 127
      %v922 = vpop.permute.xlu0 %921
      %923 = vrot.lane.b32.xlu0 %v838, 127
      %v924 = vpop.permute.xlu0 %923
      %925 = vrot.lane.b32.xlu0 %v839, 127
      %v926 = vpop.permute.xlu0 %925
      %927 = vrot.lane.b32.xlu0 %v840, 127
      %v928 = vpop.permute.xlu0 %927
      %929 = vrot.lane.b32.xlu0 %v841, 127
      %v930 = vpop.permute.xlu0 %929
      %931 = vrot.lane.b32.xlu0 %v842, 127
      %v932 = vpop.permute.xlu0 %931
      %933 = vrot.lane.b32.xlu0 %v843, 127
      %v934 = vpop.permute.xlu0 %933
      %935 = vrot.lane.b32.xlu0 %v844, 127
      %v936 = vpop.permute.xlu0 %935
      %937 = vrot.lane.b32.xlu0 %v845, 127
      %v938 = vpop.permute.xlu0 %937
      %939 = vrot.lane.b32.xlu0 %v846, 127
      %v940 = vpop.permute.xlu0 %939
      %941 = vrot.lane.b32.xlu0 %v847, 127
      %v942 = vpop.permute.xlu0 %941
      %943 = vrot.lane.b32.xlu0 %v848, 127
      %v944 = vpop.permute.xlu0 %943
      %945 = vrot.lane.b32.xlu0 %v849, 127
      %v946 = vpop.permute.xlu0 %945
      %947 = vrot.lane.b32.xlu0 %v850, 127
      %v948 = vpop.permute.xlu0 %947
      %949 = vrot.lane.b32.xlu0 %v851, 127
      %v950 = vpop.permute.xlu0 %949
      %951 = vrot.lane.b32.xlu0 %v852, 127
      %v952 = vpop.permute.xlu0 %951
      %953 = vrot.lane.b32.xlu0 %v853, 127
      %v954 = vpop.permute.xlu0 %953
      %955 = vrot.lane.b32.xlu0 %v854, 127
      %v956 = vpop.permute.xlu0 %955
      %957 = vrot.lane.b32.xlu0 %v855, 127
      %v958 = vpop.permute.xlu0 %957
      %959 = vrot.lane.b32.xlu0 %v856, 127
      %v960 = vpop.permute.xlu0 %959
      %961 = vrot.lane.b32.xlu0 %v857, 127
      %v962 = vpop.permute.xlu0 %961
      %963 = vrot.lane.b32.xlu0 %v858, 127
      %v964 = vpop.permute.xlu0 %963
      %965 = vrot.lane.b32.xlu0 %v859, 127
      %v966 = vpop.permute.xlu0 %965
      %967 = vrot.lane.b32.xlu0 %v860, 127
      %v968 = vpop.permute.xlu0 %967
      %969 = vrot.lane.b32.xlu0 %v861, 127
      %v970 = vpop.permute.xlu0 %969
      %971 = vrot.lane.b32.xlu0 %v862, 127
      %v972 = vpop.permute.xlu0 %971
      %973 = vrot.lane.b32.xlu0 %v863, 127
      %v974 = vpop.permute.xlu0 %973
      %975 = vrot.lane.b32.xlu0 %v864, 127
      %v976 = vpop.permute.xlu0 %975
      %977 = vrot.lane.b32.xlu0 %v865, 127
      %v978 = vpop.permute.xlu0 %977
      %979 = vrot.lane.b32.xlu0 %v866, 127
      %v980 = vpop.permute.xlu0 %979
      %981 = vrot.lane.b32.xlu0 %v867, 127
      %v982 = vpop.permute.xlu0 %981
      %983 = vrot.lane.b32.xlu0 %v868, 127
      %v984 = vpop.permute.xlu0 %983
      %vm985 = vcmask 1039360
      %v986 = vsel %vm985, %v870, %v872
      %v987 = vsel %vm985, %v872, %v874
      %v988 = vsel %vm985, %v874, %v876
      %v989 = vsel %vm985, %v876, %v878
      %v990 = vsel %vm985, %v878, %v880
      %v991 = vsel %vm985, %v880, %v882
      %v992 = vsel %vm985, %v882, %v884
      %v993 = vsel %vm985, %v884, %v886
      %v994 = vsel %vm985, %v886, %v888
      %v995 = vsel %vm985, %v888, %v890
      %v996 = vsel %vm985, %v890, %v892
      %v997 = vsel %vm985, %v892, %v894
      %v998 = vsel %vm985, %v894, %v896
      %v999 = vsel %vm985, %v896, %v898
      %v1000 = vsel %vm985, %v898, %v900
      %v1001 = vsel %vm985, %v900, %v902
      %v1002 = vsel %vm985, %v902, %v904
      %v1003 = vsel %vm985, %v904, %v906
      %v1004 = vsel %vm985, %v906, %v908
      %v1005 = vsel %vm985, %v908, %v910
      %v1006 = vsel %vm985, %v910, %v912
      %v1007 = vsel %vm985, %v912, %v914
      %v1008 = vsel %vm985, %v914, %v916
      %v1009 = vsel %vm985, %v916, %v918
      %v1010 = vsel %vm985, %v918, %v920
      %v1011 = vsel %vm985, %v920, %v922
      %v1012 = vsel %vm985, %v922, %v924
      %v1013 = vsel %vm985, %v924, %v926
      %v1014 = vsel %vm985, %v926, %v928
      %v1015 = vsel %vm985, %v928, %v930
      %v1016 = vsel %vm985, %v930, %v932
      %v1017 = vsel %vm985, %v932, %v934
      %v1018 = vsel %vm985, %v934, %v936
      %v1019 = vsel %vm985, %v936, %v938
      %v1020 = vsel %vm985, %v938, %v940
      %v1021 = vsel %vm985, %v940, %v942
      %v1022 = vsel %vm985, %v942, %v944
      %v1023 = vsel %vm985, %v944, %v946
      %v1024 = vsel %vm985, %v946, %v948
      %v1025 = vsel %vm985, %v948, %v950
      %v1026 = vsel %vm985, %v950, %v952
      %v1027 = vsel %vm985, %v952, %v954
      %v1028 = vsel %vm985, %v954, %v956
      %v1029 = vsel %vm985, %v956, %v958
      %v1030 = vsel %vm985, %v958, %v960
      %v1031 = vsel %vm985, %v960, %v962
      %v1032 = vsel %vm985, %v962, %v964
      %v1033 = vsel %vm985, %v964, %v966
      %v1034 = vsel %vm985, %v966, %v968
      %v1035 = vsel %vm985, %v968, %v970
      %v1036 = vsel %vm985, %v970, %v972
      %v1037 = vsel %vm985, %v972, %v974
      %v1038 = vsel %vm985, %v974, %v976
      %v1039 = vsel %vm985, %v976, %v978
      %v1040 = vsel %vm985, %v978, %v980
      %v1041 = vsel %vm985, %v980, %v982
      %v1042 = vsel %vm985, %v982, %v984
      %1100 = vst [vmem:[#allocation2] sm:$0xc] %v986
      %1101 = vst [vmem:[#allocation2 + $0x8] sm:$0xc] %v987
      %1102 = vst [vmem:[#allocation2 + $0x10] sm:$0xc] %v988
      %1103 = vst [vmem:[#allocation2 + $0x18] sm:$0xc] %v989
      %1104 = vst [vmem:[#allocation2 + $0x20] sm:$0xc] %v990
      %1105 = vst [vmem:[#allocation2 + $0x28] sm:$0xc] %v991
      %1106 = vst [vmem:[#allocation2 + $0x30] sm:$0xc] %v992
      %1107 = vst [vmem:[#allocation2 + $0x38] sm:$0xc] %v993
      %1108 = vst [vmem:[#allocation2 + $0x40] sm:$0xc] %v994
      %1109 = vst [vmem:[#allocation2 + $0x48] sm:$0xc] %v995
      %1110 = vst [vmem:[#allocation2 + $0x50] sm:$0xc] %v996
      %1111 = vst [vmem:[#allocation2 + $0x58] sm:$0xc] %v997
      %1112 = vst [vmem:[#allocation2 + $0x60] sm:$0xc] %v998
      %1113 = vst [vmem:[#allocation2 + $0x68] sm:$0xc] %v999
      %1114 = vst [vmem:[#allocation2 + $0x70] sm:$0xc] %v1000
      %1115 = vst [vmem:[#allocation2 + $0x78] sm:$0xc] %v1001
      %1116 = vst [vmem:[#allocation2 + $0x80] sm:$0xc] %v1002
      %1117 = vst [vmem:[#allocation2 + $0x88] sm:$0xc] %v1003
      %1118 = vst [vmem:[#allocation2 + $0x90] sm:$0xc] %v1004
      %1119 = vst [vmem:[#allocation2 + $0x98] sm:$0xc] %v1005
      %1120 = vst [vmem:[#allocation2 + $0xa0] sm:$0xc] %v1006
      %1121 = vst [vmem:[#allocation2 + $0xa8] sm:$0xc] %v1007
      %1122 = vst [vmem:[#allocation2 + $0xb0] sm:$0xc] %v1008
      %1123 = vst [vmem:[#allocation2 + $0xb8] sm:$0xc] %v1009
      %1124 = vst [vmem:[#allocation2 + $0xc0] sm:$0xc] %v1010
      %1125 = vst [vmem:[#allocation2 + $0xc8] sm:$0xc] %v1011
      %1126 = vst [vmem:[#allocation2 + $0xd0] sm:$0xc] %v1012
      %1127 = vst [vmem:[#allocation2 + $0xd8] sm:$0xc] %v1013
      %1128 = vst [vmem:[#allocation2 + $0xe0] sm:$0xc] %v1014
      %1129 = vst [vmem:[#allocation2 + $0xe8] sm:$0xc] %v1015
      %1130 = vst [vmem:[#allocation2 + $0xf0] sm:$0xc] %v1016
      %1131 = vst [vmem:[#allocation2 + $0xf8] sm:$0xc] %v1017
      %1132 = vst [vmem:[#allocation2 + $0x100] sm:$0xc] %v1018
      %1133 = vst [vmem:[#allocation2 + $0x108] sm:$0xc] %v1019
      %1134 = vst [vmem:[#allocation2 + $0x110] sm:$0xc] %v1020
      %1135 = vst [vmem:[#allocation2 + $0x118] sm:$0xc] %v1021
      %1136 = vst [vmem:[#allocation2 + $0x120] sm:$0xc] %v1022
      %1137 = vst [vmem:[#allocation2 + $0x128] sm:$0xc] %v1023
      %1138 = vst [vmem:[#allocation2 + $0x130] sm:$0xc] %v1024
      %1139 = vst [vmem:[#allocation2 + $0x138] sm:$0xc] %v1025
      %1140 = vst [vmem:[#allocation2 + $0x140] sm:$0xc] %v1026
      %1141 = vst [vmem:[#allocation2 + $0x148] sm:$0xc] %v1027
      %1142 = vst [vmem:[#allocation2 + $0x150] sm:$0xc] %v1028
      %1143 = vst [vmem:[#allocation2 + $0x158] sm:$0xc] %v1029
      %1144 = vst [vmem:[#allocation2 + $0x160] sm:$0xc] %v1030
      %1145 = vst [vmem:[#allocation2 + $0x168] sm:$0xc] %v1031
      %1146 = vst [vmem:[#allocation2 + $0x170] sm:$0xc] %v1032
      %1147 = vst [vmem:[#allocation2 + $0x178] sm:$0xc] %v1033
      %1148 = vst [vmem:[#allocation2 + $0x180] sm:$0xc] %v1034
      %1149 = vst [vmem:[#allocation2 + $0x188] sm:$0xc] %v1035
      %1150 = vst [vmem:[#allocation2 + $0x190] sm:$0xc] %v1036
      %1151 = vst [vmem:[#allocation2 + $0x198] sm:$0xc] %v1037
      %1152 = vst [vmem:[#allocation2 + $0x1a0] sm:$0xc] %v1038
      %1153 = vst [vmem:[#allocation2 + $0x1a8] sm:$0xc] %v1039
      %1154 = vst [vmem:[#allocation2 + $0x1b0] sm:$0xc] %v1040
      %1155 = vst [vmem:[#allocation2 + $0x1b8] sm:$0xc] %v1041
      %1156 = vst [vmem:[#allocation2 + $0x1c0] sm:$0xc] %v1042
      %v1157 = vrot.slane %v370, 4
      %v1158 = vrot.slane %v378, 4
      %v1159 = vrot.slane %v377, 4
      %v1160 = vrot.slane %v379, 4
      %v1161 = vrot.slane %v387, 4
      %v1162 = vrot.slane %v395, 4
      %v1163 = vrot.slane %v394, 4
      %v1164 = vrot.slane %v396, 4
      %v1165 = vrot.slane %v404, 4
      %v1166 = vrot.slane %v412, 4
      %v1167 = vrot.slane %v411, 4
      %v1168 = vrot.slane %v413, 4
      %v1169 = vrot.slane %v421, 4
      %v1170 = vrot.slane %v429, 4
      %v1171 = vrot.slane %v428, 4
      %v1172 = vrot.slane %v430, 4
      %v1173 = vrot.slane %v438, 4
      %v1174 = vrot.slane %v446, 4
      %v1175 = vrot.slane %v445, 4
      %v1176 = vrot.slane %v447, 4
      %v1177 = vrot.slane %v455, 4
      %v1178 = vrot.slane %v463, 4
      %v1179 = vrot.slane %v462, 4
      %v1180 = vrot.slane %v464, 4
      %v1181 = vrot.slane %v472, 4
      %v1182 = vrot.slane %v480, 4
      %v1183 = vrot.slane %v479, 4
      %v1184 = vrot.slane %v481, 4
      %v1185 = vrot.slane %v489, 4
      %v1186 = vrot.slane %v497, 4
      %v1187 = vrot.slane %v496, 4
      %v1188 = vrot.slane %v498, 4
      %v1189 = vrot.slane %v506, 4
      %v1190 = vrot.slane %v514, 4
      %v1191 = vrot.slane %v513, 4
      %v1192 = vrot.slane %v515, 4
      %v1193 = vrot.slane %v523, 4
      %v1194 = vrot.slane %v531, 4
      %v1195 = vrot.slane %v530, 4
      %v1196 = vrot.slane %v532, 4
      %v1197 = vrot.slane %v540, 4
      %v1198 = vrot.slane %v548, 4
      %v1199 = vrot.slane %v547, 4
      %v1200 = vrot.slane %v549, 4
      %v1201 = vrot.slane %v557, 4
      %v1202 = vrot.slane %v565, 4
      %v1203 = vrot.slane %v564, 4
      %v1204 = vrot.slane %v566, 4
      %v1205 = vrot.slane %v574, 4
      %v1206 = vrot.slane %v582, 4
      %v1207 = vrot.slane %v581, 4
      %v1208 = vrot.slane %v583, 4
      %v1209 = vrot.slane %v591, 4
      %v1210 = vrot.slane %v599, 4
      %v1211 = vrot.slane %v598, 4
      %v1212 = vrot.slane %v600, 4
      %v1213 = vrot.slane %v607, 4
      %v1214 = vrot.slane %v677, 4
      %1215 = vrot.lane.b32.xlu0 %v1157, 126
      %v1216 = vpop.permute.xlu0 %1215
      %1217 = vrot.lane.b32.xlu0 %v1158, 126
      %v1218 = vpop.permute.xlu0 %1217
      %1219 = vrot.lane.b32.xlu0 %v1159, 126
      %v1220 = vpop.permute.xlu0 %1219
      %1221 = vrot.lane.b32.xlu0 %v1160, 126
      %v1222 = vpop.permute.xlu0 %1221
      %1223 = vrot.lane.b32.xlu0 %v1161, 126
      %v1224 = vpop.permute.xlu0 %1223
      %1225 = vrot.lane.b32.xlu0 %v1162, 126
      %v1226 = vpop.permute.xlu0 %1225
      %1227 = vrot.lane.b32.xlu0 %v1163, 126
      %v1228 = vpop.permute.xlu0 %1227
      %1229 = vrot.lane.b32.xlu0 %v1164, 126
      %v1230 = vpop.permute.xlu0 %1229
      %1231 = vrot.lane.b32.xlu0 %v1165, 126
      %v1232 = vpop.permute.xlu0 %1231
      %1233 = vrot.lane.b32.xlu0 %v1166, 126
      %v1234 = vpop.permute.xlu0 %1233
      %1235 = vrot.lane.b32.xlu0 %v1167, 126
      %v1236 = vpop.permute.xlu0 %1235
      %1237 = vrot.lane.b32.xlu0 %v1168, 126
      %v1238 = vpop.permute.xlu0 %1237
      %1239 = vrot.lane.b32.xlu0 %v1169, 126
      %v1240 = vpop.permute.xlu0 %1239
      %1241 = vrot.lane.b32.xlu0 %v1170, 126
      %v1242 = vpop.permute.xlu0 %1241
      %1243 = vrot.lane.b32.xlu0 %v1171, 126
      %v1244 = vpop.permute.xlu0 %1243
      %1245 = vrot.lane.b32.xlu0 %v1172, 126
      %v1246 = vpop.permute.xlu0 %1245
      %1247 = vrot.lane.b32.xlu0 %v1173, 126
      %v1248 = vpop.permute.xlu0 %1247
      %1249 = vrot.lane.b32.xlu0 %v1174, 126
      %v1250 = vpop.permute.xlu0 %1249
      %1251 = vrot.lane.b32.xlu0 %v1175, 126
      %v1252 = vpop.permute.xlu0 %1251
      %1253 = vrot.lane.b32.xlu0 %v1176, 126
      %v1254 = vpop.permute.xlu0 %1253
      %1255 = vrot.lane.b32.xlu0 %v1177, 126
      %v1256 = vpop.permute.xlu0 %1255
      %1257 = vrot.lane.b32.xlu0 %v1178, 126
      %v1258 = vpop.permute.xlu0 %1257
      %1259 = vrot.lane.b32.xlu0 %v1179, 126
      %v1260 = vpop.permute.xlu0 %1259
      %1261 = vrot.lane.b32.xlu0 %v1180, 126
      %v1262 = vpop.permute.xlu0 %1261
      %1263 = vrot.lane.b32.xlu0 %v1181, 126
      %v1264 = vpop.permute.xlu0 %1263
      %1265 = vrot.lane.b32.xlu0 %v1182, 126
      %v1266 = vpop.permute.xlu0 %1265
      %1267 = vrot.lane.b32.xlu0 %v1183, 126
      %v1268 = vpop.permute.xlu0 %1267
      %1269 = vrot.lane.b32.xlu0 %v1184, 126
      %v1270 = vpop.permute.xlu0 %1269
      %1271 = vrot.lane.b32.xlu0 %v1185, 126
      %v1272 = vpop.permute.xlu0 %1271
      %1273 = vrot.lane.b32.xlu0 %v1186, 126
      %v1274 = vpop.permute.xlu0 %1273
      %1275 = vrot.lane.b32.xlu0 %v1187, 126
      %v1276 = vpop.permute.xlu0 %1275
      %1277 = vrot.lane.b32.xlu0 %v1188, 126
      %v1278 = vpop.permute.xlu0 %1277
      %1279 = vrot.lane.b32.xlu0 %v1189, 126
      %v1280 = vpop.permute.xlu0 %1279
      %1281 = vrot.lane.b32.xlu0 %v1190, 126
      %v1282 = vpop.permute.xlu0 %1281
      %1283 = vrot.lane.b32.xlu0 %v1191, 126
      %v1284 = vpop.permute.xlu0 %1283
      %1285 = vrot.lane.b32.xlu0 %v1192, 126
      %v1286 = vpop.permute.xlu0 %1285
      %1287 = vrot.lane.b32.xlu0 %v1193, 126
      %v1288 = vpop.permute.xlu0 %1287
      %1289 = vrot.lane.b32.xlu0 %v1194, 126
      %v1290 = vpop.permute.xlu0 %1289
      %1291 = vrot.lane.b32.xlu0 %v1195, 126
      %v1292 = vpop.permute.xlu0 %1291
      %1293 = vrot.lane.b32.xlu0 %v1196, 126
      %v1294 = vpop.permute.xlu0 %1293
      %1295 = vrot.lane.b32.xlu0 %v1197, 126
      %v1296 = vpop.permute.xlu0 %1295
      %1297 = vrot.lane.b32.xlu0 %v1198, 126
      %v1298 = vpop.permute.xlu0 %1297
      %1299 = vrot.lane.b32.xlu0 %v1199, 126
      %v1300 = vpop.permute.xlu0 %1299
      %1301 = vrot.lane.b32.xlu0 %v1200, 126
      %v1302 = vpop.permute.xlu0 %1301
      %1303 = vrot.lane.b32.xlu0 %v1201, 126
      %v1304 = vpop.permute.xlu0 %1303
      %1305 = vrot.lane.b32.xlu0 %v1202, 126
      %v1306 = vpop.permute.xlu0 %1305
      %1307 = vrot.lane.b32.xlu0 %v1203, 126
      %v1308 = vpop.permute.xlu0 %1307
      %1309 = vrot.lane.b32.xlu0 %v1204, 126
      %v1310 = vpop.permute.xlu0 %1309
      %1311 = vrot.lane.b32.xlu0 %v1205, 126
      %v1312 = vpop.permute.xlu0 %1311
      %1313 = vrot.lane.b32.xlu0 %v1206, 126
      %v1314 = vpop.permute.xlu0 %1313
      %1315 = vrot.lane.b32.xlu0 %v1207, 126
      %v1316 = vpop.permute.xlu0 %1315
      %1317 = vrot.lane.b32.xlu0 %v1208, 126
      %v1318 = vpop.permute.xlu0 %1317
      %1319 = vrot.lane.b32.xlu0 %v1209, 126
      %v1320 = vpop.permute.xlu0 %1319
      %1321 = vrot.lane.b32.xlu0 %v1210, 126
      %v1322 = vpop.permute.xlu0 %1321
      %1323 = vrot.lane.b32.xlu0 %v1211, 126
      %v1324 = vpop.permute.xlu0 %1323
      %1325 = vrot.lane.b32.xlu0 %v1212, 126
      %v1326 = vpop.permute.xlu0 %1325
      %1327 = vrot.lane.b32.xlu0 %v1213, 126
      %v1328 = vpop.permute.xlu0 %1327
      %1329 = vrot.lane.b32.xlu0 %v1214, 126
      %v1330 = vpop.permute.xlu0 %1329
      %vm1331 = vcmask 1031168
      %v1332 = vsel %vm1331, %v1216, %v1218
      %v1333 = vsel %vm1331, %v1218, %v1220
      %v1334 = vsel %vm1331, %v1220, %v1222
      %v1335 = vsel %vm1331, %v1222, %v1224
      %v1336 = vsel %vm1331, %v1224, %v1226
      %v1337 = vsel %vm1331, %v1226, %v1228
      %v1338 = vsel %vm1331, %v1228, %v1230
      %v1339 = vsel %vm1331, %v1230, %v1232
      %v1340 = vsel %vm1331, %v1232, %v1234
      %v1341 = vsel %vm1331, %v1234, %v1236
      %v1342 = vsel %vm1331, %v1236, %v1238
      %v1343 = vsel %vm1331, %v1238, %v1240
      %v1344 = vsel %vm1331, %v1240, %v1242
      %v1345 = vsel %vm1331, %v1242, %v1244
      %v1346 = vsel %vm1331, %v1244, %v1246
      %v1347 = vsel %vm1331, %v1246, %v1248
      %v1348 = vsel %vm1331, %v1248, %v1250
      %v1349 = vsel %vm1331, %v1250, %v1252
      %v1350 = vsel %vm1331, %v1252, %v1254
      %v1351 = vsel %vm1331, %v1254, %v1256
      %v1352 = vsel %vm1331, %v1256, %v1258
      %v1353 = vsel %vm1331, %v1258, %v1260
      %v1354 = vsel %vm1331, %v1260, %v1262
      %v1355 = vsel %vm1331, %v1262, %v1264
      %v1356 = vsel %vm1331, %v1264, %v1266
      %v1357 = vsel %vm1331, %v1266, %v1268
      %v1358 = vsel %vm1331, %v1268, %v1270
      %v1359 = vsel %vm1331, %v1270, %v1272
      %v1360 = vsel %vm1331, %v1272, %v1274
      %v1361 = vsel %vm1331, %v1274, %v1276
      %v1362 = vsel %vm1331, %v1276, %v1278
      %v1363 = vsel %vm1331, %v1278, %v1280
      %v1364 = vsel %vm1331, %v1280, %v1282
      %v1365 = vsel %vm1331, %v1282, %v1284
      %v1366 = vsel %vm1331, %v1284, %v1286
      %v1367 = vsel %vm1331, %v1286, %v1288
      %v1368 = vsel %vm1331, %v1288, %v1290
      %v1369 = vsel %vm1331, %v1290, %v1292
      %v1370 = vsel %vm1331, %v1292, %v1294
      %v1371 = vsel %vm1331, %v1294, %v1296
      %v1372 = vsel %vm1331, %v1296, %v1298
      %v1373 = vsel %vm1331, %v1298, %v1300
      %v1374 = vsel %vm1331, %v1300, %v1302
      %v1375 = vsel %vm1331, %v1302, %v1304
      %v1376 = vsel %vm1331, %v1304, %v1306
      %v1377 = vsel %vm1331, %v1306, %v1308
      %v1378 = vsel %vm1331, %v1308, %v1310
      %v1379 = vsel %vm1331, %v1310, %v1312
      %v1380 = vsel %vm1331, %v1312, %v1314
      %v1381 = vsel %vm1331, %v1314, %v1316
      %v1382 = vsel %vm1331, %v1316, %v1318
      %v1383 = vsel %vm1331, %v1318, %v1320
      %v1384 = vsel %vm1331, %v1320, %v1322
      %v1385 = vsel %vm1331, %v1322, %v1324
      %v1386 = vsel %vm1331, %v1324, %v1326
      %v1387 = vsel %vm1331, %v1326, %v1328
      %v1388 = vsel %vm1331, %v1328, %v1330
      %1446 = vst [vmem:[#allocation2] sm:$0x30] %v1332
      %1447 = vst [vmem:[#allocation2 + $0x8] sm:$0x30] %v1333
      %1448 = vst [vmem:[#allocation2 + $0x10] sm:$0x30] %v1334
      %1449 = vst [vmem:[#allocation2 + $0x18] sm:$0x30] %v1335
      %1450 = vst [vmem:[#allocation2 + $0x20] sm:$0x30] %v1336
      %1451 = vst [vmem:[#allocation2 + $0x28] sm:$0x30] %v1337
      %1452 = vst [vmem:[#allocation2 + $0x30] sm:$0x30] %v1338
      %1453 = vst [vmem:[#allocation2 + $0x38] sm:$0x30] %v1339
      %1454 = vst [vmem:[#allocation2 + $0x40] sm:$0x30] %v1340
      %1455 = vst [vmem:[#allocation2 + $0x48] sm:$0x30] %v1341
      %1456 = vst [vmem:[#allocation2 + $0x50] sm:$0x30] %v1342
      %1457 = vst [vmem:[#allocation2 + $0x58] sm:$0x30] %v1343
      %1458 = vst [vmem:[#allocation2 + $0x60] sm:$0x30] %v1344
      %1459 = vst [vmem:[#allocation2 + $0x68] sm:$0x30] %v1345
      %1460 = vst [vmem:[#allocation2 + $0x70] sm:$0x30] %v1346
      %1461 = vst [vmem:[#allocation2 + $0x78] sm:$0x30] %v1347
      %1462 = vst [vmem:[#allocation2 + $0x80] sm:$0x30] %v1348
      %1463 = vst [vmem:[#allocation2 + $0x88] sm:$0x30] %v1349
      %1464 = vst [vmem:[#allocation2 + $0x90] sm:$0x30] %v1350
      %1465 = vst [vmem:[#allocation2 + $0x98] sm:$0x30] %v1351
      %1466 = vst [vmem:[#allocation2 + $0xa0] sm:$0x30] %v1352
      %1467 = vst [vmem:[#allocation2 + $0xa8] sm:$0x30] %v1353
      %1468 = vst [vmem:[#allocation2 + $0xb0] sm:$0x30] %v1354
      %1469 = vst [vmem:[#allocation2 + $0xb8] sm:$0x30] %v1355
      %1470 = vst [vmem:[#allocation2 + $0xc0] sm:$0x30] %v1356
      %1471 = vst [vmem:[#allocation2 + $0xc8] sm:$0x30] %v1357
      %1472 = vst [vmem:[#allocation2 + $0xd0] sm:$0x30] %v1358
      %1473 = vst [vmem:[#allocation2 + $0xd8] sm:$0x30] %v1359
      %1474 = vst [vmem:[#allocation2 + $0xe0] sm:$0x30] %v1360
      %1475 = vst [vmem:[#allocation2 + $0xe8] sm:$0x30] %v1361
      %1476 = vst [vmem:[#allocation2 + $0xf0] sm:$0x30] %v1362
      %1477 = vst [vmem:[#allocation2 + $0xf8] sm:$0x30] %v1363
      %1478 = vst [vmem:[#allocation2 + $0x100] sm:$0x30] %v1364
      %1479 = vst [vmem:[#allocation2 + $0x108] sm:$0x30] %v1365
      %1480 = vst [vmem:[#allocation2 + $0x110] sm:$0x30] %v1366
      %1481 = vst [vmem:[#allocation2 + $0x118] sm:$0x30] %v1367
      %1482 = vst [vmem:[#allocation2 + $0x120] sm:$0x30] %v1368
      %1483 = vst [vmem:[#allocation2 + $0x128] sm:$0x30] %v1369
      %1484 = vst [vmem:[#allocation2 + $0x130] sm:$0x30] %v1370
      %1485 = vst [vmem:[#allocation2 + $0x138] sm:$0x30] %v1371
      %1486 = vst [vmem:[#allocation2 + $0x140] sm:$0x30] %v1372
      %1487 = vst [vmem:[#allocation2 + $0x148] sm:$0x30] %v1373
      %1488 = vst [vmem:[#allocation2 + $0x150] sm:$0x30] %v1374
      %1489 = vst [vmem:[#allocation2 + $0x158] sm:$0x30] %v1375
      %1490 = vst [vmem:[#allocation2 + $0x160] sm:$0x30] %v1376
      %1491 = vst [vmem:[#allocation2 + $0x168] sm:$0x30] %v1377
      %1492 = vst [vmem:[#allocation2 + $0x170] sm:$0x30] %v1378
      %1493 = vst [vmem:[#allocation2 + $0x178] sm:$0x30] %v1379
      %1494 = vst [vmem:[#allocation2 + $0x180] sm:$0x30] %v1380
      %1495 = vst [vmem:[#allocation2 + $0x188] sm:$0x30] %v1381
      %1496 = vst [vmem:[#allocation2 + $0x190] sm:$0x30] %v1382
      %1497 = vst [vmem:[#allocation2 + $0x198] sm:$0x30] %v1383
      %1498 = vst [vmem:[#allocation2 + $0x1a0] sm:$0x30] %v1384
      %1499 = vst [vmem:[#allocation2 + $0x1a8] sm:$0x30] %v1385
      %1500 = vst [vmem:[#allocation2 + $0x1b0] sm:$0x30] %v1386
      %1501 = vst [vmem:[#allocation2 + $0x1b8] sm:$0x30] %v1387
      %1502 = vst [vmem:[#allocation2 + $0x1c0] sm:$0x30] %v1388
      %v1503 = vrot.slane %v370, 2
      %v1504 = vrot.slane %v378, 2
      %v1505 = vrot.slane %v377, 2
      %v1506 = vrot.slane %v379, 2
      %v1507 = vrot.slane %v387, 2
      %v1508 = vrot.slane %v395, 2
      %v1509 = vrot.slane %v394, 2
      %v1510 = vrot.slane %v396, 2
      %v1511 = vrot.slane %v404, 2
      %v1512 = vrot.slane %v412, 2
      %v1513 = vrot.slane %v411, 2
      %v1514 = vrot.slane %v413, 2
      %v1515 = vrot.slane %v421, 2
      %v1516 = vrot.slane %v429, 2
      %v1517 = vrot.slane %v428, 2
      %v1518 = vrot.slane %v430, 2
      %v1519 = vrot.slane %v438, 2
      %v1520 = vrot.slane %v446, 2
      %v1521 = vrot.slane %v445, 2
      %v1522 = vrot.slane %v447, 2
      %v1523 = vrot.slane %v455, 2
      %v1524 = vrot.slane %v463, 2
      %v1525 = vrot.slane %v462, 2
      %v1526 = vrot.slane %v464, 2
      %v1527 = vrot.slane %v472, 2
      %v1528 = vrot.slane %v480, 2
      %v1529 = vrot.slane %v479, 2
      %v1530 = vrot.slane %v481, 2
      %v1531 = vrot.slane %v489, 2
      %v1532 = vrot.slane %v497, 2
      %v1533 = vrot.slane %v496, 2
      %v1534 = vrot.slane %v498, 2
      %v1535 = vrot.slane %v506, 2
      %v1536 = vrot.slane %v514, 2
      %v1537 = vrot.slane %v513, 2
      %v1538 = vrot.slane %v515, 2
      %v1539 = vrot.slane %v523, 2
      %v1540 = vrot.slane %v531, 2
      %v1541 = vrot.slane %v530, 2
      %v1542 = vrot.slane %v532, 2
      %v1543 = vrot.slane %v540, 2
      %v1544 = vrot.slane %v548, 2
      %v1545 = vrot.slane %v547, 2
      %v1546 = vrot.slane %v549, 2
      %v1547 = vrot.slane %v557, 2
      %v1548 = vrot.slane %v565, 2
      %v1549 = vrot.slane %v564, 2
      %v1550 = vrot.slane %v566, 2
      %v1551 = vrot.slane %v574, 2
      %v1552 = vrot.slane %v582, 2
      %v1553 = vrot.slane %v581, 2
      %v1554 = vrot.slane %v583, 2
      %v1555 = vrot.slane %v591, 2
      %v1556 = vrot.slane %v599, 2
      %v1557 = vrot.slane %v598, 2
      %v1558 = vrot.slane %v600, 2
      %v1559 = vrot.slane %v607, 2
      %v1560 = vrot.slane %v677, 2
      %1561 = vrot.lane.b32.xlu0 %v1503, 94
      %v1562 = vpop.permute.xlu0 %1561
      %1563 = vrot.lane.b32.xlu0 %v1504, 94
      %v1564 = vpop.permute.xlu0 %1563
      %1565 = vrot.lane.b32.xlu0 %v1505, 94
      %v1566 = vpop.permute.xlu0 %1565
      %1567 = vrot.lane.b32.xlu0 %v1506, 94
      %v1568 = vpop.permute.xlu0 %1567
      %1569 = vrot.lane.b32.xlu0 %v1507, 94
      %v1570 = vpop.permute.xlu0 %1569
      %1571 = vrot.lane.b32.xlu0 %v1508, 94
      %v1572 = vpop.permute.xlu0 %1571
      %1573 = vrot.lane.b32.xlu0 %v1509, 94
      %v1574 = vpop.permute.xlu0 %1573
      %1575 = vrot.lane.b32.xlu0 %v1510, 94
      %v1576 = vpop.permute.xlu0 %1575
      %1577 = vrot.lane.b32.xlu0 %v1511, 94
      %v1578 = vpop.permute.xlu0 %1577
      %1579 = vrot.lane.b32.xlu0 %v1512, 94
      %v1580 = vpop.permute.xlu0 %1579
      %1581 = vrot.lane.b32.xlu0 %v1513, 94
      %v1582 = vpop.permute.xlu0 %1581
      %1583 = vrot.lane.b32.xlu0 %v1514, 94
      %v1584 = vpop.permute.xlu0 %1583
      %1585 = vrot.lane.b32.xlu0 %v1515, 94
      %v1586 = vpop.permute.xlu0 %1585
      %1587 = vrot.lane.b32.xlu0 %v1516, 94
      %v1588 = vpop.permute.xlu0 %1587
      %1589 = vrot.lane.b32.xlu0 %v1517, 94
      %v1590 = vpop.permute.xlu0 %1589
      %1591 = vrot.lane.b32.xlu0 %v1518, 94
      %v1592 = vpop.permute.xlu0 %1591
      %1593 = vrot.lane.b32.xlu0 %v1519, 94
      %v1594 = vpop.permute.xlu0 %1593
      %1595 = vrot.lane.b32.xlu0 %v1520, 94
      %v1596 = vpop.permute.xlu0 %1595
      %1597 = vrot.lane.b32.xlu0 %v1521, 94
      %v1598 = vpop.permute.xlu0 %1597
      %1599 = vrot.lane.b32.xlu0 %v1522, 94
      %v1600 = vpop.permute.xlu0 %1599
      %1601 = vrot.lane.b32.xlu0 %v1523, 94
      %v1602 = vpop.permute.xlu0 %1601
      %1603 = vrot.lane.b32.xlu0 %v1524, 94
      %v1604 = vpop.permute.xlu0 %1603
      %1605 = vrot.lane.b32.xlu0 %v1525, 94
      %v1606 = vpop.permute.xlu0 %1605
      %1607 = vrot.lane.b32.xlu0 %v1526, 94
      %v1608 = vpop.permute.xlu0 %1607
      %1609 = vrot.lane.b32.xlu0 %v1527, 94
      %v1610 = vpop.permute.xlu0 %1609
      %1611 = vrot.lane.b32.xlu0 %v1528, 94
      %v1612 = vpop.permute.xlu0 %1611
      %1613 = vrot.lane.b32.xlu0 %v1529, 94
      %v1614 = vpop.permute.xlu0 %1613
      %1615 = vrot.lane.b32.xlu0 %v1530, 94
      %v1616 = vpop.permute.xlu0 %1615
      %1617 = vrot.lane.b32.xlu0 %v1531, 94
      %v1618 = vpop.permute.xlu0 %1617
      %1619 = vrot.lane.b32.xlu0 %v1532, 94
      %v1620 = vpop.permute.xlu0 %1619
      %1621 = vrot.lane.b32.xlu0 %v1533, 94
      %v1622 = vpop.permute.xlu0 %1621
      %1623 = vrot.lane.b32.xlu0 %v1534, 94
      %v1624 = vpop.permute.xlu0 %1623
      %1625 = vrot.lane.b32.xlu0 %v1535, 94
      %v1626 = vpop.permute.xlu0 %1625
      %1627 = vrot.lane.b32.xlu0 %v1536, 94
      %v1628 = vpop.permute.xlu0 %1627
      %1629 = vrot.lane.b32.xlu0 %v1537, 94
      %v1630 = vpop.permute.xlu0 %1629
      %1631 = vrot.lane.b32.xlu0 %v1538, 94
      %v1632 = vpop.permute.xlu0 %1631
      %1633 = vrot.lane.b32.xlu0 %v1539, 94
      %v1634 = vpop.permute.xlu0 %1633
      %1635 = vrot.lane.b32.xlu0 %v1540, 94
      %v1636 = vpop.permute.xlu0 %1635
      %1637 = vrot.lane.b32.xlu0 %v1541, 94
      %v1638 = vpop.permute.xlu0 %1637
      %1639 = vrot.lane.b32.xlu0 %v1542, 94
      %v1640 = vpop.permute.xlu0 %1639
      %1641 = vrot.lane.b32.xlu0 %v1543, 94
      %v1642 = vpop.permute.xlu0 %1641
      %1643 = vrot.lane.b32.xlu0 %v1544, 94
      %v1644 = vpop.permute.xlu0 %1643
      %1645 = vrot.lane.b32.xlu0 %v1545, 94
      %v1646 = vpop.permute.xlu0 %1645
      %1647 = vrot.lane.b32.xlu0 %v1546, 94
      %v1648 = vpop.permute.xlu0 %1647
      %1649 = vrot.lane.b32.xlu0 %v1547, 94
      %v1650 = vpop.permute.xlu0 %1649
      %1651 = vrot.lane.b32.xlu0 %v1548, 94
      %v1652 = vpop.permute.xlu0 %1651
      %1653 = vrot.lane.b32.xlu0 %v1549, 94
      %v1654 = vpop.permute.xlu0 %1653
      %1655 = vrot.lane.b32.xlu0 %v1550, 94
      %v1656 = vpop.permute.xlu0 %1655
      %1657 = vrot.lane.b32.xlu0 %v1551, 94
      %v1658 = vpop.permute.xlu0 %1657
      %1659 = vrot.lane.b32.xlu0 %v1552, 94
      %v1660 = vpop.permute.xlu0 %1659
      %1661 = vrot.lane.b32.xlu0 %v1553, 94
      %v1662 = vpop.permute.xlu0 %1661
      %1663 = vrot.lane.b32.xlu0 %v1554, 94
      %v1664 = vpop.permute.xlu0 %1663
      %1665 = vrot.lane.b32.xlu0 %v1555, 94
      %v1666 = vpop.permute.xlu0 %1665
      %1667 = vrot.lane.b32.xlu0 %v1556, 94
      %v1668 = vpop.permute.xlu0 %1667
      %1669 = vrot.lane.b32.xlu0 %v1557, 94
      %v1670 = vpop.permute.xlu0 %1669
      %1671 = vrot.lane.b32.xlu0 %v1558, 94
      %v1672 = vpop.permute.xlu0 %1671
      %1673 = vrot.lane.b32.xlu0 %v1559, 94
      %v1674 = vpop.permute.xlu0 %1673
      %1675 = vrot.lane.b32.xlu0 %v1560, 94
      %v1676 = vpop.permute.xlu0 %1675
      %vm1677 = vcmask 769024
      %v1678 = vsel %vm1677, %v1562, %v1564
      %v1679 = vsel %vm1677, %v1564, %v1566
      %v1680 = vsel %vm1677, %v1566, %v1568
      %v1681 = vsel %vm1677, %v1568, %v1570
      %v1682 = vsel %vm1677, %v1570, %v1572
      %v1683 = vsel %vm1677, %v1572, %v1574
      %v1684 = vsel %vm1677, %v1574, %v1576
      %v1685 = vsel %vm1677, %v1576, %v1578
      %v1686 = vsel %vm1677, %v1578, %v1580
      %v1687 = vsel %vm1677, %v1580, %v1582
      %v1688 = vsel %vm1677, %v1582, %v1584
      %v1689 = vsel %vm1677, %v1584, %v1586
      %v1690 = vsel %vm1677, %v1586, %v1588
      %v1691 = vsel %vm1677, %v1588, %v1590
      %v1692 = vsel %vm1677, %v1590, %v1592
      %v1693 = vsel %vm1677, %v1592, %v1594
      %v1694 = vsel %vm1677, %v1594, %v1596
      %v1695 = vsel %vm1677, %v1596, %v1598
      %v1696 = vsel %vm1677, %v1598, %v1600
      %v1697 = vsel %vm1677, %v1600, %v1602
      %v1698 = vsel %vm1677, %v1602, %v1604
      %v1699 = vsel %vm1677, %v1604, %v1606
      %v1700 = vsel %vm1677, %v1606, %v1608
      %v1701 = vsel %vm1677, %v1608, %v1610
      %v1702 = vsel %vm1677, %v1610, %v1612
      %v1703 = vsel %vm1677, %v1612, %v1614
      %v1704 = vsel %vm1677, %v1614, %v1616
      %v1705 = vsel %vm1677, %v1616, %v1618
      %v1706 = vsel %vm1677, %v1618, %v1620
      %v1707 = vsel %vm1677, %v1620, %v1622
      %v1708 = vsel %vm1677, %v1622, %v1624
      %v1709 = vsel %vm1677, %v1624, %v1626
      %v1710 = vsel %vm1677, %v1626, %v1628
      %v1711 = vsel %vm1677, %v1628, %v1630
      %v1712 = vsel %vm1677, %v1630, %v1632
      %v1713 = vsel %vm1677, %v1632, %v1634
      %v1714 = vsel %vm1677, %v1634, %v1636
      %v1715 = vsel %vm1677, %v1636, %v1638
      %v1716 = vsel %vm1677, %v1638, %v1640
      %v1717 = vsel %vm1677, %v1640, %v1642
      %v1718 = vsel %vm1677, %v1642, %v1644
      %v1719 = vsel %vm1677, %v1644, %v1646
      %v1720 = vsel %vm1677, %v1646, %v1648
      %v1721 = vsel %vm1677, %v1648, %v1650
      %v1722 = vsel %vm1677, %v1650, %v1652
      %v1723 = vsel %vm1677, %v1652, %v1654
      %v1724 = vsel %vm1677, %v1654, %v1656
      %v1725 = vsel %vm1677, %v1656, %v1658
      %v1726 = vsel %vm1677, %v1658, %v1660
      %v1727 = vsel %vm1677, %v1660, %v1662
      %v1728 = vsel %vm1677, %v1662, %v1664
      %v1729 = vsel %vm1677, %v1664, %v1666
      %v1730 = vsel %vm1677, %v1666, %v1668
      %v1731 = vsel %vm1677, %v1668, %v1670
      %v1732 = vsel %vm1677, %v1670, %v1672
      %v1733 = vsel %vm1677, %v1672, %v1674
      %v1734 = vsel %vm1677, %v1674, %v1676
      %1792 = vst [vmem:[#allocation2] sm:$0xc0] %v1678
      %1793 = vst [vmem:[#allocation2 + $0x8] sm:$0xc0] %v1679
      %1794 = vst [vmem:[#allocation2 + $0x10] sm:$0xc0] %v1680
      %1795 = vst [vmem:[#allocation2 + $0x18] sm:$0xc0] %v1681
      %1796 = vst [vmem:[#allocation2 + $0x20] sm:$0xc0] %v1682
      %1797 = vst [vmem:[#allocation2 + $0x28] sm:$0xc0] %v1683
      %1798 = vst [vmem:[#allocation2 + $0x30] sm:$0xc0] %v1684
      %1799 = vst [vmem:[#allocation2 + $0x38] sm:$0xc0] %v1685
      %1800 = vst [vmem:[#allocation2 + $0x40] sm:$0xc0] %v1686
      %1801 = vst [vmem:[#allocation2 + $0x48] sm:$0xc0] %v1687
      %1802 = vst [vmem:[#allocation2 + $0x50] sm:$0xc0] %v1688
      %1803 = vst [vmem:[#allocation2 + $0x58] sm:$0xc0] %v1689
      %1804 = vst [vmem:[#allocation2 + $0x60] sm:$0xc0] %v1690
      %1805 = vst [vmem:[#allocation2 + $0x68] sm:$0xc0] %v1691
      %1806 = vst [vmem:[#allocation2 + $0x70] sm:$0xc0] %v1692
      %1807 = vst [vmem:[#allocation2 + $0x78] sm:$0xc0] %v1693
      %1808 = vst [vmem:[#allocation2 + $0x80] sm:$0xc0] %v1694
      %1809 = vst [vmem:[#allocation2 + $0x88] sm:$0xc0] %v1695
      %1810 = vst [vmem:[#allocation2 + $0x90] sm:$0xc0] %v1696
      %1811 = vst [vmem:[#allocation2 + $0x98] sm:$0xc0] %v1697
      %1812 = vst [vmem:[#allocation2 + $0xa0] sm:$0xc0] %v1698
      %1813 = vst [vmem:[#allocation2 + $0xa8] sm:$0xc0] %v1699
      %1814 = vst [vmem:[#allocation2 + $0xb0] sm:$0xc0] %v1700
      %1815 = vst [vmem:[#allocation2 + $0xb8] sm:$0xc0] %v1701
      %1816 = vst [vmem:[#allocation2 + $0xc0] sm:$0xc0] %v1702
      %1817 = vst [vmem:[#allocation2 + $0xc8] sm:$0xc0] %v1703
      %1818 = vst [vmem:[#allocation2 + $0xd0] sm:$0xc0] %v1704
      %1819 = vst [vmem:[#allocation2 + $0xd8] sm:$0xc0] %v1705
      %1820 = vst [vmem:[#allocation2 + $0xe0] sm:$0xc0] %v1706
      %1821 = vst [vmem:[#allocation2 + $0xe8] sm:$0xc0] %v1707
      %1822 = vst [vmem:[#allocation2 + $0xf0] sm:$0xc0] %v1708
      %1823 = vst [vmem:[#allocation2 + $0xf8] sm:$0xc0] %v1709
      %1824 = vst [vmem:[#allocation2 + $0x100] sm:$0xc0] %v1710
      %1825 = vst [vmem:[#allocation2 + $0x108] sm:$0xc0] %v1711
      %1826 = vst [vmem:[#allocation2 + $0x110] sm:$0xc0] %v1712
      %1827 = vst [vmem:[#allocation2 + $0x118] sm:$0xc0] %v1713
      %1828 = vst [vmem:[#allocation2 + $0x120] sm:$0xc0] %v1714
      %1829 = vst [vmem:[#allocation2 + $0x128] sm:$0xc0] %v1715
      %1830 = vst [vmem:[#allocation2 + $0x130] sm:$0xc0] %v1716
      %1831 = vst [vmem:[#allocation2 + $0x138] sm:$0xc0] %v1717
      %1832 = vst [vmem:[#allocation2 + $0x140] sm:$0xc0] %v1718
      %1833 = vst [vmem:[#allocation2 + $0x148] sm:$0xc0] %v1719
      %1834 = vst [vmem:[#allocation2 + $0x150] sm:$0xc0] %v1720
      %1835 = vst [vmem:[#allocation2 + $0x158] sm:$0xc0] %v1721
      %1836 = vst [vmem:[#allocation2 + $0x160] sm:$0xc0] %v1722
      %1837 = vst [vmem:[#allocation2 + $0x168] sm:$0xc0] %v1723
      %1838 = vst [vmem:[#allocation2 + $0x170] sm:$0xc0] %v1724
      %1839 = vst [vmem:[#allocation2 + $0x178] sm:$0xc0] %v1725
      %1840 = vst [vmem:[#allocation2 + $0x180] sm:$0xc0] %v1726
      %1841 = vst [vmem:[#allocation2 + $0x188] sm:$0xc0] %v1727
      %1842 = vst [vmem:[#allocation2 + $0x190] sm:$0xc0] %v1728
      %1843 = vst [vmem:[#allocation2 + $0x198] sm:$0xc0] %v1729
      %1844 = vst [vmem:[#allocation2 + $0x1a0] sm:$0xc0] %v1730
      %1845 = vst [vmem:[#allocation2 + $0x1a8] sm:$0xc0] %v1731
      %1846 = vst [vmem:[#allocation2 + $0x1b0] sm:$0xc0] %v1732
      %1847 = vst [vmem:[#allocation2 + $0x1b8] sm:$0xc0] %v1733
      %1848 = vst [vmem:[#allocation2 + $0x1c0] sm:$0xc0] %v1734
      %1849 = vrot.lane.b32.xlu0 %v370, 93
      %v1850 = vpop.permute.xlu0 %1849
      %1851 = vrot.lane.b32.xlu0 %v378, 93
      %v1852 = vpop.permute.xlu0 %1851
      %1853 = vrot.lane.b32.xlu0 %v377, 93
      %v1854 = vpop.permute.xlu0 %1853
      %1855 = vrot.lane.b32.xlu0 %v379, 93
      %v1856 = vpop.permute.xlu0 %1855
      %1857 = vrot.lane.b32.xlu0 %v387, 93
      %v1858 = vpop.permute.xlu0 %1857
      %1859 = vrot.lane.b32.xlu0 %v395, 93
      %v1860 = vpop.permute.xlu0 %1859
      %1861 = vrot.lane.b32.xlu0 %v394, 93
      %v1862 = vpop.permute.xlu0 %1861
      %1863 = vrot.lane.b32.xlu0 %v396, 93
      %v1864 = vpop.permute.xlu0 %1863
      %1865 = vrot.lane.b32.xlu0 %v404, 93
      %v1866 = vpop.permute.xlu0 %1865
      %1867 = vrot.lane.b32.xlu0 %v412, 93
      %v1868 = vpop.permute.xlu0 %1867
      %1869 = vrot.lane.b32.xlu0 %v411, 93
      %v1870 = vpop.permute.xlu0 %1869
      %1871 = vrot.lane.b32.xlu0 %v413, 93
      %v1872 = vpop.permute.xlu0 %1871
      %1873 = vrot.lane.b32.xlu0 %v421, 93
      %v1874 = vpop.permute.xlu0 %1873
      %1875 = vrot.lane.b32.xlu0 %v429, 93
      %v1876 = vpop.permute.xlu0 %1875
      %1877 = vrot.lane.b32.xlu0 %v428, 93
      %v1878 = vpop.permute.xlu0 %1877
      %1879 = vrot.lane.b32.xlu0 %v430, 93
      %v1880 = vpop.permute.xlu0 %1879
      %1881 = vrot.lane.b32.xlu0 %v438, 93
      %v1882 = vpop.permute.xlu0 %1881
      %1883 = vrot.lane.b32.xlu0 %v446, 93
      %v1884 = vpop.permute.xlu0 %1883
      %1885 = vrot.lane.b32.xlu0 %v445, 93
      %v1886 = vpop.permute.xlu0 %1885
      %1887 = vrot.lane.b32.xlu0 %v447, 93
      %v1888 = vpop.permute.xlu0 %1887
      %1889 = vrot.lane.b32.xlu0 %v455, 93
      %v1890 = vpop.permute.xlu0 %1889
      %1891 = vrot.lane.b32.xlu0 %v463, 93
      %v1892 = vpop.permute.xlu0 %1891
      %1893 = vrot.lane.b32.xlu0 %v462, 93
      %v1894 = vpop.permute.xlu0 %1893
      %1895 = vrot.lane.b32.xlu0 %v464, 93
      %v1896 = vpop.permute.xlu0 %1895
      %1897 = vrot.lane.b32.xlu0 %v472, 93
      %v1898 = vpop.permute.xlu0 %1897
      %1899 = vrot.lane.b32.xlu0 %v480, 93
      %v1900 = vpop.permute.xlu0 %1899
      %1901 = vrot.lane.b32.xlu0 %v479, 93
      %v1902 = vpop.permute.xlu0 %1901
      %1903 = vrot.lane.b32.xlu0 %v481, 93
      %v1904 = vpop.permute.xlu0 %1903
      %1905 = vrot.lane.b32.xlu0 %v489, 93
      %v1906 = vpop.permute.xlu0 %1905
      %1907 = vrot.lane.b32.xlu0 %v497, 93
      %v1908 = vpop.permute.xlu0 %1907
      %1909 = vrot.lane.b32.xlu0 %v496, 93
      %v1910 = vpop.permute.xlu0 %1909
      %1911 = vrot.lane.b32.xlu0 %v498, 93
      %v1912 = vpop.permute.xlu0 %1911
      %1913 = vrot.lane.b32.xlu0 %v506, 93
      %v1914 = vpop.permute.xlu0 %1913
      %1915 = vrot.lane.b32.xlu0 %v514, 93
      %v1916 = vpop.permute.xlu0 %1915
      %1917 = vrot.lane.b32.xlu0 %v513, 93
      %v1918 = vpop.permute.xlu0 %1917
      %1919 = vrot.lane.b32.xlu0 %v515, 93
      %v1920 = vpop.permute.xlu0 %1919
      %1921 = vrot.lane.b32.xlu0 %v523, 93
      %v1922 = vpop.permute.xlu0 %1921
      %1923 = vrot.lane.b32.xlu0 %v531, 93
      %v1924 = vpop.permute.xlu0 %1923
      %1925 = vrot.lane.b32.xlu0 %v530, 93
      %v1926 = vpop.permute.xlu0 %1925
      %1927 = vrot.lane.b32.xlu0 %v532, 93
      %v1928 = vpop.permute.xlu0 %1927
      %1929 = vrot.lane.b32.xlu0 %v540, 93
      %v1930 = vpop.permute.xlu0 %1929
      %1931 = vrot.lane.b32.xlu0 %v548, 93
      %v1932 = vpop.permute.xlu0 %1931
      %1933 = vrot.lane.b32.xlu0 %v547, 93
      %v1934 = vpop.permute.xlu0 %1933
      %1935 = vrot.lane.b32.xlu0 %v549, 93
      %v1936 = vpop.permute.xlu0 %1935
      %1937 = vrot.lane.b32.xlu0 %v557, 93
      %v1938 = vpop.permute.xlu0 %1937
      %1939 = vrot.lane.b32.xlu0 %v565, 93
      %v1940 = vpop.permute.xlu0 %1939
      %1941 = vrot.lane.b32.xlu0 %v564, 93
      %v1942 = vpop.permute.xlu0 %1941
      %1943 = vrot.lane.b32.xlu0 %v566, 93
      %v1944 = vpop.permute.xlu0 %1943
      %1945 = vrot.lane.b32.xlu0 %v574, 93
      %v1946 = vpop.permute.xlu0 %1945
      %1947 = vrot.lane.b32.xlu0 %v582, 93
      %v1948 = vpop.permute.xlu0 %1947
      %1949 = vrot.lane.b32.xlu0 %v581, 93
      %v1950 = vpop.permute.xlu0 %1949
      %1951 = vrot.lane.b32.xlu0 %v583, 93
      %v1952 = vpop.permute.xlu0 %1951
      %1953 = vrot.lane.b32.xlu0 %v591, 93
      %v1954 = vpop.permute.xlu0 %1953
      %1955 = vrot.lane.b32.xlu0 %v599, 93
      %v1956 = vpop.permute.xlu0 %1955
      %1957 = vrot.lane.b32.xlu0 %v598, 93
      %v1958 = vpop.permute.xlu0 %1957
      %1959 = vrot.lane.b32.xlu0 %v600, 93
      %v1960 = vpop.permute.xlu0 %1959
      %1961 = vrot.lane.b32.xlu0 %v607, 93
      %v1962 = vpop.permute.xlu0 %1961
      %1963 = vrot.lane.b32.xlu0 %v677, 93
      %v1964 = vpop.permute.xlu0 %1963
      %vm1965 = vcmask 760832
      %v1966 = vsel %vm1965, %v1850, %v1852
      %v1967 = vsel %vm1965, %v1852, %v1854
      %v1968 = vsel %vm1965, %v1854, %v1856
      %v1969 = vsel %vm1965, %v1856, %v1858
      %v1970 = vsel %vm1965, %v1858, %v1860
      %v1971 = vsel %vm1965, %v1860, %v1862
      %v1972 = vsel %vm1965, %v1862, %v1864
      %v1973 = vsel %vm1965, %v1864, %v1866
      %v1974 = vsel %vm1965, %v1866, %v1868
      %v1975 = vsel %vm1965, %v1868, %v1870
      %v1976 = vsel %vm1965, %v1870, %v1872
      %v1977 = vsel %vm1965, %v1872, %v1874
      %v1978 = vsel %vm1965, %v1874, %v1876
      %v1979 = vsel %vm1965, %v1876, %v1878
      %v1980 = vsel %vm1965, %v1878, %v1880
      %v1981 = vsel %vm1965, %v1880, %v1882
      %v1982 = vsel %vm1965, %v1882, %v1884
      %v1983 = vsel %vm1965, %v1884, %v1886
      %v1984 = vsel %vm1965, %v1886, %v1888
      %v1985 = vsel %vm1965, %v1888, %v1890
      %v1986 = vsel %vm1965, %v1890, %v1892
      %v1987 = vsel %vm1965, %v1892, %v1894
      %v1988 = vsel %vm1965, %v1894, %v1896
      %v1989 = vsel %vm1965, %v1896, %v1898
      %v1990 = vsel %vm1965, %v1898, %v1900
      %v1991 = vsel %vm1965, %v1900, %v1902
      %v1992 = vsel %vm1965, %v1902, %v1904
      %v1993 = vsel %vm1965, %v1904, %v1906
      %v1994 = vsel %vm1965, %v1906, %v1908
      %v1995 = vsel %vm1965, %v1908, %v1910
      %v1996 = vsel %vm1965, %v1910, %v1912
      %v1997 = vsel %vm1965, %v1912, %v1914
      %v1998 = vsel %vm1965, %v1914, %v1916
      %v1999 = vsel %vm1965, %v1916, %v1918
      %v2000 = vsel %vm1965, %v1918, %v1920
      %v2001 = vsel %vm1965, %v1920, %v1922
      %v2002 = vsel %vm1965, %v1922, %v1924
      %v2003 = vsel %vm1965, %v1924, %v1926
      %v2004 = vsel %vm1965, %v1926, %v1928
      %v2005 = vsel %vm1965, %v1928, %v1930
      %v2006 = vsel %vm1965, %v1930, %v1932
      %v2007 = vsel %vm1965, %v1932, %v1934
      %v2008 = vsel %vm1965, %v1934, %v1936
      %v2009 = vsel %vm1965, %v1936, %v1938
      %v2010 = vsel %vm1965, %v1938, %v1940
      %v2011 = vsel %vm1965, %v1940, %v1942
      %v2012 = vsel %vm1965, %v1942, %v1944
      %v2013 = vsel %vm1965, %v1944, %v1946
      %v2014 = vsel %vm1965, %v1946, %v1948
      %v2015 = vsel %vm1965, %v1948, %v1950
      %v2016 = vsel %vm1965, %v1950, %v1952
      %v2017 = vsel %vm1965, %v1952, %v1954
      %v2018 = vsel %vm1965, %v1954, %v1956
      %v2019 = vsel %vm1965, %v1956, %v1958
      %v2020 = vsel %vm1965, %v1958, %v1960
      %v2021 = vsel %vm1965, %v1960, %v1962
      %v2022 = vsel %vm1965, %v1962, %v1964
      %2080 = vst [vmem:[#allocation2 + $0x1c8] sm:$0x3] %v1966
      %2081 = vst [vmem:[#allocation2 + $0x1d0] sm:$0x3] %v1967
      %2082 = vst [vmem:[#allocation2 + $0x1d8] sm:$0x3] %v1968
      %2083 = vst [vmem:[#allocation2 + $0x1e0] sm:$0x3] %v1969
      %2084 = vst [vmem:[#allocation2 + $0x1e8] sm:$0x3] %v1970
      %2085 = vst [vmem:[#allocation2 + $0x1f0] sm:$0x3] %v1971
      %2086 = vst [vmem:[#allocation2 + $0x1f8] sm:$0x3] %v1972
      %2087 = vst [vmem:[#allocation2 + $0x200] sm:$0x3] %v1973
      %2088 = vst [vmem:[#allocation2 + $0x208] sm:$0x3] %v1974
      %2089 = vst [vmem:[#allocation2 + $0x210] sm:$0x3] %v1975
      %2090 = vst [vmem:[#allocation2 + $0x218] sm:$0x3] %v1976
      %2091 = vst [vmem:[#allocation2 + $0x220] sm:$0x3] %v1977
      %2092 = vst [vmem:[#allocation2 + $0x228] sm:$0x3] %v1978
      %2093 = vst [vmem:[#allocation2 + $0x230] sm:$0x3] %v1979
      %2094 = vst [vmem:[#allocation2 + $0x238] sm:$0x3] %v1980
      %2095 = vst [vmem:[#allocation2 + $0x240] sm:$0x3] %v1981
      %2096 = vst [vmem:[#allocation2 + $0x248] sm:$0x3] %v1982
      %2097 = vst [vmem:[#allocation2 + $0x250] sm:$0x3] %v1983
      %2098 = vst [vmem:[#allocation2 + $0x258] sm:$0x3] %v1984
      %2099 = vst [vmem:[#allocation2 + $0x260] sm:$0x3] %v1985
      %2100 = vst [vmem:[#allocation2 + $0x268] sm:$0x3] %v1986
      %2101 = vst [vmem:[#allocation2 + $0x270] sm:$0x3] %v1987
      %2102 = vst [vmem:[#allocation2 + $0x278] sm:$0x3] %v1988
      %2103 = vst [vmem:[#allocation2 + $0x280] sm:$0x3] %v1989
      %2104 = vst [vmem:[#allocation2 + $0x288] sm:$0x3] %v1990
      %2105 = vst [vmem:[#allocation2 + $0x290] sm:$0x3] %v1991
      %2106 = vst [vmem:[#allocation2 + $0x298] sm:$0x3] %v1992
      %2107 = vst [vmem:[#allocation2 + $0x2a0] sm:$0x3] %v1993
      %2108 = vst [vmem:[#allocation2 + $0x2a8] sm:$0x3] %v1994
      %2109 = vst [vmem:[#allocation2 + $0x2b0] sm:$0x3] %v1995
      %2110 = vst [vmem:[#allocation2 + $0x2b8] sm:$0x3] %v1996
      %2111 = vst [vmem:[#allocation2 + $0x2c0] sm:$0x3] %v1997
      %2112 = vst [vmem:[#allocation2 + $0x2c8] sm:$0x3] %v1998
      %2113 = vst [vmem:[#allocation2 + $0x2d0] sm:$0x3] %v1999
      %2114 = vst [vmem:[#allocation2 + $0x2d8] sm:$0x3] %v2000
      %2115 = vst [vmem:[#allocation2 + $0x2e0] sm:$0x3] %v2001
      %2116 = vst [vmem:[#allocation2 + $0x2e8] sm:$0x3] %v2002
      %2117 = vst [vmem:[#allocation2 + $0x2f0] sm:$0x3] %v2003
      %2118 = vst [vmem:[#allocation2 + $0x2f8] sm:$0x3] %v2004
      %2119 = vst [vmem:[#allocation2 + $0x300] sm:$0x3] %v2005
      %2120 = vst [vmem:[#allocation2 + $0x308] sm:$0x3] %v2006
      %2121 = vst [vmem:[#allocation2 + $0x310] sm:$0x3] %v2007
      %2122 = vst [vmem:[#allocation2 + $0x318] sm:$0x3] %v2008
      %2123 = vst [vmem:[#allocation2 + $0x320] sm:$0x3] %v2009
      %2124 = vst [vmem:[#allocation2 + $0x328] sm:$0x3] %v2010
      %2125 = vst [vmem:[#allocation2 + $0x330] sm:$0x3] %v2011
      %2126 = vst [vmem:[#allocation2 + $0x338] sm:$0x3] %v2012
      %2127 = vst [vmem:[#allocation2 + $0x340] sm:$0x3] %v2013
      %2128 = vst [vmem:[#allocation2 + $0x348] sm:$0x3] %v2014
      %2129 = vst [vmem:[#allocation2 + $0x350] sm:$0x3] %v2015
      %2130 = vst [vmem:[#allocation2 + $0x358] sm:$0x3] %v2016
      %2131 = vst [vmem:[#allocation2 + $0x360] sm:$0x3] %v2017
      %2132 = vst [vmem:[#allocation2 + $0x368] sm:$0x3] %v2018
      %2133 = vst [vmem:[#allocation2 + $0x370] sm:$0x3] %v2019
      %2134 = vst [vmem:[#allocation2 + $0x378] sm:$0x3] %v2020
      %2135 = vst [vmem:[#allocation2 + $0x380] sm:$0x3] %v2021
      %2136 = vst [vmem:[#allocation2 + $0x388] sm:$0x3] %v2022
      %2137 = vrot.lane.b32.xlu0 %v811, 92
      %v2138 = vpop.permute.xlu0 %2137
      %2139 = vrot.lane.b32.xlu0 %v812, 92
      %v2140 = vpop.permute.xlu0 %2139
      %2141 = vrot.lane.b32.xlu0 %v813, 92
      %v2142 = vpop.permute.xlu0 %2141
      %2143 = vrot.lane.b32.xlu0 %v814, 92
      %v2144 = vpop.permute.xlu0 %2143
      %2145 = vrot.lane.b32.xlu0 %v815, 92
      %v2146 = vpop.permute.xlu0 %2145
      %2147 = vrot.lane.b32.xlu0 %v816, 92
      %v2148 = vpop.permute.xlu0 %2147
      %2149 = vrot.lane.b32.xlu0 %v817, 92
      %v2150 = vpop.permute.xlu0 %2149
      %2151 = vrot.lane.b32.xlu0 %v818, 92
      %v2152 = vpop.permute.xlu0 %2151
      %2153 = vrot.lane.b32.xlu0 %v819, 92
      %v2154 = vpop.permute.xlu0 %2153
      %2155 = vrot.lane.b32.xlu0 %v820, 92
      %v2156 = vpop.permute.xlu0 %2155
      %2157 = vrot.lane.b32.xlu0 %v821, 92
      %v2158 = vpop.permute.xlu0 %2157
      %2159 = vrot.lane.b32.xlu0 %v822, 92
      %v2160 = vpop.permute.xlu0 %2159
      %2161 = vrot.lane.b32.xlu0 %v823, 92
      %v2162 = vpop.permute.xlu0 %2161
      %2163 = vrot.lane.b32.xlu0 %v824, 92
      %v2164 = vpop.permute.xlu0 %2163
      %2165 = vrot.lane.b32.xlu0 %v825, 92
      %v2166 = vpop.permute.xlu0 %2165
      %2167 = vrot.lane.b32.xlu0 %v826, 92
      %v2168 = vpop.permute.xlu0 %2167
      %2169 = vrot.lane.b32.xlu0 %v827, 92
      %v2170 = vpop.permute.xlu0 %2169
      %2171 = vrot.lane.b32.xlu0 %v828, 92
      %v2172 = vpop.permute.xlu0 %2171
      %2173 = vrot.lane.b32.xlu0 %v829, 92
      %v2174 = vpop.permute.xlu0 %2173
      %2175 = vrot.lane.b32.xlu0 %v830, 92
      %v2176 = vpop.permute.xlu0 %2175
      %2177 = vrot.lane.b32.xlu0 %v831, 92
      %v2178 = vpop.permute.xlu0 %2177
      %2179 = vrot.lane.b32.xlu0 %v832, 92
      %v2180 = vpop.permute.xlu0 %2179
      %2181 = vrot.lane.b32.xlu0 %v833, 92
      %v2182 = vpop.permute.xlu0 %2181
      %2183 = vrot.lane.b32.xlu0 %v834, 92
      %v2184 = vpop.permute.xlu0 %2183
      %2185 = vrot.lane.b32.xlu0 %v835, 92
      %v2186 = vpop.permute.xlu0 %2185
      %2187 = vrot.lane.b32.xlu0 %v836, 92
      %v2188 = vpop.permute.xlu0 %2187
      %2189 = vrot.lane.b32.xlu0 %v837, 92
      %v2190 = vpop.permute.xlu0 %2189
      %2191 = vrot.lane.b32.xlu0 %v838, 92
      %v2192 = vpop.permute.xlu0 %2191
      %2193 = vrot.lane.b32.xlu0 %v839, 92
      %v2194 = vpop.permute.xlu0 %2193
      %2195 = vrot.lane.b32.xlu0 %v840, 92
      %v2196 = vpop.permute.xlu0 %2195
      %2197 = vrot.lane.b32.xlu0 %v841, 92
      %v2198 = vpop.permute.xlu0 %2197
      %2199 = vrot.lane.b32.xlu0 %v842, 92
      %v2200 = vpop.permute.xlu0 %2199
      %2201 = vrot.lane.b32.xlu0 %v843, 92
      %v2202 = vpop.permute.xlu0 %2201
      %2203 = vrot.lane.b32.xlu0 %v844, 92
      %v2204 = vpop.permute.xlu0 %2203
      %2205 = vrot.lane.b32.xlu0 %v845, 92
      %v2206 = vpop.permute.xlu0 %2205
      %2207 = vrot.lane.b32.xlu0 %v846, 92
      %v2208 = vpop.permute.xlu0 %2207
      %2209 = vrot.lane.b32.xlu0 %v847, 92
      %v2210 = vpop.permute.xlu0 %2209
      %2211 = vrot.lane.b32.xlu0 %v848, 92
      %v2212 = vpop.permute.xlu0 %2211
      %2213 = vrot.lane.b32.xlu0 %v849, 92
      %v2214 = vpop.permute.xlu0 %2213
      %2215 = vrot.lane.b32.xlu0 %v850, 92
      %v2216 = vpop.permute.xlu0 %2215
      %2217 = vrot.lane.b32.xlu0 %v851, 92
      %v2218 = vpop.permute.xlu0 %2217
      %2219 = vrot.lane.b32.xlu0 %v852, 92
      %v2220 = vpop.permute.xlu0 %2219
      %2221 = vrot.lane.b32.xlu0 %v853, 92
      %v2222 = vpop.permute.xlu0 %2221
      %2223 = vrot.lane.b32.xlu0 %v854, 92
      %v2224 = vpop.permute.xlu0 %2223
      %2225 = vrot.lane.b32.xlu0 %v855, 92
      %v2226 = vpop.permute.xlu0 %2225
      %2227 = vrot.lane.b32.xlu0 %v856, 92
      %v2228 = vpop.permute.xlu0 %2227
      %2229 = vrot.lane.b32.xlu0 %v857, 92
      %v2230 = vpop.permute.xlu0 %2229
      %2231 = vrot.lane.b32.xlu0 %v858, 92
      %v2232 = vpop.permute.xlu0 %2231
      %2233 = vrot.lane.b32.xlu0 %v859, 92
      %v2234 = vpop.permute.xlu0 %2233
      %2235 = vrot.lane.b32.xlu0 %v860, 92
      %v2236 = vpop.permute.xlu0 %2235
      %2237 = vrot.lane.b32.xlu0 %v861, 92
      %v2238 = vpop.permute.xlu0 %2237
      %2239 = vrot.lane.b32.xlu0 %v862, 92
      %v2240 = vpop.permute.xlu0 %2239
      %2241 = vrot.lane.b32.xlu0 %v863, 92
      %v2242 = vpop.permute.xlu0 %2241
      %2243 = vrot.lane.b32.xlu0 %v864, 92
      %v2244 = vpop.permute.xlu0 %2243
      %2245 = vrot.lane.b32.xlu0 %v865, 92
      %v2246 = vpop.permute.xlu0 %2245
      %2247 = vrot.lane.b32.xlu0 %v866, 92
      %v2248 = vpop.permute.xlu0 %2247
      %2249 = vrot.lane.b32.xlu0 %v867, 92
      %v2250 = vpop.permute.xlu0 %2249
      %2251 = vrot.lane.b32.xlu0 %v868, 92
      %v2252 = vpop.permute.xlu0 %2251
      %vm2253 = vcmask 752640
      %v2254 = vsel %vm2253, %v2138, %v2140
      %v2255 = vsel %vm2253, %v2140, %v2142
      %v2256 = vsel %vm2253, %v2142, %v2144
      %v2257 = vsel %vm2253, %v2144, %v2146
      %v2258 = vsel %vm2253, %v2146, %v2148
      %v2259 = vsel %vm2253, %v2148, %v2150
      %v2260 = vsel %vm2253, %v2150, %v2152
      %v2261 = vsel %vm2253, %v2152, %v2154
      %v2262 = vsel %vm2253, %v2154, %v2156
      %v2263 = vsel %vm2253, %v2156, %v2158
      %v2264 = vsel %vm2253, %v2158, %v2160
      %v2265 = vsel %vm2253, %v2160, %v2162
      %v2266 = vsel %vm2253, %v2162, %v2164
      %v2267 = vsel %vm2253, %v2164, %v2166
      %v2268 = vsel %vm2253, %v2166, %v2168
      %v2269 = vsel %vm2253, %v2168, %v2170
      %v2270 = vsel %vm2253, %v2170, %v2172
      %v2271 = vsel %vm2253, %v2172, %v2174
      %v2272 = vsel %vm2253, %v2174, %v2176
      %v2273 = vsel %vm2253, %v2176, %v2178
      %v2274 = vsel %vm2253, %v2178, %v2180
      %v2275 = vsel %vm2253, %v2180, %v2182
      %v2276 = vsel %vm2253, %v2182, %v2184
      %v2277 = vsel %vm2253, %v2184, %v2186
      %v2278 = vsel %vm2253, %v2186, %v2188
      %v2279 = vsel %vm2253, %v2188, %v2190
      %v2280 = vsel %vm2253, %v2190, %v2192
      %v2281 = vsel %vm2253, %v2192, %v2194
      %v2282 = vsel %vm2253, %v2194, %v2196
      %v2283 = vsel %vm2253, %v2196, %v2198
      %v2284 = vsel %vm2253, %v2198, %v2200
      %v2285 = vsel %vm2253, %v2200, %v2202
      %v2286 = vsel %vm2253, %v2202, %v2204
      %v2287 = vsel %vm2253, %v2204, %v2206
      %v2288 = vsel %vm2253, %v2206, %v2208
      %v2289 = vsel %vm2253, %v2208, %v2210
      %v2290 = vsel %vm2253, %v2210, %v2212
      %v2291 = vsel %vm2253, %v2212, %v2214
      %v2292 = vsel %vm2253, %v2214, %v2216
      %v2293 = vsel %vm2253, %v2216, %v2218
      %v2294 = vsel %vm2253, %v2218, %v2220
      %v2295 = vsel %vm2253, %v2220, %v2222
      %v2296 = vsel %vm2253, %v2222, %v2224
      %v2297 = vsel %vm2253, %v2224, %v2226
      %v2298 = vsel %vm2253, %v2226, %v2228
      %v2299 = vsel %vm2253, %v2228, %v2230
      %v2300 = vsel %vm2253, %v2230, %v2232
      %v2301 = vsel %vm2253, %v2232, %v2234
      %v2302 = vsel %vm2253, %v2234, %v2236
      %v2303 = vsel %vm2253, %v2236, %v2238
      %v2304 = vsel %vm2253, %v2238, %v2240
      %v2305 = vsel %vm2253, %v2240, %v2242
      %v2306 = vsel %vm2253, %v2242, %v2244
      %v2307 = vsel %vm2253, %v2244, %v2246
      %v2308 = vsel %vm2253, %v2246, %v2248
      %v2309 = vsel %vm2253, %v2248, %v2250
      %v2310 = vsel %vm2253, %v2250, %v2252
      %2368 = vst [vmem:[#allocation2 + $0x1c8] sm:$0xc] %v2254
      %2369 = vst [vmem:[#allocation2 + $0x1d0] sm:$0xc] %v2255
      %2370 = vst [vmem:[#allocation2 + $0x1d8] sm:$0xc] %v2256
      %2371 = vst [vmem:[#allocation2 + $0x1e0] sm:$0xc] %v2257
      %2372 = vst [vmem:[#allocation2 + $0x1e8] sm:$0xc] %v2258
      %2373 = vst [vmem:[#allocation2 + $0x1f0] sm:$0xc] %v2259
      %2374 = vst [vmem:[#allocation2 + $0x1f8] sm:$0xc] %v2260
      %2375 = vst [vmem:[#allocation2 + $0x200] sm:$0xc] %v2261
      %2376 = vst [vmem:[#allocation2 + $0x208] sm:$0xc] %v2262
      %2377 = vst [vmem:[#allocation2 + $0x210] sm:$0xc] %v2263
      %2378 = vst [vmem:[#allocation2 + $0x218] sm:$0xc] %v2264
      %2379 = vst [vmem:[#allocation2 + $0x220] sm:$0xc] %v2265
      %2380 = vst [vmem:[#allocation2 + $0x228] sm:$0xc] %v2266
      %2381 = vst [vmem:[#allocation2 + $0x230] sm:$0xc] %v2267
      %2382 = vst [vmem:[#allocation2 + $0x238] sm:$0xc] %v2268
      %2383 = vst [vmem:[#allocation2 + $0x240] sm:$0xc] %v2269
      %2384 = vst [vmem:[#allocation2 + $0x248] sm:$0xc] %v2270
      %2385 = vst [vmem:[#allocation2 + $0x250] sm:$0xc] %v2271
      %2386 = vst [vmem:[#allocation2 + $0x258] sm:$0xc] %v2272
      %2387 = vst [vmem:[#allocation2 + $0x260] sm:$0xc] %v2273
      %2388 = vst [vmem:[#allocation2 + $0x268] sm:$0xc] %v2274
      %2389 = vst [vmem:[#allocation2 + $0x270] sm:$0xc] %v2275
      %2390 = vst [vmem:[#allocation2 + $0x278] sm:$0xc] %v2276
      %2391 = vst [vmem:[#allocation2 + $0x280] sm:$0xc] %v2277
      %2392 = vst [vmem:[#allocation2 + $0x288] sm:$0xc] %v2278
      %2393 = vst [vmem:[#allocation2 + $0x290] sm:$0xc] %v2279
      %2394 = vst [vmem:[#allocation2 + $0x298] sm:$0xc] %v2280
      %2395 = vst [vmem:[#allocation2 + $0x2a0] sm:$0xc] %v2281
      %2396 = vst [vmem:[#allocation2 + $0x2a8] sm:$0xc] %v2282
      %2397 = vst [vmem:[#allocation2 + $0x2b0] sm:$0xc] %v2283
      %2398 = vst [vmem:[#allocation2 + $0x2b8] sm:$0xc] %v2284
      %2399 = vst [vmem:[#allocation2 + $0x2c0] sm:$0xc] %v2285
      %2400 = vst [vmem:[#allocation2 + $0x2c8] sm:$0xc] %v2286
      %2401 = vst [vmem:[#allocation2 + $0x2d0] sm:$0xc] %v2287
      %2402 = vst [vmem:[#allocation2 + $0x2d8] sm:$0xc] %v2288
      %2403 = vst [vmem:[#allocation2 + $0x2e0] sm:$0xc] %v2289
      %2404 = vst [vmem:[#allocation2 + $0x2e8] sm:$0xc] %v2290
      %2405 = vst [vmem:[#allocation2 + $0x2f0] sm:$0xc] %v2291
      %2406 = vst [vmem:[#allocation2 + $0x2f8] sm:$0xc] %v2292
      %2407 = vst [vmem:[#allocation2 + $0x300] sm:$0xc] %v2293
      %2408 = vst [vmem:[#allocation2 + $0x308] sm:$0xc] %v2294
      %2409 = vst [vmem:[#allocation2 + $0x310] sm:$0xc] %v2295
      %2410 = vst [vmem:[#allocation2 + $0x318] sm:$0xc] %v2296
      %2411 = vst [vmem:[#allocation2 + $0x320] sm:$0xc] %v2297
      %2412 = vst [vmem:[#allocation2 + $0x328] sm:$0xc] %v2298
      %2413 = vst [vmem:[#allocation2 + $0x330] sm:$0xc] %v2299
      %2414 = vst [vmem:[#allocation2 + $0x338] sm:$0xc] %v2300
      %2415 = vst [vmem:[#allocation2 + $0x340] sm:$0xc] %v2301
      %2416 = vst [vmem:[#allocation2 + $0x348] sm:$0xc] %v2302
      %2417 = vst [vmem:[#allocation2 + $0x350] sm:$0xc] %v2303
      %2418 = vst [vmem:[#allocation2 + $0x358] sm:$0xc] %v2304
      %2419 = vst [vmem:[#allocation2 + $0x360] sm:$0xc] %v2305
      %2420 = vst [vmem:[#allocation2 + $0x368] sm:$0xc] %v2306
      %2421 = vst [vmem:[#allocation2 + $0x370] sm:$0xc] %v2307
      %2422 = vst [vmem:[#allocation2 + $0x378] sm:$0xc] %v2308
      %2423 = vst [vmem:[#allocation2 + $0x380] sm:$0xc] %v2309
      %2424 = vst [vmem:[#allocation2 + $0x388] sm:$0xc] %v2310
      %2425 = vrot.lane.b32.xlu0 %v1157, 60
      %v2426 = vpop.permute.xlu0 %2425
      %2427 = vrot.lane.b32.xlu0 %v1158, 60
      %v2428 = vpop.permute.xlu0 %2427
      %2429 = vrot.lane.b32.xlu0 %v1159, 60
      %v2430 = vpop.permute.xlu0 %2429
      %2431 = vrot.lane.b32.xlu0 %v1160, 60
      %v2432 = vpop.permute.xlu0 %2431
      %2433 = vrot.lane.b32.xlu0 %v1161, 60
      %v2434 = vpop.permute.xlu0 %2433
      %2435 = vrot.lane.b32.xlu0 %v1162, 60
      %v2436 = vpop.permute.xlu0 %2435
      %2437 = vrot.lane.b32.xlu0 %v1163, 60
      %v2438 = vpop.permute.xlu0 %2437
      %2439 = vrot.lane.b32.xlu0 %v1164, 60
      %v2440 = vpop.permute.xlu0 %2439
      %2441 = vrot.lane.b32.xlu0 %v1165, 60
      %v2442 = vpop.permute.xlu0 %2441
      %2443 = vrot.lane.b32.xlu0 %v1166, 60
      %v2444 = vpop.permute.xlu0 %2443
      %2445 = vrot.lane.b32.xlu0 %v1167, 60
      %v2446 = vpop.permute.xlu0 %2445
      %2447 = vrot.lane.b32.xlu0 %v1168, 60
      %v2448 = vpop.permute.xlu0 %2447
      %2449 = vrot.lane.b32.xlu0 %v1169, 60
      %v2450 = vpop.permute.xlu0 %2449
      %2451 = vrot.lane.b32.xlu0 %v1170, 60
      %v2452 = vpop.permute.xlu0 %2451
      %2453 = vrot.lane.b32.xlu0 %v1171, 60
      %v2454 = vpop.permute.xlu0 %2453
      %2455 = vrot.lane.b32.xlu0 %v1172, 60
      %v2456 = vpop.permute.xlu0 %2455
      %2457 = vrot.lane.b32.xlu0 %v1173, 60
      %v2458 = vpop.permute.xlu0 %2457
      %2459 = vrot.lane.b32.xlu0 %v1174, 60
      %v2460 = vpop.permute.xlu0 %2459
      %2461 = vrot.lane.b32.xlu0 %v1175, 60
      %v2462 = vpop.permute.xlu0 %2461
      %2463 = vrot.lane.b32.xlu0 %v1176, 60
      %v2464 = vpop.permute.xlu0 %2463
      %2465 = vrot.lane.b32.xlu0 %v1177, 60
      %v2466 = vpop.permute.xlu0 %2465
      %2467 = vrot.lane.b32.xlu0 %v1178, 60
      %v2468 = vpop.permute.xlu0 %2467
      %2469 = vrot.lane.b32.xlu0 %v1179, 60
      %v2470 = vpop.permute.xlu0 %2469
      %2471 = vrot.lane.b32.xlu0 %v1180, 60
      %v2472 = vpop.permute.xlu0 %2471
      %2473 = vrot.lane.b32.xlu0 %v1181, 60
      %v2474 = vpop.permute.xlu0 %2473
      %2475 = vrot.lane.b32.xlu0 %v1182, 60
      %v2476 = vpop.permute.xlu0 %2475
      %2477 = vrot.lane.b32.xlu0 %v1183, 60
      %v2478 = vpop.permute.xlu0 %2477
      %2479 = vrot.lane.b32.xlu0 %v1184, 60
      %v2480 = vpop.permute.xlu0 %2479
      %2481 = vrot.lane.b32.xlu0 %v1185, 60
      %v2482 = vpop.permute.xlu0 %2481
      %2483 = vrot.lane.b32.xlu0 %v1186, 60
      %v2484 = vpop.permute.xlu0 %2483
      %2485 = vrot.lane.b32.xlu0 %v1187, 60
      %v2486 = vpop.permute.xlu0 %2485
      %2487 = vrot.lane.b32.xlu0 %v1188, 60
      %v2488 = vpop.permute.xlu0 %2487
      %2489 = vrot.lane.b32.xlu0 %v1189, 60
      %v2490 = vpop.permute.xlu0 %2489
      %2491 = vrot.lane.b32.xlu0 %v1190, 60
      %v2492 = vpop.permute.xlu0 %2491
      %2493 = vrot.lane.b32.xlu0 %v1191, 60
      %v2494 = vpop.permute.xlu0 %2493
      %2495 = vrot.lane.b32.xlu0 %v1192, 60
      %v2496 = vpop.permute.xlu0 %2495
      %2497 = vrot.lane.b32.xlu0 %v1193, 60
      %v2498 = vpop.permute.xlu0 %2497
      %2499 = vrot.lane.b32.xlu0 %v1194, 60
      %v2500 = vpop.permute.xlu0 %2499
      %2501 = vrot.lane.b32.xlu0 %v1195, 60
      %v2502 = vpop.permute.xlu0 %2501
      %2503 = vrot.lane.b32.xlu0 %v1196, 60
      %v2504 = vpop.permute.xlu0 %2503
      %2505 = vrot.lane.b32.xlu0 %v1197, 60
      %v2506 = vpop.permute.xlu0 %2505
      %2507 = vrot.lane.b32.xlu0 %v1198, 60
      %v2508 = vpop.permute.xlu0 %2507
      %2509 = vrot.lane.b32.xlu0 %v1199, 60
      %v2510 = vpop.permute.xlu0 %2509
      %2511 = vrot.lane.b32.xlu0 %v1200, 60
      %v2512 = vpop.permute.xlu0 %2511
      %2513 = vrot.lane.b32.xlu0 %v1201, 60
      %v2514 = vpop.permute.xlu0 %2513
      %2515 = vrot.lane.b32.xlu0 %v1202, 60
      %v2516 = vpop.permute.xlu0 %2515
      %2517 = vrot.lane.b32.xlu0 %v1203, 60
      %v2518 = vpop.permute.xlu0 %2517
      %2519 = vrot.lane.b32.xlu0 %v1204, 60
      %v2520 = vpop.permute.xlu0 %2519
      %2521 = vrot.lane.b32.xlu0 %v1205, 60
      %v2522 = vpop.permute.xlu0 %2521
      %2523 = vrot.lane.b32.xlu0 %v1206, 60
      %v2524 = vpop.permute.xlu0 %2523
      %2525 = vrot.lane.b32.xlu0 %v1207, 60
      %v2526 = vpop.permute.xlu0 %2525
      %2527 = vrot.lane.b32.xlu0 %v1208, 60
      %v2528 = vpop.permute.xlu0 %2527
      %2529 = vrot.lane.b32.xlu0 %v1209, 60
      %v2530 = vpop.permute.xlu0 %2529
      %2531 = vrot.lane.b32.xlu0 %v1210, 60
      %v2532 = vpop.permute.xlu0 %2531
      %2533 = vrot.lane.b32.xlu0 %v1211, 60
      %v2534 = vpop.permute.xlu0 %2533
      %2535 = vrot.lane.b32.xlu0 %v1212, 60
      %v2536 = vpop.permute.xlu0 %2535
      %2537 = vrot.lane.b32.xlu0 %v1213, 60
      %v2538 = vpop.permute.xlu0 %2537
      %2539 = vrot.lane.b32.xlu0 %v1214, 60
      %v2540 = vpop.permute.xlu0 %2539
      %vm2541 = vcmask 490496
      %v2542 = vsel %vm2541, %v2426, %v2428
      %v2543 = vsel %vm2541, %v2428, %v2430
      %v2544 = vsel %vm2541, %v2430, %v2432
      %v2545 = vsel %vm2541, %v2432, %v2434
      %v2546 = vsel %vm2541, %v2434, %v2436
      %v2547 = vsel %vm2541, %v2436, %v2438
      %v2548 = vsel %vm2541, %v2438, %v2440
      %v2549 = vsel %vm2541, %v2440, %v2442
      %v2550 = vsel %vm2541, %v2442, %v2444
      %v2551 = vsel %vm2541, %v2444, %v2446
      %v2552 = vsel %vm2541, %v2446, %v2448
      %v2553 = vsel %vm2541, %v2448, %v2450
      %v2554 = vsel %vm2541, %v2450, %v2452
      %v2555 = vsel %vm2541, %v2452, %v2454
      %v2556 = vsel %vm2541, %v2454, %v2456
      %v2557 = vsel %vm2541, %v2456, %v2458
      %v2558 = vsel %vm2541, %v2458, %v2460
      %v2559 = vsel %vm2541, %v2460, %v2462
      %v2560 = vsel %vm2541, %v2462, %v2464
      %v2561 = vsel %vm2541, %v2464, %v2466
      %v2562 = vsel %vm2541, %v2466, %v2468
      %v2563 = vsel %vm2541, %v2468, %v2470
      %v2564 = vsel %vm2541, %v2470, %v2472
      %v2565 = vsel %vm2541, %v2472, %v2474
      %v2566 = vsel %vm2541, %v2474, %v2476
      %v2567 = vsel %vm2541, %v2476, %v2478
      %v2568 = vsel %vm2541, %v2478, %v2480
      %v2569 = vsel %vm2541, %v2480, %v2482
      %v2570 = vsel %vm2541, %v2482, %v2484
      %v2571 = vsel %vm2541, %v2484, %v2486
      %v2572 = vsel %vm2541, %v2486, %v2488
      %v2573 = vsel %vm2541, %v2488, %v2490
      %v2574 = vsel %vm2541, %v2490, %v2492
      %v2575 = vsel %vm2541, %v2492, %v2494
      %v2576 = vsel %vm2541, %v2494, %v2496
      %v2577 = vsel %vm2541, %v2496, %v2498
      %v2578 = vsel %vm2541, %v2498, %v2500
      %v2579 = vsel %vm2541, %v2500, %v2502
      %v2580 = vsel %vm2541, %v2502, %v2504
      %v2581 = vsel %vm2541, %v2504, %v2506
      %v2582 = vsel %vm2541, %v2506, %v2508
      %v2583 = vsel %vm2541, %v2508, %v2510
      %v2584 = vsel %vm2541, %v2510, %v2512
      %v2585 = vsel %vm2541, %v2512, %v2514
      %v2586 = vsel %vm2541, %v2514, %v2516
      %v2587 = vsel %vm2541, %v2516, %v2518
      %v2588 = vsel %vm2541, %v2518, %v2520
      %v2589 = vsel %vm2541, %v2520, %v2522
      %v2590 = vsel %vm2541, %v2522, %v2524
      %v2591 = vsel %vm2541, %v2524, %v2526
      %v2592 = vsel %vm2541, %v2526, %v2528
      %v2593 = vsel %vm2541, %v2528, %v2530
      %v2594 = vsel %vm2541, %v2530, %v2532
      %v2595 = vsel %vm2541, %v2532, %v2534
      %v2596 = vsel %vm2541, %v2534, %v2536
      %v2597 = vsel %vm2541, %v2536, %v2538
      %v2598 = vsel %vm2541, %v2538, %v2540
      %2656 = vst [vmem:[#allocation2 + $0x1c8] sm:$0x30] %v2542
      %2657 = vst [vmem:[#allocation2 + $0x1d0] sm:$0x30] %v2543
      %2658 = vst [vmem:[#allocation2 + $0x1d8] sm:$0x30] %v2544
      %2659 = vst [vmem:[#allocation2 + $0x1e0] sm:$0x30] %v2545
      %2660 = vst [vmem:[#allocation2 + $0x1e8] sm:$0x30] %v2546
      %2661 = vst [vmem:[#allocation2 + $0x1f0] sm:$0x30] %v2547
      %2662 = vst [vmem:[#allocation2 + $0x1f8] sm:$0x30] %v2548
      %2663 = vst [vmem:[#allocation2 + $0x200] sm:$0x30] %v2549
      %2664 = vst [vmem:[#allocation2 + $0x208] sm:$0x30] %v2550
      %2665 = vst [vmem:[#allocation2 + $0x210] sm:$0x30] %v2551
      %2666 = vst [vmem:[#allocation2 + $0x218] sm:$0x30] %v2552
      %2667 = vst [vmem:[#allocation2 + $0x220] sm:$0x30] %v2553
      %2668 = vst [vmem:[#allocation2 + $0x228] sm:$0x30] %v2554
      %2669 = vst [vmem:[#allocation2 + $0x230] sm:$0x30] %v2555
      %2670 = vst [vmem:[#allocation2 + $0x238] sm:$0x30] %v2556
      %2671 = vst [vmem:[#allocation2 + $0x240] sm:$0x30] %v2557
      %2672 = vst [vmem:[#allocation2 + $0x248] sm:$0x30] %v2558
      %2673 = vst [vmem:[#allocation2 + $0x250] sm:$0x30] %v2559
      %2674 = vst [vmem:[#allocation2 + $0x258] sm:$0x30] %v2560
      %2675 = vst [vmem:[#allocation2 + $0x260] sm:$0x30] %v2561
      %2676 = vst [vmem:[#allocation2 + $0x268] sm:$0x30] %v2562
      %2677 = vst [vmem:[#allocation2 + $0x270] sm:$0x30] %v2563
      %2678 = vst [vmem:[#allocation2 + $0x278] sm:$0x30] %v2564
      %2679 = vst [vmem:[#allocation2 + $0x280] sm:$0x30] %v2565
      %2680 = vst [vmem:[#allocation2 + $0x288] sm:$0x30] %v2566
      %2681 = vst [vmem:[#allocation2 + $0x290] sm:$0x30] %v2567
      %2682 = vst [vmem:[#allocation2 + $0x298] sm:$0x30] %v2568
      %2683 = vst [vmem:[#allocation2 + $0x2a0] sm:$0x30] %v2569
      %2684 = vst [vmem:[#allocation2 + $0x2a8] sm:$0x30] %v2570
      %2685 = vst [vmem:[#allocation2 + $0x2b0] sm:$0x30] %v2571
      %2686 = vst [vmem:[#allocation2 + $0x2b8] sm:$0x30] %v2572
      %2687 = vst [vmem:[#allocation2 + $0x2c0] sm:$0x30] %v2573
      %2688 = vst [vmem:[#allocation2 + $0x2c8] sm:$0x30] %v2574
      %2689 = vst [vmem:[#allocation2 + $0x2d0] sm:$0x30] %v2575
      %2690 = vst [vmem:[#allocation2 + $0x2d8] sm:$0x30] %v2576
      %2691 = vst [vmem:[#allocation2 + $0x2e0] sm:$0x30] %v2577
      %2692 = vst [vmem:[#allocation2 + $0x2e8] sm:$0x30] %v2578
      %2693 = vst [vmem:[#allocation2 + $0x2f0] sm:$0x30] %v2579
      %2694 = vst [vmem:[#allocation2 + $0x2f8] sm:$0x30] %v2580
      %2695 = vst [vmem:[#allocation2 + $0x300] sm:$0x30] %v2581
      %2696 = vst [vmem:[#allocation2 + $0x308] sm:$0x30] %v2582
      %2697 = vst [vmem:[#allocation2 + $0x310] sm:$0x30] %v2583
      %2698 = vst [vmem:[#allocation2 + $0x318] sm:$0x30] %v2584
      %2699 = vst [vmem:[#allocation2 + $0x320] sm:$0x30] %v2585
      %2700 = vst [vmem:[#allocation2 + $0x328] sm:$0x30] %v2586
      %2701 = vst [vmem:[#allocation2 + $0x330] sm:$0x30] %v2587
      %2702 = vst [vmem:[#allocation2 + $0x338] sm:$0x30] %v2588
      %2703 = vst [vmem:[#allocation2 + $0x340] sm:$0x30] %v2589
      %2704 = vst [vmem:[#allocation2 + $0x348] sm:$0x30] %v2590
      %2705 = vst [vmem:[#allocation2 + $0x350] sm:$0x30] %v2591
      %2706 = vst [vmem:[#allocation2 + $0x358] sm:$0x30] %v2592
      %2707 = vst [vmem:[#allocation2 + $0x360] sm:$0x30] %v2593
      %2708 = vst [vmem:[#allocation2 + $0x368] sm:$0x30] %v2594
      %2709 = vst [vmem:[#allocation2 + $0x370] sm:$0x30] %v2595
      %2710 = vst [vmem:[#allocation2 + $0x378] sm:$0x30] %v2596
      %2711 = vst [vmem:[#allocation2 + $0x380] sm:$0x30] %v2597
      %2712 = vst [vmem:[#allocation2 + $0x388] sm:$0x30] %v2598
      %2713 = vrot.lane.b32.xlu0 %v1503, 59
      %v2714 = vpop.permute.xlu0 %2713
      %2715 = vrot.lane.b32.xlu0 %v1504, 59
      %v2716 = vpop.permute.xlu0 %2715
      %2717 = vrot.lane.b32.xlu0 %v1505, 59
      %v2718 = vpop.permute.xlu0 %2717
      %2719 = vrot.lane.b32.xlu0 %v1506, 59
      %v2720 = vpop.permute.xlu0 %2719
      %2721 = vrot.lane.b32.xlu0 %v1507, 59
      %v2722 = vpop.permute.xlu0 %2721
      %2723 = vrot.lane.b32.xlu0 %v1508, 59
      %v2724 = vpop.permute.xlu0 %2723
      %2725 = vrot.lane.b32.xlu0 %v1509, 59
      %v2726 = vpop.permute.xlu0 %2725
      %2727 = vrot.lane.b32.xlu0 %v1510, 59
      %v2728 = vpop.permute.xlu0 %2727
      %2729 = vrot.lane.b32.xlu0 %v1511, 59
      %v2730 = vpop.permute.xlu0 %2729
      %2731 = vrot.lane.b32.xlu0 %v1512, 59
      %v2732 = vpop.permute.xlu0 %2731
      %2733 = vrot.lane.b32.xlu0 %v1513, 59
      %v2734 = vpop.permute.xlu0 %2733
      %2735 = vrot.lane.b32.xlu0 %v1514, 59
      %v2736 = vpop.permute.xlu0 %2735
      %2737 = vrot.lane.b32.xlu0 %v1515, 59
      %v2738 = vpop.permute.xlu0 %2737
      %2739 = vrot.lane.b32.xlu0 %v1516, 59
      %v2740 = vpop.permute.xlu0 %2739
      %2741 = vrot.lane.b32.xlu0 %v1517, 59
      %v2742 = vpop.permute.xlu0 %2741
      %2743 = vrot.lane.b32.xlu0 %v1518, 59
      %v2744 = vpop.permute.xlu0 %2743
      %2745 = vrot.lane.b32.xlu0 %v1519, 59
      %v2746 = vpop.permute.xlu0 %2745
      %2747 = vrot.lane.b32.xlu0 %v1520, 59
      %v2748 = vpop.permute.xlu0 %2747
      %2749 = vrot.lane.b32.xlu0 %v1521, 59
      %v2750 = vpop.permute.xlu0 %2749
      %2751 = vrot.lane.b32.xlu0 %v1522, 59
      %v2752 = vpop.permute.xlu0 %2751
      %2753 = vrot.lane.b32.xlu0 %v1523, 59
      %v2754 = vpop.permute.xlu0 %2753
      %2755 = vrot.lane.b32.xlu0 %v1524, 59
      %v2756 = vpop.permute.xlu0 %2755
      %2757 = vrot.lane.b32.xlu0 %v1525, 59
      %v2758 = vpop.permute.xlu0 %2757
      %2759 = vrot.lane.b32.xlu0 %v1526, 59
      %v2760 = vpop.permute.xlu0 %2759
      %2761 = vrot.lane.b32.xlu0 %v1527, 59
      %v2762 = vpop.permute.xlu0 %2761
      %2763 = vrot.lane.b32.xlu0 %v1528, 59
      %v2764 = vpop.permute.xlu0 %2763
      %2765 = vrot.lane.b32.xlu0 %v1529, 59
      %v2766 = vpop.permute.xlu0 %2765
      %2767 = vrot.lane.b32.xlu0 %v1530, 59
      %v2768 = vpop.permute.xlu0 %2767
      %2769 = vrot.lane.b32.xlu0 %v1531, 59
      %v2770 = vpop.permute.xlu0 %2769
      %2771 = vrot.lane.b32.xlu0 %v1532, 59
      %v2772 = vpop.permute.xlu0 %2771
      %2773 = vrot.lane.b32.xlu0 %v1533, 59
      %v2774 = vpop.permute.xlu0 %2773
      %2775 = vrot.lane.b32.xlu0 %v1534, 59
      %v2776 = vpop.permute.xlu0 %2775
      %2777 = vrot.lane.b32.xlu0 %v1535, 59
      %v2778 = vpop.permute.xlu0 %2777
      %2779 = vrot.lane.b32.xlu0 %v1536, 59
      %v2780 = vpop.permute.xlu0 %2779
      %2781 = vrot.lane.b32.xlu0 %v1537, 59
      %v2782 = vpop.permute.xlu0 %2781
      %2783 = vrot.lane.b32.xlu0 %v1538, 59
      %v2784 = vpop.permute.xlu0 %2783
      %2785 = vrot.lane.b32.xlu0 %v1539, 59
      %v2786 = vpop.permute.xlu0 %2785
      %2787 = vrot.lane.b32.xlu0 %v1540, 59
      %v2788 = vpop.permute.xlu0 %2787
      %2789 = vrot.lane.b32.xlu0 %v1541, 59
      %v2790 = vpop.permute.xlu0 %2789
      %2791 = vrot.lane.b32.xlu0 %v1542, 59
      %v2792 = vpop.permute.xlu0 %2791
      %2793 = vrot.lane.b32.xlu0 %v1543, 59
      %v2794 = vpop.permute.xlu0 %2793
      %2795 = vrot.lane.b32.xlu0 %v1544, 59
      %v2796 = vpop.permute.xlu0 %2795
      %2797 = vrot.lane.b32.xlu0 %v1545, 59
      %v2798 = vpop.permute.xlu0 %2797
      %2799 = vrot.lane.b32.xlu0 %v1546, 59
      %v2800 = vpop.permute.xlu0 %2799
      %2801 = vrot.lane.b32.xlu0 %v1547, 59
      %v2802 = vpop.permute.xlu0 %2801
      %2803 = vrot.lane.b32.xlu0 %v1548, 59
      %v2804 = vpop.permute.xlu0 %2803
      %2805 = vrot.lane.b32.xlu0 %v1549, 59
      %v2806 = vpop.permute.xlu0 %2805
      %2807 = vrot.lane.b32.xlu0 %v1550, 59
      %v2808 = vpop.permute.xlu0 %2807
      %2809 = vrot.lane.b32.xlu0 %v1551, 59
      %v2810 = vpop.permute.xlu0 %2809
      %2811 = vrot.lane.b32.xlu0 %v1552, 59
      %v2812 = vpop.permute.xlu0 %2811
      %2813 = vrot.lane.b32.xlu0 %v1553, 59
      %v2814 = vpop.permute.xlu0 %2813
      %2815 = vrot.lane.b32.xlu0 %v1554, 59
      %v2816 = vpop.permute.xlu0 %2815
      %2817 = vrot.lane.b32.xlu0 %v1555, 59
      %v2818 = vpop.permute.xlu0 %2817
      %2819 = vrot.lane.b32.xlu0 %v1556, 59
      %v2820 = vpop.permute.xlu0 %2819
      %2821 = vrot.lane.b32.xlu0 %v1557, 59
      %v2822 = vpop.permute.xlu0 %2821
      %2823 = vrot.lane.b32.xlu0 %v1558, 59
      %v2824 = vpop.permute.xlu0 %2823
      %2825 = vrot.lane.b32.xlu0 %v1559, 59
      %v2826 = vpop.permute.xlu0 %2825
      %2827 = vrot.lane.b32.xlu0 %v1560, 59
      %v2828 = vpop.permute.xlu0 %2827
      %vm2829 = vcmask 482304
      %v2830 = vsel %vm2829, %v2714, %v2716
      %v2831 = vsel %vm2829, %v2716, %v2718
      %v2832 = vsel %vm2829, %v2718, %v2720
      %v2833 = vsel %vm2829, %v2720, %v2722
      %v2834 = vsel %vm2829, %v2722, %v2724
      %v2835 = vsel %vm2829, %v2724, %v2726
      %v2836 = vsel %vm2829, %v2726, %v2728
      %v2837 = vsel %vm2829, %v2728, %v2730
      %v2838 = vsel %vm2829, %v2730, %v2732
      %v2839 = vsel %vm2829, %v2732, %v2734
      %v2840 = vsel %vm2829, %v2734, %v2736
      %v2841 = vsel %vm2829, %v2736, %v2738
      %v2842 = vsel %vm2829, %v2738, %v2740
      %v2843 = vsel %vm2829, %v2740, %v2742
      %v2844 = vsel %vm2829, %v2742, %v2744
      %v2845 = vsel %vm2829, %v2744, %v2746
      %v2846 = vsel %vm2829, %v2746, %v2748
      %v2847 = vsel %vm2829, %v2748, %v2750
      %v2848 = vsel %vm2829, %v2750, %v2752
      %v2849 = vsel %vm2829, %v2752, %v2754
      %v2850 = vsel %vm2829, %v2754, %v2756
      %v2851 = vsel %vm2829, %v2756, %v2758
      %v2852 = vsel %vm2829, %v2758, %v2760
      %v2853 = vsel %vm2829, %v2760, %v2762
      %v2854 = vsel %vm2829, %v2762, %v2764
      %v2855 = vsel %vm2829, %v2764, %v2766
      %v2856 = vsel %vm2829, %v2766, %v2768
      %v2857 = vsel %vm2829, %v2768, %v2770
      %v2858 = vsel %vm2829, %v2770, %v2772
      %v2859 = vsel %vm2829, %v2772, %v2774
      %v2860 = vsel %vm2829, %v2774, %v2776
      %v2861 = vsel %vm2829, %v2776, %v2778
      %v2862 = vsel %vm2829, %v2778, %v2780
      %v2863 = vsel %vm2829, %v2780, %v2782
      %v2864 = vsel %vm2829, %v2782, %v2784
      %v2865 = vsel %vm2829, %v2784, %v2786
      %v2866 = vsel %vm2829, %v2786, %v2788
      %v2867 = vsel %vm2829, %v2788, %v2790
      %v2868 = vsel %vm2829, %v2790, %v2792
      %v2869 = vsel %vm2829, %v2792, %v2794
      %v2870 = vsel %vm2829, %v2794, %v2796
      %v2871 = vsel %vm2829, %v2796, %v2798
      %v2872 = vsel %vm2829, %v2798, %v2800
      %v2873 = vsel %vm2829, %v2800, %v2802
      %v2874 = vsel %vm2829, %v2802, %v2804
      %v2875 = vsel %vm2829, %v2804, %v2806
      %v2876 = vsel %vm2829, %v2806, %v2808
      %v2877 = vsel %vm2829, %v2808, %v2810
      %v2878 = vsel %vm2829, %v2810, %v2812
      %v2879 = vsel %vm2829, %v2812, %v2814
      %v2880 = vsel %vm2829, %v2814, %v2816
      %v2881 = vsel %vm2829, %v2816, %v2818
      %v2882 = vsel %vm2829, %v2818, %v2820
      %v2883 = vsel %vm2829, %v2820, %v2822
      %v2884 = vsel %vm2829, %v2822, %v2824
      %v2885 = vsel %vm2829, %v2824, %v2826
      %v2886 = vsel %vm2829, %v2826, %v2828
      %2944 = vst [vmem:[#allocation2 + $0x1c8] sm:$0xc0] %v2830
      %2945 = vst [vmem:[#allocation2 + $0x1d0] sm:$0xc0] %v2831
      %2946 = vst [vmem:[#allocation2 + $0x1d8] sm:$0xc0] %v2832
      %2947 = vst [vmem:[#allocation2 + $0x1e0] sm:$0xc0] %v2833
      %2948 = vst [vmem:[#allocation2 + $0x1e8] sm:$0xc0] %v2834
      %2949 = vst [vmem:[#allocation2 + $0x1f0] sm:$0xc0] %v2835
      %2950 = vst [vmem:[#allocation2 + $0x1f8] sm:$0xc0] %v2836
      %2951 = vst [vmem:[#allocation2 + $0x200] sm:$0xc0] %v2837
      %2952 = vst [vmem:[#allocation2 + $0x208] sm:$0xc0] %v2838
      %2953 = vst [vmem:[#allocation2 + $0x210] sm:$0xc0] %v2839
      %2954 = vst [vmem:[#allocation2 + $0x218] sm:$0xc0] %v2840
      %2955 = vst [vmem:[#allocation2 + $0x220] sm:$0xc0] %v2841
      %2956 = vst [vmem:[#allocation2 + $0x228] sm:$0xc0] %v2842
      %2957 = vst [vmem:[#allocation2 + $0x230] sm:$0xc0] %v2843
      %2958 = vst [vmem:[#allocation2 + $0x238] sm:$0xc0] %v2844
      %2959 = vst [vmem:[#allocation2 + $0x240] sm:$0xc0] %v2845
      %2960 = vst [vmem:[#allocation2 + $0x248] sm:$0xc0] %v2846
      %2961 = vst [vmem:[#allocation2 + $0x250] sm:$0xc0] %v2847
      %2962 = vst [vmem:[#allocation2 + $0x258] sm:$0xc0] %v2848
      %2963 = vst [vmem:[#allocation2 + $0x260] sm:$0xc0] %v2849
      %2964 = vst [vmem:[#allocation2 + $0x268] sm:$0xc0] %v2850
      %2965 = vst [vmem:[#allocation2 + $0x270] sm:$0xc0] %v2851
      %2966 = vst [vmem:[#allocation2 + $0x278] sm:$0xc0] %v2852
      %2967 = vst [vmem:[#allocation2 + $0x280] sm:$0xc0] %v2853
      %2968 = vst [vmem:[#allocation2 + $0x288] sm:$0xc0] %v2854
      %2969 = vst [vmem:[#allocation2 + $0x290] sm:$0xc0] %v2855
      %2970 = vst [vmem:[#allocation2 + $0x298] sm:$0xc0] %v2856
      %2971 = vst [vmem:[#allocation2 + $0x2a0] sm:$0xc0] %v2857
      %2972 = vst [vmem:[#allocation2 + $0x2a8] sm:$0xc0] %v2858
      %2973 = vst [vmem:[#allocation2 + $0x2b0] sm:$0xc0] %v2859
      %2974 = vst [vmem:[#allocation2 + $0x2b8] sm:$0xc0] %v2860
      %2975 = vst [vmem:[#allocation2 + $0x2c0] sm:$0xc0] %v2861
      %2976 = vst [vmem:[#allocation2 + $0x2c8] sm:$0xc0] %v2862
      %2977 = vst [vmem:[#allocation2 + $0x2d0] sm:$0xc0] %v2863
      %2978 = vst [vmem:[#allocation2 + $0x2d8] sm:$0xc0] %v2864
      %2979 = vst [vmem:[#allocation2 + $0x2e0] sm:$0xc0] %v2865
      %2980 = vst [vmem:[#allocation2 + $0x2e8] sm:$0xc0] %v2866
      %2981 = vst [vmem:[#allocation2 + $0x2f0] sm:$0xc0] %v2867
      %2982 = vst [vmem:[#allocation2 + $0x2f8] sm:$0xc0] %v2868
      %2983 = vst [vmem:[#allocation2 + $0x300] sm:$0xc0] %v2869
      %2984 = vst [vmem:[#allocation2 + $0x308] sm:$0xc0] %v2870
      %2985 = vst [vmem:[#allocation2 + $0x310] sm:$0xc0] %v2871
      %2986 = vst [vmem:[#allocation2 + $0x318] sm:$0xc0] %v2872
      %2987 = vst [vmem:[#allocation2 + $0x320] sm:$0xc0] %v2873
      %2988 = vst [vmem:[#allocation2 + $0x328] sm:$0xc0] %v2874
      %2989 = vst [vmem:[#allocation2 + $0x330] sm:$0xc0] %v2875
      %2990 = vst [vmem:[#allocation2 + $0x338] sm:$0xc0] %v2876
      %2991 = vst [vmem:[#allocation2 + $0x340] sm:$0xc0] %v2877
      %2992 = vst [vmem:[#allocation2 + $0x348] sm:$0xc0] %v2878
      %2993 = vst [vmem:[#allocation2 + $0x350] sm:$0xc0] %v2879
      %2994 = vst [vmem:[#allocation2 + $0x358] sm:$0xc0] %v2880
      %2995 = vst [vmem:[#allocation2 + $0x360] sm:$0xc0] %v2881
      %2996 = vst [vmem:[#allocation2 + $0x368] sm:$0xc0] %v2882
      %2997 = vst [vmem:[#allocation2 + $0x370] sm:$0xc0] %v2883
      %2998 = vst [vmem:[#allocation2 + $0x378] sm:$0xc0] %v2884
      %2999 = vst [vmem:[#allocation2 + $0x380] sm:$0xc0] %v2885
      %3000 = vst [vmem:[#allocation2 + $0x388] sm:$0xc0] %v2886
      %3001 = vrot.lane.b32.xlu0 %v370, 58
      %v3002 = vpop.permute.xlu0 %3001
      %3003 = vrot.lane.b32.xlu0 %v378, 58
      %v3004 = vpop.permute.xlu0 %3003
      %3005 = vrot.lane.b32.xlu0 %v377, 58
      %v3006 = vpop.permute.xlu0 %3005
      %3007 = vrot.lane.b32.xlu0 %v379, 58
      %v3008 = vpop.permute.xlu0 %3007
      %3009 = vrot.lane.b32.xlu0 %v387, 58
      %v3010 = vpop.permute.xlu0 %3009
      %3011 = vrot.lane.b32.xlu0 %v395, 58
      %v3012 = vpop.permute.xlu0 %3011
      %3013 = vrot.lane.b32.xlu0 %v394, 58
      %v3014 = vpop.permute.xlu0 %3013
      %3015 = vrot.lane.b32.xlu0 %v396, 58
      %v3016 = vpop.permute.xlu0 %3015
      %3017 = vrot.lane.b32.xlu0 %v404, 58
      %v3018 = vpop.permute.xlu0 %3017
      %3019 = vrot.lane.b32.xlu0 %v412, 58
      %v3020 = vpop.permute.xlu0 %3019
      %3021 = vrot.lane.b32.xlu0 %v411, 58
      %v3022 = vpop.permute.xlu0 %3021
      %3023 = vrot.lane.b32.xlu0 %v413, 58
      %v3024 = vpop.permute.xlu0 %3023
      %3025 = vrot.lane.b32.xlu0 %v421, 58
      %v3026 = vpop.permute.xlu0 %3025
      %3027 = vrot.lane.b32.xlu0 %v429, 58
      %v3028 = vpop.permute.xlu0 %3027
      %3029 = vrot.lane.b32.xlu0 %v428, 58
      %v3030 = vpop.permute.xlu0 %3029
      %3031 = vrot.lane.b32.xlu0 %v430, 58
      %v3032 = vpop.permute.xlu0 %3031
      %3033 = vrot.lane.b32.xlu0 %v438, 58
      %v3034 = vpop.permute.xlu0 %3033
      %3035 = vrot.lane.b32.xlu0 %v446, 58
      %v3036 = vpop.permute.xlu0 %3035
      %3037 = vrot.lane.b32.xlu0 %v445, 58
      %v3038 = vpop.permute.xlu0 %3037
      %3039 = vrot.lane.b32.xlu0 %v447, 58
      %v3040 = vpop.permute.xlu0 %3039
      %3041 = vrot.lane.b32.xlu0 %v455, 58
      %v3042 = vpop.permute.xlu0 %3041
      %3043 = vrot.lane.b32.xlu0 %v463, 58
      %v3044 = vpop.permute.xlu0 %3043
      %3045 = vrot.lane.b32.xlu0 %v462, 58
      %v3046 = vpop.permute.xlu0 %3045
      %3047 = vrot.lane.b32.xlu0 %v464, 58
      %v3048 = vpop.permute.xlu0 %3047
      %3049 = vrot.lane.b32.xlu0 %v472, 58
      %v3050 = vpop.permute.xlu0 %3049
      %3051 = vrot.lane.b32.xlu0 %v480, 58
      %v3052 = vpop.permute.xlu0 %3051
      %3053 = vrot.lane.b32.xlu0 %v479, 58
      %v3054 = vpop.permute.xlu0 %3053
      %3055 = vrot.lane.b32.xlu0 %v481, 58
      %v3056 = vpop.permute.xlu0 %3055
      %3057 = vrot.lane.b32.xlu0 %v489, 58
      %v3058 = vpop.permute.xlu0 %3057
      %3059 = vrot.lane.b32.xlu0 %v497, 58
      %v3060 = vpop.permute.xlu0 %3059
      %3061 = vrot.lane.b32.xlu0 %v496, 58
      %v3062 = vpop.permute.xlu0 %3061
      %3063 = vrot.lane.b32.xlu0 %v498, 58
      %v3064 = vpop.permute.xlu0 %3063
      %3065 = vrot.lane.b32.xlu0 %v506, 58
      %v3066 = vpop.permute.xlu0 %3065
      %3067 = vrot.lane.b32.xlu0 %v514, 58
      %v3068 = vpop.permute.xlu0 %3067
      %3069 = vrot.lane.b32.xlu0 %v513, 58
      %v3070 = vpop.permute.xlu0 %3069
      %3071 = vrot.lane.b32.xlu0 %v515, 58
      %v3072 = vpop.permute.xlu0 %3071
      %3073 = vrot.lane.b32.xlu0 %v523, 58
      %v3074 = vpop.permute.xlu0 %3073
      %3075 = vrot.lane.b32.xlu0 %v531, 58
      %v3076 = vpop.permute.xlu0 %3075
      %3077 = vrot.lane.b32.xlu0 %v530, 58
      %v3078 = vpop.permute.xlu0 %3077
      %3079 = vrot.lane.b32.xlu0 %v532, 58
      %v3080 = vpop.permute.xlu0 %3079
      %3081 = vrot.lane.b32.xlu0 %v540, 58
      %v3082 = vpop.permute.xlu0 %3081
      %3083 = vrot.lane.b32.xlu0 %v548, 58
      %v3084 = vpop.permute.xlu0 %3083
      %3085 = vrot.lane.b32.xlu0 %v547, 58
      %v3086 = vpop.permute.xlu0 %3085
      %3087 = vrot.lane.b32.xlu0 %v549, 58
      %v3088 = vpop.permute.xlu0 %3087
      %3089 = vrot.lane.b32.xlu0 %v557, 58
      %v3090 = vpop.permute.xlu0 %3089
      %3091 = vrot.lane.b32.xlu0 %v565, 58
      %v3092 = vpop.permute.xlu0 %3091
      %3093 = vrot.lane.b32.xlu0 %v564, 58
      %v3094 = vpop.permute.xlu0 %3093
      %3095 = vrot.lane.b32.xlu0 %v566, 58
      %v3096 = vpop.permute.xlu0 %3095
      %3097 = vrot.lane.b32.xlu0 %v574, 58
      %v3098 = vpop.permute.xlu0 %3097
      %3099 = vrot.lane.b32.xlu0 %v582, 58
      %v3100 = vpop.permute.xlu0 %3099
      %3101 = vrot.lane.b32.xlu0 %v581, 58
      %v3102 = vpop.permute.xlu0 %3101
      %3103 = vrot.lane.b32.xlu0 %v583, 58
      %v3104 = vpop.permute.xlu0 %3103
      %3105 = vrot.lane.b32.xlu0 %v591, 58
      %v3106 = vpop.permute.xlu0 %3105
      %3107 = vrot.lane.b32.xlu0 %v599, 58
      %v3108 = vpop.permute.xlu0 %3107
      %3109 = vrot.lane.b32.xlu0 %v598, 58
      %v3110 = vpop.permute.xlu0 %3109
      %3111 = vrot.lane.b32.xlu0 %v600, 58
      %v3112 = vpop.permute.xlu0 %3111
      %3113 = vrot.lane.b32.xlu0 %v607, 58
      %v3114 = vpop.permute.xlu0 %3113
      %3115 = vrot.lane.b32.xlu0 %v677, 58
      %v3116 = vpop.permute.xlu0 %3115
      %vm3117 = vcmask 474112
      %v3118 = vsel %vm3117, %v3002, %v3004
      %v3119 = vsel %vm3117, %v3004, %v3006
      %v3120 = vsel %vm3117, %v3006, %v3008
      %v3121 = vsel %vm3117, %v3008, %v3010
      %v3122 = vsel %vm3117, %v3010, %v3012
      %v3123 = vsel %vm3117, %v3012, %v3014
      %v3124 = vsel %vm3117, %v3014, %v3016
      %v3125 = vsel %vm3117, %v3016, %v3018
      %v3126 = vsel %vm3117, %v3018, %v3020
      %v3127 = vsel %vm3117, %v3020, %v3022
      %v3128 = vsel %vm3117, %v3022, %v3024
      %v3129 = vsel %vm3117, %v3024, %v3026
      %v3130 = vsel %vm3117, %v3026, %v3028
      %v3131 = vsel %vm3117, %v3028, %v3030
      %v3132 = vsel %vm3117, %v3030, %v3032
      %v3133 = vsel %vm3117, %v3032, %v3034
      %v3134 = vsel %vm3117, %v3034, %v3036
      %v3135 = vsel %vm3117, %v3036, %v3038
      %v3136 = vsel %vm3117, %v3038, %v3040
      %v3137 = vsel %vm3117, %v3040, %v3042
      %v3138 = vsel %vm3117, %v3042, %v3044
      %v3139 = vsel %vm3117, %v3044, %v3046
      %v3140 = vsel %vm3117, %v3046, %v3048
      %v3141 = vsel %vm3117, %v3048, %v3050
      %v3142 = vsel %vm3117, %v3050, %v3052
      %v3143 = vsel %vm3117, %v3052, %v3054
      %v3144 = vsel %vm3117, %v3054, %v3056
      %v3145 = vsel %vm3117, %v3056, %v3058
      %v3146 = vsel %vm3117, %v3058, %v3060
      %v3147 = vsel %vm3117, %v3060, %v3062
      %v3148 = vsel %vm3117, %v3062, %v3064
      %v3149 = vsel %vm3117, %v3064, %v3066
      %v3150 = vsel %vm3117, %v3066, %v3068
      %v3151 = vsel %vm3117, %v3068, %v3070
      %v3152 = vsel %vm3117, %v3070, %v3072
      %v3153 = vsel %vm3117, %v3072, %v3074
      %v3154 = vsel %vm3117, %v3074, %v3076
      %v3155 = vsel %vm3117, %v3076, %v3078
      %v3156 = vsel %vm3117, %v3078, %v3080
      %v3157 = vsel %vm3117, %v3080, %v3082
      %v3158 = vsel %vm3117, %v3082, %v3084
      %v3159 = vsel %vm3117, %v3084, %v3086
      %v3160 = vsel %vm3117, %v3086, %v3088
      %v3161 = vsel %vm3117, %v3088, %v3090
      %v3162 = vsel %vm3117, %v3090, %v3092
      %v3163 = vsel %vm3117, %v3092, %v3094
      %v3164 = vsel %vm3117, %v3094, %v3096
      %v3165 = vsel %vm3117, %v3096, %v3098
      %v3166 = vsel %vm3117, %v3098, %v3100
      %v3167 = vsel %vm3117, %v3100, %v3102
      %v3168 = vsel %vm3117, %v3102, %v3104
      %v3169 = vsel %vm3117, %v3104, %v3106
      %v3170 = vsel %vm3117, %v3106, %v3108
      %v3171 = vsel %vm3117, %v3108, %v3110
      %v3172 = vsel %vm3117, %v3110, %v3112
      %v3173 = vsel %vm3117, %v3112, %v3114
      %v3174 = vsel %vm3117, %v3114, %v3116
      %3232 = vst [vmem:[#allocation2 + $0x390] sm:$0x3] %v3118
      %3233 = vst [vmem:[#allocation2 + $0x398] sm:$0x3] %v3119
      %3234 = vst [vmem:[#allocation2 + $0x3a0] sm:$0x3] %v3120
      %3235 = vst [vmem:[#allocation2 + $0x3a8] sm:$0x3] %v3121
      %3236 = vst [vmem:[#allocation2 + $0x3b0] sm:$0x3] %v3122
      %3237 = vst [vmem:[#allocation2 + $0x3b8] sm:$0x3] %v3123
      %3238 = vst [vmem:[#allocation2 + $0x3c0] sm:$0x3] %v3124
      %3239 = vst [vmem:[#allocation2 + $0x3c8] sm:$0x3] %v3125
      %3240 = vst [vmem:[#allocation2 + $0x3d0] sm:$0x3] %v3126
      %3241 = vst [vmem:[#allocation2 + $0x3d8] sm:$0x3] %v3127
      %3242 = vst [vmem:[#allocation2 + $0x3e0] sm:$0x3] %v3128
      %3243 = vst [vmem:[#allocation2 + $0x3e8] sm:$0x3] %v3129
      %3244 = vst [vmem:[#allocation2 + $0x3f0] sm:$0x3] %v3130
      %3245 = vst [vmem:[#allocation2 + $0x3f8] sm:$0x3] %v3131
      %3246 = vst [vmem:[#allocation2 + $0x400] sm:$0x3] %v3132
      %3247 = vst [vmem:[#allocation2 + $0x408] sm:$0x3] %v3133
      %3248 = vst [vmem:[#allocation2 + $0x410] sm:$0x3] %v3134
      %3249 = vst [vmem:[#allocation2 + $0x418] sm:$0x3] %v3135
      %3250 = vst [vmem:[#allocation2 + $0x420] sm:$0x3] %v3136
      %3251 = vst [vmem:[#allocation2 + $0x428] sm:$0x3] %v3137
      %3252 = vst [vmem:[#allocation2 + $0x430] sm:$0x3] %v3138
      %3253 = vst [vmem:[#allocation2 + $0x438] sm:$0x3] %v3139
      %3254 = vst [vmem:[#allocation2 + $0x440] sm:$0x3] %v3140
      %3255 = vst [vmem:[#allocation2 + $0x448] sm:$0x3] %v3141
      %3256 = vst [vmem:[#allocation2 + $0x450] sm:$0x3] %v3142
      %3257 = vst [vmem:[#allocation2 + $0x458] sm:$0x3] %v3143
      %3258 = vst [vmem:[#allocation2 + $0x460] sm:$0x3] %v3144
      %3259 = vst [vmem:[#allocation2 + $0x468] sm:$0x3] %v3145
      %3260 = vst [vmem:[#allocation2 + $0x470] sm:$0x3] %v3146
      %3261 = vst [vmem:[#allocation2 + $0x478] sm:$0x3] %v3147
      %3262 = vst [vmem:[#allocation2 + $0x480] sm:$0x3] %v3148
      %3263 = vst [vmem:[#allocation2 + $0x488] sm:$0x3] %v3149
      %3264 = vst [vmem:[#allocation2 + $0x490] sm:$0x3] %v3150
      %3265 = vst [vmem:[#allocation2 + $0x498] sm:$0x3] %v3151
      %3266 = vst [vmem:[#allocation2 + $0x4a0] sm:$0x3] %v3152
      %3267 = vst [vmem:[#allocation2 + $0x4a8] sm:$0x3] %v3153
      %3268 = vst [vmem:[#allocation2 + $0x4b0] sm:$0x3] %v3154
      %3269 = vst [vmem:[#allocation2 + $0x4b8] sm:$0x3] %v3155
      %3270 = vst [vmem:[#allocation2 + $0x4c0] sm:$0x3] %v3156
      %3271 = vst [vmem:[#allocation2 + $0x4c8] sm:$0x3] %v3157
      %3272 = vst [vmem:[#allocation2 + $0x4d0] sm:$0x3] %v3158
      %3273 = vst [vmem:[#allocation2 + $0x4d8] sm:$0x3] %v3159
      %3274 = vst [vmem:[#allocation2 + $0x4e0] sm:$0x3] %v3160
      %3275 = vst [vmem:[#allocation2 + $0x4e8] sm:$0x3] %v3161
      %3276 = vst [vmem:[#allocation2 + $0x4f0] sm:$0x3] %v3162
      %3277 = vst [vmem:[#allocation2 + $0x4f8] sm:$0x3] %v3163
      %3278 = vst [vmem:[#allocation2 + $0x500] sm:$0x3] %v3164
      %3279 = vst [vmem:[#allocation2 + $0x508] sm:$0x3] %v3165
      %3280 = vst [vmem:[#allocation2 + $0x510] sm:$0x3] %v3166
      %3281 = vst [vmem:[#allocation2 + $0x518] sm:$0x3] %v3167
      %3282 = vst [vmem:[#allocation2 + $0x520] sm:$0x3] %v3168
      %3283 = vst [vmem:[#allocation2 + $0x528] sm:$0x3] %v3169
      %3284 = vst [vmem:[#allocation2 + $0x530] sm:$0x3] %v3170
      %3285 = vst [vmem:[#allocation2 + $0x538] sm:$0x3] %v3171
      %3286 = vst [vmem:[#allocation2 + $0x540] sm:$0x3] %v3172
      %3287 = vst [vmem:[#allocation2 + $0x548] sm:$0x3] %v3173
      %3288 = vst [vmem:[#allocation2 + $0x550] sm:$0x3] %v3174
      %v3289 = vrot.slane %v685, 6
      %v3290 = vrot.slane %v684, 6
      %v3291 = vrot.slane %v686, 6
      %v3292 = vrot.slane %v694, 6
      %v3293 = vrot.slane %v702, 6
      %v3294 = vrot.slane %v701, 6
      %v3295 = vrot.slane %v703, 6
      %v3296 = vrot.slane %v711, 6
      %v3297 = vrot.slane %v719, 6
      %3298 = vrot.lane.b32.xlu0 %v820, 124
      %v3299 = vpop.permute.xlu0 %3298
      %3300 = vrot.lane.b32.xlu0 %v821, 124
      %v3301 = vpop.permute.xlu0 %3300
      %3302 = vrot.lane.b32.xlu0 %v822, 124
      %v3303 = vpop.permute.xlu0 %3302
      %3304 = vrot.lane.b32.xlu0 %v823, 124
      %v3305 = vpop.permute.xlu0 %3304
      %3306 = vrot.lane.b32.xlu0 %v824, 124
      %v3307 = vpop.permute.xlu0 %3306
      %3308 = vrot.lane.b32.xlu0 %v825, 124
      %v3309 = vpop.permute.xlu0 %3308
      %3310 = vrot.lane.b32.xlu0 %v826, 124
      %v3311 = vpop.permute.xlu0 %3310
      %3312 = vrot.lane.b32.xlu0 %v827, 124
      %v3313 = vpop.permute.xlu0 %3312
      %3314 = vrot.lane.b32.xlu0 %v828, 124
      %v3315 = vpop.permute.xlu0 %3314
      %3316 = vrot.lane.b32.xlu0 %v829, 124
      %v3317 = vpop.permute.xlu0 %3316
      %3318 = vrot.lane.b32.xlu0 %v830, 124
      %v3319 = vpop.permute.xlu0 %3318
      %3320 = vrot.lane.b32.xlu0 %v831, 124
      %v3321 = vpop.permute.xlu0 %3320
      %3322 = vrot.lane.b32.xlu0 %v832, 124
      %v3323 = vpop.permute.xlu0 %3322
      %3324 = vrot.lane.b32.xlu0 %v833, 124
      %v3325 = vpop.permute.xlu0 %3324
      %3326 = vrot.lane.b32.xlu0 %v834, 124
      %v3327 = vpop.permute.xlu0 %3326
      %3328 = vrot.lane.b32.xlu0 %v835, 124
      %v3329 = vpop.permute.xlu0 %3328
      %3330 = vrot.lane.b32.xlu0 %v836, 124
      %v3331 = vpop.permute.xlu0 %3330
      %3332 = vrot.lane.b32.xlu0 %v837, 124
      %v3333 = vpop.permute.xlu0 %3332
      %3334 = vrot.lane.b32.xlu0 %v838, 124
      %v3335 = vpop.permute.xlu0 %3334
      %3336 = vrot.lane.b32.xlu0 %v839, 124
      %v3337 = vpop.permute.xlu0 %3336
      %3338 = vrot.lane.b32.xlu0 %v840, 124
      %v3339 = vpop.permute.xlu0 %3338
      %3340 = vrot.lane.b32.xlu0 %v841, 124
      %v3341 = vpop.permute.xlu0 %3340
      %3342 = vrot.lane.b32.xlu0 %v842, 124
      %v3343 = vpop.permute.xlu0 %3342
      %3344 = vrot.lane.b32.xlu0 %v843, 124
      %v3345 = vpop.permute.xlu0 %3344
      %3346 = vrot.lane.b32.xlu0 %v844, 124
      %v3347 = vpop.permute.xlu0 %3346
      %3348 = vrot.lane.b32.xlu0 %v845, 124
      %v3349 = vpop.permute.xlu0 %3348
      %3350 = vrot.lane.b32.xlu0 %v846, 124
      %v3351 = vpop.permute.xlu0 %3350
      %3352 = vrot.lane.b32.xlu0 %v847, 124
      %v3353 = vpop.permute.xlu0 %3352
      %3354 = vrot.lane.b32.xlu0 %v848, 124
      %v3355 = vpop.permute.xlu0 %3354
      %3356 = vrot.lane.b32.xlu0 %v849, 124
      %v3357 = vpop.permute.xlu0 %3356
      %3358 = vrot.lane.b32.xlu0 %v850, 124
      %v3359 = vpop.permute.xlu0 %3358
      %3360 = vrot.lane.b32.xlu0 %v851, 124
      %v3361 = vpop.permute.xlu0 %3360
      %3362 = vrot.lane.b32.xlu0 %v852, 124
      %v3363 = vpop.permute.xlu0 %3362
      %3364 = vrot.lane.b32.xlu0 %v853, 124
      %v3365 = vpop.permute.xlu0 %3364
      %3366 = vrot.lane.b32.xlu0 %v854, 124
      %v3367 = vpop.permute.xlu0 %3366
      %3368 = vrot.lane.b32.xlu0 %v855, 124
      %v3369 = vpop.permute.xlu0 %3368
      %3370 = vrot.lane.b32.xlu0 %v856, 124
      %v3371 = vpop.permute.xlu0 %3370
      %3372 = vrot.lane.b32.xlu0 %v857, 124
      %v3373 = vpop.permute.xlu0 %3372
      %3374 = vrot.lane.b32.xlu0 %v858, 124
      %v3375 = vpop.permute.xlu0 %3374
      %3376 = vrot.lane.b32.xlu0 %v859, 124
      %v3377 = vpop.permute.xlu0 %3376
      %3378 = vrot.lane.b32.xlu0 %v860, 124
      %v3379 = vpop.permute.xlu0 %3378
      %3380 = vrot.lane.b32.xlu0 %v861, 124
      %v3381 = vpop.permute.xlu0 %3380
      %3382 = vrot.lane.b32.xlu0 %v862, 124
      %v3383 = vpop.permute.xlu0 %3382
      %3384 = vrot.lane.b32.xlu0 %v863, 124
      %v3385 = vpop.permute.xlu0 %3384
      %3386 = vrot.lane.b32.xlu0 %v864, 124
      %v3387 = vpop.permute.xlu0 %3386
      %3388 = vrot.lane.b32.xlu0 %v865, 124
      %v3389 = vpop.permute.xlu0 %3388
      %3390 = vrot.lane.b32.xlu0 %v866, 124
      %v3391 = vpop.permute.xlu0 %3390
      %3392 = vrot.lane.b32.xlu0 %v867, 124
      %v3393 = vpop.permute.xlu0 %3392
      %3394 = vrot.lane.b32.xlu0 %v868, 124
      %v3395 = vpop.permute.xlu0 %3394
      %3396 = vrot.lane.b32.xlu0 %v3289, 124
      %v3397 = vpop.permute.xlu0 %3396
      %3398 = vrot.lane.b32.xlu0 %v3290, 124
      %v3399 = vpop.permute.xlu0 %3398
      %3400 = vrot.lane.b32.xlu0 %v3291, 124
      %v3401 = vpop.permute.xlu0 %3400
      %3402 = vrot.lane.b32.xlu0 %v3292, 124
      %v3403 = vpop.permute.xlu0 %3402
      %3404 = vrot.lane.b32.xlu0 %v3293, 124
      %v3405 = vpop.permute.xlu0 %3404
      %3406 = vrot.lane.b32.xlu0 %v3294, 124
      %v3407 = vpop.permute.xlu0 %3406
      %3408 = vrot.lane.b32.xlu0 %v3295, 124
      %v3409 = vpop.permute.xlu0 %3408
      %3410 = vrot.lane.b32.xlu0 %v3296, 124
      %v3411 = vpop.permute.xlu0 %3410
      %3412 = vrot.lane.b32.xlu0 %v3297, 124
      %v3413 = vpop.permute.xlu0 %3412
      %vm3414 = vcmask 1014784
      %v3415 = vsel %vm3414, %v3299, %v3301
      %v3416 = vsel %vm3414, %v3301, %v3303
      %v3417 = vsel %vm3414, %v3303, %v3305
      %v3418 = vsel %vm3414, %v3305, %v3307
      %v3419 = vsel %vm3414, %v3307, %v3309
      %v3420 = vsel %vm3414, %v3309, %v3311
      %v3421 = vsel %vm3414, %v3311, %v3313
      %v3422 = vsel %vm3414, %v3313, %v3315
      %v3423 = vsel %vm3414, %v3315, %v3317
      %v3424 = vsel %vm3414, %v3317, %v3319
      %v3425 = vsel %vm3414, %v3319, %v3321
      %v3426 = vsel %vm3414, %v3321, %v3323
      %v3427 = vsel %vm3414, %v3323, %v3325
      %v3428 = vsel %vm3414, %v3325, %v3327
      %v3429 = vsel %vm3414, %v3327, %v3329
      %v3430 = vsel %vm3414, %v3329, %v3331
      %v3431 = vsel %vm3414, %v3331, %v3333
      %v3432 = vsel %vm3414, %v3333, %v3335
      %v3433 = vsel %vm3414, %v3335, %v3337
      %v3434 = vsel %vm3414, %v3337, %v3339
      %v3435 = vsel %vm3414, %v3339, %v3341
      %v3436 = vsel %vm3414, %v3341, %v3343
      %v3437 = vsel %vm3414, %v3343, %v3345
      %v3438 = vsel %vm3414, %v3345, %v3347
      %v3439 = vsel %vm3414, %v3347, %v3349
      %v3440 = vsel %vm3414, %v3349, %v3351
      %v3441 = vsel %vm3414, %v3351, %v3353
      %v3442 = vsel %vm3414, %v3353, %v3355
      %v3443 = vsel %vm3414, %v3355, %v3357
      %v3444 = vsel %vm3414, %v3357, %v3359
      %v3445 = vsel %vm3414, %v3359, %v3361
      %v3446 = vsel %vm3414, %v3361, %v3363
      %v3447 = vsel %vm3414, %v3363, %v3365
      %v3448 = vsel %vm3414, %v3365, %v3367
      %v3449 = vsel %vm3414, %v3367, %v3369
      %v3450 = vsel %vm3414, %v3369, %v3371
      %v3451 = vsel %vm3414, %v3371, %v3373
      %v3452 = vsel %vm3414, %v3373, %v3375
      %v3453 = vsel %vm3414, %v3375, %v3377
      %v3454 = vsel %vm3414, %v3377, %v3379
      %v3455 = vsel %vm3414, %v3379, %v3381
      %v3456 = vsel %vm3414, %v3381, %v3383
      %v3457 = vsel %vm3414, %v3383, %v3385
      %v3458 = vsel %vm3414, %v3385, %v3387
      %v3459 = vsel %vm3414, %v3387, %v3389
      %v3460 = vsel %vm3414, %v3389, %v3391
      %v3461 = vsel %vm3414, %v3391, %v3393
      %v3462 = vsel %vm3414, %v3393, %v3395
      %v3463 = vsel %vm3414, %v3395, %v3397
      %v3464 = vsel %vm3414, %v3397, %v3399
      %v3465 = vsel %vm3414, %v3399, %v3401
      %v3466 = vsel %vm3414, %v3401, %v3403
      %v3467 = vsel %vm3414, %v3403, %v3405
      %v3468 = vsel %vm3414, %v3405, %v3407
      %v3469 = vsel %vm3414, %v3407, %v3409
      %v3470 = vsel %vm3414, %v3409, %v3411
      %v3471 = vsel %vm3414, %v3411, %v3413
      %3529 = vst [vmem:[#allocation2 + $0x390] sm:$0xc] %v3415
      %3530 = vst [vmem:[#allocation2 + $0x398] sm:$0xc] %v3416
      %3531 = vst [vmem:[#allocation2 + $0x3a0] sm:$0xc] %v3417
      %3532 = vst [vmem:[#allocation2 + $0x3a8] sm:$0xc] %v3418
      %3533 = vst [vmem:[#allocation2 + $0x3b0] sm:$0xc] %v3419
      %3534 = vst [vmem:[#allocation2 + $0x3b8] sm:$0xc] %v3420
      %3535 = vst [vmem:[#allocation2 + $0x3c0] sm:$0xc] %v3421
      %3536 = vst [vmem:[#allocation2 + $0x3c8] sm:$0xc] %v3422
      %3537 = vst [vmem:[#allocation2 + $0x3d0] sm:$0xc] %v3423
      %3538 = vst [vmem:[#allocation2 + $0x3d8] sm:$0xc] %v3424
      %3539 = vst [vmem:[#allocation2 + $0x3e0] sm:$0xc] %v3425
      %3540 = vst [vmem:[#allocation2 + $0x3e8] sm:$0xc] %v3426
      %3541 = vst [vmem:[#allocation2 + $0x3f0] sm:$0xc] %v3427
      %3542 = vst [vmem:[#allocation2 + $0x3f8] sm:$0xc] %v3428
      %3543 = vst [vmem:[#allocation2 + $0x400] sm:$0xc] %v3429
      %3544 = vst [vmem:[#allocation2 + $0x408] sm:$0xc] %v3430
      %3545 = vst [vmem:[#allocation2 + $0x410] sm:$0xc] %v3431
      %3546 = vst [vmem:[#allocation2 + $0x418] sm:$0xc] %v3432
      %3547 = vst [vmem:[#allocation2 + $0x420] sm:$0xc] %v3433
      %3548 = vst [vmem:[#allocation2 + $0x428] sm:$0xc] %v3434
      %3549 = vst [vmem:[#allocation2 + $0x430] sm:$0xc] %v3435
      %3550 = vst [vmem:[#allocation2 + $0x438] sm:$0xc] %v3436
      %3551 = vst [vmem:[#allocation2 + $0x440] sm:$0xc] %v3437
      %3552 = vst [vmem:[#allocation2 + $0x448] sm:$0xc] %v3438
      %3553 = vst [vmem:[#allocation2 + $0x450] sm:$0xc] %v3439
      %3554 = vst [vmem:[#allocation2 + $0x458] sm:$0xc] %v3440
      %3555 = vst [vmem:[#allocation2 + $0x460] sm:$0xc] %v3441
      %3556 = vst [vmem:[#allocation2 + $0x468] sm:$0xc] %v3442
      %3557 = vst [vmem:[#allocation2 + $0x470] sm:$0xc] %v3443
      %3558 = vst [vmem:[#allocation2 + $0x478] sm:$0xc] %v3444
      %3559 = vst [vmem:[#allocation2 + $0x480] sm:$0xc] %v3445
      %3560 = vst [vmem:[#allocation2 + $0x488] sm:$0xc] %v3446
      %3561 = vst [vmem:[#allocation2 + $0x490] sm:$0xc] %v3447
      %3562 = vst [vmem:[#allocation2 + $0x498] sm:$0xc] %v3448
      %3563 = vst [vmem:[#allocation2 + $0x4a0] sm:$0xc] %v3449
      %3564 = vst [vmem:[#allocation2 + $0x4a8] sm:$0xc] %v3450
      %3565 = vst [vmem:[#allocation2 + $0x4b0] sm:$0xc] %v3451
      %3566 = vst [vmem:[#allocation2 + $0x4b8] sm:$0xc] %v3452
      %3567 = vst [vmem:[#allocation2 + $0x4c0] sm:$0xc] %v3453
      %3568 = vst [vmem:[#allocation2 + $0x4c8] sm:$0xc] %v3454
      %3569 = vst [vmem:[#allocation2 + $0x4d0] sm:$0xc] %v3455
      %3570 = vst [vmem:[#allocation2 + $0x4d8] sm:$0xc] %v3456
      %3571 = vst [vmem:[#allocation2 + $0x4e0] sm:$0xc] %v3457
      %3572 = vst [vmem:[#allocation2 + $0x4e8] sm:$0xc] %v3458
      %3573 = vst [vmem:[#allocation2 + $0x4f0] sm:$0xc] %v3459
      %3574 = vst [vmem:[#allocation2 + $0x4f8] sm:$0xc] %v3460
      %3575 = vst [vmem:[#allocation2 + $0x500] sm:$0xc] %v3461
      %3576 = vst [vmem:[#allocation2 + $0x508] sm:$0xc] %v3462
      %3577 = vst [vmem:[#allocation2 + $0x510] sm:$0xc] %v3463
      %3578 = vst [vmem:[#allocation2 + $0x518] sm:$0xc] %v3464
      %3579 = vst [vmem:[#allocation2 + $0x520] sm:$0xc] %v3465
      %3580 = vst [vmem:[#allocation2 + $0x528] sm:$0xc] %v3466
      %3581 = vst [vmem:[#allocation2 + $0x530] sm:$0xc] %v3467
      %3582 = vst [vmem:[#allocation2 + $0x538] sm:$0xc] %v3468
      %3583 = vst [vmem:[#allocation2 + $0x540] sm:$0xc] %v3469
      %3584 = vst [vmem:[#allocation2 + $0x548] sm:$0xc] %v3470
      %3585 = vst [vmem:[#allocation2 + $0x550] sm:$0xc] %v3471
      %v3586 = vrot.slane %v685, 4
      %v3587 = vrot.slane %v684, 4
      %v3588 = vrot.slane %v686, 4
      %v3589 = vrot.slane %v694, 4
      %v3590 = vrot.slane %v702, 4
      %v3591 = vrot.slane %v701, 4
      %v3592 = vrot.slane %v703, 4
      %v3593 = vrot.slane %v711, 4
      %v3594 = vrot.slane %v719, 4
      %3595 = vrot.lane.b32.xlu0 %v1166, 123
      %v3596 = vpop.permute.xlu0 %3595
      %3597 = vrot.lane.b32.xlu0 %v1167, 123
      %v3598 = vpop.permute.xlu0 %3597
      %3599 = vrot.lane.b32.xlu0 %v1168, 123
      %v3600 = vpop.permute.xlu0 %3599
      %3601 = vrot.lane.b32.xlu0 %v1169, 123
      %v3602 = vpop.permute.xlu0 %3601
      %3603 = vrot.lane.b32.xlu0 %v1170, 123
      %v3604 = vpop.permute.xlu0 %3603
      %3605 = vrot.lane.b32.xlu0 %v1171, 123
      %v3606 = vpop.permute.xlu0 %3605
      %3607 = vrot.lane.b32.xlu0 %v1172, 123
      %v3608 = vpop.permute.xlu0 %3607
      %3609 = vrot.lane.b32.xlu0 %v1173, 123
      %v3610 = vpop.permute.xlu0 %3609
      %3611 = vrot.lane.b32.xlu0 %v1174, 123
      %v3612 = vpop.permute.xlu0 %3611
      %3613 = vrot.lane.b32.xlu0 %v1175, 123
      %v3614 = vpop.permute.xlu0 %3613
      %3615 = vrot.lane.b32.xlu0 %v1176, 123
      %v3616 = vpop.permute.xlu0 %3615
      %3617 = vrot.lane.b32.xlu0 %v1177, 123
      %v3618 = vpop.permute.xlu0 %3617
      %3619 = vrot.lane.b32.xlu0 %v1178, 123
      %v3620 = vpop.permute.xlu0 %3619
      %3621 = vrot.lane.b32.xlu0 %v1179, 123
      %v3622 = vpop.permute.xlu0 %3621
      %3623 = vrot.lane.b32.xlu0 %v1180, 123
      %v3624 = vpop.permute.xlu0 %3623
      %3625 = vrot.lane.b32.xlu0 %v1181, 123
      %v3626 = vpop.permute.xlu0 %3625
      %3627 = vrot.lane.b32.xlu0 %v1182, 123
      %v3628 = vpop.permute.xlu0 %3627
      %3629 = vrot.lane.b32.xlu0 %v1183, 123
      %v3630 = vpop.permute.xlu0 %3629
      %3631 = vrot.lane.b32.xlu0 %v1184, 123
      %v3632 = vpop.permute.xlu0 %3631
      %3633 = vrot.lane.b32.xlu0 %v1185, 123
      %v3634 = vpop.permute.xlu0 %3633
      %3635 = vrot.lane.b32.xlu0 %v1186, 123
      %v3636 = vpop.permute.xlu0 %3635
      %3637 = vrot.lane.b32.xlu0 %v1187, 123
      %v3638 = vpop.permute.xlu0 %3637
      %3639 = vrot.lane.b32.xlu0 %v1188, 123
      %v3640 = vpop.permute.xlu0 %3639
      %3641 = vrot.lane.b32.xlu0 %v1189, 123
      %v3642 = vpop.permute.xlu0 %3641
      %3643 = vrot.lane.b32.xlu0 %v1190, 123
      %v3644 = vpop.permute.xlu0 %3643
      %3645 = vrot.lane.b32.xlu0 %v1191, 123
      %v3646 = vpop.permute.xlu0 %3645
      %3647 = vrot.lane.b32.xlu0 %v1192, 123
      %v3648 = vpop.permute.xlu0 %3647
      %3649 = vrot.lane.b32.xlu0 %v1193, 123
      %v3650 = vpop.permute.xlu0 %3649
      %3651 = vrot.lane.b32.xlu0 %v1194, 123
      %v3652 = vpop.permute.xlu0 %3651
      %3653 = vrot.lane.b32.xlu0 %v1195, 123
      %v3654 = vpop.permute.xlu0 %3653
      %3655 = vrot.lane.b32.xlu0 %v1196, 123
      %v3656 = vpop.permute.xlu0 %3655
      %3657 = vrot.lane.b32.xlu0 %v1197, 123
      %v3658 = vpop.permute.xlu0 %3657
      %3659 = vrot.lane.b32.xlu0 %v1198, 123
      %v3660 = vpop.permute.xlu0 %3659
      %3661 = vrot.lane.b32.xlu0 %v1199, 123
      %v3662 = vpop.permute.xlu0 %3661
      %3663 = vrot.lane.b32.xlu0 %v1200, 123
      %v3664 = vpop.permute.xlu0 %3663
      %3665 = vrot.lane.b32.xlu0 %v1201, 123
      %v3666 = vpop.permute.xlu0 %3665
      %3667 = vrot.lane.b32.xlu0 %v1202, 123
      %v3668 = vpop.permute.xlu0 %3667
      %3669 = vrot.lane.b32.xlu0 %v1203, 123
      %v3670 = vpop.permute.xlu0 %3669
      %3671 = vrot.lane.b32.xlu0 %v1204, 123
      %v3672 = vpop.permute.xlu0 %3671
      %3673 = vrot.lane.b32.xlu0 %v1205, 123
      %v3674 = vpop.permute.xlu0 %3673
      %3675 = vrot.lane.b32.xlu0 %v1206, 123
      %v3676 = vpop.permute.xlu0 %3675
      %3677 = vrot.lane.b32.xlu0 %v1207, 123
      %v3678 = vpop.permute.xlu0 %3677
      %3679 = vrot.lane.b32.xlu0 %v1208, 123
      %v3680 = vpop.permute.xlu0 %3679
      %3681 = vrot.lane.b32.xlu0 %v1209, 123
      %v3682 = vpop.permute.xlu0 %3681
      %3683 = vrot.lane.b32.xlu0 %v1210, 123
      %v3684 = vpop.permute.xlu0 %3683
      %3685 = vrot.lane.b32.xlu0 %v1211, 123
      %v3686 = vpop.permute.xlu0 %3685
      %3687 = vrot.lane.b32.xlu0 %v1212, 123
      %v3688 = vpop.permute.xlu0 %3687
      %3689 = vrot.lane.b32.xlu0 %v1213, 123
      %v3690 = vpop.permute.xlu0 %3689
      %3691 = vrot.lane.b32.xlu0 %v1214, 123
      %v3692 = vpop.permute.xlu0 %3691
      %3693 = vrot.lane.b32.xlu0 %v3586, 123
      %v3694 = vpop.permute.xlu0 %3693
      %3695 = vrot.lane.b32.xlu0 %v3587, 123
      %v3696 = vpop.permute.xlu0 %3695
      %3697 = vrot.lane.b32.xlu0 %v3588, 123
      %v3698 = vpop.permute.xlu0 %3697
      %3699 = vrot.lane.b32.xlu0 %v3589, 123
      %v3700 = vpop.permute.xlu0 %3699
      %3701 = vrot.lane.b32.xlu0 %v3590, 123
      %v3702 = vpop.permute.xlu0 %3701
      %3703 = vrot.lane.b32.xlu0 %v3591, 123
      %v3704 = vpop.permute.xlu0 %3703
      %3705 = vrot.lane.b32.xlu0 %v3592, 123
      %v3706 = vpop.permute.xlu0 %3705
      %3707 = vrot.lane.b32.xlu0 %v3593, 123
      %v3708 = vpop.permute.xlu0 %3707
      %3709 = vrot.lane.b32.xlu0 %v3594, 123
      %v3710 = vpop.permute.xlu0 %3709
      %vm3711 = vcmask 1006592
      %v3712 = vsel %vm3711, %v3596, %v3598
      %v3713 = vsel %vm3711, %v3598, %v3600
      %v3714 = vsel %vm3711, %v3600, %v3602
      %v3715 = vsel %vm3711, %v3602, %v3604
      %v3716 = vsel %vm3711, %v3604, %v3606
      %v3717 = vsel %vm3711, %v3606, %v3608
      %v3718 = vsel %vm3711, %v3608, %v3610
      %v3719 = vsel %vm3711, %v3610, %v3612
      %v3720 = vsel %vm3711, %v3612, %v3614
      %v3721 = vsel %vm3711, %v3614, %v3616
      %v3722 = vsel %vm3711, %v3616, %v3618
      %v3723 = vsel %vm3711, %v3618, %v3620
      %v3724 = vsel %vm3711, %v3620, %v3622
      %v3725 = vsel %vm3711, %v3622, %v3624
      %v3726 = vsel %vm3711, %v3624, %v3626
      %v3727 = vsel %vm3711, %v3626, %v3628
      %v3728 = vsel %vm3711, %v3628, %v3630
      %v3729 = vsel %vm3711, %v3630, %v3632
      %v3730 = vsel %vm3711, %v3632, %v3634
      %v3731 = vsel %vm3711, %v3634, %v3636
      %v3732 = vsel %vm3711, %v3636, %v3638
      %v3733 = vsel %vm3711, %v3638, %v3640
      %v3734 = vsel %vm3711, %v3640, %v3642
      %v3735 = vsel %vm3711, %v3642, %v3644
      %v3736 = vsel %vm3711, %v3644, %v3646
      %v3737 = vsel %vm3711, %v3646, %v3648
      %v3738 = vsel %vm3711, %v3648, %v3650
      %v3739 = vsel %vm3711, %v3650, %v3652
      %v3740 = vsel %vm3711, %v3652, %v3654
      %v3741 = vsel %vm3711, %v3654, %v3656
      %v3742 = vsel %vm3711, %v3656, %v3658
      %v3743 = vsel %vm3711, %v3658, %v3660
      %v3744 = vsel %vm3711, %v3660, %v3662
      %v3745 = vsel %vm3711, %v3662, %v3664
      %v3746 = vsel %vm3711, %v3664, %v3666
      %v3747 = vsel %vm3711, %v3666, %v3668
      %v3748 = vsel %vm3711, %v3668, %v3670
      %v3749 = vsel %vm3711, %v3670, %v3672
      %v3750 = vsel %vm3711, %v3672, %v3674
      %v3751 = vsel %vm3711, %v3674, %v3676
      %v3752 = vsel %vm3711, %v3676, %v3678
      %v3753 = vsel %vm3711, %v3678, %v3680
      %v3754 = vsel %vm3711, %v3680, %v3682
      %v3755 = vsel %vm3711, %v3682, %v3684
      %v3756 = vsel %vm3711, %v3684, %v3686
      %v3757 = vsel %vm3711, %v3686, %v3688
      %v3758 = vsel %vm3711, %v3688, %v3690
      %v3759 = vsel %vm3711, %v3690, %v3692
      %v3760 = vsel %vm3711, %v3692, %v3694
      %v3761 = vsel %vm3711, %v3694, %v3696
      %v3762 = vsel %vm3711, %v3696, %v3698
      %v3763 = vsel %vm3711, %v3698, %v3700
      %v3764 = vsel %vm3711, %v3700, %v3702
      %v3765 = vsel %vm3711, %v3702, %v3704
      %v3766 = vsel %vm3711, %v3704, %v3706
      %v3767 = vsel %vm3711, %v3706, %v3708
      %v3768 = vsel %vm3711, %v3708, %v3710
      %3826 = vst [vmem:[#allocation2 + $0x390] sm:$0x30] %v3712
      %3827 = vst [vmem:[#allocation2 + $0x398] sm:$0x30] %v3713
      %3828 = vst [vmem:[#allocation2 + $0x3a0] sm:$0x30] %v3714
      %3829 = vst [vmem:[#allocation2 + $0x3a8] sm:$0x30] %v3715
      %3830 = vst [vmem:[#allocation2 + $0x3b0] sm:$0x30] %v3716
      %3831 = vst [vmem:[#allocation2 + $0x3b8] sm:$0x30] %v3717
      %3832 = vst [vmem:[#allocation2 + $0x3c0] sm:$0x30] %v3718
      %3833 = vst [vmem:[#allocation2 + $0x3c8] sm:$0x30] %v3719
      %3834 = vst [vmem:[#allocation2 + $0x3d0] sm:$0x30] %v3720
      %3835 = vst [vmem:[#allocation2 + $0x3d8] sm:$0x30] %v3721
      %3836 = vst [vmem:[#allocation2 + $0x3e0] sm:$0x30] %v3722
      %3837 = vst [vmem:[#allocation2 + $0x3e8] sm:$0x30] %v3723
      %3838 = vst [vmem:[#allocation2 + $0x3f0] sm:$0x30] %v3724
      %3839 = vst [vmem:[#allocation2 + $0x3f8] sm:$0x30] %v3725
      %3840 = vst [vmem:[#allocation2 + $0x400] sm:$0x30] %v3726
      %3841 = vst [vmem:[#allocation2 + $0x408] sm:$0x30] %v3727
      %3842 = vst [vmem:[#allocation2 + $0x410] sm:$0x30] %v3728
      %3843 = vst [vmem:[#allocation2 + $0x418] sm:$0x30] %v3729
      %3844 = vst [vmem:[#allocation2 + $0x420] sm:$0x30] %v3730
      %3845 = vst [vmem:[#allocation2 + $0x428] sm:$0x30] %v3731
      %3846 = vst [vmem:[#allocation2 + $0x430] sm:$0x30] %v3732
      %3847 = vst [vmem:[#allocation2 + $0x438] sm:$0x30] %v3733
      %3848 = vst [vmem:[#allocation2 + $0x440] sm:$0x30] %v3734
      %3849 = vst [vmem:[#allocation2 + $0x448] sm:$0x30] %v3735
      %3850 = vst [vmem:[#allocation2 + $0x450] sm:$0x30] %v3736
      %3851 = vst [vmem:[#allocation2 + $0x458] sm:$0x30] %v3737
      %3852 = vst [vmem:[#allocation2 + $0x460] sm:$0x30] %v3738
      %3853 = vst [vmem:[#allocation2 + $0x468] sm:$0x30] %v3739
      %3854 = vst [vmem:[#allocation2 + $0x470] sm:$0x30] %v3740
      %3855 = vst [vmem:[#allocation2 + $0x478] sm:$0x30] %v3741
      %3856 = vst [vmem:[#allocation2 + $0x480] sm:$0x30] %v3742
      %3857 = vst [vmem:[#allocation2 + $0x488] sm:$0x30] %v3743
      %3858 = vst [vmem:[#allocation2 + $0x490] sm:$0x30] %v3744
      %3859 = vst [vmem:[#allocation2 + $0x498] sm:$0x30] %v3745
      %3860 = vst [vmem:[#allocation2 + $0x4a0] sm:$0x30] %v3746
      %3861 = vst [vmem:[#allocation2 + $0x4a8] sm:$0x30] %v3747
      %3862 = vst [vmem:[#allocation2 + $0x4b0] sm:$0x30] %v3748
      %3863 = vst [vmem:[#allocation2 + $0x4b8] sm:$0x30] %v3749
      %3864 = vst [vmem:[#allocation2 + $0x4c0] sm:$0x30] %v3750
      %3865 = vst [vmem:[#allocation2 + $0x4c8] sm:$0x30] %v3751
      %3866 = vst [vmem:[#allocation2 + $0x4d0] sm:$0x30] %v3752
      %3867 = vst [vmem:[#allocation2 + $0x4d8] sm:$0x30] %v3753
      %3868 = vst [vmem:[#allocation2 + $0x4e0] sm:$0x30] %v3754
      %3869 = vst [vmem:[#allocation2 + $0x4e8] sm:$0x30] %v3755
      %3870 = vst [vmem:[#allocation2 + $0x4f0] sm:$0x30] %v3756
      %3871 = vst [vmem:[#allocation2 + $0x4f8] sm:$0x30] %v3757
      %3872 = vst [vmem:[#allocation2 + $0x500] sm:$0x30] %v3758
      %3873 = vst [vmem:[#allocation2 + $0x508] sm:$0x30] %v3759
      %3874 = vst [vmem:[#allocation2 + $0x510] sm:$0x30] %v3760
      %3875 = vst [vmem:[#allocation2 + $0x518] sm:$0x30] %v3761
      %3876 = vst [vmem:[#allocation2 + $0x520] sm:$0x30] %v3762
      %3877 = vst [vmem:[#allocation2 + $0x528] sm:$0x30] %v3763
      %3878 = vst [vmem:[#allocation2 + $0x530] sm:$0x30] %v3764
      %3879 = vst [vmem:[#allocation2 + $0x538] sm:$0x30] %v3765
      %3880 = vst [vmem:[#allocation2 + $0x540] sm:$0x30] %v3766
      %3881 = vst [vmem:[#allocation2 + $0x548] sm:$0x30] %v3767
      %3882 = vst [vmem:[#allocation2 + $0x550] sm:$0x30] %v3768
      %v3883 = vrot.slane %v685, 2
      %v3884 = vrot.slane %v684, 2
      %v3885 = vrot.slane %v686, 2
      %v3886 = vrot.slane %v694, 2
      %v3887 = vrot.slane %v702, 2
      %v3888 = vrot.slane %v701, 2
      %v3889 = vrot.slane %v703, 2
      %v3890 = vrot.slane %v711, 2
      %v3891 = vrot.slane %v719, 2
      %3892 = vrot.lane.b32.xlu0 %v1512, 122
      %v3893 = vpop.permute.xlu0 %3892
      %3894 = vrot.lane.b32.xlu0 %v1513, 122
      %v3895 = vpop.permute.xlu0 %3894
      %3896 = vrot.lane.b32.xlu0 %v1514, 122
      %v3897 = vpop.permute.xlu0 %3896
      %3898 = vrot.lane.b32.xlu0 %v1515, 122
      %v3899 = vpop.permute.xlu0 %3898
      %3900 = vrot.lane.b32.xlu0 %v1516, 122
      %v3901 = vpop.permute.xlu0 %3900
      %3902 = vrot.lane.b32.xlu0 %v1517, 122
      %v3903 = vpop.permute.xlu0 %3902
      %3904 = vrot.lane.b32.xlu0 %v1518, 122
      %v3905 = vpop.permute.xlu0 %3904
      %3906 = vrot.lane.b32.xlu0 %v1519, 122
      %v3907 = vpop.permute.xlu0 %3906
      %3908 = vrot.lane.b32.xlu0 %v1520, 122
      %v3909 = vpop.permute.xlu0 %3908
      %3910 = vrot.lane.b32.xlu0 %v1521, 122
      %v3911 = vpop.permute.xlu0 %3910
      %3912 = vrot.lane.b32.xlu0 %v1522, 122
      %v3913 = vpop.permute.xlu0 %3912
      %3914 = vrot.lane.b32.xlu0 %v1523, 122
      %v3915 = vpop.permute.xlu0 %3914
      %3916 = vrot.lane.b32.xlu0 %v1524, 122
      %v3917 = vpop.permute.xlu0 %3916
      %3918 = vrot.lane.b32.xlu0 %v1525, 122
      %v3919 = vpop.permute.xlu0 %3918
      %3920 = vrot.lane.b32.xlu0 %v1526, 122
      %v3921 = vpop.permute.xlu0 %3920
      %3922 = vrot.lane.b32.xlu0 %v1527, 122
      %v3923 = vpop.permute.xlu0 %3922
      %3924 = vrot.lane.b32.xlu0 %v1528, 122
      %v3925 = vpop.permute.xlu0 %3924
      %3926 = vrot.lane.b32.xlu0 %v1529, 122
      %v3927 = vpop.permute.xlu0 %3926
      %3928 = vrot.lane.b32.xlu0 %v1530, 122
      %v3929 = vpop.permute.xlu0 %3928
      %3930 = vrot.lane.b32.xlu0 %v1531, 122
      %v3931 = vpop.permute.xlu0 %3930
      %3932 = vrot.lane.b32.xlu0 %v1532, 122
      %v3933 = vpop.permute.xlu0 %3932
      %3934 = vrot.lane.b32.xlu0 %v1533, 122
      %v3935 = vpop.permute.xlu0 %3934
      %3936 = vrot.lane.b32.xlu0 %v1534, 122
      %v3937 = vpop.permute.xlu0 %3936
      %3938 = vrot.lane.b32.xlu0 %v1535, 122
      %v3939 = vpop.permute.xlu0 %3938
      %3940 = vrot.lane.b32.xlu0 %v1536, 122
      %v3941 = vpop.permute.xlu0 %3940
      %3942 = vrot.lane.b32.xlu0 %v1537, 122
      %v3943 = vpop.permute.xlu0 %3942
      %3944 = vrot.lane.b32.xlu0 %v1538, 122
      %v3945 = vpop.permute.xlu0 %3944
      %3946 = vrot.lane.b32.xlu0 %v1539, 122
      %v3947 = vpop.permute.xlu0 %3946
      %3948 = vrot.lane.b32.xlu0 %v1540, 122
      %v3949 = vpop.permute.xlu0 %3948
      %3950 = vrot.lane.b32.xlu0 %v1541, 122
      %v3951 = vpop.permute.xlu0 %3950
      %3952 = vrot.lane.b32.xlu0 %v1542, 122
      %v3953 = vpop.permute.xlu0 %3952
      %3954 = vrot.lane.b32.xlu0 %v1543, 122
      %v3955 = vpop.permute.xlu0 %3954
      %3956 = vrot.lane.b32.xlu0 %v1544, 122
      %v3957 = vpop.permute.xlu0 %3956
      %3958 = vrot.lane.b32.xlu0 %v1545, 122
      %v3959 = vpop.permute.xlu0 %3958
      %3960 = vrot.lane.b32.xlu0 %v1546, 122
      %v3961 = vpop.permute.xlu0 %3960
      %3962 = vrot.lane.b32.xlu0 %v1547, 122
      %v3963 = vpop.permute.xlu0 %3962
      %3964 = vrot.lane.b32.xlu0 %v1548, 122
      %v3965 = vpop.permute.xlu0 %3964
      %3966 = vrot.lane.b32.xlu0 %v1549, 122
      %v3967 = vpop.permute.xlu0 %3966
      %3968 = vrot.lane.b32.xlu0 %v1550, 122
      %v3969 = vpop.permute.xlu0 %3968
      %3970 = vrot.lane.b32.xlu0 %v1551, 122
      %v3971 = vpop.permute.xlu0 %3970
      %3972 = vrot.lane.b32.xlu0 %v1552, 122
      %v3973 = vpop.permute.xlu0 %3972
      %3974 = vrot.lane.b32.xlu0 %v1553, 122
      %v3975 = vpop.permute.xlu0 %3974
      %3976 = vrot.lane.b32.xlu0 %v1554, 122
      %v3977 = vpop.permute.xlu0 %3976
      %3978 = vrot.lane.b32.xlu0 %v1555, 122
      %v3979 = vpop.permute.xlu0 %3978
      %3980 = vrot.lane.b32.xlu0 %v1556, 122
      %v3981 = vpop.permute.xlu0 %3980
      %3982 = vrot.lane.b32.xlu0 %v1557, 122
      %v3983 = vpop.permute.xlu0 %3982
      %3984 = vrot.lane.b32.xlu0 %v1558, 122
      %v3985 = vpop.permute.xlu0 %3984
      %3986 = vrot.lane.b32.xlu0 %v1559, 122
      %v3987 = vpop.permute.xlu0 %3986
      %3988 = vrot.lane.b32.xlu0 %v1560, 122
      %v3989 = vpop.permute.xlu0 %3988
      %3990 = vrot.lane.b32.xlu0 %v3883, 122
      %v3991 = vpop.permute.xlu0 %3990
      %3992 = vrot.lane.b32.xlu0 %v3884, 122
      %v3993 = vpop.permute.xlu0 %3992
      %3994 = vrot.lane.b32.xlu0 %v3885, 122
      %v3995 = vpop.permute.xlu0 %3994
      %3996 = vrot.lane.b32.xlu0 %v3886, 122
      %v3997 = vpop.permute.xlu0 %3996
      %3998 = vrot.lane.b32.xlu0 %v3887, 122
      %v3999 = vpop.permute.xlu0 %3998
      %4000 = vrot.lane.b32.xlu0 %v3888, 122
      %v4001 = vpop.permute.xlu0 %4000
      %4002 = vrot.lane.b32.xlu0 %v3889, 122
      %v4003 = vpop.permute.xlu0 %4002
      %4004 = vrot.lane.b32.xlu0 %v3890, 122
      %v4005 = vpop.permute.xlu0 %4004
      %4006 = vrot.lane.b32.xlu0 %v3891, 122
      %v4007 = vpop.permute.xlu0 %4006
      %vm4008 = vcmask 998400
      %v4009 = vsel %vm4008, %v3893, %v3895
      %v4010 = vsel %vm4008, %v3895, %v3897
      %v4011 = vsel %vm4008, %v3897, %v3899
      %v4012 = vsel %vm4008, %v3899, %v3901
      %v4013 = vsel %vm4008, %v3901, %v3903
      %v4014 = vsel %vm4008, %v3903, %v3905
      %v4015 = vsel %vm4008, %v3905, %v3907
      %v4016 = vsel %vm4008, %v3907, %v3909
      %v4017 = vsel %vm4008, %v3909, %v3911
      %v4018 = vsel %vm4008, %v3911, %v3913
      %v4019 = vsel %vm4008, %v3913, %v3915
      %v4020 = vsel %vm4008, %v3915, %v3917
      %v4021 = vsel %vm4008, %v3917, %v3919
      %v4022 = vsel %vm4008, %v3919, %v3921
      %v4023 = vsel %vm4008, %v3921, %v3923
      %v4024 = vsel %vm4008, %v3923, %v3925
      %v4025 = vsel %vm4008, %v3925, %v3927
      %v4026 = vsel %vm4008, %v3927, %v3929
      %v4027 = vsel %vm4008, %v3929, %v3931
      %v4028 = vsel %vm4008, %v3931, %v3933
      %v4029 = vsel %vm4008, %v3933, %v3935
      %v4030 = vsel %vm4008, %v3935, %v3937
      %v4031 = vsel %vm4008, %v3937, %v3939
      %v4032 = vsel %vm4008, %v3939, %v3941
      %v4033 = vsel %vm4008, %v3941, %v3943
      %v4034 = vsel %vm4008, %v3943, %v3945
      %v4035 = vsel %vm4008, %v3945, %v3947
      %v4036 = vsel %vm4008, %v3947, %v3949
      %v4037 = vsel %vm4008, %v3949, %v3951
      %v4038 = vsel %vm4008, %v3951, %v3953
      %v4039 = vsel %vm4008, %v3953, %v3955
      %v4040 = vsel %vm4008, %v3955, %v3957
      %v4041 = vsel %vm4008, %v3957, %v3959
      %v4042 = vsel %vm4008, %v3959, %v3961
      %v4043 = vsel %vm4008, %v3961, %v3963
      %v4044 = vsel %vm4008, %v3963, %v3965
      %v4045 = vsel %vm4008, %v3965, %v3967
      %v4046 = vsel %vm4008, %v3967, %v3969
      %v4047 = vsel %vm4008, %v3969, %v3971
      %v4048 = vsel %vm4008, %v3971, %v3973
      %v4049 = vsel %vm4008, %v3973, %v3975
      %v4050 = vsel %vm4008, %v3975, %v3977
      %v4051 = vsel %vm4008, %v3977, %v3979
      %v4052 = vsel %vm4008, %v3979, %v3981
      %v4053 = vsel %vm4008, %v3981, %v3983
      %v4054 = vsel %vm4008, %v3983, %v3985
      %v4055 = vsel %vm4008, %v3985, %v3987
      %v4056 = vsel %vm4008, %v3987, %v3989
      %v4057 = vsel %vm4008, %v3989, %v3991
      %v4058 = vsel %vm4008, %v3991, %v3993
      %v4059 = vsel %vm4008, %v3993, %v3995
      %v4060 = vsel %vm4008, %v3995, %v3997
      %v4061 = vsel %vm4008, %v3997, %v3999
      %v4062 = vsel %vm4008, %v3999, %v4001
      %v4063 = vsel %vm4008, %v4001, %v4003
      %v4064 = vsel %vm4008, %v4003, %v4005
      %v4065 = vsel %vm4008, %v4005, %v4007
      %4123 = vst [vmem:[#allocation2 + $0x390] sm:$0xc0] %v4009
      %4124 = vst [vmem:[#allocation2 + $0x398] sm:$0xc0] %v4010
      %4125 = vst [vmem:[#allocation2 + $0x3a0] sm:$0xc0] %v4011
      %4126 = vst [vmem:[#allocation2 + $0x3a8] sm:$0xc0] %v4012
      %4127 = vst [vmem:[#allocation2 + $0x3b0] sm:$0xc0] %v4013
      %4128 = vst [vmem:[#allocation2 + $0x3b8] sm:$0xc0] %v4014
      %4129 = vst [vmem:[#allocation2 + $0x3c0] sm:$0xc0] %v4015
      %4130 = vst [vmem:[#allocation2 + $0x3c8] sm:$0xc0] %v4016
      %4131 = vst [vmem:[#allocation2 + $0x3d0] sm:$0xc0] %v4017
      %4132 = vst [vmem:[#allocation2 + $0x3d8] sm:$0xc0] %v4018
      %4133 = vst [vmem:[#allocation2 + $0x3e0] sm:$0xc0] %v4019
      %4134 = vst [vmem:[#allocation2 + $0x3e8] sm:$0xc0] %v4020
      %4135 = vst [vmem:[#allocation2 + $0x3f0] sm:$0xc0] %v4021
      %4136 = vst [vmem:[#allocation2 + $0x3f8] sm:$0xc0] %v4022
      %4137 = vst [vmem:[#allocation2 + $0x400] sm:$0xc0] %v4023
      %4138 = vst [vmem:[#allocation2 + $0x408] sm:$0xc0] %v4024
      %4139 = vst [vmem:[#allocation2 + $0x410] sm:$0xc0] %v4025
      %4140 = vst [vmem:[#allocation2 + $0x418] sm:$0xc0] %v4026
      %4141 = vst [vmem:[#allocation2 + $0x420] sm:$0xc0] %v4027
      %4142 = vst [vmem:[#allocation2 + $0x428] sm:$0xc0] %v4028
      %4143 = vst [vmem:[#allocation2 + $0x430] sm:$0xc0] %v4029
      %4144 = vst [vmem:[#allocation2 + $0x438] sm:$0xc0] %v4030
      %4145 = vst [vmem:[#allocation2 + $0x440] sm:$0xc0] %v4031
      %4146 = vst [vmem:[#allocation2 + $0x448] sm:$0xc0] %v4032
      %4147 = vst [vmem:[#allocation2 + $0x450] sm:$0xc0] %v4033
      %4148 = vst [vmem:[#allocation2 + $0x458] sm:$0xc0] %v4034
      %4149 = vst [vmem:[#allocation2 + $0x460] sm:$0xc0] %v4035
      %4150 = vst [vmem:[#allocation2 + $0x468] sm:$0xc0] %v4036
      %4151 = vst [vmem:[#allocation2 + $0x470] sm:$0xc0] %v4037
      %4152 = vst [vmem:[#allocation2 + $0x478] sm:$0xc0] %v4038
      %4153 = vst [vmem:[#allocation2 + $0x480] sm:$0xc0] %v4039
      %4154 = vst [vmem:[#allocation2 + $0x488] sm:$0xc0] %v4040
      %4155 = vst [vmem:[#allocation2 + $0x490] sm:$0xc0] %v4041
      %4156 = vst [vmem:[#allocation2 + $0x498] sm:$0xc0] %v4042
      %4157 = vst [vmem:[#allocation2 + $0x4a0] sm:$0xc0] %v4043
      %4158 = vst [vmem:[#allocation2 + $0x4a8] sm:$0xc0] %v4044
      %4159 = vst [vmem:[#allocation2 + $0x4b0] sm:$0xc0] %v4045
      %4160 = vst [vmem:[#allocation2 + $0x4b8] sm:$0xc0] %v4046
      %4161 = vst [vmem:[#allocation2 + $0x4c0] sm:$0xc0] %v4047
      %4162 = vst [vmem:[#allocation2 + $0x4c8] sm:$0xc0] %v4048
      %4163 = vst [vmem:[#allocation2 + $0x4d0] sm:$0xc0] %v4049
      %4164 = vst [vmem:[#allocation2 + $0x4d8] sm:$0xc0] %v4050
      %4165 = vst [vmem:[#allocation2 + $0x4e0] sm:$0xc0] %v4051
      %4166 = vst [vmem:[#allocation2 + $0x4e8] sm:$0xc0] %v4052
      %4167 = vst [vmem:[#allocation2 + $0x4f0] sm:$0xc0] %v4053
      %4168 = vst [vmem:[#allocation2 + $0x4f8] sm:$0xc0] %v4054
      %4169 = vst [vmem:[#allocation2 + $0x500] sm:$0xc0] %v4055
      %4170 = vst [vmem:[#allocation2 + $0x508] sm:$0xc0] %v4056
      %4171 = vst [vmem:[#allocation2 + $0x510] sm:$0xc0] %v4057
      %4172 = vst [vmem:[#allocation2 + $0x518] sm:$0xc0] %v4058
      %4173 = vst [vmem:[#allocation2 + $0x520] sm:$0xc0] %v4059
      %4174 = vst [vmem:[#allocation2 + $0x528] sm:$0xc0] %v4060
      %4175 = vst [vmem:[#allocation2 + $0x530] sm:$0xc0] %v4061
      %4176 = vst [vmem:[#allocation2 + $0x538] sm:$0xc0] %v4062
      %4177 = vst [vmem:[#allocation2 + $0x540] sm:$0xc0] %v4063
      %4178 = vst [vmem:[#allocation2 + $0x548] sm:$0xc0] %v4064
      %4179 = vst [vmem:[#allocation2 + $0x550] sm:$0xc0] %v4065
      %4180 = vrot.lane.b32.xlu0 %v412, 90
      %v4181 = vpop.permute.xlu0 %4180
      %4182 = vrot.lane.b32.xlu0 %v411, 90
      %v4183 = vpop.permute.xlu0 %4182
      %4184 = vrot.lane.b32.xlu0 %v413, 90
      %v4185 = vpop.permute.xlu0 %4184
      %4186 = vrot.lane.b32.xlu0 %v421, 90
      %v4187 = vpop.permute.xlu0 %4186
      %4188 = vrot.lane.b32.xlu0 %v429, 90
      %v4189 = vpop.permute.xlu0 %4188
      %4190 = vrot.lane.b32.xlu0 %v428, 90
      %v4191 = vpop.permute.xlu0 %4190
      %4192 = vrot.lane.b32.xlu0 %v430, 90
      %v4193 = vpop.permute.xlu0 %4192
      %4194 = vrot.lane.b32.xlu0 %v438, 90
      %v4195 = vpop.permute.xlu0 %4194
      %4196 = vrot.lane.b32.xlu0 %v446, 90
      %v4197 = vpop.permute.xlu0 %4196
      %4198 = vrot.lane.b32.xlu0 %v445, 90
      %v4199 = vpop.permute.xlu0 %4198
      %4200 = vrot.lane.b32.xlu0 %v447, 90
      %v4201 = vpop.permute.xlu0 %4200
      %4202 = vrot.lane.b32.xlu0 %v455, 90
      %v4203 = vpop.permute.xlu0 %4202
      %4204 = vrot.lane.b32.xlu0 %v463, 90
      %v4205 = vpop.permute.xlu0 %4204
      %4206 = vrot.lane.b32.xlu0 %v462, 90
      %v4207 = vpop.permute.xlu0 %4206
      %4208 = vrot.lane.b32.xlu0 %v464, 90
      %v4209 = vpop.permute.xlu0 %4208
      %4210 = vrot.lane.b32.xlu0 %v472, 90
      %v4211 = vpop.permute.xlu0 %4210
      %4212 = vrot.lane.b32.xlu0 %v480, 90
      %v4213 = vpop.permute.xlu0 %4212
      %4214 = vrot.lane.b32.xlu0 %v479, 90
      %v4215 = vpop.permute.xlu0 %4214
      %4216 = vrot.lane.b32.xlu0 %v481, 90
      %v4217 = vpop.permute.xlu0 %4216
      %4218 = vrot.lane.b32.xlu0 %v489, 90
      %v4219 = vpop.permute.xlu0 %4218
      %4220 = vrot.lane.b32.xlu0 %v497, 90
      %v4221 = vpop.permute.xlu0 %4220
      %4222 = vrot.lane.b32.xlu0 %v496, 90
      %v4223 = vpop.permute.xlu0 %4222
      %4224 = vrot.lane.b32.xlu0 %v498, 90
      %v4225 = vpop.permute.xlu0 %4224
      %4226 = vrot.lane.b32.xlu0 %v506, 90
      %v4227 = vpop.permute.xlu0 %4226
      %4228 = vrot.lane.b32.xlu0 %v514, 90
      %v4229 = vpop.permute.xlu0 %4228
      %4230 = vrot.lane.b32.xlu0 %v513, 90
      %v4231 = vpop.permute.xlu0 %4230
      %4232 = vrot.lane.b32.xlu0 %v515, 90
      %v4233 = vpop.permute.xlu0 %4232
      %4234 = vrot.lane.b32.xlu0 %v523, 90
      %v4235 = vpop.permute.xlu0 %4234
      %4236 = vrot.lane.b32.xlu0 %v531, 90
      %v4237 = vpop.permute.xlu0 %4236
      %4238 = vrot.lane.b32.xlu0 %v530, 90
      %v4239 = vpop.permute.xlu0 %4238
      %4240 = vrot.lane.b32.xlu0 %v532, 90
      %v4241 = vpop.permute.xlu0 %4240
      %4242 = vrot.lane.b32.xlu0 %v540, 90
      %v4243 = vpop.permute.xlu0 %4242
      %4244 = vrot.lane.b32.xlu0 %v548, 90
      %v4245 = vpop.permute.xlu0 %4244
      %4246 = vrot.lane.b32.xlu0 %v547, 90
      %v4247 = vpop.permute.xlu0 %4246
      %4248 = vrot.lane.b32.xlu0 %v549, 90
      %v4249 = vpop.permute.xlu0 %4248
      %4250 = vrot.lane.b32.xlu0 %v557, 90
      %v4251 = vpop.permute.xlu0 %4250
      %4252 = vrot.lane.b32.xlu0 %v565, 90
      %v4253 = vpop.permute.xlu0 %4252
      %4254 = vrot.lane.b32.xlu0 %v564, 90
      %v4255 = vpop.permute.xlu0 %4254
      %4256 = vrot.lane.b32.xlu0 %v566, 90
      %v4257 = vpop.permute.xlu0 %4256
      %4258 = vrot.lane.b32.xlu0 %v574, 90
      %v4259 = vpop.permute.xlu0 %4258
      %4260 = vrot.lane.b32.xlu0 %v582, 90
      %v4261 = vpop.permute.xlu0 %4260
      %4262 = vrot.lane.b32.xlu0 %v581, 90
      %v4263 = vpop.permute.xlu0 %4262
      %4264 = vrot.lane.b32.xlu0 %v583, 90
      %v4265 = vpop.permute.xlu0 %4264
      %4266 = vrot.lane.b32.xlu0 %v591, 90
      %v4267 = vpop.permute.xlu0 %4266
      %4268 = vrot.lane.b32.xlu0 %v599, 90
      %v4269 = vpop.permute.xlu0 %4268
      %4270 = vrot.lane.b32.xlu0 %v598, 90
      %v4271 = vpop.permute.xlu0 %4270
      %4272 = vrot.lane.b32.xlu0 %v600, 90
      %v4273 = vpop.permute.xlu0 %4272
      %4274 = vrot.lane.b32.xlu0 %v607, 90
      %v4275 = vpop.permute.xlu0 %4274
      %4276 = vrot.lane.b32.xlu0 %v677, 90
      %v4277 = vpop.permute.xlu0 %4276
      %4278 = vrot.lane.b32.xlu0 %v685, 90
      %v4279 = vpop.permute.xlu0 %4278
      %4280 = vrot.lane.b32.xlu0 %v684, 90
      %v4281 = vpop.permute.xlu0 %4280
      %4282 = vrot.lane.b32.xlu0 %v686, 90
      %v4283 = vpop.permute.xlu0 %4282
      %4284 = vrot.lane.b32.xlu0 %v694, 90
      %v4285 = vpop.permute.xlu0 %4284
      %4286 = vrot.lane.b32.xlu0 %v702, 90
      %v4287 = vpop.permute.xlu0 %4286
      %4288 = vrot.lane.b32.xlu0 %v701, 90
      %v4289 = vpop.permute.xlu0 %4288
      %4290 = vrot.lane.b32.xlu0 %v703, 90
      %v4291 = vpop.permute.xlu0 %4290
      %4292 = vrot.lane.b32.xlu0 %v711, 90
      %v4293 = vpop.permute.xlu0 %4292
      %4294 = vrot.lane.b32.xlu0 %v719, 90
      %v4295 = vpop.permute.xlu0 %4294
      %vm4296 = vcmask 736256
      %v4297 = vsel %vm4296, %v4181, %v4183
      %v4298 = vsel %vm4296, %v4183, %v4185
      %v4299 = vsel %vm4296, %v4185, %v4187
      %v4300 = vsel %vm4296, %v4187, %v4189
      %v4301 = vsel %vm4296, %v4189, %v4191
      %v4302 = vsel %vm4296, %v4191, %v4193
      %v4303 = vsel %vm4296, %v4193, %v4195
      %v4304 = vsel %vm4296, %v4195, %v4197
      %v4305 = vsel %vm4296, %v4197, %v4199
      %v4306 = vsel %vm4296, %v4199, %v4201
      %v4307 = vsel %vm4296, %v4201, %v4203
      %v4308 = vsel %vm4296, %v4203, %v4205
      %v4309 = vsel %vm4296, %v4205, %v4207
      %v4310 = vsel %vm4296, %v4207, %v4209
      %v4311 = vsel %vm4296, %v4209, %v4211
      %v4312 = vsel %vm4296, %v4211, %v4213
      %v4313 = vsel %vm4296, %v4213, %v4215
      %v4314 = vsel %vm4296, %v4215, %v4217
      %v4315 = vsel %vm4296, %v4217, %v4219
      %v4316 = vsel %vm4296, %v4219, %v4221
      %v4317 = vsel %vm4296, %v4221, %v4223
      %v4318 = vsel %vm4296, %v4223, %v4225
      %v4319 = vsel %vm4296, %v4225, %v4227
      %v4320 = vsel %vm4296, %v4227, %v4229
      %v4321 = vsel %vm4296, %v4229, %v4231
      %v4322 = vsel %vm4296, %v4231, %v4233
      %v4323 = vsel %vm4296, %v4233, %v4235
      %v4324 = vsel %vm4296, %v4235, %v4237
      %v4325 = vsel %vm4296, %v4237, %v4239
      %v4326 = vsel %vm4296, %v4239, %v4241
      %v4327 = vsel %vm4296, %v4241, %v4243
      %v4328 = vsel %vm4296, %v4243, %v4245
      %v4329 = vsel %vm4296, %v4245, %v4247
      %v4330 = vsel %vm4296, %v4247, %v4249
      %v4331 = vsel %vm4296, %v4249, %v4251
      %v4332 = vsel %vm4296, %v4251, %v4253
      %v4333 = vsel %vm4296, %v4253, %v4255
      %v4334 = vsel %vm4296, %v4255, %v4257
      %v4335 = vsel %vm4296, %v4257, %v4259
      %v4336 = vsel %vm4296, %v4259, %v4261
      %v4337 = vsel %vm4296, %v4261, %v4263
      %v4338 = vsel %vm4296, %v4263, %v4265
      %v4339 = vsel %vm4296, %v4265, %v4267
      %v4340 = vsel %vm4296, %v4267, %v4269
      %v4341 = vsel %vm4296, %v4269, %v4271
      %v4342 = vsel %vm4296, %v4271, %v4273
      %v4343 = vsel %vm4296, %v4273, %v4275
      %v4344 = vsel %vm4296, %v4275, %v4277
      %v4345 = vsel %vm4296, %v4277, %v4279
      %v4346 = vsel %vm4296, %v4279, %v4281
      %v4347 = vsel %vm4296, %v4281, %v4283
      %v4348 = vsel %vm4296, %v4283, %v4285
      %v4349 = vsel %vm4296, %v4285, %v4287
      %v4350 = vsel %vm4296, %v4287, %v4289
      %v4351 = vsel %vm4296, %v4289, %v4291
      %v4352 = vsel %vm4296, %v4291, %v4293
      %v4353 = vsel %vm4296, %v4293, %v4295
      %4411 = vst [vmem:[#allocation2 + $0x558] sm:$0x3] %v4297
      %4412 = vst [vmem:[#allocation2 + $0x560] sm:$0x3] %v4298
      %4413 = vst [vmem:[#allocation2 + $0x568] sm:$0x3] %v4299
      %4414 = vst [vmem:[#allocation2 + $0x570] sm:$0x3] %v4300
      %4415 = vst [vmem:[#allocation2 + $0x578] sm:$0x3] %v4301
      %4416 = vst [vmem:[#allocation2 + $0x580] sm:$0x3] %v4302
      %4417 = vst [vmem:[#allocation2 + $0x588] sm:$0x3] %v4303
      %4418 = vst [vmem:[#allocation2 + $0x590] sm:$0x3] %v4304
      %4419 = vst [vmem:[#allocation2 + $0x598] sm:$0x3] %v4305
      %4420 = vst [vmem:[#allocation2 + $0x5a0] sm:$0x3] %v4306
      %4421 = vst [vmem:[#allocation2 + $0x5a8] sm:$0x3] %v4307
      %4422 = vst [vmem:[#allocation2 + $0x5b0] sm:$0x3] %v4308
      %4423 = vst [vmem:[#allocation2 + $0x5b8] sm:$0x3] %v4309
      %4424 = vst [vmem:[#allocation2 + $0x5c0] sm:$0x3] %v4310
      %4425 = vst [vmem:[#allocation2 + $0x5c8] sm:$0x3] %v4311
      %4426 = vst [vmem:[#allocation2 + $0x5d0] sm:$0x3] %v4312
      %4427 = vst [vmem:[#allocation2 + $0x5d8] sm:$0x3] %v4313
      %4428 = vst [vmem:[#allocation2 + $0x5e0] sm:$0x3] %v4314
      %4429 = vst [vmem:[#allocation2 + $0x5e8] sm:$0x3] %v4315
      %4430 = vst [vmem:[#allocation2 + $0x5f0] sm:$0x3] %v4316
      %4431 = vst [vmem:[#allocation2 + $0x5f8] sm:$0x3] %v4317
      %4432 = vst [vmem:[#allocation2 + $0x600] sm:$0x3] %v4318
      %4433 = vst [vmem:[#allocation2 + $0x608] sm:$0x3] %v4319
      %4434 = vst [vmem:[#allocation2 + $0x610] sm:$0x3] %v4320
      %4435 = vst [vmem:[#allocation2 + $0x618] sm:$0x3] %v4321
      %4436 = vst [vmem:[#allocation2 + $0x620] sm:$0x3] %v4322
      %4437 = vst [vmem:[#allocation2 + $0x628] sm:$0x3] %v4323
      %4438 = vst [vmem:[#allocation2 + $0x630] sm:$0x3] %v4324
      %4439 = vst [vmem:[#allocation2 + $0x638] sm:$0x3] %v4325
      %4440 = vst [vmem:[#allocation2 + $0x640] sm:$0x3] %v4326
      %4441 = vst [vmem:[#allocation2 + $0x648] sm:$0x3] %v4327
      %4442 = vst [vmem:[#allocation2 + $0x650] sm:$0x3] %v4328
      %4443 = vst [vmem:[#allocation2 + $0x658] sm:$0x3] %v4329
      %4444 = vst [vmem:[#allocation2 + $0x660] sm:$0x3] %v4330
      %4445 = vst [vmem:[#allocation2 + $0x668] sm:$0x3] %v4331
      %4446 = vst [vmem:[#allocation2 + $0x670] sm:$0x3] %v4332
      %4447 = vst [vmem:[#allocation2 + $0x678] sm:$0x3] %v4333
      %4448 = vst [vmem:[#allocation2 + $0x680] sm:$0x3] %v4334
      %4449 = vst [vmem:[#allocation2 + $0x688] sm:$0x3] %v4335
      %4450 = vst [vmem:[#allocation2 + $0x690] sm:$0x3] %v4336
      %4451 = vst [vmem:[#allocation2 + $0x698] sm:$0x3] %v4337
      %4452 = vst [vmem:[#allocation2 + $0x6a0] sm:$0x3] %v4338
      %4453 = vst [vmem:[#allocation2 + $0x6a8] sm:$0x3] %v4339
      %4454 = vst [vmem:[#allocation2 + $0x6b0] sm:$0x3] %v4340
      %4455 = vst [vmem:[#allocation2 + $0x6b8] sm:$0x3] %v4341
      %4456 = vst [vmem:[#allocation2 + $0x6c0] sm:$0x3] %v4342
      %4457 = vst [vmem:[#allocation2 + $0x6c8] sm:$0x3] %v4343
      %4458 = vst [vmem:[#allocation2 + $0x6d0] sm:$0x3] %v4344
      %4459 = vst [vmem:[#allocation2 + $0x6d8] sm:$0x3] %v4345
      %4460 = vst [vmem:[#allocation2 + $0x6e0] sm:$0x3] %v4346
      %4461 = vst [vmem:[#allocation2 + $0x6e8] sm:$0x3] %v4347
      %4462 = vst [vmem:[#allocation2 + $0x6f0] sm:$0x3] %v4348
      %4463 = vst [vmem:[#allocation2 + $0x6f8] sm:$0x3] %v4349
      %4464 = vst [vmem:[#allocation2 + $0x700] sm:$0x3] %v4350
      %4465 = vst [vmem:[#allocation2 + $0x708] sm:$0x3] %v4351
      %4466 = vst [vmem:[#allocation2 + $0x710] sm:$0x3] %v4352
      %4467 = vst [vmem:[#allocation2 + $0x718] sm:$0x3] %v4353
      %4468 = vrot.lane.b32.xlu0 %v820, 89
      %v4469 = vpop.permute.xlu0 %4468
      %4470 = vrot.lane.b32.xlu0 %v821, 89
      %v4471 = vpop.permute.xlu0 %4470
      %4472 = vrot.lane.b32.xlu0 %v822, 89
      %v4473 = vpop.permute.xlu0 %4472
      %4474 = vrot.lane.b32.xlu0 %v823, 89
      %v4475 = vpop.permute.xlu0 %4474
      %4476 = vrot.lane.b32.xlu0 %v824, 89
      %v4477 = vpop.permute.xlu0 %4476
      %4478 = vrot.lane.b32.xlu0 %v825, 89
      %v4479 = vpop.permute.xlu0 %4478
      %4480 = vrot.lane.b32.xlu0 %v826, 89
      %v4481 = vpop.permute.xlu0 %4480
      %4482 = vrot.lane.b32.xlu0 %v827, 89
      %v4483 = vpop.permute.xlu0 %4482
      %4484 = vrot.lane.b32.xlu0 %v828, 89
      %v4485 = vpop.permute.xlu0 %4484
      %4486 = vrot.lane.b32.xlu0 %v829, 89
      %v4487 = vpop.permute.xlu0 %4486
      %4488 = vrot.lane.b32.xlu0 %v830, 89
      %v4489 = vpop.permute.xlu0 %4488
      %4490 = vrot.lane.b32.xlu0 %v831, 89
      %v4491 = vpop.permute.xlu0 %4490
      %4492 = vrot.lane.b32.xlu0 %v832, 89
      %v4493 = vpop.permute.xlu0 %4492
      %4494 = vrot.lane.b32.xlu0 %v833, 89
      %v4495 = vpop.permute.xlu0 %4494
      %4496 = vrot.lane.b32.xlu0 %v834, 89
      %v4497 = vpop.permute.xlu0 %4496
      %4498 = vrot.lane.b32.xlu0 %v835, 89
      %v4499 = vpop.permute.xlu0 %4498
      %4500 = vrot.lane.b32.xlu0 %v836, 89
      %v4501 = vpop.permute.xlu0 %4500
      %4502 = vrot.lane.b32.xlu0 %v837, 89
      %v4503 = vpop.permute.xlu0 %4502
      %4504 = vrot.lane.b32.xlu0 %v838, 89
      %v4505 = vpop.permute.xlu0 %4504
      %4506 = vrot.lane.b32.xlu0 %v839, 89
      %v4507 = vpop.permute.xlu0 %4506
      %4508 = vrot.lane.b32.xlu0 %v840, 89
      %v4509 = vpop.permute.xlu0 %4508
      %4510 = vrot.lane.b32.xlu0 %v841, 89
      %v4511 = vpop.permute.xlu0 %4510
      %4512 = vrot.lane.b32.xlu0 %v842, 89
      %v4513 = vpop.permute.xlu0 %4512
      %4514 = vrot.lane.b32.xlu0 %v843, 89
      %v4515 = vpop.permute.xlu0 %4514
      %4516 = vrot.lane.b32.xlu0 %v844, 89
      %v4517 = vpop.permute.xlu0 %4516
      %4518 = vrot.lane.b32.xlu0 %v845, 89
      %v4519 = vpop.permute.xlu0 %4518
      %4520 = vrot.lane.b32.xlu0 %v846, 89
      %v4521 = vpop.permute.xlu0 %4520
      %4522 = vrot.lane.b32.xlu0 %v847, 89
      %v4523 = vpop.permute.xlu0 %4522
      %4524 = vrot.lane.b32.xlu0 %v848, 89
      %v4525 = vpop.permute.xlu0 %4524
      %4526 = vrot.lane.b32.xlu0 %v849, 89
      %v4527 = vpop.permute.xlu0 %4526
      %4528 = vrot.lane.b32.xlu0 %v850, 89
      %v4529 = vpop.permute.xlu0 %4528
      %4530 = vrot.lane.b32.xlu0 %v851, 89
      %v4531 = vpop.permute.xlu0 %4530
      %4532 = vrot.lane.b32.xlu0 %v852, 89
      %v4533 = vpop.permute.xlu0 %4532
      %4534 = vrot.lane.b32.xlu0 %v853, 89
      %v4535 = vpop.permute.xlu0 %4534
      %4536 = vrot.lane.b32.xlu0 %v854, 89
      %v4537 = vpop.permute.xlu0 %4536
      %4538 = vrot.lane.b32.xlu0 %v855, 89
      %v4539 = vpop.permute.xlu0 %4538
      %4540 = vrot.lane.b32.xlu0 %v856, 89
      %v4541 = vpop.permute.xlu0 %4540
      %4542 = vrot.lane.b32.xlu0 %v857, 89
      %v4543 = vpop.permute.xlu0 %4542
      %4544 = vrot.lane.b32.xlu0 %v858, 89
      %v4545 = vpop.permute.xlu0 %4544
      %4546 = vrot.lane.b32.xlu0 %v859, 89
      %v4547 = vpop.permute.xlu0 %4546
      %4548 = vrot.lane.b32.xlu0 %v860, 89
      %v4549 = vpop.permute.xlu0 %4548
      %4550 = vrot.lane.b32.xlu0 %v861, 89
      %v4551 = vpop.permute.xlu0 %4550
      %4552 = vrot.lane.b32.xlu0 %v862, 89
      %v4553 = vpop.permute.xlu0 %4552
      %4554 = vrot.lane.b32.xlu0 %v863, 89
      %v4555 = vpop.permute.xlu0 %4554
      %4556 = vrot.lane.b32.xlu0 %v864, 89
      %v4557 = vpop.permute.xlu0 %4556
      %4558 = vrot.lane.b32.xlu0 %v865, 89
      %v4559 = vpop.permute.xlu0 %4558
      %4560 = vrot.lane.b32.xlu0 %v866, 89
      %v4561 = vpop.permute.xlu0 %4560
      %4562 = vrot.lane.b32.xlu0 %v867, 89
      %v4563 = vpop.permute.xlu0 %4562
      %4564 = vrot.lane.b32.xlu0 %v868, 89
      %v4565 = vpop.permute.xlu0 %4564
      %4566 = vrot.lane.b32.xlu0 %v3289, 89
      %v4567 = vpop.permute.xlu0 %4566
      %4568 = vrot.lane.b32.xlu0 %v3290, 89
      %v4569 = vpop.permute.xlu0 %4568
      %4570 = vrot.lane.b32.xlu0 %v3291, 89
      %v4571 = vpop.permute.xlu0 %4570
      %4572 = vrot.lane.b32.xlu0 %v3292, 89
      %v4573 = vpop.permute.xlu0 %4572
      %4574 = vrot.lane.b32.xlu0 %v3293, 89
      %v4575 = vpop.permute.xlu0 %4574
      %4576 = vrot.lane.b32.xlu0 %v3294, 89
      %v4577 = vpop.permute.xlu0 %4576
      %4578 = vrot.lane.b32.xlu0 %v3295, 89
      %v4579 = vpop.permute.xlu0 %4578
      %4580 = vrot.lane.b32.xlu0 %v3296, 89
      %v4581 = vpop.permute.xlu0 %4580
      %4582 = vrot.lane.b32.xlu0 %v3297, 89
      %v4583 = vpop.permute.xlu0 %4582
      %vm4584 = vcmask 728064
      %v4585 = vsel %vm4584, %v4469, %v4471
      %v4586 = vsel %vm4584, %v4471, %v4473
      %v4587 = vsel %vm4584, %v4473, %v4475
      %v4588 = vsel %vm4584, %v4475, %v4477
      %v4589 = vsel %vm4584, %v4477, %v4479
      %v4590 = vsel %vm4584, %v4479, %v4481
      %v4591 = vsel %vm4584, %v4481, %v4483
      %v4592 = vsel %vm4584, %v4483, %v4485
      %v4593 = vsel %vm4584, %v4485, %v4487
      %v4594 = vsel %vm4584, %v4487, %v4489
      %v4595 = vsel %vm4584, %v4489, %v4491
      %v4596 = vsel %vm4584, %v4491, %v4493
      %v4597 = vsel %vm4584, %v4493, %v4495
      %v4598 = vsel %vm4584, %v4495, %v4497
      %v4599 = vsel %vm4584, %v4497, %v4499
      %v4600 = vsel %vm4584, %v4499, %v4501
      %v4601 = vsel %vm4584, %v4501, %v4503
      %v4602 = vsel %vm4584, %v4503, %v4505
      %v4603 = vsel %vm4584, %v4505, %v4507
      %v4604 = vsel %vm4584, %v4507, %v4509
      %v4605 = vsel %vm4584, %v4509, %v4511
      %v4606 = vsel %vm4584, %v4511, %v4513
      %v4607 = vsel %vm4584, %v4513, %v4515
      %v4608 = vsel %vm4584, %v4515, %v4517
      %v4609 = vsel %vm4584, %v4517, %v4519
      %v4610 = vsel %vm4584, %v4519, %v4521
      %v4611 = vsel %vm4584, %v4521, %v4523
      %v4612 = vsel %vm4584, %v4523, %v4525
      %v4613 = vsel %vm4584, %v4525, %v4527
      %v4614 = vsel %vm4584, %v4527, %v4529
      %v4615 = vsel %vm4584, %v4529, %v4531
      %v4616 = vsel %vm4584, %v4531, %v4533
      %v4617 = vsel %vm4584, %v4533, %v4535
      %v4618 = vsel %vm4584, %v4535, %v4537
      %v4619 = vsel %vm4584, %v4537, %v4539
      %v4620 = vsel %vm4584, %v4539, %v4541
      %v4621 = vsel %vm4584, %v4541, %v4543
      %v4622 = vsel %vm4584, %v4543, %v4545
      %v4623 = vsel %vm4584, %v4545, %v4547
      %v4624 = vsel %vm4584, %v4547, %v4549
      %v4625 = vsel %vm4584, %v4549, %v4551
      %v4626 = vsel %vm4584, %v4551, %v4553
      %v4627 = vsel %vm4584, %v4553, %v4555
      %v4628 = vsel %vm4584, %v4555, %v4557
      %v4629 = vsel %vm4584, %v4557, %v4559
      %v4630 = vsel %vm4584, %v4559, %v4561
      %v4631 = vsel %vm4584, %v4561, %v4563
      %v4632 = vsel %vm4584, %v4563, %v4565
      %v4633 = vsel %vm4584, %v4565, %v4567
      %v4634 = vsel %vm4584, %v4567, %v4569
      %v4635 = vsel %vm4584, %v4569, %v4571
      %v4636 = vsel %vm4584, %v4571, %v4573
      %v4637 = vsel %vm4584, %v4573, %v4575
      %v4638 = vsel %vm4584, %v4575, %v4577
      %v4639 = vsel %vm4584, %v4577, %v4579
      %v4640 = vsel %vm4584, %v4579, %v4581
      %v4641 = vsel %vm4584, %v4581, %v4583
      %4699 = vst [vmem:[#allocation2 + $0x558] sm:$0xc] %v4585
      %4700 = vst [vmem:[#allocation2 + $0x560] sm:$0xc] %v4586
      %4701 = vst [vmem:[#allocation2 + $0x568] sm:$0xc] %v4587
      %4702 = vst [vmem:[#allocation2 + $0x570] sm:$0xc] %v4588
      %4703 = vst [vmem:[#allocation2 + $0x578] sm:$0xc] %v4589
      %4704 = vst [vmem:[#allocation2 + $0x580] sm:$0xc] %v4590
      %4705 = vst [vmem:[#allocation2 + $0x588] sm:$0xc] %v4591
      %4706 = vst [vmem:[#allocation2 + $0x590] sm:$0xc] %v4592
      %4707 = vst [vmem:[#allocation2 + $0x598] sm:$0xc] %v4593
      %4708 = vst [vmem:[#allocation2 + $0x5a0] sm:$0xc] %v4594
      %4709 = vst [vmem:[#allocation2 + $0x5a8] sm:$0xc] %v4595
      %4710 = vst [vmem:[#allocation2 + $0x5b0] sm:$0xc] %v4596
      %4711 = vst [vmem:[#allocation2 + $0x5b8] sm:$0xc] %v4597
      %4712 = vst [vmem:[#allocation2 + $0x5c0] sm:$0xc] %v4598
      %4713 = vst [vmem:[#allocation2 + $0x5c8] sm:$0xc] %v4599
      %4714 = vst [vmem:[#allocation2 + $0x5d0] sm:$0xc] %v4600
      %4715 = vst [vmem:[#allocation2 + $0x5d8] sm:$0xc] %v4601
      %4716 = vst [vmem:[#allocation2 + $0x5e0] sm:$0xc] %v4602
      %4717 = vst [vmem:[#allocation2 + $0x5e8] sm:$0xc] %v4603
      %4718 = vst [vmem:[#allocation2 + $0x5f0] sm:$0xc] %v4604
      %4719 = vst [vmem:[#allocation2 + $0x5f8] sm:$0xc] %v4605
      %4720 = vst [vmem:[#allocation2 + $0x600] sm:$0xc] %v4606
      %4721 = vst [vmem:[#allocation2 + $0x608] sm:$0xc] %v4607
      %4722 = vst [vmem:[#allocation2 + $0x610] sm:$0xc] %v4608
      %4723 = vst [vmem:[#allocation2 + $0x618] sm:$0xc] %v4609
      %4724 = vst [vmem:[#allocation2 + $0x620] sm:$0xc] %v4610
      %4725 = vst [vmem:[#allocation2 + $0x628] sm:$0xc] %v4611
      %4726 = vst [vmem:[#allocation2 + $0x630] sm:$0xc] %v4612
      %4727 = vst [vmem:[#allocation2 + $0x638] sm:$0xc] %v4613
      %4728 = vst [vmem:[#allocation2 + $0x640] sm:$0xc] %v4614
      %4729 = vst [vmem:[#allocation2 + $0x648] sm:$0xc] %v4615
      %4730 = vst [vmem:[#allocation2 + $0x650] sm:$0xc] %v4616
      %4731 = vst [vmem:[#allocation2 + $0x658] sm:$0xc] %v4617
      %4732 = vst [vmem:[#allocation2 + $0x660] sm:$0xc] %v4618
      %4733 = vst [vmem:[#allocation2 + $0x668] sm:$0xc] %v4619
      %4734 = vst [vmem:[#allocation2 + $0x670] sm:$0xc] %v4620
      %4735 = vst [vmem:[#allocation2 + $0x678] sm:$0xc] %v4621
      %4736 = vst [vmem:[#allocation2 + $0x680] sm:$0xc] %v4622
      %4737 = vst [vmem:[#allocation2 + $0x688] sm:$0xc] %v4623
      %4738 = vst [vmem:[#allocation2 + $0x690] sm:$0xc] %v4624
      %4739 = vst [vmem:[#allocation2 + $0x698] sm:$0xc] %v4625
      %4740 = vst [vmem:[#allocation2 + $0x6a0] sm:$0xc] %v4626
      %4741 = vst [vmem:[#allocation2 + $0x6a8] sm:$0xc] %v4627
      %4742 = vst [vmem:[#allocation2 + $0x6b0] sm:$0xc] %v4628
      %4743 = vst [vmem:[#allocation2 + $0x6b8] sm:$0xc] %v4629
      %4744 = vst [vmem:[#allocation2 + $0x6c0] sm:$0xc] %v4630
      %4745 = vst [vmem:[#allocation2 + $0x6c8] sm:$0xc] %v4631
      %4746 = vst [vmem:[#allocation2 + $0x6d0] sm:$0xc] %v4632
      %4747 = vst [vmem:[#allocation2 + $0x6d8] sm:$0xc] %v4633
      %4748 = vst [vmem:[#allocation2 + $0x6e0] sm:$0xc] %v4634
      %4749 = vst [vmem:[#allocation2 + $0x6e8] sm:$0xc] %v4635
      %4750 = vst [vmem:[#allocation2 + $0x6f0] sm:$0xc] %v4636
      %4751 = vst [vmem:[#allocation2 + $0x6f8] sm:$0xc] %v4637
      %4752 = vst [vmem:[#allocation2 + $0x700] sm:$0xc] %v4638
      %4753 = vst [vmem:[#allocation2 + $0x708] sm:$0xc] %v4639
      %4754 = vst [vmem:[#allocation2 + $0x710] sm:$0xc] %v4640
      %4755 = vst [vmem:[#allocation2 + $0x718] sm:$0xc] %v4641
      %4756 = vrot.lane.b32.xlu0 %v1166, 88
      %v4757 = vpop.permute.xlu0 %4756
      %4758 = vrot.lane.b32.xlu0 %v1167, 88
      %v4759 = vpop.permute.xlu0 %4758
      %4760 = vrot.lane.b32.xlu0 %v1168, 88
      %v4761 = vpop.permute.xlu0 %4760
      %4762 = vrot.lane.b32.xlu0 %v1169, 88
      %v4763 = vpop.permute.xlu0 %4762
      %4764 = vrot.lane.b32.xlu0 %v1170, 88
      %v4765 = vpop.permute.xlu0 %4764
      %4766 = vrot.lane.b32.xlu0 %v1171, 88
      %v4767 = vpop.permute.xlu0 %4766
      %4768 = vrot.lane.b32.xlu0 %v1172, 88
      %v4769 = vpop.permute.xlu0 %4768
      %4770 = vrot.lane.b32.xlu0 %v1173, 88
      %v4771 = vpop.permute.xlu0 %4770
      %4772 = vrot.lane.b32.xlu0 %v1174, 88
      %v4773 = vpop.permute.xlu0 %4772
      %4774 = vrot.lane.b32.xlu0 %v1175, 88
      %v4775 = vpop.permute.xlu0 %4774
      %4776 = vrot.lane.b32.xlu0 %v1176, 88
      %v4777 = vpop.permute.xlu0 %4776
      %4778 = vrot.lane.b32.xlu0 %v1177, 88
      %v4779 = vpop.permute.xlu0 %4778
      %4780 = vrot.lane.b32.xlu0 %v1178, 88
      %v4781 = vpop.permute.xlu0 %4780
      %4782 = vrot.lane.b32.xlu0 %v1179, 88
      %v4783 = vpop.permute.xlu0 %4782
      %4784 = vrot.lane.b32.xlu0 %v1180, 88
      %v4785 = vpop.permute.xlu0 %4784
      %4786 = vrot.lane.b32.xlu0 %v1181, 88
      %v4787 = vpop.permute.xlu0 %4786
      %4788 = vrot.lane.b32.xlu0 %v1182, 88
      %v4789 = vpop.permute.xlu0 %4788
      %4790 = vrot.lane.b32.xlu0 %v1183, 88
      %v4791 = vpop.permute.xlu0 %4790
      %4792 = vrot.lane.b32.xlu0 %v1184, 88
      %v4793 = vpop.permute.xlu0 %4792
      %4794 = vrot.lane.b32.xlu0 %v1185, 88
      %v4795 = vpop.permute.xlu0 %4794
      %4796 = vrot.lane.b32.xlu0 %v1186, 88
      %v4797 = vpop.permute.xlu0 %4796
      %4798 = vrot.lane.b32.xlu0 %v1187, 88
      %v4799 = vpop.permute.xlu0 %4798
      %4800 = vrot.lane.b32.xlu0 %v1188, 88
      %v4801 = vpop.permute.xlu0 %4800
      %4802 = vrot.lane.b32.xlu0 %v1189, 88
      %v4803 = vpop.permute.xlu0 %4802
      %4804 = vrot.lane.b32.xlu0 %v1190, 88
      %v4805 = vpop.permute.xlu0 %4804
      %4806 = vrot.lane.b32.xlu0 %v1191, 88
      %v4807 = vpop.permute.xlu0 %4806
      %4808 = vrot.lane.b32.xlu0 %v1192, 88
      %v4809 = vpop.permute.xlu0 %4808
      %4810 = vrot.lane.b32.xlu0 %v1193, 88
      %v4811 = vpop.permute.xlu0 %4810
      %4812 = vrot.lane.b32.xlu0 %v1194, 88
      %v4813 = vpop.permute.xlu0 %4812
      %4814 = vrot.lane.b32.xlu0 %v1195, 88
      %v4815 = vpop.permute.xlu0 %4814
      %4816 = vrot.lane.b32.xlu0 %v1196, 88
      %v4817 = vpop.permute.xlu0 %4816
      %4818 = vrot.lane.b32.xlu0 %v1197, 88
      %v4819 = vpop.permute.xlu0 %4818
      %4820 = vrot.lane.b32.xlu0 %v1198, 88
      %v4821 = vpop.permute.xlu0 %4820
      %4822 = vrot.lane.b32.xlu0 %v1199, 88
      %v4823 = vpop.permute.xlu0 %4822
      %4824 = vrot.lane.b32.xlu0 %v1200, 88
      %v4825 = vpop.permute.xlu0 %4824
      %4826 = vrot.lane.b32.xlu0 %v1201, 88
      %v4827 = vpop.permute.xlu0 %4826
      %4828 = vrot.lane.b32.xlu0 %v1202, 88
      %v4829 = vpop.permute.xlu0 %4828
      %4830 = vrot.lane.b32.xlu0 %v1203, 88
      %v4831 = vpop.permute.xlu0 %4830
      %4832 = vrot.lane.b32.xlu0 %v1204, 88
      %v4833 = vpop.permute.xlu0 %4832
      %4834 = vrot.lane.b32.xlu0 %v1205, 88
      %v4835 = vpop.permute.xlu0 %4834
      %4836 = vrot.lane.b32.xlu0 %v1206, 88
      %v4837 = vpop.permute.xlu0 %4836
      %4838 = vrot.lane.b32.xlu0 %v1207, 88
      %v4839 = vpop.permute.xlu0 %4838
      %4840 = vrot.lane.b32.xlu0 %v1208, 88
      %v4841 = vpop.permute.xlu0 %4840
      %4842 = vrot.lane.b32.xlu0 %v1209, 88
      %v4843 = vpop.permute.xlu0 %4842
      %4844 = vrot.lane.b32.xlu0 %v1210, 88
      %v4845 = vpop.permute.xlu0 %4844
      %4846 = vrot.lane.b32.xlu0 %v1211, 88
      %v4847 = vpop.permute.xlu0 %4846
      %4848 = vrot.lane.b32.xlu0 %v1212, 88
      %v4849 = vpop.permute.xlu0 %4848
      %4850 = vrot.lane.b32.xlu0 %v1213, 88
      %v4851 = vpop.permute.xlu0 %4850
      %4852 = vrot.lane.b32.xlu0 %v1214, 88
      %v4853 = vpop.permute.xlu0 %4852
      %4854 = vrot.lane.b32.xlu0 %v3586, 88
      %v4855 = vpop.permute.xlu0 %4854
      %4856 = vrot.lane.b32.xlu0 %v3587, 88
      %v4857 = vpop.permute.xlu0 %4856
      %4858 = vrot.lane.b32.xlu0 %v3588, 88
      %v4859 = vpop.permute.xlu0 %4858
      %4860 = vrot.lane.b32.xlu0 %v3589, 88
      %v4861 = vpop.permute.xlu0 %4860
      %4862 = vrot.lane.b32.xlu0 %v3590, 88
      %v4863 = vpop.permute.xlu0 %4862
      %4864 = vrot.lane.b32.xlu0 %v3591, 88
      %v4865 = vpop.permute.xlu0 %4864
      %4866 = vrot.lane.b32.xlu0 %v3592, 88
      %v4867 = vpop.permute.xlu0 %4866
      %4868 = vrot.lane.b32.xlu0 %v3593, 88
      %v4869 = vpop.permute.xlu0 %4868
      %4870 = vrot.lane.b32.xlu0 %v3594, 88
      %v4871 = vpop.permute.xlu0 %4870
      %vm4872 = vcmask 719872
      %v4873 = vsel %vm4872, %v4757, %v4759
      %v4874 = vsel %vm4872, %v4759, %v4761
      %v4875 = vsel %vm4872, %v4761, %v4763
      %v4876 = vsel %vm4872, %v4763, %v4765
      %v4877 = vsel %vm4872, %v4765, %v4767
      %v4878 = vsel %vm4872, %v4767, %v4769
      %v4879 = vsel %vm4872, %v4769, %v4771
      %v4880 = vsel %vm4872, %v4771, %v4773
      %v4881 = vsel %vm4872, %v4773, %v4775
      %v4882 = vsel %vm4872, %v4775, %v4777
      %v4883 = vsel %vm4872, %v4777, %v4779
      %v4884 = vsel %vm4872, %v4779, %v4781
      %v4885 = vsel %vm4872, %v4781, %v4783
      %v4886 = vsel %vm4872, %v4783, %v4785
      %v4887 = vsel %vm4872, %v4785, %v4787
      %v4888 = vsel %vm4872, %v4787, %v4789
      %v4889 = vsel %vm4872, %v4789, %v4791
      %v4890 = vsel %vm4872, %v4791, %v4793
      %v4891 = vsel %vm4872, %v4793, %v4795
      %v4892 = vsel %vm4872, %v4795, %v4797
      %v4893 = vsel %vm4872, %v4797, %v4799
      %v4894 = vsel %vm4872, %v4799, %v4801
      %v4895 = vsel %vm4872, %v4801, %v4803
      %v4896 = vsel %vm4872, %v4803, %v4805
      %v4897 = vsel %vm4872, %v4805, %v4807
      %v4898 = vsel %vm4872, %v4807, %v4809
      %v4899 = vsel %vm4872, %v4809, %v4811
      %v4900 = vsel %vm4872, %v4811, %v4813
      %v4901 = vsel %vm4872, %v4813, %v4815
      %v4902 = vsel %vm4872, %v4815, %v4817
      %v4903 = vsel %vm4872, %v4817, %v4819
      %v4904 = vsel %vm4872, %v4819, %v4821
      %v4905 = vsel %vm4872, %v4821, %v4823
      %v4906 = vsel %vm4872, %v4823, %v4825
      %v4907 = vsel %vm4872, %v4825, %v4827
      %v4908 = vsel %vm4872, %v4827, %v4829
      %v4909 = vsel %vm4872, %v4829, %v4831
      %v4910 = vsel %vm4872, %v4831, %v4833
      %v4911 = vsel %vm4872, %v4833, %v4835
      %v4912 = vsel %vm4872, %v4835, %v4837
      %v4913 = vsel %vm4872, %v4837, %v4839
      %v4914 = vsel %vm4872, %v4839, %v4841
      %v4915 = vsel %vm4872, %v4841, %v4843
      %v4916 = vsel %vm4872, %v4843, %v4845
      %v4917 = vsel %vm4872, %v4845, %v4847
      %v4918 = vsel %vm4872, %v4847, %v4849
      %v4919 = vsel %vm4872, %v4849, %v4851
      %v4920 = vsel %vm4872, %v4851, %v4853
      %v4921 = vsel %vm4872, %v4853, %v4855
      %v4922 = vsel %vm4872, %v4855, %v4857
      %v4923 = vsel %vm4872, %v4857, %v4859
      %v4924 = vsel %vm4872, %v4859, %v4861
      %v4925 = vsel %vm4872, %v4861, %v4863
      %v4926 = vsel %vm4872, %v4863, %v4865
      %v4927 = vsel %vm4872, %v4865, %v4867
      %v4928 = vsel %vm4872, %v4867, %v4869
      %v4929 = vsel %vm4872, %v4869, %v4871
      %4987 = vst [vmem:[#allocation2 + $0x558] sm:$0x30] %v4873
      %4988 = vst [vmem:[#allocation2 + $0x560] sm:$0x30] %v4874
      %4989 = vst [vmem:[#allocation2 + $0x568] sm:$0x30] %v4875
      %4990 = vst [vmem:[#allocation2 + $0x570] sm:$0x30] %v4876
      %4991 = vst [vmem:[#allocation2 + $0x578] sm:$0x30] %v4877
      %4992 = vst [vmem:[#allocation2 + $0x580] sm:$0x30] %v4878
      %4993 = vst [vmem:[#allocation2 + $0x588] sm:$0x30] %v4879
      %4994 = vst [vmem:[#allocation2 + $0x590] sm:$0x30] %v4880
      %4995 = vst [vmem:[#allocation2 + $0x598] sm:$0x30] %v4881
      %4996 = vst [vmem:[#allocation2 + $0x5a0] sm:$0x30] %v4882
      %4997 = vst [vmem:[#allocation2 + $0x5a8] sm:$0x30] %v4883
      %4998 = vst [vmem:[#allocation2 + $0x5b0] sm:$0x30] %v4884
      %4999 = vst [vmem:[#allocation2 + $0x5b8] sm:$0x30] %v4885
      %5000 = vst [vmem:[#allocation2 + $0x5c0] sm:$0x30] %v4886
      %5001 = vst [vmem:[#allocation2 + $0x5c8] sm:$0x30] %v4887
      %5002 = vst [vmem:[#allocation2 + $0x5d0] sm:$0x30] %v4888
      %5003 = vst [vmem:[#allocation2 + $0x5d8] sm:$0x30] %v4889
      %5004 = vst [vmem:[#allocation2 + $0x5e0] sm:$0x30] %v4890
      %5005 = vst [vmem:[#allocation2 + $0x5e8] sm:$0x30] %v4891
      %5006 = vst [vmem:[#allocation2 + $0x5f0] sm:$0x30] %v4892
      %5007 = vst [vmem:[#allocation2 + $0x5f8] sm:$0x30] %v4893
      %5008 = vst [vmem:[#allocation2 + $0x600] sm:$0x30] %v4894
      %5009 = vst [vmem:[#allocation2 + $0x608] sm:$0x30] %v4895
      %5010 = vst [vmem:[#allocation2 + $0x610] sm:$0x30] %v4896
      %5011 = vst [vmem:[#allocation2 + $0x618] sm:$0x30] %v4897
      %5012 = vst [vmem:[#allocation2 + $0x620] sm:$0x30] %v4898
      %5013 = vst [vmem:[#allocation2 + $0x628] sm:$0x30] %v4899
      %5014 = vst [vmem:[#allocation2 + $0x630] sm:$0x30] %v4900
      %5015 = vst [vmem:[#allocation2 + $0x638] sm:$0x30] %v4901
      %5016 = vst [vmem:[#allocation2 + $0x640] sm:$0x30] %v4902
      %5017 = vst [vmem:[#allocation2 + $0x648] sm:$0x30] %v4903
      %5018 = vst [vmem:[#allocation2 + $0x650] sm:$0x30] %v4904
      %5019 = vst [vmem:[#allocation2 + $0x658] sm:$0x30] %v4905
      %5020 = vst [vmem:[#allocation2 + $0x660] sm:$0x30] %v4906
      %5021 = vst [vmem:[#allocation2 + $0x668] sm:$0x30] %v4907
      %5022 = vst [vmem:[#allocation2 + $0x670] sm:$0x30] %v4908
      %5023 = vst [vmem:[#allocation2 + $0x678] sm:$0x30] %v4909
      %5024 = vst [vmem:[#allocation2 + $0x680] sm:$0x30] %v4910
      %5025 = vst [vmem:[#allocation2 + $0x688] sm:$0x30] %v4911
      %5026 = vst [vmem:[#allocation2 + $0x690] sm:$0x30] %v4912
      %5027 = vst [vmem:[#allocation2 + $0x698] sm:$0x30] %v4913
      %5028 = vst [vmem:[#allocation2 + $0x6a0] sm:$0x30] %v4914
      %5029 = vst [vmem:[#allocation2 + $0x6a8] sm:$0x30] %v4915
      %5030 = vst [vmem:[#allocation2 + $0x6b0] sm:$0x30] %v4916
      %5031 = vst [vmem:[#allocation2 + $0x6b8] sm:$0x30] %v4917
      %5032 = vst [vmem:[#allocation2 + $0x6c0] sm:$0x30] %v4918
      %5033 = vst [vmem:[#allocation2 + $0x6c8] sm:$0x30] %v4919
      %5034 = vst [vmem:[#allocation2 + $0x6d0] sm:$0x30] %v4920
      %5035 = vst [vmem:[#allocation2 + $0x6d8] sm:$0x30] %v4921
      %5036 = vst [vmem:[#allocation2 + $0x6e0] sm:$0x30] %v4922
      %5037 = vst [vmem:[#allocation2 + $0x6e8] sm:$0x30] %v4923
      %5038 = vst [vmem:[#allocation2 + $0x6f0] sm:$0x30] %v4924
      %5039 = vst [vmem:[#allocation2 + $0x6f8] sm:$0x30] %v4925
      %5040 = vst [vmem:[#allocation2 + $0x700] sm:$0x30] %v4926
      %5041 = vst [vmem:[#allocation2 + $0x708] sm:$0x30] %v4927
      %5042 = vst [vmem:[#allocation2 + $0x710] sm:$0x30] %v4928
      %5043 = vst [vmem:[#allocation2 + $0x718] sm:$0x30] %v4929
      %5044 = vrot.lane.b32.xlu0 %v1512, 56
      %v5045 = vpop.permute.xlu0 %5044
      %5046 = vrot.lane.b32.xlu0 %v1513, 56
      %v5047 = vpop.permute.xlu0 %5046
      %5048 = vrot.lane.b32.xlu0 %v1514, 56
      %v5049 = vpop.permute.xlu0 %5048
      %5050 = vrot.lane.b32.xlu0 %v1515, 56
      %v5051 = vpop.permute.xlu0 %5050
      %5052 = vrot.lane.b32.xlu0 %v1516, 56
      %v5053 = vpop.permute.xlu0 %5052
      %5054 = vrot.lane.b32.xlu0 %v1517, 56
      %v5055 = vpop.permute.xlu0 %5054
      %5056 = vrot.lane.b32.xlu0 %v1518, 56
      %v5057 = vpop.permute.xlu0 %5056
      %5058 = vrot.lane.b32.xlu0 %v1519, 56
      %v5059 = vpop.permute.xlu0 %5058
      %5060 = vrot.lane.b32.xlu0 %v1520, 56
      %v5061 = vpop.permute.xlu0 %5060
      %5062 = vrot.lane.b32.xlu0 %v1521, 56
      %v5063 = vpop.permute.xlu0 %5062
      %5064 = vrot.lane.b32.xlu0 %v1522, 56
      %v5065 = vpop.permute.xlu0 %5064
      %5066 = vrot.lane.b32.xlu0 %v1523, 56
      %v5067 = vpop.permute.xlu0 %5066
      %5068 = vrot.lane.b32.xlu0 %v1524, 56
      %v5069 = vpop.permute.xlu0 %5068
      %5070 = vrot.lane.b32.xlu0 %v1525, 56
      %v5071 = vpop.permute.xlu0 %5070
      %5072 = vrot.lane.b32.xlu0 %v1526, 56
      %v5073 = vpop.permute.xlu0 %5072
      %5074 = vrot.lane.b32.xlu0 %v1527, 56
      %v5075 = vpop.permute.xlu0 %5074
      %5076 = vrot.lane.b32.xlu0 %v1528, 56
      %v5077 = vpop.permute.xlu0 %5076
      %5078 = vrot.lane.b32.xlu0 %v1529, 56
      %v5079 = vpop.permute.xlu0 %5078
      %5080 = vrot.lane.b32.xlu0 %v1530, 56
      %v5081 = vpop.permute.xlu0 %5080
      %5082 = vrot.lane.b32.xlu0 %v1531, 56
      %v5083 = vpop.permute.xlu0 %5082
      %5084 = vrot.lane.b32.xlu0 %v1532, 56
      %v5085 = vpop.permute.xlu0 %5084
      %5086 = vrot.lane.b32.xlu0 %v1533, 56
      %v5087 = vpop.permute.xlu0 %5086
      %5088 = vrot.lane.b32.xlu0 %v1534, 56
      %v5089 = vpop.permute.xlu0 %5088
      %5090 = vrot.lane.b32.xlu0 %v1535, 56
      %v5091 = vpop.permute.xlu0 %5090
      %5092 = vrot.lane.b32.xlu0 %v1536, 56
      %v5093 = vpop.permute.xlu0 %5092
      %5094 = vrot.lane.b32.xlu0 %v1537, 56
      %v5095 = vpop.permute.xlu0 %5094
      %5096 = vrot.lane.b32.xlu0 %v1538, 56
      %v5097 = vpop.permute.xlu0 %5096
      %5098 = vrot.lane.b32.xlu0 %v1539, 56
      %v5099 = vpop.permute.xlu0 %5098
      %5100 = vrot.lane.b32.xlu0 %v1540, 56
      %v5101 = vpop.permute.xlu0 %5100
      %5102 = vrot.lane.b32.xlu0 %v1541, 56
      %v5103 = vpop.permute.xlu0 %5102
      %5104 = vrot.lane.b32.xlu0 %v1542, 56
      %v5105 = vpop.permute.xlu0 %5104
      %5106 = vrot.lane.b32.xlu0 %v1543, 56
      %v5107 = vpop.permute.xlu0 %5106
      %5108 = vrot.lane.b32.xlu0 %v1544, 56
      %v5109 = vpop.permute.xlu0 %5108
      %5110 = vrot.lane.b32.xlu0 %v1545, 56
      %v5111 = vpop.permute.xlu0 %5110
      %5112 = vrot.lane.b32.xlu0 %v1546, 56
      %v5113 = vpop.permute.xlu0 %5112
      %5114 = vrot.lane.b32.xlu0 %v1547, 56
      %v5115 = vpop.permute.xlu0 %5114
      %5116 = vrot.lane.b32.xlu0 %v1548, 56
      %v5117 = vpop.permute.xlu0 %5116
      %5118 = vrot.lane.b32.xlu0 %v1549, 56
      %v5119 = vpop.permute.xlu0 %5118
      %5120 = vrot.lane.b32.xlu0 %v1550, 56
      %v5121 = vpop.permute.xlu0 %5120
      %5122 = vrot.lane.b32.xlu0 %v1551, 56
      %v5123 = vpop.permute.xlu0 %5122
      %5124 = vrot.lane.b32.xlu0 %v1552, 56
      %v5125 = vpop.permute.xlu0 %5124
      %5126 = vrot.lane.b32.xlu0 %v1553, 56
      %v5127 = vpop.permute.xlu0 %5126
      %5128 = vrot.lane.b32.xlu0 %v1554, 56
      %v5129 = vpop.permute.xlu0 %5128
      %5130 = vrot.lane.b32.xlu0 %v1555, 56
      %v5131 = vpop.permute.xlu0 %5130
      %5132 = vrot.lane.b32.xlu0 %v1556, 56
      %v5133 = vpop.permute.xlu0 %5132
      %5134 = vrot.lane.b32.xlu0 %v1557, 56
      %v5135 = vpop.permute.xlu0 %5134
      %5136 = vrot.lane.b32.xlu0 %v1558, 56
      %v5137 = vpop.permute.xlu0 %5136
      %5138 = vrot.lane.b32.xlu0 %v1559, 56
      %v5139 = vpop.permute.xlu0 %5138
      %5140 = vrot.lane.b32.xlu0 %v1560, 56
      %v5141 = vpop.permute.xlu0 %5140
      %5142 = vrot.lane.b32.xlu0 %v3883, 56
      %v5143 = vpop.permute.xlu0 %5142
      %5144 = vrot.lane.b32.xlu0 %v3884, 56
      %v5145 = vpop.permute.xlu0 %5144
      %5146 = vrot.lane.b32.xlu0 %v3885, 56
      %v5147 = vpop.permute.xlu0 %5146
      %5148 = vrot.lane.b32.xlu0 %v3886, 56
      %v5149 = vpop.permute.xlu0 %5148
      %5150 = vrot.lane.b32.xlu0 %v3887, 56
      %v5151 = vpop.permute.xlu0 %5150
      %5152 = vrot.lane.b32.xlu0 %v3888, 56
      %v5153 = vpop.permute.xlu0 %5152
      %5154 = vrot.lane.b32.xlu0 %v3889, 56
      %v5155 = vpop.permute.xlu0 %5154
      %5156 = vrot.lane.b32.xlu0 %v3890, 56
      %v5157 = vpop.permute.xlu0 %5156
      %5158 = vrot.lane.b32.xlu0 %v3891, 56
      %v5159 = vpop.permute.xlu0 %5158
      %vm5160 = vcmask 457728
      %v5161 = vsel %vm5160, %v5045, %v5047
      %v5162 = vsel %vm5160, %v5047, %v5049
      %v5163 = vsel %vm5160, %v5049, %v5051
      %v5164 = vsel %vm5160, %v5051, %v5053
      %v5165 = vsel %vm5160, %v5053, %v5055
      %v5166 = vsel %vm5160, %v5055, %v5057
      %v5167 = vsel %vm5160, %v5057, %v5059
      %v5168 = vsel %vm5160, %v5059, %v5061
      %v5169 = vsel %vm5160, %v5061, %v5063
      %v5170 = vsel %vm5160, %v5063, %v5065
      %v5171 = vsel %vm5160, %v5065, %v5067
      %v5172 = vsel %vm5160, %v5067, %v5069
      %v5173 = vsel %vm5160, %v5069, %v5071
      %v5174 = vsel %vm5160, %v5071, %v5073
      %v5175 = vsel %vm5160, %v5073, %v5075
      %v5176 = vsel %vm5160, %v5075, %v5077
      %v5177 = vsel %vm5160, %v5077, %v5079
      %v5178 = vsel %vm5160, %v5079, %v5081
      %v5179 = vsel %vm5160, %v5081, %v5083
      %v5180 = vsel %vm5160, %v5083, %v5085
      %v5181 = vsel %vm5160, %v5085, %v5087
      %v5182 = vsel %vm5160, %v5087, %v5089
      %v5183 = vsel %vm5160, %v5089, %v5091
      %v5184 = vsel %vm5160, %v5091, %v5093
      %v5185 = vsel %vm5160, %v5093, %v5095
      %v5186 = vsel %vm5160, %v5095, %v5097
      %v5187 = vsel %vm5160, %v5097, %v5099
      %v5188 = vsel %vm5160, %v5099, %v5101
      %v5189 = vsel %vm5160, %v5101, %v5103
      %v5190 = vsel %vm5160, %v5103, %v5105
      %v5191 = vsel %vm5160, %v5105, %v5107
      %v5192 = vsel %vm5160, %v5107, %v5109
      %v5193 = vsel %vm5160, %v5109, %v5111
      %v5194 = vsel %vm5160, %v5111, %v5113
      %v5195 = vsel %vm5160, %v5113, %v5115
      %v5196 = vsel %vm5160, %v5115, %v5117
      %v5197 = vsel %vm5160, %v5117, %v5119
      %v5198 = vsel %vm5160, %v5119, %v5121
      %v5199 = vsel %vm5160, %v5121, %v5123
      %v5200 = vsel %vm5160, %v5123, %v5125
      %v5201 = vsel %vm5160, %v5125, %v5127
      %v5202 = vsel %vm5160, %v5127, %v5129
      %v5203 = vsel %vm5160, %v5129, %v5131
      %v5204 = vsel %vm5160, %v5131, %v5133
      %v5205 = vsel %vm5160, %v5133, %v5135
      %v5206 = vsel %vm5160, %v5135, %v5137
      %v5207 = vsel %vm5160, %v5137, %v5139
      %v5208 = vsel %vm5160, %v5139, %v5141
      %v5209 = vsel %vm5160, %v5141, %v5143
      %v5210 = vsel %vm5160, %v5143, %v5145
      %v5211 = vsel %vm5160, %v5145, %v5147
      %v5212 = vsel %vm5160, %v5147, %v5149
      %v5213 = vsel %vm5160, %v5149, %v5151
      %v5214 = vsel %vm5160, %v5151, %v5153
      %v5215 = vsel %vm5160, %v5153, %v5155
      %v5216 = vsel %vm5160, %v5155, %v5157
      %v5217 = vsel %vm5160, %v5157, %v5159
      %5275 = vst [vmem:[#allocation2 + $0x558] sm:$0xc0] %v5161
      %5276 = vst [vmem:[#allocation2 + $0x560] sm:$0xc0] %v5162
      %5277 = vst [vmem:[#allocation2 + $0x568] sm:$0xc0] %v5163
      %5278 = vst [vmem:[#allocation2 + $0x570] sm:$0xc0] %v5164
      %5279 = vst [vmem:[#allocation2 + $0x578] sm:$0xc0] %v5165
      %5280 = vst [vmem:[#allocation2 + $0x580] sm:$0xc0] %v5166
      %5281 = vst [vmem:[#allocation2 + $0x588] sm:$0xc0] %v5167
      %5282 = vst [vmem:[#allocation2 + $0x590] sm:$0xc0] %v5168
      %5283 = vst [vmem:[#allocation2 + $0x598] sm:$0xc0] %v5169
      %5284 = vst [vmem:[#allocation2 + $0x5a0] sm:$0xc0] %v5170
      %5285 = vst [vmem:[#allocation2 + $0x5a8] sm:$0xc0] %v5171
      %5286 = vst [vmem:[#allocation2 + $0x5b0] sm:$0xc0] %v5172
      %5287 = vst [vmem:[#allocation2 + $0x5b8] sm:$0xc0] %v5173
      %5288 = vst [vmem:[#allocation2 + $0x5c0] sm:$0xc0] %v5174
      %5289 = vst [vmem:[#allocation2 + $0x5c8] sm:$0xc0] %v5175
      %5290 = vst [vmem:[#allocation2 + $0x5d0] sm:$0xc0] %v5176
      %5291 = vst [vmem:[#allocation2 + $0x5d8] sm:$0xc0] %v5177
      %5292 = vst [vmem:[#allocation2 + $0x5e0] sm:$0xc0] %v5178
      %5293 = vst [vmem:[#allocation2 + $0x5e8] sm:$0xc0] %v5179
      %5294 = vst [vmem:[#allocation2 + $0x5f0] sm:$0xc0] %v5180
      %5295 = vst [vmem:[#allocation2 + $0x5f8] sm:$0xc0] %v5181
      %5296 = vst [vmem:[#allocation2 + $0x600] sm:$0xc0] %v5182
      %5297 = vst [vmem:[#allocation2 + $0x608] sm:$0xc0] %v5183
      %5298 = vst [vmem:[#allocation2 + $0x610] sm:$0xc0] %v5184
      %5299 = vst [vmem:[#allocation2 + $0x618] sm:$0xc0] %v5185
      %5300 = vst [vmem:[#allocation2 + $0x620] sm:$0xc0] %v5186
      %5301 = vst [vmem:[#allocation2 + $0x628] sm:$0xc0] %v5187
      %5302 = vst [vmem:[#allocation2 + $0x630] sm:$0xc0] %v5188
      %5303 = vst [vmem:[#allocation2 + $0x638] sm:$0xc0] %v5189
      %5304 = vst [vmem:[#allocation2 + $0x640] sm:$0xc0] %v5190
      %5305 = vst [vmem:[#allocation2 + $0x648] sm:$0xc0] %v5191
      %5306 = vst [vmem:[#allocation2 + $0x650] sm:$0xc0] %v5192
      %5307 = vst [vmem:[#allocation2 + $0x658] sm:$0xc0] %v5193
      %5308 = vst [vmem:[#allocation2 + $0x660] sm:$0xc0] %v5194
      %5309 = vst [vmem:[#allocation2 + $0x668] sm:$0xc0] %v5195
      %5310 = vst [vmem:[#allocation2 + $0x670] sm:$0xc0] %v5196
      %5311 = vst [vmem:[#allocation2 + $0x678] sm:$0xc0] %v5197
      %5312 = vst [vmem:[#allocation2 + $0x680] sm:$0xc0] %v5198
      %5313 = vst [vmem:[#allocation2 + $0x688] sm:$0xc0] %v5199
      %5314 = vst [vmem:[#allocation2 + $0x690] sm:$0xc0] %v5200
      %5315 = vst [vmem:[#allocation2 + $0x698] sm:$0xc0] %v5201
      %5316 = vst [vmem:[#allocation2 + $0x6a0] sm:$0xc0] %v5202
      %5317 = vst [vmem:[#allocation2 + $0x6a8] sm:$0xc0] %v5203
      %5318 = vst [vmem:[#allocation2 + $0x6b0] sm:$0xc0] %v5204
      %5319 = vst [vmem:[#allocation2 + $0x6b8] sm:$0xc0] %v5205
      %5320 = vst [vmem:[#allocation2 + $0x6c0] sm:$0xc0] %v5206
      %5321 = vst [vmem:[#allocation2 + $0x6c8] sm:$0xc0] %v5207
      %5322 = vst [vmem:[#allocation2 + $0x6d0] sm:$0xc0] %v5208
      %5323 = vst [vmem:[#allocation2 + $0x6d8] sm:$0xc0] %v5209
      %5324 = vst [vmem:[#allocation2 + $0x6e0] sm:$0xc0] %v5210
      %5325 = vst [vmem:[#allocation2 + $0x6e8] sm:$0xc0] %v5211
      %5326 = vst [vmem:[#allocation2 + $0x6f0] sm:$0xc0] %v5212
      %5327 = vst [vmem:[#allocation2 + $0x6f8] sm:$0xc0] %v5213
      %5328 = vst [vmem:[#allocation2 + $0x700] sm:$0xc0] %v5214
      %5329 = vst [vmem:[#allocation2 + $0x708] sm:$0xc0] %v5215
      %5330 = vst [vmem:[#allocation2 + $0x710] sm:$0xc0] %v5216
      %5331 = vst [vmem:[#allocation2 + $0x718] sm:$0xc0] %v5217
      %5332 = vrot.lane.b32.xlu0 %v412, 55
      %v5333 = vpop.permute.xlu0 %5332
      %5334 = vrot.lane.b32.xlu0 %v411, 55
      %v5335 = vpop.permute.xlu0 %5334
      %5336 = vrot.lane.b32.xlu0 %v413, 55
      %v5337 = vpop.permute.xlu0 %5336
      %5338 = vrot.lane.b32.xlu0 %v421, 55
      %v5339 = vpop.permute.xlu0 %5338
      %5340 = vrot.lane.b32.xlu0 %v429, 55
      %v5341 = vpop.permute.xlu0 %5340
      %5342 = vrot.lane.b32.xlu0 %v428, 55
      %v5343 = vpop.permute.xlu0 %5342
      %5344 = vrot.lane.b32.xlu0 %v430, 55
      %v5345 = vpop.permute.xlu0 %5344
      %5346 = vrot.lane.b32.xlu0 %v438, 55
      %v5347 = vpop.permute.xlu0 %5346
      %5348 = vrot.lane.b32.xlu0 %v446, 55
      %v5349 = vpop.permute.xlu0 %5348
      %5350 = vrot.lane.b32.xlu0 %v445, 55
      %v5351 = vpop.permute.xlu0 %5350
      %5352 = vrot.lane.b32.xlu0 %v447, 55
      %v5353 = vpop.permute.xlu0 %5352
      %5354 = vrot.lane.b32.xlu0 %v455, 55
      %v5355 = vpop.permute.xlu0 %5354
      %5356 = vrot.lane.b32.xlu0 %v463, 55
      %v5357 = vpop.permute.xlu0 %5356
      %5358 = vrot.lane.b32.xlu0 %v462, 55
      %v5359 = vpop.permute.xlu0 %5358
      %5360 = vrot.lane.b32.xlu0 %v464, 55
      %v5361 = vpop.permute.xlu0 %5360
      %5362 = vrot.lane.b32.xlu0 %v472, 55
      %v5363 = vpop.permute.xlu0 %5362
      %5364 = vrot.lane.b32.xlu0 %v480, 55
      %v5365 = vpop.permute.xlu0 %5364
      %5366 = vrot.lane.b32.xlu0 %v479, 55
      %v5367 = vpop.permute.xlu0 %5366
      %5368 = vrot.lane.b32.xlu0 %v481, 55
      %v5369 = vpop.permute.xlu0 %5368
      %5370 = vrot.lane.b32.xlu0 %v489, 55
      %v5371 = vpop.permute.xlu0 %5370
      %5372 = vrot.lane.b32.xlu0 %v497, 55
      %v5373 = vpop.permute.xlu0 %5372
      %5374 = vrot.lane.b32.xlu0 %v496, 55
      %v5375 = vpop.permute.xlu0 %5374
      %5376 = vrot.lane.b32.xlu0 %v498, 55
      %v5377 = vpop.permute.xlu0 %5376
      %5378 = vrot.lane.b32.xlu0 %v506, 55
      %v5379 = vpop.permute.xlu0 %5378
      %5380 = vrot.lane.b32.xlu0 %v514, 55
      %v5381 = vpop.permute.xlu0 %5380
      %5382 = vrot.lane.b32.xlu0 %v513, 55
      %v5383 = vpop.permute.xlu0 %5382
      %5384 = vrot.lane.b32.xlu0 %v515, 55
      %v5385 = vpop.permute.xlu0 %5384
      %5386 = vrot.lane.b32.xlu0 %v523, 55
      %v5387 = vpop.permute.xlu0 %5386
      %5388 = vrot.lane.b32.xlu0 %v531, 55
      %v5389 = vpop.permute.xlu0 %5388
      %5390 = vrot.lane.b32.xlu0 %v530, 55
      %v5391 = vpop.permute.xlu0 %5390
      %5392 = vrot.lane.b32.xlu0 %v532, 55
      %v5393 = vpop.permute.xlu0 %5392
      %5394 = vrot.lane.b32.xlu0 %v540, 55
      %v5395 = vpop.permute.xlu0 %5394
      %5396 = vrot.lane.b32.xlu0 %v548, 55
      %v5397 = vpop.permute.xlu0 %5396
      %5398 = vrot.lane.b32.xlu0 %v547, 55
      %v5399 = vpop.permute.xlu0 %5398
      %5400 = vrot.lane.b32.xlu0 %v549, 55
      %v5401 = vpop.permute.xlu0 %5400
      %5402 = vrot.lane.b32.xlu0 %v557, 55
      %v5403 = vpop.permute.xlu0 %5402
      %5404 = vrot.lane.b32.xlu0 %v565, 55
      %v5405 = vpop.permute.xlu0 %5404
      %5406 = vrot.lane.b32.xlu0 %v564, 55
      %v5407 = vpop.permute.xlu0 %5406
      %5408 = vrot.lane.b32.xlu0 %v566, 55
      %v5409 = vpop.permute.xlu0 %5408
      %5410 = vrot.lane.b32.xlu0 %v574, 55
      %v5411 = vpop.permute.xlu0 %5410
      %5412 = vrot.lane.b32.xlu0 %v582, 55
      %v5413 = vpop.permute.xlu0 %5412
      %5414 = vrot.lane.b32.xlu0 %v581, 55
      %v5415 = vpop.permute.xlu0 %5414
      %5416 = vrot.lane.b32.xlu0 %v583, 55
      %v5417 = vpop.permute.xlu0 %5416
      %5418 = vrot.lane.b32.xlu0 %v591, 55
      %v5419 = vpop.permute.xlu0 %5418
      %5420 = vrot.lane.b32.xlu0 %v599, 55
      %v5421 = vpop.permute.xlu0 %5420
      %5422 = vrot.lane.b32.xlu0 %v598, 55
      %v5423 = vpop.permute.xlu0 %5422
      %5424 = vrot.lane.b32.xlu0 %v600, 55
      %v5425 = vpop.permute.xlu0 %5424
      %5426 = vrot.lane.b32.xlu0 %v607, 55
      %v5427 = vpop.permute.xlu0 %5426
      %5428 = vrot.lane.b32.xlu0 %v677, 55
      %v5429 = vpop.permute.xlu0 %5428
      %5430 = vrot.lane.b32.xlu0 %v685, 55
      %v5431 = vpop.permute.xlu0 %5430
      %5432 = vrot.lane.b32.xlu0 %v684, 55
      %v5433 = vpop.permute.xlu0 %5432
      %5434 = vrot.lane.b32.xlu0 %v686, 55
      %v5435 = vpop.permute.xlu0 %5434
      %5436 = vrot.lane.b32.xlu0 %v694, 55
      %v5437 = vpop.permute.xlu0 %5436
      %5438 = vrot.lane.b32.xlu0 %v702, 55
      %v5439 = vpop.permute.xlu0 %5438
      %5440 = vrot.lane.b32.xlu0 %v701, 55
      %v5441 = vpop.permute.xlu0 %5440
      %5442 = vrot.lane.b32.xlu0 %v703, 55
      %v5443 = vpop.permute.xlu0 %5442
      %5444 = vrot.lane.b32.xlu0 %v711, 55
      %v5445 = vpop.permute.xlu0 %5444
      %5446 = vrot.lane.b32.xlu0 %v719, 55
      %v5447 = vpop.permute.xlu0 %5446
      %vm5448 = vcmask 449536
      %v5449 = vsel %vm5448, %v5333, %v5335
      %v5450 = vsel %vm5448, %v5335, %v5337
      %v5451 = vsel %vm5448, %v5337, %v5339
      %v5452 = vsel %vm5448, %v5339, %v5341
      %v5453 = vsel %vm5448, %v5341, %v5343
      %v5454 = vsel %vm5448, %v5343, %v5345
      %v5455 = vsel %vm5448, %v5345, %v5347
      %v5456 = vsel %vm5448, %v5347, %v5349
      %v5457 = vsel %vm5448, %v5349, %v5351
      %v5458 = vsel %vm5448, %v5351, %v5353
      %v5459 = vsel %vm5448, %v5353, %v5355
      %v5460 = vsel %vm5448, %v5355, %v5357
      %v5461 = vsel %vm5448, %v5357, %v5359
      %v5462 = vsel %vm5448, %v5359, %v5361
      %v5463 = vsel %vm5448, %v5361, %v5363
      %v5464 = vsel %vm5448, %v5363, %v5365
      %v5465 = vsel %vm5448, %v5365, %v5367
      %v5466 = vsel %vm5448, %v5367, %v5369
      %v5467 = vsel %vm5448, %v5369, %v5371
      %v5468 = vsel %vm5448, %v5371, %v5373
      %v5469 = vsel %vm5448, %v5373, %v5375
      %v5470 = vsel %vm5448, %v5375, %v5377
      %v5471 = vsel %vm5448, %v5377, %v5379
      %v5472 = vsel %vm5448, %v5379, %v5381
      %v5473 = vsel %vm5448, %v5381, %v5383
      %v5474 = vsel %vm5448, %v5383, %v5385
      %v5475 = vsel %vm5448, %v5385, %v5387
      %v5476 = vsel %vm5448, %v5387, %v5389
      %v5477 = vsel %vm5448, %v5389, %v5391
      %v5478 = vsel %vm5448, %v5391, %v5393
      %v5479 = vsel %vm5448, %v5393, %v5395
      %v5480 = vsel %vm5448, %v5395, %v5397
      %v5481 = vsel %vm5448, %v5397, %v5399
      %v5482 = vsel %vm5448, %v5399, %v5401
      %v5483 = vsel %vm5448, %v5401, %v5403
      %v5484 = vsel %vm5448, %v5403, %v5405
      %v5485 = vsel %vm5448, %v5405, %v5407
      %v5486 = vsel %vm5448, %v5407, %v5409
      %v5487 = vsel %vm5448, %v5409, %v5411
      %v5488 = vsel %vm5448, %v5411, %v5413
      %v5489 = vsel %vm5448, %v5413, %v5415
      %v5490 = vsel %vm5448, %v5415, %v5417
      %v5491 = vsel %vm5448, %v5417, %v5419
      %v5492 = vsel %vm5448, %v5419, %v5421
      %v5493 = vsel %vm5448, %v5421, %v5423
      %v5494 = vsel %vm5448, %v5423, %v5425
      %v5495 = vsel %vm5448, %v5425, %v5427
      %v5496 = vsel %vm5448, %v5427, %v5429
      %v5497 = vsel %vm5448, %v5429, %v5431
      %v5498 = vsel %vm5448, %v5431, %v5433
      %v5499 = vsel %vm5448, %v5433, %v5435
      %v5500 = vsel %vm5448, %v5435, %v5437
      %v5501 = vsel %vm5448, %v5437, %v5439
      %v5502 = vsel %vm5448, %v5439, %v5441
      %v5503 = vsel %vm5448, %v5441, %v5443
      %v5504 = vsel %vm5448, %v5443, %v5445
      %v5505 = vsel %vm5448, %v5445, %v5447
      %5563 = vst [vmem:[#allocation2 + $0x720] sm:$0x3] %v5449
      %5564 = vst [vmem:[#allocation2 + $0x728] sm:$0x3] %v5450
      %5565 = vst [vmem:[#allocation2 + $0x730] sm:$0x3] %v5451
      %5566 = vst [vmem:[#allocation2 + $0x738] sm:$0x3] %v5452
      %5567 = vst [vmem:[#allocation2 + $0x740] sm:$0x3] %v5453
      %5568 = vst [vmem:[#allocation2 + $0x748] sm:$0x3] %v5454
      %5569 = vst [vmem:[#allocation2 + $0x750] sm:$0x3] %v5455
      %5570 = vst [vmem:[#allocation2 + $0x758] sm:$0x3] %v5456
      %5571 = vst [vmem:[#allocation2 + $0x760] sm:$0x3] %v5457
      %5572 = vst [vmem:[#allocation2 + $0x768] sm:$0x3] %v5458
      %5573 = vst [vmem:[#allocation2 + $0x770] sm:$0x3] %v5459
      %5574 = vst [vmem:[#allocation2 + $0x778] sm:$0x3] %v5460
      %5575 = vst [vmem:[#allocation2 + $0x780] sm:$0x3] %v5461
      %5576 = vst [vmem:[#allocation2 + $0x788] sm:$0x3] %v5462
      %5577 = vst [vmem:[#allocation2 + $0x790] sm:$0x3] %v5463
      %5578 = vst [vmem:[#allocation2 + $0x798] sm:$0x3] %v5464
      %5579 = vst [vmem:[#allocation2 + $0x7a0] sm:$0x3] %v5465
      %5580 = vst [vmem:[#allocation2 + $0x7a8] sm:$0x3] %v5466
      %5581 = vst [vmem:[#allocation2 + $0x7b0] sm:$0x3] %v5467
      %5582 = vst [vmem:[#allocation2 + $0x7b8] sm:$0x3] %v5468
      %5583 = vst [vmem:[#allocation2 + $0x7c0] sm:$0x3] %v5469
      %5584 = vst [vmem:[#allocation2 + $0x7c8] sm:$0x3] %v5470
      %5585 = vst [vmem:[#allocation2 + $0x7d0] sm:$0x3] %v5471
      %5586 = vst [vmem:[#allocation2 + $0x7d8] sm:$0x3] %v5472
      %5587 = vst [vmem:[#allocation2 + $0x7e0] sm:$0x3] %v5473
      %5588 = vst [vmem:[#allocation2 + $0x7e8] sm:$0x3] %v5474
      %5589 = vst [vmem:[#allocation2 + $0x7f0] sm:$0x3] %v5475
      %5590 = vst [vmem:[#allocation2 + $0x7f8] sm:$0x3] %v5476
      %5591 = vst [vmem:[#allocation2 + $0x800] sm:$0x3] %v5477
      %5592 = vst [vmem:[#allocation2 + $0x808] sm:$0x3] %v5478
      %5593 = vst [vmem:[#allocation2 + $0x810] sm:$0x3] %v5479
      %5594 = vst [vmem:[#allocation2 + $0x818] sm:$0x3] %v5480
      %5595 = vst [vmem:[#allocation2 + $0x820] sm:$0x3] %v5481
      %5596 = vst [vmem:[#allocation2 + $0x828] sm:$0x3] %v5482
      %5597 = vst [vmem:[#allocation2 + $0x830] sm:$0x3] %v5483
      %5598 = vst [vmem:[#allocation2 + $0x838] sm:$0x3] %v5484
      %5599 = vst [vmem:[#allocation2 + $0x840] sm:$0x3] %v5485
      %5600 = vst [vmem:[#allocation2 + $0x848] sm:$0x3] %v5486
      %5601 = vst [vmem:[#allocation2 + $0x850] sm:$0x3] %v5487
      %5602 = vst [vmem:[#allocation2 + $0x858] sm:$0x3] %v5488
      %5603 = vst [vmem:[#allocation2 + $0x860] sm:$0x3] %v5489
      %5604 = vst [vmem:[#allocation2 + $0x868] sm:$0x3] %v5490
      %5605 = vst [vmem:[#allocation2 + $0x870] sm:$0x3] %v5491
      %5606 = vst [vmem:[#allocation2 + $0x878] sm:$0x3] %v5492
      %5607 = vst [vmem:[#allocation2 + $0x880] sm:$0x3] %v5493
      %5608 = vst [vmem:[#allocation2 + $0x888] sm:$0x3] %v5494
      %5609 = vst [vmem:[#allocation2 + $0x890] sm:$0x3] %v5495
      %5610 = vst [vmem:[#allocation2 + $0x898] sm:$0x3] %v5496
      %5611 = vst [vmem:[#allocation2 + $0x8a0] sm:$0x3] %v5497
      %5612 = vst [vmem:[#allocation2 + $0x8a8] sm:$0x3] %v5498
      %5613 = vst [vmem:[#allocation2 + $0x8b0] sm:$0x3] %v5499
      %5614 = vst [vmem:[#allocation2 + $0x8b8] sm:$0x3] %v5500
      %5615 = vst [vmem:[#allocation2 + $0x8c0] sm:$0x3] %v5501
      %5616 = vst [vmem:[#allocation2 + $0x8c8] sm:$0x3] %v5502
      %5617 = vst [vmem:[#allocation2 + $0x8d0] sm:$0x3] %v5503
      %5618 = vst [vmem:[#allocation2 + $0x8d8] sm:$0x3] %v5504
      %5619 = vst [vmem:[#allocation2 + $0x8e0] sm:$0x3] %v5505
      %5620 = vrot.lane.b32.xlu0 %v820, 54
      %v5621 = vpop.permute.xlu0 %5620
      %5622 = vrot.lane.b32.xlu0 %v821, 54
      %v5623 = vpop.permute.xlu0 %5622
      %5624 = vrot.lane.b32.xlu0 %v822, 54
      %v5625 = vpop.permute.xlu0 %5624
      %5626 = vrot.lane.b32.xlu0 %v823, 54
      %v5627 = vpop.permute.xlu0 %5626
      %5628 = vrot.lane.b32.xlu0 %v824, 54
      %v5629 = vpop.permute.xlu0 %5628
      %5630 = vrot.lane.b32.xlu0 %v825, 54
      %v5631 = vpop.permute.xlu0 %5630
      %5632 = vrot.lane.b32.xlu0 %v826, 54
      %v5633 = vpop.permute.xlu0 %5632
      %5634 = vrot.lane.b32.xlu0 %v827, 54
      %v5635 = vpop.permute.xlu0 %5634
      %5636 = vrot.lane.b32.xlu0 %v828, 54
      %v5637 = vpop.permute.xlu0 %5636
      %5638 = vrot.lane.b32.xlu0 %v829, 54
      %v5639 = vpop.permute.xlu0 %5638
      %5640 = vrot.lane.b32.xlu0 %v830, 54
      %v5641 = vpop.permute.xlu0 %5640
      %5642 = vrot.lane.b32.xlu0 %v831, 54
      %v5643 = vpop.permute.xlu0 %5642
      %5644 = vrot.lane.b32.xlu0 %v832, 54
      %v5645 = vpop.permute.xlu0 %5644
      %5646 = vrot.lane.b32.xlu0 %v833, 54
      %v5647 = vpop.permute.xlu0 %5646
      %5648 = vrot.lane.b32.xlu0 %v834, 54
      %v5649 = vpop.permute.xlu0 %5648
      %5650 = vrot.lane.b32.xlu0 %v835, 54
      %v5651 = vpop.permute.xlu0 %5650
      %5652 = vrot.lane.b32.xlu0 %v836, 54
      %v5653 = vpop.permute.xlu0 %5652
      %5654 = vrot.lane.b32.xlu0 %v837, 54
      %v5655 = vpop.permute.xlu0 %5654
      %5656 = vrot.lane.b32.xlu0 %v838, 54
      %v5657 = vpop.permute.xlu0 %5656
      %5658 = vrot.lane.b32.xlu0 %v839, 54
      %v5659 = vpop.permute.xlu0 %5658
      %5660 = vrot.lane.b32.xlu0 %v840, 54
      %v5661 = vpop.permute.xlu0 %5660
      %5662 = vrot.lane.b32.xlu0 %v841, 54
      %v5663 = vpop.permute.xlu0 %5662
      %5664 = vrot.lane.b32.xlu0 %v842, 54
      %v5665 = vpop.permute.xlu0 %5664
      %5666 = vrot.lane.b32.xlu0 %v843, 54
      %v5667 = vpop.permute.xlu0 %5666
      %5668 = vrot.lane.b32.xlu0 %v844, 54
      %v5669 = vpop.permute.xlu0 %5668
      %5670 = vrot.lane.b32.xlu0 %v845, 54
      %v5671 = vpop.permute.xlu0 %5670
      %5672 = vrot.lane.b32.xlu0 %v846, 54
      %v5673 = vpop.permute.xlu0 %5672
      %5674 = vrot.lane.b32.xlu0 %v847, 54
      %v5675 = vpop.permute.xlu0 %5674
      %5676 = vrot.lane.b32.xlu0 %v848, 54
      %v5677 = vpop.permute.xlu0 %5676
      %5678 = vrot.lane.b32.xlu0 %v849, 54
      %v5679 = vpop.permute.xlu0 %5678
      %5680 = vrot.lane.b32.xlu0 %v850, 54
      %v5681 = vpop.permute.xlu0 %5680
      %5682 = vrot.lane.b32.xlu0 %v851, 54
      %v5683 = vpop.permute.xlu0 %5682
      %5684 = vrot.lane.b32.xlu0 %v852, 54
      %v5685 = vpop.permute.xlu0 %5684
      %5686 = vrot.lane.b32.xlu0 %v853, 54
      %v5687 = vpop.permute.xlu0 %5686
      %5688 = vrot.lane.b32.xlu0 %v854, 54
      %v5689 = vpop.permute.xlu0 %5688
      %5690 = vrot.lane.b32.xlu0 %v855, 54
      %v5691 = vpop.permute.xlu0 %5690
      %5692 = vrot.lane.b32.xlu0 %v856, 54
      %v5693 = vpop.permute.xlu0 %5692
      %5694 = vrot.lane.b32.xlu0 %v857, 54
      %v5695 = vpop.permute.xlu0 %5694
      %5696 = vrot.lane.b32.xlu0 %v858, 54
      %v5697 = vpop.permute.xlu0 %5696
      %5698 = vrot.lane.b32.xlu0 %v859, 54
      %v5699 = vpop.permute.xlu0 %5698
      %5700 = vrot.lane.b32.xlu0 %v860, 54
      %v5701 = vpop.permute.xlu0 %5700
      %5702 = vrot.lane.b32.xlu0 %v861, 54
      %v5703 = vpop.permute.xlu0 %5702
      %5704 = vrot.lane.b32.xlu0 %v862, 54
      %v5705 = vpop.permute.xlu0 %5704
      %5706 = vrot.lane.b32.xlu0 %v863, 54
      %v5707 = vpop.permute.xlu0 %5706
      %5708 = vrot.lane.b32.xlu0 %v864, 54
      %v5709 = vpop.permute.xlu0 %5708
      %5710 = vrot.lane.b32.xlu0 %v865, 54
      %v5711 = vpop.permute.xlu0 %5710
      %5712 = vrot.lane.b32.xlu0 %v866, 54
      %v5713 = vpop.permute.xlu0 %5712
      %5714 = vrot.lane.b32.xlu0 %v867, 54
      %v5715 = vpop.permute.xlu0 %5714
      %5716 = vrot.lane.b32.xlu0 %v868, 54
      %v5717 = vpop.permute.xlu0 %5716
      %5718 = vrot.lane.b32.xlu0 %v3289, 54
      %v5719 = vpop.permute.xlu0 %5718
      %5720 = vrot.lane.b32.xlu0 %v3290, 54
      %v5721 = vpop.permute.xlu0 %5720
      %5722 = vrot.lane.b32.xlu0 %v3291, 54
      %v5723 = vpop.permute.xlu0 %5722
      %5724 = vrot.lane.b32.xlu0 %v3292, 54
      %v5725 = vpop.permute.xlu0 %5724
      %5726 = vrot.lane.b32.xlu0 %v3293, 54
      %v5727 = vpop.permute.xlu0 %5726
      %5728 = vrot.lane.b32.xlu0 %v3294, 54
      %v5729 = vpop.permute.xlu0 %5728
      %5730 = vrot.lane.b32.xlu0 %v3295, 54
      %v5731 = vpop.permute.xlu0 %5730
      %5732 = vrot.lane.b32.xlu0 %v3296, 54
      %v5733 = vpop.permute.xlu0 %5732
      %5734 = vrot.lane.b32.xlu0 %v3297, 54
      %v5735 = vpop.permute.xlu0 %5734
      %vm5736 = vcmask 441344
      %v5737 = vsel %vm5736, %v5621, %v5623
      %v5738 = vsel %vm5736, %v5623, %v5625
      %v5739 = vsel %vm5736, %v5625, %v5627
      %v5740 = vsel %vm5736, %v5627, %v5629
      %v5741 = vsel %vm5736, %v5629, %v5631
      %v5742 = vsel %vm5736, %v5631, %v5633
      %v5743 = vsel %vm5736, %v5633, %v5635
      %v5744 = vsel %vm5736, %v5635, %v5637
      %v5745 = vsel %vm5736, %v5637, %v5639
      %v5746 = vsel %vm5736, %v5639, %v5641
      %v5747 = vsel %vm5736, %v5641, %v5643
      %v5748 = vsel %vm5736, %v5643, %v5645
      %v5749 = vsel %vm5736, %v5645, %v5647
      %v5750 = vsel %vm5736, %v5647, %v5649
      %v5751 = vsel %vm5736, %v5649, %v5651
      %v5752 = vsel %vm5736, %v5651, %v5653
      %v5753 = vsel %vm5736, %v5653, %v5655
      %v5754 = vsel %vm5736, %v5655, %v5657
      %v5755 = vsel %vm5736, %v5657, %v5659
      %v5756 = vsel %vm5736, %v5659, %v5661
      %v5757 = vsel %vm5736, %v5661, %v5663
      %v5758 = vsel %vm5736, %v5663, %v5665
      %v5759 = vsel %vm5736, %v5665, %v5667
      %v5760 = vsel %vm5736, %v5667, %v5669
      %v5761 = vsel %vm5736, %v5669, %v5671
      %v5762 = vsel %vm5736, %v5671, %v5673
      %v5763 = vsel %vm5736, %v5673, %v5675
      %v5764 = vsel %vm5736, %v5675, %v5677
      %v5765 = vsel %vm5736, %v5677, %v5679
      %v5766 = vsel %vm5736, %v5679, %v5681
      %v5767 = vsel %vm5736, %v5681, %v5683
      %v5768 = vsel %vm5736, %v5683, %v5685
      %v5769 = vsel %vm5736, %v5685, %v5687
      %v5770 = vsel %vm5736, %v5687, %v5689
      %v5771 = vsel %vm5736, %v5689, %v5691
      %v5772 = vsel %vm5736, %v5691, %v5693
      %v5773 = vsel %vm5736, %v5693, %v5695
      %v5774 = vsel %vm5736, %v5695, %v5697
      %v5775 = vsel %vm5736, %v5697, %v5699
      %v5776 = vsel %vm5736, %v5699, %v5701
      %v5777 = vsel %vm5736, %v5701, %v5703
      %v5778 = vsel %vm5736, %v5703, %v5705
      %v5779 = vsel %vm5736, %v5705, %v5707
      %v5780 = vsel %vm5736, %v5707, %v5709
      %v5781 = vsel %vm5736, %v5709, %v5711
      %v5782 = vsel %vm5736, %v5711, %v5713
      %v5783 = vsel %vm5736, %v5713, %v5715
      %v5784 = vsel %vm5736, %v5715, %v5717
      %v5785 = vsel %vm5736, %v5717, %v5719
      %v5786 = vsel %vm5736, %v5719, %v5721
      %v5787 = vsel %vm5736, %v5721, %v5723
      %v5788 = vsel %vm5736, %v5723, %v5725
      %v5789 = vsel %vm5736, %v5725, %v5727
      %v5790 = vsel %vm5736, %v5727, %v5729
      %v5791 = vsel %vm5736, %v5729, %v5731
      %v5792 = vsel %vm5736, %v5731, %v5733
      %v5793 = vsel %vm5736, %v5733, %v5735
      %5851 = vst [vmem:[#allocation2 + $0x720] sm:$0xc] %v5737
      %5852 = vst [vmem:[#allocation2 + $0x728] sm:$0xc] %v5738
      %5853 = vst [vmem:[#allocation2 + $0x730] sm:$0xc] %v5739
      %5854 = vst [vmem:[#allocation2 + $0x738] sm:$0xc] %v5740
      %5855 = vst [vmem:[#allocation2 + $0x740] sm:$0xc] %v5741
      %5856 = vst [vmem:[#allocation2 + $0x748] sm:$0xc] %v5742
      %5857 = vst [vmem:[#allocation2 + $0x750] sm:$0xc] %v5743
      %5858 = vst [vmem:[#allocation2 + $0x758] sm:$0xc] %v5744
      %5859 = vst [vmem:[#allocation2 + $0x760] sm:$0xc] %v5745
      %5860 = vst [vmem:[#allocation2 + $0x768] sm:$0xc] %v5746
      %5861 = vst [vmem:[#allocation2 + $0x770] sm:$0xc] %v5747
      %5862 = vst [vmem:[#allocation2 + $0x778] sm:$0xc] %v5748
      %5863 = vst [vmem:[#allocation2 + $0x780] sm:$0xc] %v5749
      %5864 = vst [vmem:[#allocation2 + $0x788] sm:$0xc] %v5750
      %5865 = vst [vmem:[#allocation2 + $0x790] sm:$0xc] %v5751
      %5866 = vst [vmem:[#allocation2 + $0x798] sm:$0xc] %v5752
      %5867 = vst [vmem:[#allocation2 + $0x7a0] sm:$0xc] %v5753
      %5868 = vst [vmem:[#allocation2 + $0x7a8] sm:$0xc] %v5754
      %5869 = vst [vmem:[#allocation2 + $0x7b0] sm:$0xc] %v5755
      %5870 = vst [vmem:[#allocation2 + $0x7b8] sm:$0xc] %v5756
      %5871 = vst [vmem:[#allocation2 + $0x7c0] sm:$0xc] %v5757
      %5872 = vst [vmem:[#allocation2 + $0x7c8] sm:$0xc] %v5758
      %5873 = vst [vmem:[#allocation2 + $0x7d0] sm:$0xc] %v5759
      %5874 = vst [vmem:[#allocation2 + $0x7d8] sm:$0xc] %v5760
      %5875 = vst [vmem:[#allocation2 + $0x7e0] sm:$0xc] %v5761
      %5876 = vst [vmem:[#allocation2 + $0x7e8] sm:$0xc] %v5762
      %5877 = vst [vmem:[#allocation2 + $0x7f0] sm:$0xc] %v5763
      %5878 = vst [vmem:[#allocation2 + $0x7f8] sm:$0xc] %v5764
      %5879 = vst [vmem:[#allocation2 + $0x800] sm:$0xc] %v5765
      %5880 = vst [vmem:[#allocation2 + $0x808] sm:$0xc] %v5766
      %5881 = vst [vmem:[#allocation2 + $0x810] sm:$0xc] %v5767
      %5882 = vst [vmem:[#allocation2 + $0x818] sm:$0xc] %v5768
      %5883 = vst [vmem:[#allocation2 + $0x820] sm:$0xc] %v5769
      %5884 = vst [vmem:[#allocation2 + $0x828] sm:$0xc] %v5770
      %5885 = vst [vmem:[#allocation2 + $0x830] sm:$0xc] %v5771
      %5886 = vst [vmem:[#allocation2 + $0x838] sm:$0xc] %v5772
      %5887 = vst [vmem:[#allocation2 + $0x840] sm:$0xc] %v5773
      %5888 = vst [vmem:[#allocation2 + $0x848] sm:$0xc] %v5774
      %5889 = vst [vmem:[#allocation2 + $0x850] sm:$0xc] %v5775
      %5890 = vst [vmem:[#allocation2 + $0x858] sm:$0xc] %v5776
      %5891 = vst [vmem:[#allocation2 + $0x860] sm:$0xc] %v5777
      %5892 = vst [vmem:[#allocation2 + $0x868] sm:$0xc] %v5778
      %5893 = vst [vmem:[#allocation2 + $0x870] sm:$0xc] %v5779
      %5894 = vst [vmem:[#allocation2 + $0x878] sm:$0xc] %v5780
      %5895 = vst [vmem:[#allocation2 + $0x880] sm:$0xc] %v5781
      %5896 = vst [vmem:[#allocation2 + $0x888] sm:$0xc] %v5782
      %5897 = vst [vmem:[#allocation2 + $0x890] sm:$0xc] %v5783
      %5898 = vst [vmem:[#allocation2 + $0x898] sm:$0xc] %v5784
      %5899 = vst [vmem:[#allocation2 + $0x8a0] sm:$0xc] %v5785
      %5900 = vst [vmem:[#allocation2 + $0x8a8] sm:$0xc] %v5786
      %5901 = vst [vmem:[#allocation2 + $0x8b0] sm:$0xc] %v5787
      %5902 = vst [vmem:[#allocation2 + $0x8b8] sm:$0xc] %v5788
      %5903 = vst [vmem:[#allocation2 + $0x8c0] sm:$0xc] %v5789
      %5904 = vst [vmem:[#allocation2 + $0x8c8] sm:$0xc] %v5790
      %5905 = vst [vmem:[#allocation2 + $0x8d0] sm:$0xc] %v5791
      %5906 = vst [vmem:[#allocation2 + $0x8d8] sm:$0xc] %v5792
      %5907 = vst [vmem:[#allocation2 + $0x8e0] sm:$0xc] %v5793
      %v5908 = vrot.slane %v718, 4
      %v5909 = vrot.slane %v720, 4
      %v5910 = vrot.slane %v728, 4
      %v5911 = vrot.slane %v736, 4
      %v5912 = vrot.slane %v735, 4
      %v5913 = vrot.slane %v737, 4
      %v5914 = vrot.slane %v745, 4
      %v5915 = vrot.slane %v753, 4
      %v5916 = vrot.slane %v752, 4
      %5917 = vrot.lane.b32.xlu0 %v1175, 120
      %v5918 = vpop.permute.xlu0 %5917
      %5919 = vrot.lane.b32.xlu0 %v1176, 120
      %v5920 = vpop.permute.xlu0 %5919
      %5921 = vrot.lane.b32.xlu0 %v1177, 120
      %v5922 = vpop.permute.xlu0 %5921
      %5923 = vrot.lane.b32.xlu0 %v1178, 120
      %v5924 = vpop.permute.xlu0 %5923
      %5925 = vrot.lane.b32.xlu0 %v1179, 120
      %v5926 = vpop.permute.xlu0 %5925
      %5927 = vrot.lane.b32.xlu0 %v1180, 120
      %v5928 = vpop.permute.xlu0 %5927
      %5929 = vrot.lane.b32.xlu0 %v1181, 120
      %v5930 = vpop.permute.xlu0 %5929
      %5931 = vrot.lane.b32.xlu0 %v1182, 120
      %v5932 = vpop.permute.xlu0 %5931
      %5933 = vrot.lane.b32.xlu0 %v1183, 120
      %v5934 = vpop.permute.xlu0 %5933
      %5935 = vrot.lane.b32.xlu0 %v1184, 120
      %v5936 = vpop.permute.xlu0 %5935
      %5937 = vrot.lane.b32.xlu0 %v1185, 120
      %v5938 = vpop.permute.xlu0 %5937
      %5939 = vrot.lane.b32.xlu0 %v1186, 120
      %v5940 = vpop.permute.xlu0 %5939
      %5941 = vrot.lane.b32.xlu0 %v1187, 120
      %v5942 = vpop.permute.xlu0 %5941
      %5943 = vrot.lane.b32.xlu0 %v1188, 120
      %v5944 = vpop.permute.xlu0 %5943
      %5945 = vrot.lane.b32.xlu0 %v1189, 120
      %v5946 = vpop.permute.xlu0 %5945
      %5947 = vrot.lane.b32.xlu0 %v1190, 120
      %v5948 = vpop.permute.xlu0 %5947
      %5949 = vrot.lane.b32.xlu0 %v1191, 120
      %v5950 = vpop.permute.xlu0 %5949
      %5951 = vrot.lane.b32.xlu0 %v1192, 120
      %v5952 = vpop.permute.xlu0 %5951
      %5953 = vrot.lane.b32.xlu0 %v1193, 120
      %v5954 = vpop.permute.xlu0 %5953
      %5955 = vrot.lane.b32.xlu0 %v1194, 120
      %v5956 = vpop.permute.xlu0 %5955
      %5957 = vrot.lane.b32.xlu0 %v1195, 120
      %v5958 = vpop.permute.xlu0 %5957
      %5959 = vrot.lane.b32.xlu0 %v1196, 120
      %v5960 = vpop.permute.xlu0 %5959
      %5961 = vrot.lane.b32.xlu0 %v1197, 120
      %v5962 = vpop.permute.xlu0 %5961
      %5963 = vrot.lane.b32.xlu0 %v1198, 120
      %v5964 = vpop.permute.xlu0 %5963
      %5965 = vrot.lane.b32.xlu0 %v1199, 120
      %v5966 = vpop.permute.xlu0 %5965
      %5967 = vrot.lane.b32.xlu0 %v1200, 120
      %v5968 = vpop.permute.xlu0 %5967
      %5969 = vrot.lane.b32.xlu0 %v1201, 120
      %v5970 = vpop.permute.xlu0 %5969
      %5971 = vrot.lane.b32.xlu0 %v1202, 120
      %v5972 = vpop.permute.xlu0 %5971
      %5973 = vrot.lane.b32.xlu0 %v1203, 120
      %v5974 = vpop.permute.xlu0 %5973
      %5975 = vrot.lane.b32.xlu0 %v1204, 120
      %v5976 = vpop.permute.xlu0 %5975
      %5977 = vrot.lane.b32.xlu0 %v1205, 120
      %v5978 = vpop.permute.xlu0 %5977
      %5979 = vrot.lane.b32.xlu0 %v1206, 120
      %v5980 = vpop.permute.xlu0 %5979
      %5981 = vrot.lane.b32.xlu0 %v1207, 120
      %v5982 = vpop.permute.xlu0 %5981
      %5983 = vrot.lane.b32.xlu0 %v1208, 120
      %v5984 = vpop.permute.xlu0 %5983
      %5985 = vrot.lane.b32.xlu0 %v1209, 120
      %v5986 = vpop.permute.xlu0 %5985
      %5987 = vrot.lane.b32.xlu0 %v1210, 120
      %v5988 = vpop.permute.xlu0 %5987
      %5989 = vrot.lane.b32.xlu0 %v1211, 120
      %v5990 = vpop.permute.xlu0 %5989
      %5991 = vrot.lane.b32.xlu0 %v1212, 120
      %v5992 = vpop.permute.xlu0 %5991
      %5993 = vrot.lane.b32.xlu0 %v1213, 120
      %v5994 = vpop.permute.xlu0 %5993
      %5995 = vrot.lane.b32.xlu0 %v1214, 120
      %v5996 = vpop.permute.xlu0 %5995
      %5997 = vrot.lane.b32.xlu0 %v3586, 120
      %v5998 = vpop.permute.xlu0 %5997
      %5999 = vrot.lane.b32.xlu0 %v3587, 120
      %v6000 = vpop.permute.xlu0 %5999
      %6001 = vrot.lane.b32.xlu0 %v3588, 120
      %v6002 = vpop.permute.xlu0 %6001
      %6003 = vrot.lane.b32.xlu0 %v3589, 120
      %v6004 = vpop.permute.xlu0 %6003
      %6005 = vrot.lane.b32.xlu0 %v3590, 120
      %v6006 = vpop.permute.xlu0 %6005
      %6007 = vrot.lane.b32.xlu0 %v3591, 120
      %v6008 = vpop.permute.xlu0 %6007
      %6009 = vrot.lane.b32.xlu0 %v3592, 120
      %v6010 = vpop.permute.xlu0 %6009
      %6011 = vrot.lane.b32.xlu0 %v3593, 120
      %v6012 = vpop.permute.xlu0 %6011
      %6013 = vrot.lane.b32.xlu0 %v3594, 120
      %v6014 = vpop.permute.xlu0 %6013
      %6015 = vrot.lane.b32.xlu0 %v5908, 120
      %v6016 = vpop.permute.xlu0 %6015
      %6017 = vrot.lane.b32.xlu0 %v5909, 120
      %v6018 = vpop.permute.xlu0 %6017
      %6019 = vrot.lane.b32.xlu0 %v5910, 120
      %v6020 = vpop.permute.xlu0 %6019
      %6021 = vrot.lane.b32.xlu0 %v5911, 120
      %v6022 = vpop.permute.xlu0 %6021
      %6023 = vrot.lane.b32.xlu0 %v5912, 120
      %v6024 = vpop.permute.xlu0 %6023
      %6025 = vrot.lane.b32.xlu0 %v5913, 120
      %v6026 = vpop.permute.xlu0 %6025
      %6027 = vrot.lane.b32.xlu0 %v5914, 120
      %v6028 = vpop.permute.xlu0 %6027
      %6029 = vrot.lane.b32.xlu0 %v5915, 120
      %v6030 = vpop.permute.xlu0 %6029
      %6031 = vrot.lane.b32.xlu0 %v5916, 120
      %v6032 = vpop.permute.xlu0 %6031
      %vm6033 = vcmask 982016
      %v6034 = vsel %vm6033, %v5918, %v5920
      %v6035 = vsel %vm6033, %v5920, %v5922
      %v6036 = vsel %vm6033, %v5922, %v5924
      %v6037 = vsel %vm6033, %v5924, %v5926
      %v6038 = vsel %vm6033, %v5926, %v5928
      %v6039 = vsel %vm6033, %v5928, %v5930
      %v6040 = vsel %vm6033, %v5930, %v5932
      %v6041 = vsel %vm6033, %v5932, %v5934
      %v6042 = vsel %vm6033, %v5934, %v5936
      %v6043 = vsel %vm6033, %v5936, %v5938
      %v6044 = vsel %vm6033, %v5938, %v5940
      %v6045 = vsel %vm6033, %v5940, %v5942
      %v6046 = vsel %vm6033, %v5942, %v5944
      %v6047 = vsel %vm6033, %v5944, %v5946
      %v6048 = vsel %vm6033, %v5946, %v5948
      %v6049 = vsel %vm6033, %v5948, %v5950
      %v6050 = vsel %vm6033, %v5950, %v5952
      %v6051 = vsel %vm6033, %v5952, %v5954
      %v6052 = vsel %vm6033, %v5954, %v5956
      %v6053 = vsel %vm6033, %v5956, %v5958
      %v6054 = vsel %vm6033, %v5958, %v5960
      %v6055 = vsel %vm6033, %v5960, %v5962
      %v6056 = vsel %vm6033, %v5962, %v5964
      %v6057 = vsel %vm6033, %v5964, %v5966
      %v6058 = vsel %vm6033, %v5966, %v5968
      %v6059 = vsel %vm6033, %v5968, %v5970
      %v6060 = vsel %vm6033, %v5970, %v5972
      %v6061 = vsel %vm6033, %v5972, %v5974
      %v6062 = vsel %vm6033, %v5974, %v5976
      %v6063 = vsel %vm6033, %v5976, %v5978
      %v6064 = vsel %vm6033, %v5978, %v5980
      %v6065 = vsel %vm6033, %v5980, %v5982
      %v6066 = vsel %vm6033, %v5982, %v5984
      %v6067 = vsel %vm6033, %v5984, %v5986
      %v6068 = vsel %vm6033, %v5986, %v5988
      %v6069 = vsel %vm6033, %v5988, %v5990
      %v6070 = vsel %vm6033, %v5990, %v5992
      %v6071 = vsel %vm6033, %v5992, %v5994
      %v6072 = vsel %vm6033, %v5994, %v5996
      %v6073 = vsel %vm6033, %v5996, %v5998
      %v6074 = vsel %vm6033, %v5998, %v6000
      %v6075 = vsel %vm6033, %v6000, %v6002
      %v6076 = vsel %vm6033, %v6002, %v6004
      %v6077 = vsel %vm6033, %v6004, %v6006
      %v6078 = vsel %vm6033, %v6006, %v6008
      %v6079 = vsel %vm6033, %v6008, %v6010
      %v6080 = vsel %vm6033, %v6010, %v6012
      %v6081 = vsel %vm6033, %v6012, %v6014
      %v6082 = vsel %vm6033, %v6014, %v6016
      %v6083 = vsel %vm6033, %v6016, %v6018
      %v6084 = vsel %vm6033, %v6018, %v6020
      %v6085 = vsel %vm6033, %v6020, %v6022
      %v6086 = vsel %vm6033, %v6022, %v6024
      %v6087 = vsel %vm6033, %v6024, %v6026
      %v6088 = vsel %vm6033, %v6026, %v6028
      %v6089 = vsel %vm6033, %v6028, %v6030
      %v6090 = vsel %vm6033, %v6030, %v6032
      %6148 = vst [vmem:[#allocation2 + $0x720] sm:$0x30] %v6034
      %6149 = vst [vmem:[#allocation2 + $0x728] sm:$0x30] %v6035
      %6150 = vst [vmem:[#allocation2 + $0x730] sm:$0x30] %v6036
      %6151 = vst [vmem:[#allocation2 + $0x738] sm:$0x30] %v6037
      %6152 = vst [vmem:[#allocation2 + $0x740] sm:$0x30] %v6038
      %6153 = vst [vmem:[#allocation2 + $0x748] sm:$0x30] %v6039
      %6154 = vst [vmem:[#allocation2 + $0x750] sm:$0x30] %v6040
      %6155 = vst [vmem:[#allocation2 + $0x758] sm:$0x30] %v6041
      %6156 = vst [vmem:[#allocation2 + $0x760] sm:$0x30] %v6042
      %6157 = vst [vmem:[#allocation2 + $0x768] sm:$0x30] %v6043
      %6158 = vst [vmem:[#allocation2 + $0x770] sm:$0x30] %v6044
      %6159 = vst [vmem:[#allocation2 + $0x778] sm:$0x30] %v6045
      %6160 = vst [vmem:[#allocation2 + $0x780] sm:$0x30] %v6046
      %6161 = vst [vmem:[#allocation2 + $0x788] sm:$0x30] %v6047
      %6162 = vst [vmem:[#allocation2 + $0x790] sm:$0x30] %v6048
      %6163 = vst [vmem:[#allocation2 + $0x798] sm:$0x30] %v6049
      %6164 = vst [vmem:[#allocation2 + $0x7a0] sm:$0x30] %v6050
      %6165 = vst [vmem:[#allocation2 + $0x7a8] sm:$0x30] %v6051
      %6166 = vst [vmem:[#allocation2 + $0x7b0] sm:$0x30] %v6052
      %6167 = vst [vmem:[#allocation2 + $0x7b8] sm:$0x30] %v6053
      %6168 = vst [vmem:[#allocation2 + $0x7c0] sm:$0x30] %v6054
      %6169 = vst [vmem:[#allocation2 + $0x7c8] sm:$0x30] %v6055
      %6170 = vst [vmem:[#allocation2 + $0x7d0] sm:$0x30] %v6056
      %6171 = vst [vmem:[#allocation2 + $0x7d8] sm:$0x30] %v6057
      %6172 = vst [vmem:[#allocation2 + $0x7e0] sm:$0x30] %v6058
      %6173 = vst [vmem:[#allocation2 + $0x7e8] sm:$0x30] %v6059
      %6174 = vst [vmem:[#allocation2 + $0x7f0] sm:$0x30] %v6060
      %6175 = vst [vmem:[#allocation2 + $0x7f8] sm:$0x30] %v6061
      %6176 = vst [vmem:[#allocation2 + $0x800] sm:$0x30] %v6062
      %6177 = vst [vmem:[#allocation2 + $0x808] sm:$0x30] %v6063
      %6178 = vst [vmem:[#allocation2 + $0x810] sm:$0x30] %v6064
      %6179 = vst [vmem:[#allocation2 + $0x818] sm:$0x30] %v6065
      %6180 = vst [vmem:[#allocation2 + $0x820] sm:$0x30] %v6066
      %6181 = vst [vmem:[#allocation2 + $0x828] sm:$0x30] %v6067
      %6182 = vst [vmem:[#allocation2 + $0x830] sm:$0x30] %v6068
      %6183 = vst [vmem:[#allocation2 + $0x838] sm:$0x30] %v6069
      %6184 = vst [vmem:[#allocation2 + $0x840] sm:$0x30] %v6070
      %6185 = vst [vmem:[#allocation2 + $0x848] sm:$0x30] %v6071
      %6186 = vst [vmem:[#allocation2 + $0x850] sm:$0x30] %v6072
      %6187 = vst [vmem:[#allocation2 + $0x858] sm:$0x30] %v6073
      %6188 = vst [vmem:[#allocation2 + $0x860] sm:$0x30] %v6074
      %6189 = vst [vmem:[#allocation2 + $0x868] sm:$0x30] %v6075
      %6190 = vst [vmem:[#allocation2 + $0x870] sm:$0x30] %v6076
      %6191 = vst [vmem:[#allocation2 + $0x878] sm:$0x30] %v6077
      %6192 = vst [vmem:[#allocation2 + $0x880] sm:$0x30] %v6078
      %6193 = vst [vmem:[#allocation2 + $0x888] sm:$0x30] %v6079
      %6194 = vst [vmem:[#allocation2 + $0x890] sm:$0x30] %v6080
      %6195 = vst [vmem:[#allocation2 + $0x898] sm:$0x30] %v6081
      %6196 = vst [vmem:[#allocation2 + $0x8a0] sm:$0x30] %v6082
      %6197 = vst [vmem:[#allocation2 + $0x8a8] sm:$0x30] %v6083
      %6198 = vst [vmem:[#allocation2 + $0x8b0] sm:$0x30] %v6084
      %6199 = vst [vmem:[#allocation2 + $0x8b8] sm:$0x30] %v6085
      %6200 = vst [vmem:[#allocation2 + $0x8c0] sm:$0x30] %v6086
      %6201 = vst [vmem:[#allocation2 + $0x8c8] sm:$0x30] %v6087
      %6202 = vst [vmem:[#allocation2 + $0x8d0] sm:$0x30] %v6088
      %6203 = vst [vmem:[#allocation2 + $0x8d8] sm:$0x30] %v6089
      %6204 = vst [vmem:[#allocation2 + $0x8e0] sm:$0x30] %v6090
      %v6205 = vrot.slane %v718, 2
      %v6206 = vrot.slane %v720, 2
      %v6207 = vrot.slane %v728, 2
      %v6208 = vrot.slane %v736, 2
      %v6209 = vrot.slane %v735, 2
      %v6210 = vrot.slane %v737, 2
      %v6211 = vrot.slane %v745, 2
      %v6212 = vrot.slane %v753, 2
      %v6213 = vrot.slane %v752, 2
      %6214 = vrot.lane.b32.xlu0 %v1521, 119
      %v6215 = vpop.permute.xlu0 %6214
      %6216 = vrot.lane.b32.xlu0 %v1522, 119
      %v6217 = vpop.permute.xlu0 %6216
      %6218 = vrot.lane.b32.xlu0 %v1523, 119
      %v6219 = vpop.permute.xlu0 %6218
      %6220 = vrot.lane.b32.xlu0 %v1524, 119
      %v6221 = vpop.permute.xlu0 %6220
      %6222 = vrot.lane.b32.xlu0 %v1525, 119
      %v6223 = vpop.permute.xlu0 %6222
      %6224 = vrot.lane.b32.xlu0 %v1526, 119
      %v6225 = vpop.permute.xlu0 %6224
      %6226 = vrot.lane.b32.xlu0 %v1527, 119
      %v6227 = vpop.permute.xlu0 %6226
      %6228 = vrot.lane.b32.xlu0 %v1528, 119
      %v6229 = vpop.permute.xlu0 %6228
      %6230 = vrot.lane.b32.xlu0 %v1529, 119
      %v6231 = vpop.permute.xlu0 %6230
      %6232 = vrot.lane.b32.xlu0 %v1530, 119
      %v6233 = vpop.permute.xlu0 %6232
      %6234 = vrot.lane.b32.xlu0 %v1531, 119
      %v6235 = vpop.permute.xlu0 %6234
      %6236 = vrot.lane.b32.xlu0 %v1532, 119
      %v6237 = vpop.permute.xlu0 %6236
      %6238 = vrot.lane.b32.xlu0 %v1533, 119
      %v6239 = vpop.permute.xlu0 %6238
      %6240 = vrot.lane.b32.xlu0 %v1534, 119
      %v6241 = vpop.permute.xlu0 %6240
      %6242 = vrot.lane.b32.xlu0 %v1535, 119
      %v6243 = vpop.permute.xlu0 %6242
      %6244 = vrot.lane.b32.xlu0 %v1536, 119
      %v6245 = vpop.permute.xlu0 %6244
      %6246 = vrot.lane.b32.xlu0 %v1537, 119
      %v6247 = vpop.permute.xlu0 %6246
      %6248 = vrot.lane.b32.xlu0 %v1538, 119
      %v6249 = vpop.permute.xlu0 %6248
      %6250 = vrot.lane.b32.xlu0 %v1539, 119
      %v6251 = vpop.permute.xlu0 %6250
      %6252 = vrot.lane.b32.xlu0 %v1540, 119
      %v6253 = vpop.permute.xlu0 %6252
      %6254 = vrot.lane.b32.xlu0 %v1541, 119
      %v6255 = vpop.permute.xlu0 %6254
      %6256 = vrot.lane.b32.xlu0 %v1542, 119
      %v6257 = vpop.permute.xlu0 %6256
      %6258 = vrot.lane.b32.xlu0 %v1543, 119
      %v6259 = vpop.permute.xlu0 %6258
      %6260 = vrot.lane.b32.xlu0 %v1544, 119
      %v6261 = vpop.permute.xlu0 %6260
      %6262 = vrot.lane.b32.xlu0 %v1545, 119
      %v6263 = vpop.permute.xlu0 %6262
      %6264 = vrot.lane.b32.xlu0 %v1546, 119
      %v6265 = vpop.permute.xlu0 %6264
      %6266 = vrot.lane.b32.xlu0 %v1547, 119
      %v6267 = vpop.permute.xlu0 %6266
      %6268 = vrot.lane.b32.xlu0 %v1548, 119
      %v6269 = vpop.permute.xlu0 %6268
      %6270 = vrot.lane.b32.xlu0 %v1549, 119
      %v6271 = vpop.permute.xlu0 %6270
      %6272 = vrot.lane.b32.xlu0 %v1550, 119
      %v6273 = vpop.permute.xlu0 %6272
      %6274 = vrot.lane.b32.xlu0 %v1551, 119
      %v6275 = vpop.permute.xlu0 %6274
      %6276 = vrot.lane.b32.xlu0 %v1552, 119
      %v6277 = vpop.permute.xlu0 %6276
      %6278 = vrot.lane.b32.xlu0 %v1553, 119
      %v6279 = vpop.permute.xlu0 %6278
      %6280 = vrot.lane.b32.xlu0 %v1554, 119
      %v6281 = vpop.permute.xlu0 %6280
      %6282 = vrot.lane.b32.xlu0 %v1555, 119
      %v6283 = vpop.permute.xlu0 %6282
      %6284 = vrot.lane.b32.xlu0 %v1556, 119
      %v6285 = vpop.permute.xlu0 %6284
      %6286 = vrot.lane.b32.xlu0 %v1557, 119
      %v6287 = vpop.permute.xlu0 %6286
      %6288 = vrot.lane.b32.xlu0 %v1558, 119
      %v6289 = vpop.permute.xlu0 %6288
      %6290 = vrot.lane.b32.xlu0 %v1559, 119
      %v6291 = vpop.permute.xlu0 %6290
      %6292 = vrot.lane.b32.xlu0 %v1560, 119
      %v6293 = vpop.permute.xlu0 %6292
      %6294 = vrot.lane.b32.xlu0 %v3883, 119
      %v6295 = vpop.permute.xlu0 %6294
      %6296 = vrot.lane.b32.xlu0 %v3884, 119
      %v6297 = vpop.permute.xlu0 %6296
      %6298 = vrot.lane.b32.xlu0 %v3885, 119
      %v6299 = vpop.permute.xlu0 %6298
      %6300 = vrot.lane.b32.xlu0 %v3886, 119
      %v6301 = vpop.permute.xlu0 %6300
      %6302 = vrot.lane.b32.xlu0 %v3887, 119
      %v6303 = vpop.permute.xlu0 %6302
      %6304 = vrot.lane.b32.xlu0 %v3888, 119
      %v6305 = vpop.permute.xlu0 %6304
      %6306 = vrot.lane.b32.xlu0 %v3889, 119
      %v6307 = vpop.permute.xlu0 %6306
      %6308 = vrot.lane.b32.xlu0 %v3890, 119
      %v6309 = vpop.permute.xlu0 %6308
      %6310 = vrot.lane.b32.xlu0 %v3891, 119
      %v6311 = vpop.permute.xlu0 %6310
      %6312 = vrot.lane.b32.xlu0 %v6205, 119
      %v6313 = vpop.permute.xlu0 %6312
      %6314 = vrot.lane.b32.xlu0 %v6206, 119
      %v6315 = vpop.permute.xlu0 %6314
      %6316 = vrot.lane.b32.xlu0 %v6207, 119
      %v6317 = vpop.permute.xlu0 %6316
      %6318 = vrot.lane.b32.xlu0 %v6208, 119
      %v6319 = vpop.permute.xlu0 %6318
      %6320 = vrot.lane.b32.xlu0 %v6209, 119
      %v6321 = vpop.permute.xlu0 %6320
      %6322 = vrot.lane.b32.xlu0 %v6210, 119
      %v6323 = vpop.permute.xlu0 %6322
      %6324 = vrot.lane.b32.xlu0 %v6211, 119
      %v6325 = vpop.permute.xlu0 %6324
      %6326 = vrot.lane.b32.xlu0 %v6212, 119
      %v6327 = vpop.permute.xlu0 %6326
      %6328 = vrot.lane.b32.xlu0 %v6213, 119
      %v6329 = vpop.permute.xlu0 %6328
      %vm6330 = vcmask 973824
      %v6331 = vsel %vm6330, %v6215, %v6217
      %v6332 = vsel %vm6330, %v6217, %v6219
      %v6333 = vsel %vm6330, %v6219, %v6221
      %v6334 = vsel %vm6330, %v6221, %v6223
      %v6335 = vsel %vm6330, %v6223, %v6225
      %v6336 = vsel %vm6330, %v6225, %v6227
      %v6337 = vsel %vm6330, %v6227, %v6229
      %v6338 = vsel %vm6330, %v6229, %v6231
      %v6339 = vsel %vm6330, %v6231, %v6233
      %v6340 = vsel %vm6330, %v6233, %v6235
      %v6341 = vsel %vm6330, %v6235, %v6237
      %v6342 = vsel %vm6330, %v6237, %v6239
      %v6343 = vsel %vm6330, %v6239, %v6241
      %v6344 = vsel %vm6330, %v6241, %v6243
      %v6345 = vsel %vm6330, %v6243, %v6245
      %v6346 = vsel %vm6330, %v6245, %v6247
      %v6347 = vsel %vm6330, %v6247, %v6249
      %v6348 = vsel %vm6330, %v6249, %v6251
      %v6349 = vsel %vm6330, %v6251, %v6253
      %v6350 = vsel %vm6330, %v6253, %v6255
      %v6351 = vsel %vm6330, %v6255, %v6257
      %v6352 = vsel %vm6330, %v6257, %v6259
      %v6353 = vsel %vm6330, %v6259, %v6261
      %v6354 = vsel %vm6330, %v6261, %v6263
      %v6355 = vsel %vm6330, %v6263, %v6265
      %v6356 = vsel %vm6330, %v6265, %v6267
      %v6357 = vsel %vm6330, %v6267, %v6269
      %v6358 = vsel %vm6330, %v6269, %v6271
      %v6359 = vsel %vm6330, %v6271, %v6273
      %v6360 = vsel %vm6330, %v6273, %v6275
      %v6361 = vsel %vm6330, %v6275, %v6277
      %v6362 = vsel %vm6330, %v6277, %v6279
      %v6363 = vsel %vm6330, %v6279, %v6281
      %v6364 = vsel %vm6330, %v6281, %v6283
      %v6365 = vsel %vm6330, %v6283, %v6285
      %v6366 = vsel %vm6330, %v6285, %v6287
      %v6367 = vsel %vm6330, %v6287, %v6289
      %v6368 = vsel %vm6330, %v6289, %v6291
      %v6369 = vsel %vm6330, %v6291, %v6293
      %v6370 = vsel %vm6330, %v6293, %v6295
      %v6371 = vsel %vm6330, %v6295, %v6297
      %v6372 = vsel %vm6330, %v6297, %v6299
      %v6373 = vsel %vm6330, %v6299, %v6301
      %v6374 = vsel %vm6330, %v6301, %v6303
      %v6375 = vsel %vm6330, %v6303, %v6305
      %v6376 = vsel %vm6330, %v6305, %v6307
      %v6377 = vsel %vm6330, %v6307, %v6309
      %v6378 = vsel %vm6330, %v6309, %v6311
      %v6379 = vsel %vm6330, %v6311, %v6313
      %v6380 = vsel %vm6330, %v6313, %v6315
      %v6381 = vsel %vm6330, %v6315, %v6317
      %v6382 = vsel %vm6330, %v6317, %v6319
      %v6383 = vsel %vm6330, %v6319, %v6321
      %v6384 = vsel %vm6330, %v6321, %v6323
      %v6385 = vsel %vm6330, %v6323, %v6325
      %v6386 = vsel %vm6330, %v6325, %v6327
      %v6387 = vsel %vm6330, %v6327, %v6329
      %6445 = vst [vmem:[#allocation2 + $0x720] sm:$0xc0] %v6331
      %6446 = vst [vmem:[#allocation2 + $0x728] sm:$0xc0] %v6332
      %6447 = vst [vmem:[#allocation2 + $0x730] sm:$0xc0] %v6333
      %6448 = vst [vmem:[#allocation2 + $0x738] sm:$0xc0] %v6334
      %6449 = vst [vmem:[#allocation2 + $0x740] sm:$0xc0] %v6335
      %6450 = vst [vmem:[#allocation2 + $0x748] sm:$0xc0] %v6336
      %6451 = vst [vmem:[#allocation2 + $0x750] sm:$0xc0] %v6337
      %6452 = vst [vmem:[#allocation2 + $0x758] sm:$0xc0] %v6338
      %6453 = vst [vmem:[#allocation2 + $0x760] sm:$0xc0] %v6339
      %6454 = vst [vmem:[#allocation2 + $0x768] sm:$0xc0] %v6340
      %6455 = vst [vmem:[#allocation2 + $0x770] sm:$0xc0] %v6341
      %6456 = vst [vmem:[#allocation2 + $0x778] sm:$0xc0] %v6342
      %6457 = vst [vmem:[#allocation2 + $0x780] sm:$0xc0] %v6343
      %6458 = vst [vmem:[#allocation2 + $0x788] sm:$0xc0] %v6344
      %6459 = vst [vmem:[#allocation2 + $0x790] sm:$0xc0] %v6345
      %6460 = vst [vmem:[#allocation2 + $0x798] sm:$0xc0] %v6346
      %6461 = vst [vmem:[#allocation2 + $0x7a0] sm:$0xc0] %v6347
      %6462 = vst [vmem:[#allocation2 + $0x7a8] sm:$0xc0] %v6348
      %6463 = vst [vmem:[#allocation2 + $0x7b0] sm:$0xc0] %v6349
      %6464 = vst [vmem:[#allocation2 + $0x7b8] sm:$0xc0] %v6350
      %6465 = vst [vmem:[#allocation2 + $0x7c0] sm:$0xc0] %v6351
      %6466 = vst [vmem:[#allocation2 + $0x7c8] sm:$0xc0] %v6352
      %6467 = vst [vmem:[#allocation2 + $0x7d0] sm:$0xc0] %v6353
      %6468 = vst [vmem:[#allocation2 + $0x7d8] sm:$0xc0] %v6354
      %6469 = vst [vmem:[#allocation2 + $0x7e0] sm:$0xc0] %v6355
      %6470 = vst [vmem:[#allocation2 + $0x7e8] sm:$0xc0] %v6356
      %6471 = vst [vmem:[#allocation2 + $0x7f0] sm:$0xc0] %v6357
      %6472 = vst [vmem:[#allocation2 + $0x7f8] sm:$0xc0] %v6358
      %6473 = vst [vmem:[#allocation2 + $0x800] sm:$0xc0] %v6359
      %6474 = vst [vmem:[#allocation2 + $0x808] sm:$0xc0] %v6360
      %6475 = vst [vmem:[#allocation2 + $0x810] sm:$0xc0] %v6361
      %6476 = vst [vmem:[#allocation2 + $0x818] sm:$0xc0] %v6362
      %6477 = vst [vmem:[#allocation2 + $0x820] sm:$0xc0] %v6363
      %6478 = vst [vmem:[#allocation2 + $0x828] sm:$0xc0] %v6364
      %6479 = vst [vmem:[#allocation2 + $0x830] sm:$0xc0] %v6365
      %6480 = vst [vmem:[#allocation2 + $0x838] sm:$0xc0] %v6366
      %6481 = vst [vmem:[#allocation2 + $0x840] sm:$0xc0] %v6367
      %6482 = vst [vmem:[#allocation2 + $0x848] sm:$0xc0] %v6368
      %6483 = vst [vmem:[#allocation2 + $0x850] sm:$0xc0] %v6369
      %6484 = vst [vmem:[#allocation2 + $0x858] sm:$0xc0] %v6370
      %6485 = vst [vmem:[#allocation2 + $0x860] sm:$0xc0] %v6371
      %6486 = vst [vmem:[#allocation2 + $0x868] sm:$0xc0] %v6372
      %6487 = vst [vmem:[#allocation2 + $0x870] sm:$0xc0] %v6373
      %6488 = vst [vmem:[#allocation2 + $0x878] sm:$0xc0] %v6374
      %6489 = vst [vmem:[#allocation2 + $0x880] sm:$0xc0] %v6375
      %6490 = vst [vmem:[#allocation2 + $0x888] sm:$0xc0] %v6376
      %6491 = vst [vmem:[#allocation2 + $0x890] sm:$0xc0] %v6377
      %6492 = vst [vmem:[#allocation2 + $0x898] sm:$0xc0] %v6378
      %6493 = vst [vmem:[#allocation2 + $0x8a0] sm:$0xc0] %v6379
      %6494 = vst [vmem:[#allocation2 + $0x8a8] sm:$0xc0] %v6380
      %6495 = vst [vmem:[#allocation2 + $0x8b0] sm:$0xc0] %v6381
      %6496 = vst [vmem:[#allocation2 + $0x8b8] sm:$0xc0] %v6382
      %6497 = vst [vmem:[#allocation2 + $0x8c0] sm:$0xc0] %v6383
      %6498 = vst [vmem:[#allocation2 + $0x8c8] sm:$0xc0] %v6384
      %6499 = vst [vmem:[#allocation2 + $0x8d0] sm:$0xc0] %v6385
      %6500 = vst [vmem:[#allocation2 + $0x8d8] sm:$0xc0] %v6386
      %6501 = vst [vmem:[#allocation2 + $0x8e0] sm:$0xc0] %v6387
      %6502 = vrot.lane.b32.xlu0 %v445, 118
      %v6503 = vpop.permute.xlu0 %6502
      %6504 = vrot.lane.b32.xlu0 %v447, 118
      %v6505 = vpop.permute.xlu0 %6504
      %6506 = vrot.lane.b32.xlu0 %v455, 118
      %v6507 = vpop.permute.xlu0 %6506
      %6508 = vrot.lane.b32.xlu0 %v463, 118
      %v6509 = vpop.permute.xlu0 %6508
      %6510 = vrot.lane.b32.xlu0 %v462, 118
      %v6511 = vpop.permute.xlu0 %6510
      %6512 = vrot.lane.b32.xlu0 %v464, 118
      %v6513 = vpop.permute.xlu0 %6512
      %6514 = vrot.lane.b32.xlu0 %v472, 118
      %v6515 = vpop.permute.xlu0 %6514
      %6516 = vrot.lane.b32.xlu0 %v480, 118
      %v6517 = vpop.permute.xlu0 %6516
      %6518 = vrot.lane.b32.xlu0 %v479, 118
      %v6519 = vpop.permute.xlu0 %6518
      %6520 = vrot.lane.b32.xlu0 %v481, 118
      %v6521 = vpop.permute.xlu0 %6520
      %6522 = vrot.lane.b32.xlu0 %v489, 118
      %v6523 = vpop.permute.xlu0 %6522
      %6524 = vrot.lane.b32.xlu0 %v497, 118
      %v6525 = vpop.permute.xlu0 %6524
      %6526 = vrot.lane.b32.xlu0 %v496, 118
      %v6527 = vpop.permute.xlu0 %6526
      %6528 = vrot.lane.b32.xlu0 %v498, 118
      %v6529 = vpop.permute.xlu0 %6528
      %6530 = vrot.lane.b32.xlu0 %v506, 118
      %v6531 = vpop.permute.xlu0 %6530
      %6532 = vrot.lane.b32.xlu0 %v514, 118
      %v6533 = vpop.permute.xlu0 %6532
      %6534 = vrot.lane.b32.xlu0 %v513, 118
      %v6535 = vpop.permute.xlu0 %6534
      %6536 = vrot.lane.b32.xlu0 %v515, 118
      %v6537 = vpop.permute.xlu0 %6536
      %6538 = vrot.lane.b32.xlu0 %v523, 118
      %v6539 = vpop.permute.xlu0 %6538
      %6540 = vrot.lane.b32.xlu0 %v531, 118
      %v6541 = vpop.permute.xlu0 %6540
      %6542 = vrot.lane.b32.xlu0 %v530, 118
      %v6543 = vpop.permute.xlu0 %6542
      %6544 = vrot.lane.b32.xlu0 %v532, 118
      %v6545 = vpop.permute.xlu0 %6544
      %6546 = vrot.lane.b32.xlu0 %v540, 118
      %v6547 = vpop.permute.xlu0 %6546
      %6548 = vrot.lane.b32.xlu0 %v548, 118
      %v6549 = vpop.permute.xlu0 %6548
      %6550 = vrot.lane.b32.xlu0 %v547, 118
      %v6551 = vpop.permute.xlu0 %6550
      %6552 = vrot.lane.b32.xlu0 %v549, 118
      %v6553 = vpop.permute.xlu0 %6552
      %6554 = vrot.lane.b32.xlu0 %v557, 118
      %v6555 = vpop.permute.xlu0 %6554
      %6556 = vrot.lane.b32.xlu0 %v565, 118
      %v6557 = vpop.permute.xlu0 %6556
      %6558 = vrot.lane.b32.xlu0 %v564, 118
      %v6559 = vpop.permute.xlu0 %6558
      %6560 = vrot.lane.b32.xlu0 %v566, 118
      %v6561 = vpop.permute.xlu0 %6560
      %6562 = vrot.lane.b32.xlu0 %v574, 118
      %v6563 = vpop.permute.xlu0 %6562
      %6564 = vrot.lane.b32.xlu0 %v582, 118
      %v6565 = vpop.permute.xlu0 %6564
      %6566 = vrot.lane.b32.xlu0 %v581, 118
      %v6567 = vpop.permute.xlu0 %6566
      %6568 = vrot.lane.b32.xlu0 %v583, 118
      %v6569 = vpop.permute.xlu0 %6568
      %6570 = vrot.lane.b32.xlu0 %v591, 118
      %v6571 = vpop.permute.xlu0 %6570
      %6572 = vrot.lane.b32.xlu0 %v599, 118
      %v6573 = vpop.permute.xlu0 %6572
      %6574 = vrot.lane.b32.xlu0 %v598, 118
      %v6575 = vpop.permute.xlu0 %6574
      %6576 = vrot.lane.b32.xlu0 %v600, 118
      %v6577 = vpop.permute.xlu0 %6576
      %6578 = vrot.lane.b32.xlu0 %v607, 118
      %v6579 = vpop.permute.xlu0 %6578
      %6580 = vrot.lane.b32.xlu0 %v677, 118
      %v6581 = vpop.permute.xlu0 %6580
      %6582 = vrot.lane.b32.xlu0 %v685, 118
      %v6583 = vpop.permute.xlu0 %6582
      %6584 = vrot.lane.b32.xlu0 %v684, 118
      %v6585 = vpop.permute.xlu0 %6584
      %6586 = vrot.lane.b32.xlu0 %v686, 118
      %v6587 = vpop.permute.xlu0 %6586
      %6588 = vrot.lane.b32.xlu0 %v694, 118
      %v6589 = vpop.permute.xlu0 %6588
      %6590 = vrot.lane.b32.xlu0 %v702, 118
      %v6591 = vpop.permute.xlu0 %6590
      %6592 = vrot.lane.b32.xlu0 %v701, 118
      %v6593 = vpop.permute.xlu0 %6592
      %6594 = vrot.lane.b32.xlu0 %v703, 118
      %v6595 = vpop.permute.xlu0 %6594
      %6596 = vrot.lane.b32.xlu0 %v711, 118
      %v6597 = vpop.permute.xlu0 %6596
      %6598 = vrot.lane.b32.xlu0 %v719, 118
      %v6599 = vpop.permute.xlu0 %6598
      %6600 = vrot.lane.b32.xlu0 %v718, 118
      %v6601 = vpop.permute.xlu0 %6600
      %6602 = vrot.lane.b32.xlu0 %v720, 118
      %v6603 = vpop.permute.xlu0 %6602
      %6604 = vrot.lane.b32.xlu0 %v728, 118
      %v6605 = vpop.permute.xlu0 %6604
      %6606 = vrot.lane.b32.xlu0 %v736, 118
      %v6607 = vpop.permute.xlu0 %6606
      %6608 = vrot.lane.b32.xlu0 %v735, 118
      %v6609 = vpop.permute.xlu0 %6608
      %6610 = vrot.lane.b32.xlu0 %v737, 118
      %v6611 = vpop.permute.xlu0 %6610
      %6612 = vrot.lane.b32.xlu0 %v745, 118
      %v6613 = vpop.permute.xlu0 %6612
      %6614 = vrot.lane.b32.xlu0 %v753, 118
      %v6615 = vpop.permute.xlu0 %6614
      %6616 = vrot.lane.b32.xlu0 %v752, 118
      %v6617 = vpop.permute.xlu0 %6616
      %vm6618 = vcmask 965632
      %v6619 = vsel %vm6618, %v6503, %v6505
      %v6620 = vsel %vm6618, %v6505, %v6507
      %v6621 = vsel %vm6618, %v6507, %v6509
      %v6622 = vsel %vm6618, %v6509, %v6511
      %v6623 = vsel %vm6618, %v6511, %v6513
      %v6624 = vsel %vm6618, %v6513, %v6515
      %v6625 = vsel %vm6618, %v6515, %v6517
      %v6626 = vsel %vm6618, %v6517, %v6519
      %v6627 = vsel %vm6618, %v6519, %v6521
      %v6628 = vsel %vm6618, %v6521, %v6523
      %v6629 = vsel %vm6618, %v6523, %v6525
      %v6630 = vsel %vm6618, %v6525, %v6527
      %v6631 = vsel %vm6618, %v6527, %v6529
      %v6632 = vsel %vm6618, %v6529, %v6531
      %v6633 = vsel %vm6618, %v6531, %v6533
      %v6634 = vsel %vm6618, %v6533, %v6535
      %v6635 = vsel %vm6618, %v6535, %v6537
      %v6636 = vsel %vm6618, %v6537, %v6539
      %v6637 = vsel %vm6618, %v6539, %v6541
      %v6638 = vsel %vm6618, %v6541, %v6543
      %v6639 = vsel %vm6618, %v6543, %v6545
      %v6640 = vsel %vm6618, %v6545, %v6547
      %v6641 = vsel %vm6618, %v6547, %v6549
      %v6642 = vsel %vm6618, %v6549, %v6551
      %v6643 = vsel %vm6618, %v6551, %v6553
      %v6644 = vsel %vm6618, %v6553, %v6555
      %v6645 = vsel %vm6618, %v6555, %v6557
      %v6646 = vsel %vm6618, %v6557, %v6559
      %v6647 = vsel %vm6618, %v6559, %v6561
      %v6648 = vsel %vm6618, %v6561, %v6563
      %v6649 = vsel %vm6618, %v6563, %v6565
      %v6650 = vsel %vm6618, %v6565, %v6567
      %v6651 = vsel %vm6618, %v6567, %v6569
      %v6652 = vsel %vm6618, %v6569, %v6571
      %v6653 = vsel %vm6618, %v6571, %v6573
      %v6654 = vsel %vm6618, %v6573, %v6575
      %v6655 = vsel %vm6618, %v6575, %v6577
      %v6656 = vsel %vm6618, %v6577, %v6579
      %v6657 = vsel %vm6618, %v6579, %v6581
      %v6658 = vsel %vm6618, %v6581, %v6583
      %v6659 = vsel %vm6618, %v6583, %v6585
      %v6660 = vsel %vm6618, %v6585, %v6587
      %v6661 = vsel %vm6618, %v6587, %v6589
      %v6662 = vsel %vm6618, %v6589, %v6591
      %v6663 = vsel %vm6618, %v6591, %v6593
      %v6664 = vsel %vm6618, %v6593, %v6595
      %v6665 = vsel %vm6618, %v6595, %v6597
      %v6666 = vsel %vm6618, %v6597, %v6599
      %v6667 = vsel %vm6618, %v6599, %v6601
      %v6668 = vsel %vm6618, %v6601, %v6603
      %v6669 = vsel %vm6618, %v6603, %v6605
      %v6670 = vsel %vm6618, %v6605, %v6607
      %v6671 = vsel %vm6618, %v6607, %v6609
      %v6672 = vsel %vm6618, %v6609, %v6611
      %v6673 = vsel %vm6618, %v6611, %v6613
      %v6674 = vsel %vm6618, %v6613, %v6615
      %v6675 = vsel %vm6618, %v6615, %v6617
      %6733 = vst [vmem:[#allocation2 + $0x8e8] sm:$0x3] %v6619
      %6734 = vst [vmem:[#allocation2 + $0x8f0] sm:$0x3] %v6620
      %6735 = vst [vmem:[#allocation2 + $0x8f8] sm:$0x3] %v6621
      %6736 = vst [vmem:[#allocation2 + $0x900] sm:$0x3] %v6622
      %6737 = vst [vmem:[#allocation2 + $0x908] sm:$0x3] %v6623
      %6738 = vst [vmem:[#allocation2 + $0x910] sm:$0x3] %v6624
      %6739 = vst [vmem:[#allocation2 + $0x918] sm:$0x3] %v6625
      %6740 = vst [vmem:[#allocation2 + $0x920] sm:$0x3] %v6626
      %6741 = vst [vmem:[#allocation2 + $0x928] sm:$0x3] %v6627
      %6742 = vst [vmem:[#allocation2 + $0x930] sm:$0x3] %v6628
      %6743 = vst [vmem:[#allocation2 + $0x938] sm:$0x3] %v6629
      %6744 = vst [vmem:[#allocation2 + $0x940] sm:$0x3] %v6630
      %6745 = vst [vmem:[#allocation2 + $0x948] sm:$0x3] %v6631
      %6746 = vst [vmem:[#allocation2 + $0x950] sm:$0x3] %v6632
      %6747 = vst [vmem:[#allocation2 + $0x958] sm:$0x3] %v6633
      %6748 = vst [vmem:[#allocation2 + $0x960] sm:$0x3] %v6634
      %6749 = vst [vmem:[#allocation2 + $0x968] sm:$0x3] %v6635
      %6750 = vst [vmem:[#allocation2 + $0x970] sm:$0x3] %v6636
      %6751 = vst [vmem:[#allocation2 + $0x978] sm:$0x3] %v6637
      %6752 = vst [vmem:[#allocation2 + $0x980] sm:$0x3] %v6638
      %6753 = vst [vmem:[#allocation2 + $0x988] sm:$0x3] %v6639
      %6754 = vst [vmem:[#allocation2 + $0x990] sm:$0x3] %v6640
      %6755 = vst [vmem:[#allocation2 + $0x998] sm:$0x3] %v6641
      %6756 = vst [vmem:[#allocation2 + $0x9a0] sm:$0x3] %v6642
      %6757 = vst [vmem:[#allocation2 + $0x9a8] sm:$0x3] %v6643
      %6758 = vst [vmem:[#allocation2 + $0x9b0] sm:$0x3] %v6644
      %6759 = vst [vmem:[#allocation2 + $0x9b8] sm:$0x3] %v6645
      %6760 = vst [vmem:[#allocation2 + $0x9c0] sm:$0x3] %v6646
      %6761 = vst [vmem:[#allocation2 + $0x9c8] sm:$0x3] %v6647
      %6762 = vst [vmem:[#allocation2 + $0x9d0] sm:$0x3] %v6648
      %6763 = vst [vmem:[#allocation2 + $0x9d8] sm:$0x3] %v6649
      %6764 = vst [vmem:[#allocation2 + $0x9e0] sm:$0x3] %v6650
      %6765 = vst [vmem:[#allocation2 + $0x9e8] sm:$0x3] %v6651
      %6766 = vst [vmem:[#allocation2 + $0x9f0] sm:$0x3] %v6652
      %6767 = vst [vmem:[#allocation2 + $0x9f8] sm:$0x3] %v6653
      %6768 = vst [vmem:[#allocation2 + $0xa00] sm:$0x3] %v6654
      %6769 = vst [vmem:[#allocation2 + $0xa08] sm:$0x3] %v6655
      %6770 = vst [vmem:[#allocation2 + $0xa10] sm:$0x3] %v6656
      %6771 = vst [vmem:[#allocation2 + $0xa18] sm:$0x3] %v6657
      %6772 = vst [vmem:[#allocation2 + $0xa20] sm:$0x3] %v6658
      %6773 = vst [vmem:[#allocation2 + $0xa28] sm:$0x3] %v6659
      %6774 = vst [vmem:[#allocation2 + $0xa30] sm:$0x3] %v6660
      %6775 = vst [vmem:[#allocation2 + $0xa38] sm:$0x3] %v6661
      %6776 = vst [vmem:[#allocation2 + $0xa40] sm:$0x3] %v6662
      %6777 = vst [vmem:[#allocation2 + $0xa48] sm:$0x3] %v6663
      %6778 = vst [vmem:[#allocation2 + $0xa50] sm:$0x3] %v6664
      %6779 = vst [vmem:[#allocation2 + $0xa58] sm:$0x3] %v6665
      %6780 = vst [vmem:[#allocation2 + $0xa60] sm:$0x3] %v6666
      %6781 = vst [vmem:[#allocation2 + $0xa68] sm:$0x3] %v6667
      %6782 = vst [vmem:[#allocation2 + $0xa70] sm:$0x3] %v6668
      %6783 = vst [vmem:[#allocation2 + $0xa78] sm:$0x3] %v6669
      %6784 = vst [vmem:[#allocation2 + $0xa80] sm:$0x3] %v6670
      %6785 = vst [vmem:[#allocation2 + $0xa88] sm:$0x3] %v6671
      %6786 = vst [vmem:[#allocation2 + $0xa90] sm:$0x3] %v6672
      %6787 = vst [vmem:[#allocation2 + $0xa98] sm:$0x3] %v6673
      %6788 = vst [vmem:[#allocation2 + $0xaa0] sm:$0x3] %v6674
      %6789 = vst [vmem:[#allocation2 + $0xaa8] sm:$0x3] %v6675
      %v6790 = vrot.slane %v718, 6
      %v6791 = vrot.slane %v720, 6
      %v6792 = vrot.slane %v728, 6
      %v6793 = vrot.slane %v736, 6
      %v6794 = vrot.slane %v735, 6
      %v6795 = vrot.slane %v737, 6
      %v6796 = vrot.slane %v745, 6
      %v6797 = vrot.slane %v753, 6
      %v6798 = vrot.slane %v752, 6
      %6799 = vrot.lane.b32.xlu0 %v829, 86
      %v6800 = vpop.permute.xlu0 %6799
      %6801 = vrot.lane.b32.xlu0 %v830, 86
      %v6802 = vpop.permute.xlu0 %6801
      %6803 = vrot.lane.b32.xlu0 %v831, 86
      %v6804 = vpop.permute.xlu0 %6803
      %6805 = vrot.lane.b32.xlu0 %v832, 86
      %v6806 = vpop.permute.xlu0 %6805
      %6807 = vrot.lane.b32.xlu0 %v833, 86
      %v6808 = vpop.permute.xlu0 %6807
      %6809 = vrot.lane.b32.xlu0 %v834, 86
      %v6810 = vpop.permute.xlu0 %6809
      %6811 = vrot.lane.b32.xlu0 %v835, 86
      %v6812 = vpop.permute.xlu0 %6811
      %6813 = vrot.lane.b32.xlu0 %v836, 86
      %v6814 = vpop.permute.xlu0 %6813
      %6815 = vrot.lane.b32.xlu0 %v837, 86
      %v6816 = vpop.permute.xlu0 %6815
      %6817 = vrot.lane.b32.xlu0 %v838, 86
      %v6818 = vpop.permute.xlu0 %6817
      %6819 = vrot.lane.b32.xlu0 %v839, 86
      %v6820 = vpop.permute.xlu0 %6819
      %6821 = vrot.lane.b32.xlu0 %v840, 86
      %v6822 = vpop.permute.xlu0 %6821
      %6823 = vrot.lane.b32.xlu0 %v841, 86
      %v6824 = vpop.permute.xlu0 %6823
      %6825 = vrot.lane.b32.xlu0 %v842, 86
      %v6826 = vpop.permute.xlu0 %6825
      %6827 = vrot.lane.b32.xlu0 %v843, 86
      %v6828 = vpop.permute.xlu0 %6827
      %6829 = vrot.lane.b32.xlu0 %v844, 86
      %v6830 = vpop.permute.xlu0 %6829
      %6831 = vrot.lane.b32.xlu0 %v845, 86
      %v6832 = vpop.permute.xlu0 %6831
      %6833 = vrot.lane.b32.xlu0 %v846, 86
      %v6834 = vpop.permute.xlu0 %6833
      %6835 = vrot.lane.b32.xlu0 %v847, 86
      %v6836 = vpop.permute.xlu0 %6835
      %6837 = vrot.lane.b32.xlu0 %v848, 86
      %v6838 = vpop.permute.xlu0 %6837
      %6839 = vrot.lane.b32.xlu0 %v849, 86
      %v6840 = vpop.permute.xlu0 %6839
      %6841 = vrot.lane.b32.xlu0 %v850, 86
      %v6842 = vpop.permute.xlu0 %6841
      %6843 = vrot.lane.b32.xlu0 %v851, 86
      %v6844 = vpop.permute.xlu0 %6843
      %6845 = vrot.lane.b32.xlu0 %v852, 86
      %v6846 = vpop.permute.xlu0 %6845
      %6847 = vrot.lane.b32.xlu0 %v853, 86
      %v6848 = vpop.permute.xlu0 %6847
      %6849 = vrot.lane.b32.xlu0 %v854, 86
      %v6850 = vpop.permute.xlu0 %6849
      %6851 = vrot.lane.b32.xlu0 %v855, 86
      %v6852 = vpop.permute.xlu0 %6851
      %6853 = vrot.lane.b32.xlu0 %v856, 86
      %v6854 = vpop.permute.xlu0 %6853
      %6855 = vrot.lane.b32.xlu0 %v857, 86
      %v6856 = vpop.permute.xlu0 %6855
      %6857 = vrot.lane.b32.xlu0 %v858, 86
      %v6858 = vpop.permute.xlu0 %6857
      %6859 = vrot.lane.b32.xlu0 %v859, 86
      %v6860 = vpop.permute.xlu0 %6859
      %6861 = vrot.lane.b32.xlu0 %v860, 86
      %v6862 = vpop.permute.xlu0 %6861
      %6863 = vrot.lane.b32.xlu0 %v861, 86
      %v6864 = vpop.permute.xlu0 %6863
      %6865 = vrot.lane.b32.xlu0 %v862, 86
      %v6866 = vpop.permute.xlu0 %6865
      %6867 = vrot.lane.b32.xlu0 %v863, 86
      %v6868 = vpop.permute.xlu0 %6867
      %6869 = vrot.lane.b32.xlu0 %v864, 86
      %v6870 = vpop.permute.xlu0 %6869
      %6871 = vrot.lane.b32.xlu0 %v865, 86
      %v6872 = vpop.permute.xlu0 %6871
      %6873 = vrot.lane.b32.xlu0 %v866, 86
      %v6874 = vpop.permute.xlu0 %6873
      %6875 = vrot.lane.b32.xlu0 %v867, 86
      %v6876 = vpop.permute.xlu0 %6875
      %6877 = vrot.lane.b32.xlu0 %v868, 86
      %v6878 = vpop.permute.xlu0 %6877
      %6879 = vrot.lane.b32.xlu0 %v3289, 86
      %v6880 = vpop.permute.xlu0 %6879
      %6881 = vrot.lane.b32.xlu0 %v3290, 86
      %v6882 = vpop.permute.xlu0 %6881
      %6883 = vrot.lane.b32.xlu0 %v3291, 86
      %v6884 = vpop.permute.xlu0 %6883
      %6885 = vrot.lane.b32.xlu0 %v3292, 86
      %v6886 = vpop.permute.xlu0 %6885
      %6887 = vrot.lane.b32.xlu0 %v3293, 86
      %v6888 = vpop.permute.xlu0 %6887
      %6889 = vrot.lane.b32.xlu0 %v3294, 86
      %v6890 = vpop.permute.xlu0 %6889
      %6891 = vrot.lane.b32.xlu0 %v3295, 86
      %v6892 = vpop.permute.xlu0 %6891
      %6893 = vrot.lane.b32.xlu0 %v3296, 86
      %v6894 = vpop.permute.xlu0 %6893
      %6895 = vrot.lane.b32.xlu0 %v3297, 86
      %v6896 = vpop.permute.xlu0 %6895
      %6897 = vrot.lane.b32.xlu0 %v6790, 86
      %v6898 = vpop.permute.xlu0 %6897
      %6899 = vrot.lane.b32.xlu0 %v6791, 86
      %v6900 = vpop.permute.xlu0 %6899
      %6901 = vrot.lane.b32.xlu0 %v6792, 86
      %v6902 = vpop.permute.xlu0 %6901
      %6903 = vrot.lane.b32.xlu0 %v6793, 86
      %v6904 = vpop.permute.xlu0 %6903
      %6905 = vrot.lane.b32.xlu0 %v6794, 86
      %v6906 = vpop.permute.xlu0 %6905
      %6907 = vrot.lane.b32.xlu0 %v6795, 86
      %v6908 = vpop.permute.xlu0 %6907
      %6909 = vrot.lane.b32.xlu0 %v6796, 86
      %v6910 = vpop.permute.xlu0 %6909
      %6911 = vrot.lane.b32.xlu0 %v6797, 86
      %v6912 = vpop.permute.xlu0 %6911
      %6913 = vrot.lane.b32.xlu0 %v6798, 86
      %v6914 = vpop.permute.xlu0 %6913
      %vm6915 = vcmask 703488
      %v6916 = vsel %vm6915, %v6800, %v6802
      %v6917 = vsel %vm6915, %v6802, %v6804
      %v6918 = vsel %vm6915, %v6804, %v6806
      %v6919 = vsel %vm6915, %v6806, %v6808
      %v6920 = vsel %vm6915, %v6808, %v6810
      %v6921 = vsel %vm6915, %v6810, %v6812
      %v6922 = vsel %vm6915, %v6812, %v6814
      %v6923 = vsel %vm6915, %v6814, %v6816
      %v6924 = vsel %vm6915, %v6816, %v6818
      %v6925 = vsel %vm6915, %v6818, %v6820
      %v6926 = vsel %vm6915, %v6820, %v6822
      %v6927 = vsel %vm6915, %v6822, %v6824
      %v6928 = vsel %vm6915, %v6824, %v6826
      %v6929 = vsel %vm6915, %v6826, %v6828
      %v6930 = vsel %vm6915, %v6828, %v6830
      %v6931 = vsel %vm6915, %v6830, %v6832
      %v6932 = vsel %vm6915, %v6832, %v6834
      %v6933 = vsel %vm6915, %v6834, %v6836
      %v6934 = vsel %vm6915, %v6836, %v6838
      %v6935 = vsel %vm6915, %v6838, %v6840
      %v6936 = vsel %vm6915, %v6840, %v6842
      %v6937 = vsel %vm6915, %v6842, %v6844
      %v6938 = vsel %vm6915, %v6844, %v6846
      %v6939 = vsel %vm6915, %v6846, %v6848
      %v6940 = vsel %vm6915, %v6848, %v6850
      %v6941 = vsel %vm6915, %v6850, %v6852
      %v6942 = vsel %vm6915, %v6852, %v6854
      %v6943 = vsel %vm6915, %v6854, %v6856
      %v6944 = vsel %vm6915, %v6856, %v6858
      %v6945 = vsel %vm6915, %v6858, %v6860
      %v6946 = vsel %vm6915, %v6860, %v6862
      %v6947 = vsel %vm6915, %v6862, %v6864
      %v6948 = vsel %vm6915, %v6864, %v6866
      %v6949 = vsel %vm6915, %v6866, %v6868
      %v6950 = vsel %vm6915, %v6868, %v6870
      %v6951 = vsel %vm6915, %v6870, %v6872
      %v6952 = vsel %vm6915, %v6872, %v6874
      %v6953 = vsel %vm6915, %v6874, %v6876
      %v6954 = vsel %vm6915, %v6876, %v6878
      %v6955 = vsel %vm6915, %v6878, %v6880
      %v6956 = vsel %vm6915, %v6880, %v6882
      %v6957 = vsel %vm6915, %v6882, %v6884
      %v6958 = vsel %vm6915, %v6884, %v6886
      %v6959 = vsel %vm6915, %v6886, %v6888
      %v6960 = vsel %vm6915, %v6888, %v6890
      %v6961 = vsel %vm6915, %v6890, %v6892
      %v6962 = vsel %vm6915, %v6892, %v6894
      %v6963 = vsel %vm6915, %v6894, %v6896
      %v6964 = vsel %vm6915, %v6896, %v6898
      %v6965 = vsel %vm6915, %v6898, %v6900
      %v6966 = vsel %vm6915, %v6900, %v6902
      %v6967 = vsel %vm6915, %v6902, %v6904
      %v6968 = vsel %vm6915, %v6904, %v6906
      %v6969 = vsel %vm6915, %v6906, %v6908
      %v6970 = vsel %vm6915, %v6908, %v6910
      %v6971 = vsel %vm6915, %v6910, %v6912
      %v6972 = vsel %vm6915, %v6912, %v6914
      %7030 = vst [vmem:[#allocation2 + $0x8e8] sm:$0xc] %v6916
      %7031 = vst [vmem:[#allocation2 + $0x8f0] sm:$0xc] %v6917
      %7032 = vst [vmem:[#allocation2 + $0x8f8] sm:$0xc] %v6918
      %7033 = vst [vmem:[#allocation2 + $0x900] sm:$0xc] %v6919
      %7034 = vst [vmem:[#allocation2 + $0x908] sm:$0xc] %v6920
      %7035 = vst [vmem:[#allocation2 + $0x910] sm:$0xc] %v6921
      %7036 = vst [vmem:[#allocation2 + $0x918] sm:$0xc] %v6922
      %7037 = vst [vmem:[#allocation2 + $0x920] sm:$0xc] %v6923
      %7038 = vst [vmem:[#allocation2 + $0x928] sm:$0xc] %v6924
      %7039 = vst [vmem:[#allocation2 + $0x930] sm:$0xc] %v6925
      %7040 = vst [vmem:[#allocation2 + $0x938] sm:$0xc] %v6926
      %7041 = vst [vmem:[#allocation2 + $0x940] sm:$0xc] %v6927
      %7042 = vst [vmem:[#allocation2 + $0x948] sm:$0xc] %v6928
      %7043 = vst [vmem:[#allocation2 + $0x950] sm:$0xc] %v6929
      %7044 = vst [vmem:[#allocation2 + $0x958] sm:$0xc] %v6930
      %7045 = vst [vmem:[#allocation2 + $0x960] sm:$0xc] %v6931
      %7046 = vst [vmem:[#allocation2 + $0x968] sm:$0xc] %v6932
      %7047 = vst [vmem:[#allocation2 + $0x970] sm:$0xc] %v6933
      %7048 = vst [vmem:[#allocation2 + $0x978] sm:$0xc] %v6934
      %7049 = vst [vmem:[#allocation2 + $0x980] sm:$0xc] %v6935
      %7050 = vst [vmem:[#allocation2 + $0x988] sm:$0xc] %v6936
      %7051 = vst [vmem:[#allocation2 + $0x990] sm:$0xc] %v6937
      %7052 = vst [vmem:[#allocation2 + $0x998] sm:$0xc] %v6938
      %7053 = vst [vmem:[#allocation2 + $0x9a0] sm:$0xc] %v6939
      %7054 = vst [vmem:[#allocation2 + $0x9a8] sm:$0xc] %v6940
      %7055 = vst [vmem:[#allocation2 + $0x9b0] sm:$0xc] %v6941
      %7056 = vst [vmem:[#allocation2 + $0x9b8] sm:$0xc] %v6942
      %7057 = vst [vmem:[#allocation2 + $0x9c0] sm:$0xc] %v6943
      %7058 = vst [vmem:[#allocation2 + $0x9c8] sm:$0xc] %v6944
      %7059 = vst [vmem:[#allocation2 + $0x9d0] sm:$0xc] %v6945
      %7060 = vst [vmem:[#allocation2 + $0x9d8] sm:$0xc] %v6946
      %7061 = vst [vmem:[#allocation2 + $0x9e0] sm:$0xc] %v6947
      %7062 = vst [vmem:[#allocation2 + $0x9e8] sm:$0xc] %v6948
      %7063 = vst [vmem:[#allocation2 + $0x9f0] sm:$0xc] %v6949
      %7064 = vst [vmem:[#allocation2 + $0x9f8] sm:$0xc] %v6950
      %7065 = vst [vmem:[#allocation2 + $0xa00] sm:$0xc] %v6951
      %7066 = vst [vmem:[#allocation2 + $0xa08] sm:$0xc] %v6952
      %7067 = vst [vmem:[#allocation2 + $0xa10] sm:$0xc] %v6953
      %7068 = vst [vmem:[#allocation2 + $0xa18] sm:$0xc] %v6954
      %7069 = vst [vmem:[#allocation2 + $0xa20] sm:$0xc] %v6955
      %7070 = vst [vmem:[#allocation2 + $0xa28] sm:$0xc] %v6956
      %7071 = vst [vmem:[#allocation2 + $0xa30] sm:$0xc] %v6957
      %7072 = vst [vmem:[#allocation2 + $0xa38] sm:$0xc] %v6958
      %7073 = vst [vmem:[#allocation2 + $0xa40] sm:$0xc] %v6959
      %7074 = vst [vmem:[#allocation2 + $0xa48] sm:$0xc] %v6960
      %7075 = vst [vmem:[#allocation2 + $0xa50] sm:$0xc] %v6961
      %7076 = vst [vmem:[#allocation2 + $0xa58] sm:$0xc] %v6962
      %7077 = vst [vmem:[#allocation2 + $0xa60] sm:$0xc] %v6963
      %7078 = vst [vmem:[#allocation2 + $0xa68] sm:$0xc] %v6964
      %7079 = vst [vmem:[#allocation2 + $0xa70] sm:$0xc] %v6965
      %7080 = vst [vmem:[#allocation2 + $0xa78] sm:$0xc] %v6966
      %7081 = vst [vmem:[#allocation2 + $0xa80] sm:$0xc] %v6967
      %7082 = vst [vmem:[#allocation2 + $0xa88] sm:$0xc] %v6968
      %7083 = vst [vmem:[#allocation2 + $0xa90] sm:$0xc] %v6969
      %7084 = vst [vmem:[#allocation2 + $0xa98] sm:$0xc] %v6970
      %7085 = vst [vmem:[#allocation2 + $0xaa0] sm:$0xc] %v6971
      %7086 = vst [vmem:[#allocation2 + $0xaa8] sm:$0xc] %v6972
      %7087 = vrot.lane.b32.xlu0 %v1175, 85
      %v7088 = vpop.permute.xlu0 %7087
      %7089 = vrot.lane.b32.xlu0 %v1176, 85
      %v7090 = vpop.permute.xlu0 %7089
      %7091 = vrot.lane.b32.xlu0 %v1177, 85
      %v7092 = vpop.permute.xlu0 %7091
      %7093 = vrot.lane.b32.xlu0 %v1178, 85
      %v7094 = vpop.permute.xlu0 %7093
      %7095 = vrot.lane.b32.xlu0 %v1179, 85
      %v7096 = vpop.permute.xlu0 %7095
      %7097 = vrot.lane.b32.xlu0 %v1180, 85
      %v7098 = vpop.permute.xlu0 %7097
      %7099 = vrot.lane.b32.xlu0 %v1181, 85
      %v7100 = vpop.permute.xlu0 %7099
      %7101 = vrot.lane.b32.xlu0 %v1182, 85
      %v7102 = vpop.permute.xlu0 %7101
      %7103 = vrot.lane.b32.xlu0 %v1183, 85
      %v7104 = vpop.permute.xlu0 %7103
      %7105 = vrot.lane.b32.xlu0 %v1184, 85
      %v7106 = vpop.permute.xlu0 %7105
      %7107 = vrot.lane.b32.xlu0 %v1185, 85
      %v7108 = vpop.permute.xlu0 %7107
      %7109 = vrot.lane.b32.xlu0 %v1186, 85
      %v7110 = vpop.permute.xlu0 %7109
      %7111 = vrot.lane.b32.xlu0 %v1187, 85
      %v7112 = vpop.permute.xlu0 %7111
      %7113 = vrot.lane.b32.xlu0 %v1188, 85
      %v7114 = vpop.permute.xlu0 %7113
      %7115 = vrot.lane.b32.xlu0 %v1189, 85
      %v7116 = vpop.permute.xlu0 %7115
      %7117 = vrot.lane.b32.xlu0 %v1190, 85
      %v7118 = vpop.permute.xlu0 %7117
      %7119 = vrot.lane.b32.xlu0 %v1191, 85
      %v7120 = vpop.permute.xlu0 %7119
      %7121 = vrot.lane.b32.xlu0 %v1192, 85
      %v7122 = vpop.permute.xlu0 %7121
      %7123 = vrot.lane.b32.xlu0 %v1193, 85
      %v7124 = vpop.permute.xlu0 %7123
      %7125 = vrot.lane.b32.xlu0 %v1194, 85
      %v7126 = vpop.permute.xlu0 %7125
      %7127 = vrot.lane.b32.xlu0 %v1195, 85
      %v7128 = vpop.permute.xlu0 %7127
      %7129 = vrot.lane.b32.xlu0 %v1196, 85
      %v7130 = vpop.permute.xlu0 %7129
      %7131 = vrot.lane.b32.xlu0 %v1197, 85
      %v7132 = vpop.permute.xlu0 %7131
      %7133 = vrot.lane.b32.xlu0 %v1198, 85
      %v7134 = vpop.permute.xlu0 %7133
      %7135 = vrot.lane.b32.xlu0 %v1199, 85
      %v7136 = vpop.permute.xlu0 %7135
      %7137 = vrot.lane.b32.xlu0 %v1200, 85
      %v7138 = vpop.permute.xlu0 %7137
      %7139 = vrot.lane.b32.xlu0 %v1201, 85
      %v7140 = vpop.permute.xlu0 %7139
      %7141 = vrot.lane.b32.xlu0 %v1202, 85
      %v7142 = vpop.permute.xlu0 %7141
      %7143 = vrot.lane.b32.xlu0 %v1203, 85
      %v7144 = vpop.permute.xlu0 %7143
      %7145 = vrot.lane.b32.xlu0 %v1204, 85
      %v7146 = vpop.permute.xlu0 %7145
      %7147 = vrot.lane.b32.xlu0 %v1205, 85
      %v7148 = vpop.permute.xlu0 %7147
      %7149 = vrot.lane.b32.xlu0 %v1206, 85
      %v7150 = vpop.permute.xlu0 %7149
      %7151 = vrot.lane.b32.xlu0 %v1207, 85
      %v7152 = vpop.permute.xlu0 %7151
      %7153 = vrot.lane.b32.xlu0 %v1208, 85
      %v7154 = vpop.permute.xlu0 %7153
      %7155 = vrot.lane.b32.xlu0 %v1209, 85
      %v7156 = vpop.permute.xlu0 %7155
      %7157 = vrot.lane.b32.xlu0 %v1210, 85
      %v7158 = vpop.permute.xlu0 %7157
      %7159 = vrot.lane.b32.xlu0 %v1211, 85
      %v7160 = vpop.permute.xlu0 %7159
      %7161 = vrot.lane.b32.xlu0 %v1212, 85
      %v7162 = vpop.permute.xlu0 %7161
      %7163 = vrot.lane.b32.xlu0 %v1213, 85
      %v7164 = vpop.permute.xlu0 %7163
      %7165 = vrot.lane.b32.xlu0 %v1214, 85
      %v7166 = vpop.permute.xlu0 %7165
      %7167 = vrot.lane.b32.xlu0 %v3586, 85
      %v7168 = vpop.permute.xlu0 %7167
      %7169 = vrot.lane.b32.xlu0 %v3587, 85
      %v7170 = vpop.permute.xlu0 %7169
      %7171 = vrot.lane.b32.xlu0 %v3588, 85
      %v7172 = vpop.permute.xlu0 %7171
      %7173 = vrot.lane.b32.xlu0 %v3589, 85
      %v7174 = vpop.permute.xlu0 %7173
      %7175 = vrot.lane.b32.xlu0 %v3590, 85
      %v7176 = vpop.permute.xlu0 %7175
      %7177 = vrot.lane.b32.xlu0 %v3591, 85
      %v7178 = vpop.permute.xlu0 %7177
      %7179 = vrot.lane.b32.xlu0 %v3592, 85
      %v7180 = vpop.permute.xlu0 %7179
      %7181 = vrot.lane.b32.xlu0 %v3593, 85
      %v7182 = vpop.permute.xlu0 %7181
      %7183 = vrot.lane.b32.xlu0 %v3594, 85
      %v7184 = vpop.permute.xlu0 %7183
      %7185 = vrot.lane.b32.xlu0 %v5908, 85
      %v7186 = vpop.permute.xlu0 %7185
      %7187 = vrot.lane.b32.xlu0 %v5909, 85
      %v7188 = vpop.permute.xlu0 %7187
      %7189 = vrot.lane.b32.xlu0 %v5910, 85
      %v7190 = vpop.permute.xlu0 %7189
      %7191 = vrot.lane.b32.xlu0 %v5911, 85
      %v7192 = vpop.permute.xlu0 %7191
      %7193 = vrot.lane.b32.xlu0 %v5912, 85
      %v7194 = vpop.permute.xlu0 %7193
      %7195 = vrot.lane.b32.xlu0 %v5913, 85
      %v7196 = vpop.permute.xlu0 %7195
      %7197 = vrot.lane.b32.xlu0 %v5914, 85
      %v7198 = vpop.permute.xlu0 %7197
      %7199 = vrot.lane.b32.xlu0 %v5915, 85
      %v7200 = vpop.permute.xlu0 %7199
      %7201 = vrot.lane.b32.xlu0 %v5916, 85
      %v7202 = vpop.permute.xlu0 %7201
      %vm7203 = vcmask 695296
      %v7204 = vsel %vm7203, %v7088, %v7090
      %v7205 = vsel %vm7203, %v7090, %v7092
      %v7206 = vsel %vm7203, %v7092, %v7094
      %v7207 = vsel %vm7203, %v7094, %v7096
      %v7208 = vsel %vm7203, %v7096, %v7098
      %v7209 = vsel %vm7203, %v7098, %v7100
      %v7210 = vsel %vm7203, %v7100, %v7102
      %v7211 = vsel %vm7203, %v7102, %v7104
      %v7212 = vsel %vm7203, %v7104, %v7106
      %v7213 = vsel %vm7203, %v7106, %v7108
      %v7214 = vsel %vm7203, %v7108, %v7110
      %v7215 = vsel %vm7203, %v7110, %v7112
      %v7216 = vsel %vm7203, %v7112, %v7114
      %v7217 = vsel %vm7203, %v7114, %v7116
      %v7218 = vsel %vm7203, %v7116, %v7118
      %v7219 = vsel %vm7203, %v7118, %v7120
      %v7220 = vsel %vm7203, %v7120, %v7122
      %v7221 = vsel %vm7203, %v7122, %v7124
      %v7222 = vsel %vm7203, %v7124, %v7126
      %v7223 = vsel %vm7203, %v7126, %v7128
      %v7224 = vsel %vm7203, %v7128, %v7130
      %v7225 = vsel %vm7203, %v7130, %v7132
      %v7226 = vsel %vm7203, %v7132, %v7134
      %v7227 = vsel %vm7203, %v7134, %v7136
      %v7228 = vsel %vm7203, %v7136, %v7138
      %v7229 = vsel %vm7203, %v7138, %v7140
      %v7230 = vsel %vm7203, %v7140, %v7142
      %v7231 = vsel %vm7203, %v7142, %v7144
      %v7232 = vsel %vm7203, %v7144, %v7146
      %v7233 = vsel %vm7203, %v7146, %v7148
      %v7234 = vsel %vm7203, %v7148, %v7150
      %v7235 = vsel %vm7203, %v7150, %v7152
      %v7236 = vsel %vm7203, %v7152, %v7154
      %v7237 = vsel %vm7203, %v7154, %v7156
      %v7238 = vsel %vm7203, %v7156, %v7158
      %v7239 = vsel %vm7203, %v7158, %v7160
      %v7240 = vsel %vm7203, %v7160, %v7162
      %v7241 = vsel %vm7203, %v7162, %v7164
      %v7242 = vsel %vm7203, %v7164, %v7166
      %v7243 = vsel %vm7203, %v7166, %v7168
      %v7244 = vsel %vm7203, %v7168, %v7170
      %v7245 = vsel %vm7203, %v7170, %v7172
      %v7246 = vsel %vm7203, %v7172, %v7174
      %v7247 = vsel %vm7203, %v7174, %v7176
      %v7248 = vsel %vm7203, %v7176, %v7178
      %v7249 = vsel %vm7203, %v7178, %v7180
      %v7250 = vsel %vm7203, %v7180, %v7182
      %v7251 = vsel %vm7203, %v7182, %v7184
      %v7252 = vsel %vm7203, %v7184, %v7186
      %v7253 = vsel %vm7203, %v7186, %v7188
      %v7254 = vsel %vm7203, %v7188, %v7190
      %v7255 = vsel %vm7203, %v7190, %v7192
      %v7256 = vsel %vm7203, %v7192, %v7194
      %v7257 = vsel %vm7203, %v7194, %v7196
      %v7258 = vsel %vm7203, %v7196, %v7198
      %v7259 = vsel %vm7203, %v7198, %v7200
      %v7260 = vsel %vm7203, %v7200, %v7202
      %7318 = vst [vmem:[#allocation2 + $0x8e8] sm:$0x30] %v7204
      %7319 = vst [vmem:[#allocation2 + $0x8f0] sm:$0x30] %v7205
      %7320 = vst [vmem:[#allocation2 + $0x8f8] sm:$0x30] %v7206
      %7321 = vst [vmem:[#allocation2 + $0x900] sm:$0x30] %v7207
      %7322 = vst [vmem:[#allocation2 + $0x908] sm:$0x30] %v7208
      %7323 = vst [vmem:[#allocation2 + $0x910] sm:$0x30] %v7209
      %7324 = vst [vmem:[#allocation2 + $0x918] sm:$0x30] %v7210
      %7325 = vst [vmem:[#allocation2 + $0x920] sm:$0x30] %v7211
      %7326 = vst [vmem:[#allocation2 + $0x928] sm:$0x30] %v7212
      %7327 = vst [vmem:[#allocation2 + $0x930] sm:$0x30] %v7213
      %7328 = vst [vmem:[#allocation2 + $0x938] sm:$0x30] %v7214
      %7329 = vst [vmem:[#allocation2 + $0x940] sm:$0x30] %v7215
      %7330 = vst [vmem:[#allocation2 + $0x948] sm:$0x30] %v7216
      %7331 = vst [vmem:[#allocation2 + $0x950] sm:$0x30] %v7217
      %7332 = vst [vmem:[#allocation2 + $0x958] sm:$0x30] %v7218
      %7333 = vst [vmem:[#allocation2 + $0x960] sm:$0x30] %v7219
      %7334 = vst [vmem:[#allocation2 + $0x968] sm:$0x30] %v7220
      %7335 = vst [vmem:[#allocation2 + $0x970] sm:$0x30] %v7221
      %7336 = vst [vmem:[#allocation2 + $0x978] sm:$0x30] %v7222
      %7337 = vst [vmem:[#allocation2 + $0x980] sm:$0x30] %v7223
      %7338 = vst [vmem:[#allocation2 + $0x988] sm:$0x30] %v7224
      %7339 = vst [vmem:[#allocation2 + $0x990] sm:$0x30] %v7225
      %7340 = vst [vmem:[#allocation2 + $0x998] sm:$0x30] %v7226
      %7341 = vst [vmem:[#allocation2 + $0x9a0] sm:$0x30] %v7227
      %7342 = vst [vmem:[#allocation2 + $0x9a8] sm:$0x30] %v7228
      %7343 = vst [vmem:[#allocation2 + $0x9b0] sm:$0x30] %v7229
      %7344 = vst [vmem:[#allocation2 + $0x9b8] sm:$0x30] %v7230
      %7345 = vst [vmem:[#allocation2 + $0x9c0] sm:$0x30] %v7231
      %7346 = vst [vmem:[#allocation2 + $0x9c8] sm:$0x30] %v7232
      %7347 = vst [vmem:[#allocation2 + $0x9d0] sm:$0x30] %v7233
      %7348 = vst [vmem:[#allocation2 + $0x9d8] sm:$0x30] %v7234
      %7349 = vst [vmem:[#allocation2 + $0x9e0] sm:$0x30] %v7235
      %7350 = vst [vmem:[#allocation2 + $0x9e8] sm:$0x30] %v7236
      %7351 = vst [vmem:[#allocation2 + $0x9f0] sm:$0x30] %v7237
      %7352 = vst [vmem:[#allocation2 + $0x9f8] sm:$0x30] %v7238
      %7353 = vst [vmem:[#allocation2 + $0xa00] sm:$0x30] %v7239
      %7354 = vst [vmem:[#allocation2 + $0xa08] sm:$0x30] %v7240
      %7355 = vst [vmem:[#allocation2 + $0xa10] sm:$0x30] %v7241
      %7356 = vst [vmem:[#allocation2 + $0xa18] sm:$0x30] %v7242
      %7357 = vst [vmem:[#allocation2 + $0xa20] sm:$0x30] %v7243
      %7358 = vst [vmem:[#allocation2 + $0xa28] sm:$0x30] %v7244
      %7359 = vst [vmem:[#allocation2 + $0xa30] sm:$0x30] %v7245
      %7360 = vst [vmem:[#allocation2 + $0xa38] sm:$0x30] %v7246
      %7361 = vst [vmem:[#allocation2 + $0xa40] sm:$0x30] %v7247
      %7362 = vst [vmem:[#allocation2 + $0xa48] sm:$0x30] %v7248
      %7363 = vst [vmem:[#allocation2 + $0xa50] sm:$0x30] %v7249
      %7364 = vst [vmem:[#allocation2 + $0xa58] sm:$0x30] %v7250
      %7365 = vst [vmem:[#allocation2 + $0xa60] sm:$0x30] %v7251
      %7366 = vst [vmem:[#allocation2 + $0xa68] sm:$0x30] %v7252
      %7367 = vst [vmem:[#allocation2 + $0xa70] sm:$0x30] %v7253
      %7368 = vst [vmem:[#allocation2 + $0xa78] sm:$0x30] %v7254
      %7369 = vst [vmem:[#allocation2 + $0xa80] sm:$0x30] %v7255
      %7370 = vst [vmem:[#allocation2 + $0xa88] sm:$0x30] %v7256
      %7371 = vst [vmem:[#allocation2 + $0xa90] sm:$0x30] %v7257
      %7372 = vst [vmem:[#allocation2 + $0xa98] sm:$0x30] %v7258
      %7373 = vst [vmem:[#allocation2 + $0xaa0] sm:$0x30] %v7259
      %7374 = vst [vmem:[#allocation2 + $0xaa8] sm:$0x30] %v7260
      %7375 = vrot.lane.b32.xlu0 %v1521, 84
      %v7376 = vpop.permute.xlu0 %7375
      %7377 = vrot.lane.b32.xlu0 %v1522, 84
      %v7378 = vpop.permute.xlu0 %7377
      %7379 = vrot.lane.b32.xlu0 %v1523, 84
      %v7380 = vpop.permute.xlu0 %7379
      %7381 = vrot.lane.b32.xlu0 %v1524, 84
      %v7382 = vpop.permute.xlu0 %7381
      %7383 = vrot.lane.b32.xlu0 %v1525, 84
      %v7384 = vpop.permute.xlu0 %7383
      %7385 = vrot.lane.b32.xlu0 %v1526, 84
      %v7386 = vpop.permute.xlu0 %7385
      %7387 = vrot.lane.b32.xlu0 %v1527, 84
      %v7388 = vpop.permute.xlu0 %7387
      %7389 = vrot.lane.b32.xlu0 %v1528, 84
      %v7390 = vpop.permute.xlu0 %7389
      %7391 = vrot.lane.b32.xlu0 %v1529, 84
      %v7392 = vpop.permute.xlu0 %7391
      %7393 = vrot.lane.b32.xlu0 %v1530, 84
      %v7394 = vpop.permute.xlu0 %7393
      %7395 = vrot.lane.b32.xlu0 %v1531, 84
      %v7396 = vpop.permute.xlu0 %7395
      %7397 = vrot.lane.b32.xlu0 %v1532, 84
      %v7398 = vpop.permute.xlu0 %7397
      %7399 = vrot.lane.b32.xlu0 %v1533, 84
      %v7400 = vpop.permute.xlu0 %7399
      %7401 = vrot.lane.b32.xlu0 %v1534, 84
      %v7402 = vpop.permute.xlu0 %7401
      %7403 = vrot.lane.b32.xlu0 %v1535, 84
      %v7404 = vpop.permute.xlu0 %7403
      %7405 = vrot.lane.b32.xlu0 %v1536, 84
      %v7406 = vpop.permute.xlu0 %7405
      %7407 = vrot.lane.b32.xlu0 %v1537, 84
      %v7408 = vpop.permute.xlu0 %7407
      %7409 = vrot.lane.b32.xlu0 %v1538, 84
      %v7410 = vpop.permute.xlu0 %7409
      %7411 = vrot.lane.b32.xlu0 %v1539, 84
      %v7412 = vpop.permute.xlu0 %7411
      %7413 = vrot.lane.b32.xlu0 %v1540, 84
      %v7414 = vpop.permute.xlu0 %7413
      %7415 = vrot.lane.b32.xlu0 %v1541, 84
      %v7416 = vpop.permute.xlu0 %7415
      %7417 = vrot.lane.b32.xlu0 %v1542, 84
      %v7418 = vpop.permute.xlu0 %7417
      %7419 = vrot.lane.b32.xlu0 %v1543, 84
      %v7420 = vpop.permute.xlu0 %7419
      %7421 = vrot.lane.b32.xlu0 %v1544, 84
      %v7422 = vpop.permute.xlu0 %7421
      %7423 = vrot.lane.b32.xlu0 %v1545, 84
      %v7424 = vpop.permute.xlu0 %7423
      %7425 = vrot.lane.b32.xlu0 %v1546, 84
      %v7426 = vpop.permute.xlu0 %7425
      %7427 = vrot.lane.b32.xlu0 %v1547, 84
      %v7428 = vpop.permute.xlu0 %7427
      %7429 = vrot.lane.b32.xlu0 %v1548, 84
      %v7430 = vpop.permute.xlu0 %7429
      %7431 = vrot.lane.b32.xlu0 %v1549, 84
      %v7432 = vpop.permute.xlu0 %7431
      %7433 = vrot.lane.b32.xlu0 %v1550, 84
      %v7434 = vpop.permute.xlu0 %7433
      %7435 = vrot.lane.b32.xlu0 %v1551, 84
      %v7436 = vpop.permute.xlu0 %7435
      %7437 = vrot.lane.b32.xlu0 %v1552, 84
      %v7438 = vpop.permute.xlu0 %7437
      %7439 = vrot.lane.b32.xlu0 %v1553, 84
      %v7440 = vpop.permute.xlu0 %7439
      %7441 = vrot.lane.b32.xlu0 %v1554, 84
      %v7442 = vpop.permute.xlu0 %7441
      %7443 = vrot.lane.b32.xlu0 %v1555, 84
      %v7444 = vpop.permute.xlu0 %7443
      %7445 = vrot.lane.b32.xlu0 %v1556, 84
      %v7446 = vpop.permute.xlu0 %7445
      %7447 = vrot.lane.b32.xlu0 %v1557, 84
      %v7448 = vpop.permute.xlu0 %7447
      %7449 = vrot.lane.b32.xlu0 %v1558, 84
      %v7450 = vpop.permute.xlu0 %7449
      %7451 = vrot.lane.b32.xlu0 %v1559, 84
      %v7452 = vpop.permute.xlu0 %7451
      %7453 = vrot.lane.b32.xlu0 %v1560, 84
      %v7454 = vpop.permute.xlu0 %7453
      %7455 = vrot.lane.b32.xlu0 %v3883, 84
      %v7456 = vpop.permute.xlu0 %7455
      %7457 = vrot.lane.b32.xlu0 %v3884, 84
      %v7458 = vpop.permute.xlu0 %7457
      %7459 = vrot.lane.b32.xlu0 %v3885, 84
      %v7460 = vpop.permute.xlu0 %7459
      %7461 = vrot.lane.b32.xlu0 %v3886, 84
      %v7462 = vpop.permute.xlu0 %7461
      %7463 = vrot.lane.b32.xlu0 %v3887, 84
      %v7464 = vpop.permute.xlu0 %7463
      %7465 = vrot.lane.b32.xlu0 %v3888, 84
      %v7466 = vpop.permute.xlu0 %7465
      %7467 = vrot.lane.b32.xlu0 %v3889, 84
      %v7468 = vpop.permute.xlu0 %7467
      %7469 = vrot.lane.b32.xlu0 %v3890, 84
      %v7470 = vpop.permute.xlu0 %7469
      %7471 = vrot.lane.b32.xlu0 %v3891, 84
      %v7472 = vpop.permute.xlu0 %7471
      %7473 = vrot.lane.b32.xlu0 %v6205, 84
      %v7474 = vpop.permute.xlu0 %7473
      %7475 = vrot.lane.b32.xlu0 %v6206, 84
      %v7476 = vpop.permute.xlu0 %7475
      %7477 = vrot.lane.b32.xlu0 %v6207, 84
      %v7478 = vpop.permute.xlu0 %7477
      %7479 = vrot.lane.b32.xlu0 %v6208, 84
      %v7480 = vpop.permute.xlu0 %7479
      %7481 = vrot.lane.b32.xlu0 %v6209, 84
      %v7482 = vpop.permute.xlu0 %7481
      %7483 = vrot.lane.b32.xlu0 %v6210, 84
      %v7484 = vpop.permute.xlu0 %7483
      %7485 = vrot.lane.b32.xlu0 %v6211, 84
      %v7486 = vpop.permute.xlu0 %7485
      %7487 = vrot.lane.b32.xlu0 %v6212, 84
      %v7488 = vpop.permute.xlu0 %7487
      %7489 = vrot.lane.b32.xlu0 %v6213, 84
      %v7490 = vpop.permute.xlu0 %7489
      %vm7491 = vcmask 687104
      %v7492 = vsel %vm7491, %v7376, %v7378
      %v7493 = vsel %vm7491, %v7378, %v7380
      %v7494 = vsel %vm7491, %v7380, %v7382
      %v7495 = vsel %vm7491, %v7382, %v7384
      %v7496 = vsel %vm7491, %v7384, %v7386
      %v7497 = vsel %vm7491, %v7386, %v7388
      %v7498 = vsel %vm7491, %v7388, %v7390
      %v7499 = vsel %vm7491, %v7390, %v7392
      %v7500 = vsel %vm7491, %v7392, %v7394
      %v7501 = vsel %vm7491, %v7394, %v7396
      %v7502 = vsel %vm7491, %v7396, %v7398
      %v7503 = vsel %vm7491, %v7398, %v7400
      %v7504 = vsel %vm7491, %v7400, %v7402
      %v7505 = vsel %vm7491, %v7402, %v7404
      %v7506 = vsel %vm7491, %v7404, %v7406
      %v7507 = vsel %vm7491, %v7406, %v7408
      %v7508 = vsel %vm7491, %v7408, %v7410
      %v7509 = vsel %vm7491, %v7410, %v7412
      %v7510 = vsel %vm7491, %v7412, %v7414
      %v7511 = vsel %vm7491, %v7414, %v7416
      %v7512 = vsel %vm7491, %v7416, %v7418
      %v7513 = vsel %vm7491, %v7418, %v7420
      %v7514 = vsel %vm7491, %v7420, %v7422
      %v7515 = vsel %vm7491, %v7422, %v7424
      %v7516 = vsel %vm7491, %v7424, %v7426
      %v7517 = vsel %vm7491, %v7426, %v7428
      %v7518 = vsel %vm7491, %v7428, %v7430
      %v7519 = vsel %vm7491, %v7430, %v7432
      %v7520 = vsel %vm7491, %v7432, %v7434
      %v7521 = vsel %vm7491, %v7434, %v7436
      %v7522 = vsel %vm7491, %v7436, %v7438
      %v7523 = vsel %vm7491, %v7438, %v7440
      %v7524 = vsel %vm7491, %v7440, %v7442
      %v7525 = vsel %vm7491, %v7442, %v7444
      %v7526 = vsel %vm7491, %v7444, %v7446
      %v7527 = vsel %vm7491, %v7446, %v7448
      %v7528 = vsel %vm7491, %v7448, %v7450
      %v7529 = vsel %vm7491, %v7450, %v7452
      %v7530 = vsel %vm7491, %v7452, %v7454
      %v7531 = vsel %vm7491, %v7454, %v7456
      %v7532 = vsel %vm7491, %v7456, %v7458
      %v7533 = vsel %vm7491, %v7458, %v7460
      %v7534 = vsel %vm7491, %v7460, %v7462
      %v7535 = vsel %vm7491, %v7462, %v7464
      %v7536 = vsel %vm7491, %v7464, %v7466
      %v7537 = vsel %vm7491, %v7466, %v7468
      %v7538 = vsel %vm7491, %v7468, %v7470
      %v7539 = vsel %vm7491, %v7470, %v7472
      %v7540 = vsel %vm7491, %v7472, %v7474
      %v7541 = vsel %vm7491, %v7474, %v7476
      %v7542 = vsel %vm7491, %v7476, %v7478
      %v7543 = vsel %vm7491, %v7478, %v7480
      %v7544 = vsel %vm7491, %v7480, %v7482
      %v7545 = vsel %vm7491, %v7482, %v7484
      %v7546 = vsel %vm7491, %v7484, %v7486
      %v7547 = vsel %vm7491, %v7486, %v7488
      %v7548 = vsel %vm7491, %v7488, %v7490
      %7606 = vst [vmem:[#allocation2 + $0x8e8] sm:$0xc0] %v7492
      %7607 = vst [vmem:[#allocation2 + $0x8f0] sm:$0xc0] %v7493
      %7608 = vst [vmem:[#allocation2 + $0x8f8] sm:$0xc0] %v7494
      %7609 = vst [vmem:[#allocation2 + $0x900] sm:$0xc0] %v7495
      %7610 = vst [vmem:[#allocation2 + $0x908] sm:$0xc0] %v7496
      %7611 = vst [vmem:[#allocation2 + $0x910] sm:$0xc0] %v7497
      %7612 = vst [vmem:[#allocation2 + $0x918] sm:$0xc0] %v7498
      %7613 = vst [vmem:[#allocation2 + $0x920] sm:$0xc0] %v7499
      %7614 = vst [vmem:[#allocation2 + $0x928] sm:$0xc0] %v7500
      %7615 = vst [vmem:[#allocation2 + $0x930] sm:$0xc0] %v7501
      %7616 = vst [vmem:[#allocation2 + $0x938] sm:$0xc0] %v7502
      %7617 = vst [vmem:[#allocation2 + $0x940] sm:$0xc0] %v7503
      %7618 = vst [vmem:[#allocation2 + $0x948] sm:$0xc0] %v7504
      %7619 = vst [vmem:[#allocation2 + $0x950] sm:$0xc0] %v7505
      %7620 = vst [vmem:[#allocation2 + $0x958] sm:$0xc0] %v7506
      %7621 = vst [vmem:[#allocation2 + $0x960] sm:$0xc0] %v7507
      %7622 = vst [vmem:[#allocation2 + $0x968] sm:$0xc0] %v7508
      %7623 = vst [vmem:[#allocation2 + $0x970] sm:$0xc0] %v7509
      %7624 = vst [vmem:[#allocation2 + $0x978] sm:$0xc0] %v7510
      %7625 = vst [vmem:[#allocation2 + $0x980] sm:$0xc0] %v7511
      %7626 = vst [vmem:[#allocation2 + $0x988] sm:$0xc0] %v7512
      %7627 = vst [vmem:[#allocation2 + $0x990] sm:$0xc0] %v7513
      %7628 = vst [vmem:[#allocation2 + $0x998] sm:$0xc0] %v7514
      %7629 = vst [vmem:[#allocation2 + $0x9a0] sm:$0xc0] %v7515
      %7630 = vst [vmem:[#allocation2 + $0x9a8] sm:$0xc0] %v7516
      %7631 = vst [vmem:[#allocation2 + $0x9b0] sm:$0xc0] %v7517
      %7632 = vst [vmem:[#allocation2 + $0x9b8] sm:$0xc0] %v7518
      %7633 = vst [vmem:[#allocation2 + $0x9c0] sm:$0xc0] %v7519
      %7634 = vst [vmem:[#allocation2 + $0x9c8] sm:$0xc0] %v7520
      %7635 = vst [vmem:[#allocation2 + $0x9d0] sm:$0xc0] %v7521
      %7636 = vst [vmem:[#allocation2 + $0x9d8] sm:$0xc0] %v7522
      %7637 = vst [vmem:[#allocation2 + $0x9e0] sm:$0xc0] %v7523
      %7638 = vst [vmem:[#allocation2 + $0x9e8] sm:$0xc0] %v7524
      %7639 = vst [vmem:[#allocation2 + $0x9f0] sm:$0xc0] %v7525
      %7640 = vst [vmem:[#allocation2 + $0x9f8] sm:$0xc0] %v7526
      %7641 = vst [vmem:[#allocation2 + $0xa00] sm:$0xc0] %v7527
      %7642 = vst [vmem:[#allocation2 + $0xa08] sm:$0xc0] %v7528
      %7643 = vst [vmem:[#allocation2 + $0xa10] sm:$0xc0] %v7529
      %7644 = vst [vmem:[#allocation2 + $0xa18] sm:$0xc0] %v7530
      %7645 = vst [vmem:[#allocation2 + $0xa20] sm:$0xc0] %v7531
      %7646 = vst [vmem:[#allocation2 + $0xa28] sm:$0xc0] %v7532
      %7647 = vst [vmem:[#allocation2 + $0xa30] sm:$0xc0] %v7533
      %7648 = vst [vmem:[#allocation2 + $0xa38] sm:$0xc0] %v7534
      %7649 = vst [vmem:[#allocation2 + $0xa40] sm:$0xc0] %v7535
      %7650 = vst [vmem:[#allocation2 + $0xa48] sm:$0xc0] %v7536
      %7651 = vst [vmem:[#allocation2 + $0xa50] sm:$0xc0] %v7537
      %7652 = vst [vmem:[#allocation2 + $0xa58] sm:$0xc0] %v7538
      %7653 = vst [vmem:[#allocation2 + $0xa60] sm:$0xc0] %v7539
      %7654 = vst [vmem:[#allocation2 + $0xa68] sm:$0xc0] %v7540
      %7655 = vst [vmem:[#allocation2 + $0xa70] sm:$0xc0] %v7541
      %7656 = vst [vmem:[#allocation2 + $0xa78] sm:$0xc0] %v7542
      %7657 = vst [vmem:[#allocation2 + $0xa80] sm:$0xc0] %v7543
      %7658 = vst [vmem:[#allocation2 + $0xa88] sm:$0xc0] %v7544
      %7659 = vst [vmem:[#allocation2 + $0xa90] sm:$0xc0] %v7545
      %7660 = vst [vmem:[#allocation2 + $0xa98] sm:$0xc0] %v7546
      %7661 = vst [vmem:[#allocation2 + $0xaa0] sm:$0xc0] %v7547
      %7662 = vst [vmem:[#allocation2 + $0xaa8] sm:$0xc0] %v7548
      %7663 = vrot.lane.b32.xlu0 %v445, 52
      %v7664 = vpop.permute.xlu0 %7663
      %7665 = vrot.lane.b32.xlu0 %v447, 52
      %v7666 = vpop.permute.xlu0 %7665
      %7667 = vrot.lane.b32.xlu0 %v455, 52
      %v7668 = vpop.permute.xlu0 %7667
      %7669 = vrot.lane.b32.xlu0 %v463, 52
      %v7670 = vpop.permute.xlu0 %7669
      %7671 = vrot.lane.b32.xlu0 %v462, 52
      %v7672 = vpop.permute.xlu0 %7671
      %7673 = vrot.lane.b32.xlu0 %v464, 52
      %v7674 = vpop.permute.xlu0 %7673
      %7675 = vrot.lane.b32.xlu0 %v472, 52
      %v7676 = vpop.permute.xlu0 %7675
      %7677 = vrot.lane.b32.xlu0 %v480, 52
      %v7678 = vpop.permute.xlu0 %7677
      %7679 = vrot.lane.b32.xlu0 %v479, 52
      %v7680 = vpop.permute.xlu0 %7679
      %7681 = vrot.lane.b32.xlu0 %v481, 52
      %v7682 = vpop.permute.xlu0 %7681
      %7683 = vrot.lane.b32.xlu0 %v489, 52
      %v7684 = vpop.permute.xlu0 %7683
      %7685 = vrot.lane.b32.xlu0 %v497, 52
      %v7686 = vpop.permute.xlu0 %7685
      %7687 = vrot.lane.b32.xlu0 %v496, 52
      %v7688 = vpop.permute.xlu0 %7687
      %7689 = vrot.lane.b32.xlu0 %v498, 52
      %v7690 = vpop.permute.xlu0 %7689
      %7691 = vrot.lane.b32.xlu0 %v506, 52
      %v7692 = vpop.permute.xlu0 %7691
      %7693 = vrot.lane.b32.xlu0 %v514, 52
      %v7694 = vpop.permute.xlu0 %7693
      %7695 = vrot.lane.b32.xlu0 %v513, 52
      %v7696 = vpop.permute.xlu0 %7695
      %7697 = vrot.lane.b32.xlu0 %v515, 52
      %v7698 = vpop.permute.xlu0 %7697
      %7699 = vrot.lane.b32.xlu0 %v523, 52
      %v7700 = vpop.permute.xlu0 %7699
      %7701 = vrot.lane.b32.xlu0 %v531, 52
      %v7702 = vpop.permute.xlu0 %7701
      %7703 = vrot.lane.b32.xlu0 %v530, 52
      %v7704 = vpop.permute.xlu0 %7703
      %7705 = vrot.lane.b32.xlu0 %v532, 52
      %v7706 = vpop.permute.xlu0 %7705
      %7707 = vrot.lane.b32.xlu0 %v540, 52
      %v7708 = vpop.permute.xlu0 %7707
      %7709 = vrot.lane.b32.xlu0 %v548, 52
      %v7710 = vpop.permute.xlu0 %7709
      %7711 = vrot.lane.b32.xlu0 %v547, 52
      %v7712 = vpop.permute.xlu0 %7711
      %7713 = vrot.lane.b32.xlu0 %v549, 52
      %v7714 = vpop.permute.xlu0 %7713
      %7715 = vrot.lane.b32.xlu0 %v557, 52
      %v7716 = vpop.permute.xlu0 %7715
      %7717 = vrot.lane.b32.xlu0 %v565, 52
      %v7718 = vpop.permute.xlu0 %7717
      %7719 = vrot.lane.b32.xlu0 %v564, 52
      %v7720 = vpop.permute.xlu0 %7719
      %7721 = vrot.lane.b32.xlu0 %v566, 52
      %v7722 = vpop.permute.xlu0 %7721
      %7723 = vrot.lane.b32.xlu0 %v574, 52
      %v7724 = vpop.permute.xlu0 %7723
      %7725 = vrot.lane.b32.xlu0 %v582, 52
      %v7726 = vpop.permute.xlu0 %7725
      %7727 = vrot.lane.b32.xlu0 %v581, 52
      %v7728 = vpop.permute.xlu0 %7727
      %7729 = vrot.lane.b32.xlu0 %v583, 52
      %v7730 = vpop.permute.xlu0 %7729
      %7731 = vrot.lane.b32.xlu0 %v591, 52
      %v7732 = vpop.permute.xlu0 %7731
      %7733 = vrot.lane.b32.xlu0 %v599, 52
      %v7734 = vpop.permute.xlu0 %7733
      %7735 = vrot.lane.b32.xlu0 %v598, 52
      %v7736 = vpop.permute.xlu0 %7735
      %7737 = vrot.lane.b32.xlu0 %v600, 52
      %v7738 = vpop.permute.xlu0 %7737
      %7739 = vrot.lane.b32.xlu0 %v607, 52
      %v7740 = vpop.permute.xlu0 %7739
      %7741 = vrot.lane.b32.xlu0 %v677, 52
      %v7742 = vpop.permute.xlu0 %7741
      %7743 = vrot.lane.b32.xlu0 %v685, 52
      %v7744 = vpop.permute.xlu0 %7743
      %7745 = vrot.lane.b32.xlu0 %v684, 52
      %v7746 = vpop.permute.xlu0 %7745
      %7747 = vrot.lane.b32.xlu0 %v686, 52
      %v7748 = vpop.permute.xlu0 %7747
      %7749 = vrot.lane.b32.xlu0 %v694, 52
      %v7750 = vpop.permute.xlu0 %7749
      %7751 = vrot.lane.b32.xlu0 %v702, 52
      %v7752 = vpop.permute.xlu0 %7751
      %7753 = vrot.lane.b32.xlu0 %v701, 52
      %v7754 = vpop.permute.xlu0 %7753
      %7755 = vrot.lane.b32.xlu0 %v703, 52
      %v7756 = vpop.permute.xlu0 %7755
      %7757 = vrot.lane.b32.xlu0 %v711, 52
      %v7758 = vpop.permute.xlu0 %7757
      %7759 = vrot.lane.b32.xlu0 %v719, 52
      %v7760 = vpop.permute.xlu0 %7759
      %7761 = vrot.lane.b32.xlu0 %v718, 52
      %v7762 = vpop.permute.xlu0 %7761
      %7763 = vrot.lane.b32.xlu0 %v720, 52
      %v7764 = vpop.permute.xlu0 %7763
      %7765 = vrot.lane.b32.xlu0 %v728, 52
      %v7766 = vpop.permute.xlu0 %7765
      %7767 = vrot.lane.b32.xlu0 %v736, 52
      %v7768 = vpop.permute.xlu0 %7767
      %7769 = vrot.lane.b32.xlu0 %v735, 52
      %v7770 = vpop.permute.xlu0 %7769
      %7771 = vrot.lane.b32.xlu0 %v737, 52
      %v7772 = vpop.permute.xlu0 %7771
      %7773 = vrot.lane.b32.xlu0 %v745, 52
      %v7774 = vpop.permute.xlu0 %7773
      %7775 = vrot.lane.b32.xlu0 %v753, 52
      %v7776 = vpop.permute.xlu0 %7775
      %7777 = vrot.lane.b32.xlu0 %v752, 52
      %v7778 = vpop.permute.xlu0 %7777
      %vm7779 = vcmask 424960
      %v7780 = vsel %vm7779, %v7664, %v7666
      %v7781 = vsel %vm7779, %v7666, %v7668
      %v7782 = vsel %vm7779, %v7668, %v7670
      %v7783 = vsel %vm7779, %v7670, %v7672
      %v7784 = vsel %vm7779, %v7672, %v7674
      %v7785 = vsel %vm7779, %v7674, %v7676
      %v7786 = vsel %vm7779, %v7676, %v7678
      %v7787 = vsel %vm7779, %v7678, %v7680
      %v7788 = vsel %vm7779, %v7680, %v7682
      %v7789 = vsel %vm7779, %v7682, %v7684
      %v7790 = vsel %vm7779, %v7684, %v7686
      %v7791 = vsel %vm7779, %v7686, %v7688
      %v7792 = vsel %vm7779, %v7688, %v7690
      %v7793 = vsel %vm7779, %v7690, %v7692
      %v7794 = vsel %vm7779, %v7692, %v7694
      %v7795 = vsel %vm7779, %v7694, %v7696
      %v7796 = vsel %vm7779, %v7696, %v7698
      %v7797 = vsel %vm7779, %v7698, %v7700
      %v7798 = vsel %vm7779, %v7700, %v7702
      %v7799 = vsel %vm7779, %v7702, %v7704
      %v7800 = vsel %vm7779, %v7704, %v7706
      %v7801 = vsel %vm7779, %v7706, %v7708
      %v7802 = vsel %vm7779, %v7708, %v7710
      %v7803 = vsel %vm7779, %v7710, %v7712
      %v7804 = vsel %vm7779, %v7712, %v7714
      %v7805 = vsel %vm7779, %v7714, %v7716
      %v7806 = vsel %vm7779, %v7716, %v7718
      %v7807 = vsel %vm7779, %v7718, %v7720
      %v7808 = vsel %vm7779, %v7720, %v7722
      %v7809 = vsel %vm7779, %v7722, %v7724
      %v7810 = vsel %vm7779, %v7724, %v7726
      %v7811 = vsel %vm7779, %v7726, %v7728
      %v7812 = vsel %vm7779, %v7728, %v7730
      %v7813 = vsel %vm7779, %v7730, %v7732
      %v7814 = vsel %vm7779, %v7732, %v7734
      %v7815 = vsel %vm7779, %v7734, %v7736
      %v7816 = vsel %vm7779, %v7736, %v7738
      %v7817 = vsel %vm7779, %v7738, %v7740
      %v7818 = vsel %vm7779, %v7740, %v7742
      %v7819 = vsel %vm7779, %v7742, %v7744
      %v7820 = vsel %vm7779, %v7744, %v7746
      %v7821 = vsel %vm7779, %v7746, %v7748
      %v7822 = vsel %vm7779, %v7748, %v7750
      %v7823 = vsel %vm7779, %v7750, %v7752
      %v7824 = vsel %vm7779, %v7752, %v7754
      %v7825 = vsel %vm7779, %v7754, %v7756
      %v7826 = vsel %vm7779, %v7756, %v7758
      %v7827 = vsel %vm7779, %v7758, %v7760
      %v7828 = vsel %vm7779, %v7760, %v7762
      %v7829 = vsel %vm7779, %v7762, %v7764
      %v7830 = vsel %vm7779, %v7764, %v7766
      %v7831 = vsel %vm7779, %v7766, %v7768
      %v7832 = vsel %vm7779, %v7768, %v7770
      %v7833 = vsel %vm7779, %v7770, %v7772
      %v7834 = vsel %vm7779, %v7772, %v7774
      %v7835 = vsel %vm7779, %v7774, %v7776
      %v7836 = vsel %vm7779, %v7776, %v7778
      %7894 = vst [vmem:[#allocation2 + $0xab0] sm:$0x3] %v7780
      %7895 = vst [vmem:[#allocation2 + $0xab8] sm:$0x3] %v7781
      %7896 = vst [vmem:[#allocation2 + $0xac0] sm:$0x3] %v7782
      %7897 = vst [vmem:[#allocation2 + $0xac8] sm:$0x3] %v7783
      %7898 = vst [vmem:[#allocation2 + $0xad0] sm:$0x3] %v7784
      %7899 = vst [vmem:[#allocation2 + $0xad8] sm:$0x3] %v7785
      %7900 = vst [vmem:[#allocation2 + $0xae0] sm:$0x3] %v7786
      %7901 = vst [vmem:[#allocation2 + $0xae8] sm:$0x3] %v7787
      %7902 = vst [vmem:[#allocation2 + $0xaf0] sm:$0x3] %v7788
      %7903 = vst [vmem:[#allocation2 + $0xaf8] sm:$0x3] %v7789
      %7904 = vst [vmem:[#allocation2 + $0xb00] sm:$0x3] %v7790
      %7905 = vst [vmem:[#allocation2 + $0xb08] sm:$0x3] %v7791
      %7906 = vst [vmem:[#allocation2 + $0xb10] sm:$0x3] %v7792
      %7907 = vst [vmem:[#allocation2 + $0xb18] sm:$0x3] %v7793
      %7908 = vst [vmem:[#allocation2 + $0xb20] sm:$0x3] %v7794
      %7909 = vst [vmem:[#allocation2 + $0xb28] sm:$0x3] %v7795
      %7910 = vst [vmem:[#allocation2 + $0xb30] sm:$0x3] %v7796
      %7911 = vst [vmem:[#allocation2 + $0xb38] sm:$0x3] %v7797
      %7912 = vst [vmem:[#allocation2 + $0xb40] sm:$0x3] %v7798
      %7913 = vst [vmem:[#allocation2 + $0xb48] sm:$0x3] %v7799
      %7914 = vst [vmem:[#allocation2 + $0xb50] sm:$0x3] %v7800
      %7915 = vst [vmem:[#allocation2 + $0xb58] sm:$0x3] %v7801
      %7916 = vst [vmem:[#allocation2 + $0xb60] sm:$0x3] %v7802
      %7917 = vst [vmem:[#allocation2 + $0xb68] sm:$0x3] %v7803
      %7918 = vst [vmem:[#allocation2 + $0xb70] sm:$0x3] %v7804
      %7919 = vst [vmem:[#allocation2 + $0xb78] sm:$0x3] %v7805
      %7920 = vst [vmem:[#allocation2 + $0xb80] sm:$0x3] %v7806
      %7921 = vst [vmem:[#allocation2 + $0xb88] sm:$0x3] %v7807
      %7922 = vst [vmem:[#allocation2 + $0xb90] sm:$0x3] %v7808
      %7923 = vst [vmem:[#allocation2 + $0xb98] sm:$0x3] %v7809
      %7924 = vst [vmem:[#allocation2 + $0xba0] sm:$0x3] %v7810
      %7925 = vst [vmem:[#allocation2 + $0xba8] sm:$0x3] %v7811
      %7926 = vst [vmem:[#allocation2 + $0xbb0] sm:$0x3] %v7812
      %7927 = vst [vmem:[#allocation2 + $0xbb8] sm:$0x3] %v7813
      %7928 = vst [vmem:[#allocation2 + $0xbc0] sm:$0x3] %v7814
      %7929 = vst [vmem:[#allocation2 + $0xbc8] sm:$0x3] %v7815
      %7930 = vst [vmem:[#allocation2 + $0xbd0] sm:$0x3] %v7816
      %7931 = vst [vmem:[#allocation2 + $0xbd8] sm:$0x3] %v7817
      %7932 = vst [vmem:[#allocation2 + $0xbe0] sm:$0x3] %v7818
      %7933 = vst [vmem:[#allocation2 + $0xbe8] sm:$0x3] %v7819
      %7934 = vst [vmem:[#allocation2 + $0xbf0] sm:$0x3] %v7820
      %7935 = vst [vmem:[#allocation2 + $0xbf8] sm:$0x3] %v7821
      %7936 = vst [vmem:[#allocation2 + $0xc00] sm:$0x3] %v7822
      %7937 = vst [vmem:[#allocation2 + $0xc08] sm:$0x3] %v7823
      %7938 = vst [vmem:[#allocation2 + $0xc10] sm:$0x3] %v7824
      %7939 = vst [vmem:[#allocation2 + $0xc18] sm:$0x3] %v7825
      %7940 = vst [vmem:[#allocation2 + $0xc20] sm:$0x3] %v7826
      %7941 = vst [vmem:[#allocation2 + $0xc28] sm:$0x3] %v7827
      %7942 = vst [vmem:[#allocation2 + $0xc30] sm:$0x3] %v7828
      %7943 = vst [vmem:[#allocation2 + $0xc38] sm:$0x3] %v7829
      %7944 = vst [vmem:[#allocation2 + $0xc40] sm:$0x3] %v7830
      %7945 = vst [vmem:[#allocation2 + $0xc48] sm:$0x3] %v7831
      %7946 = vst [vmem:[#allocation2 + $0xc50] sm:$0x3] %v7832
      %7947 = vst [vmem:[#allocation2 + $0xc58] sm:$0x3] %v7833
      %7948 = vst [vmem:[#allocation2 + $0xc60] sm:$0x3] %v7834
      %7949 = vst [vmem:[#allocation2 + $0xc68] sm:$0x3] %v7835
      %7950 = vst [vmem:[#allocation2 + $0xc70] sm:$0x3] %v7836
      %7951 = vrot.lane.b32.xlu0 %v829, 51
      %v7952 = vpop.permute.xlu0 %7951
      %7953 = vrot.lane.b32.xlu0 %v830, 51
      %v7954 = vpop.permute.xlu0 %7953
      %7955 = vrot.lane.b32.xlu0 %v831, 51
      %v7956 = vpop.permute.xlu0 %7955
      %7957 = vrot.lane.b32.xlu0 %v832, 51
      %v7958 = vpop.permute.xlu0 %7957
      %7959 = vrot.lane.b32.xlu0 %v833, 51
      %v7960 = vpop.permute.xlu0 %7959
      %7961 = vrot.lane.b32.xlu0 %v834, 51
      %v7962 = vpop.permute.xlu0 %7961
      %7963 = vrot.lane.b32.xlu0 %v835, 51
      %v7964 = vpop.permute.xlu0 %7963
      %7965 = vrot.lane.b32.xlu0 %v836, 51
      %v7966 = vpop.permute.xlu0 %7965
      %7967 = vrot.lane.b32.xlu0 %v837, 51
      %v7968 = vpop.permute.xlu0 %7967
      %7969 = vrot.lane.b32.xlu0 %v838, 51
      %v7970 = vpop.permute.xlu0 %7969
      %7971 = vrot.lane.b32.xlu0 %v839, 51
      %v7972 = vpop.permute.xlu0 %7971
      %7973 = vrot.lane.b32.xlu0 %v840, 51
      %v7974 = vpop.permute.xlu0 %7973
      %7975 = vrot.lane.b32.xlu0 %v841, 51
      %v7976 = vpop.permute.xlu0 %7975
      %7977 = vrot.lane.b32.xlu0 %v842, 51
      %v7978 = vpop.permute.xlu0 %7977
      %7979 = vrot.lane.b32.xlu0 %v843, 51
      %v7980 = vpop.permute.xlu0 %7979
      %7981 = vrot.lane.b32.xlu0 %v844, 51
      %v7982 = vpop.permute.xlu0 %7981
      %7983 = vrot.lane.b32.xlu0 %v845, 51
      %v7984 = vpop.permute.xlu0 %7983
      %7985 = vrot.lane.b32.xlu0 %v846, 51
      %v7986 = vpop.permute.xlu0 %7985
      %7987 = vrot.lane.b32.xlu0 %v847, 51
      %v7988 = vpop.permute.xlu0 %7987
      %7989 = vrot.lane.b32.xlu0 %v848, 51
      %v7990 = vpop.permute.xlu0 %7989
      %7991 = vrot.lane.b32.xlu0 %v849, 51
      %v7992 = vpop.permute.xlu0 %7991
      %7993 = vrot.lane.b32.xlu0 %v850, 51
      %v7994 = vpop.permute.xlu0 %7993
      %7995 = vrot.lane.b32.xlu0 %v851, 51
      %v7996 = vpop.permute.xlu0 %7995
      %7997 = vrot.lane.b32.xlu0 %v852, 51
      %v7998 = vpop.permute.xlu0 %7997
      %7999 = vrot.lane.b32.xlu0 %v853, 51
      %v8000 = vpop.permute.xlu0 %7999
      %8001 = vrot.lane.b32.xlu0 %v854, 51
      %v8002 = vpop.permute.xlu0 %8001
      %8003 = vrot.lane.b32.xlu0 %v855, 51
      %v8004 = vpop.permute.xlu0 %8003
      %8005 = vrot.lane.b32.xlu0 %v856, 51
      %v8006 = vpop.permute.xlu0 %8005
      %8007 = vrot.lane.b32.xlu0 %v857, 51
      %v8008 = vpop.permute.xlu0 %8007
      %8009 = vrot.lane.b32.xlu0 %v858, 51
      %v8010 = vpop.permute.xlu0 %8009
      %8011 = vrot.lane.b32.xlu0 %v859, 51
      %v8012 = vpop.permute.xlu0 %8011
      %8013 = vrot.lane.b32.xlu0 %v860, 51
      %v8014 = vpop.permute.xlu0 %8013
      %8015 = vrot.lane.b32.xlu0 %v861, 51
      %v8016 = vpop.permute.xlu0 %8015
      %8017 = vrot.lane.b32.xlu0 %v862, 51
      %v8018 = vpop.permute.xlu0 %8017
      %8019 = vrot.lane.b32.xlu0 %v863, 51
      %v8020 = vpop.permute.xlu0 %8019
      %8021 = vrot.lane.b32.xlu0 %v864, 51
      %v8022 = vpop.permute.xlu0 %8021
      %8023 = vrot.lane.b32.xlu0 %v865, 51
      %v8024 = vpop.permute.xlu0 %8023
      %8025 = vrot.lane.b32.xlu0 %v866, 51
      %v8026 = vpop.permute.xlu0 %8025
      %8027 = vrot.lane.b32.xlu0 %v867, 51
      %v8028 = vpop.permute.xlu0 %8027
      %8029 = vrot.lane.b32.xlu0 %v868, 51
      %v8030 = vpop.permute.xlu0 %8029
      %8031 = vrot.lane.b32.xlu0 %v3289, 51
      %v8032 = vpop.permute.xlu0 %8031
      %8033 = vrot.lane.b32.xlu0 %v3290, 51
      %v8034 = vpop.permute.xlu0 %8033
      %8035 = vrot.lane.b32.xlu0 %v3291, 51
      %v8036 = vpop.permute.xlu0 %8035
      %8037 = vrot.lane.b32.xlu0 %v3292, 51
      %v8038 = vpop.permute.xlu0 %8037
      %8039 = vrot.lane.b32.xlu0 %v3293, 51
      %v8040 = vpop.permute.xlu0 %8039
      %8041 = vrot.lane.b32.xlu0 %v3294, 51
      %v8042 = vpop.permute.xlu0 %8041
      %8043 = vrot.lane.b32.xlu0 %v3295, 51
      %v8044 = vpop.permute.xlu0 %8043
      %8045 = vrot.lane.b32.xlu0 %v3296, 51
      %v8046 = vpop.permute.xlu0 %8045
      %8047 = vrot.lane.b32.xlu0 %v3297, 51
      %v8048 = vpop.permute.xlu0 %8047
      %8049 = vrot.lane.b32.xlu0 %v6790, 51
      %v8050 = vpop.permute.xlu0 %8049
      %8051 = vrot.lane.b32.xlu0 %v6791, 51
      %v8052 = vpop.permute.xlu0 %8051
      %8053 = vrot.lane.b32.xlu0 %v6792, 51
      %v8054 = vpop.permute.xlu0 %8053
      %8055 = vrot.lane.b32.xlu0 %v6793, 51
      %v8056 = vpop.permute.xlu0 %8055
      %8057 = vrot.lane.b32.xlu0 %v6794, 51
      %v8058 = vpop.permute.xlu0 %8057
      %8059 = vrot.lane.b32.xlu0 %v6795, 51
      %v8060 = vpop.permute.xlu0 %8059
      %8061 = vrot.lane.b32.xlu0 %v6796, 51
      %v8062 = vpop.permute.xlu0 %8061
      %8063 = vrot.lane.b32.xlu0 %v6797, 51
      %v8064 = vpop.permute.xlu0 %8063
      %8065 = vrot.lane.b32.xlu0 %v6798, 51
      %v8066 = vpop.permute.xlu0 %8065
      %vm8067 = vcmask 416768
      %v8068 = vsel %vm8067, %v7952, %v7954
      %v8069 = vsel %vm8067, %v7954, %v7956
      %v8070 = vsel %vm8067, %v7956, %v7958
      %v8071 = vsel %vm8067, %v7958, %v7960
      %v8072 = vsel %vm8067, %v7960, %v7962
      %v8073 = vsel %vm8067, %v7962, %v7964
      %v8074 = vsel %vm8067, %v7964, %v7966
      %v8075 = vsel %vm8067, %v7966, %v7968
      %v8076 = vsel %vm8067, %v7968, %v7970
      %v8077 = vsel %vm8067, %v7970, %v7972
      %v8078 = vsel %vm8067, %v7972, %v7974
      %v8079 = vsel %vm8067, %v7974, %v7976
      %v8080 = vsel %vm8067, %v7976, %v7978
      %v8081 = vsel %vm8067, %v7978, %v7980
      %v8082 = vsel %vm8067, %v7980, %v7982
      %v8083 = vsel %vm8067, %v7982, %v7984
      %v8084 = vsel %vm8067, %v7984, %v7986
      %v8085 = vsel %vm8067, %v7986, %v7988
      %v8086 = vsel %vm8067, %v7988, %v7990
      %v8087 = vsel %vm8067, %v7990, %v7992
      %v8088 = vsel %vm8067, %v7992, %v7994
      %v8089 = vsel %vm8067, %v7994, %v7996
      %v8090 = vsel %vm8067, %v7996, %v7998
      %v8091 = vsel %vm8067, %v7998, %v8000
      %v8092 = vsel %vm8067, %v8000, %v8002
      %v8093 = vsel %vm8067, %v8002, %v8004
      %v8094 = vsel %vm8067, %v8004, %v8006
      %v8095 = vsel %vm8067, %v8006, %v8008
      %v8096 = vsel %vm8067, %v8008, %v8010
      %v8097 = vsel %vm8067, %v8010, %v8012
      %v8098 = vsel %vm8067, %v8012, %v8014
      %v8099 = vsel %vm8067, %v8014, %v8016
      %v8100 = vsel %vm8067, %v8016, %v8018
      %v8101 = vsel %vm8067, %v8018, %v8020
      %v8102 = vsel %vm8067, %v8020, %v8022
      %v8103 = vsel %vm8067, %v8022, %v8024
      %v8104 = vsel %vm8067, %v8024, %v8026
      %v8105 = vsel %vm8067, %v8026, %v8028
      %v8106 = vsel %vm8067, %v8028, %v8030
      %v8107 = vsel %vm8067, %v8030, %v8032
      %v8108 = vsel %vm8067, %v8032, %v8034
      %v8109 = vsel %vm8067, %v8034, %v8036
      %v8110 = vsel %vm8067, %v8036, %v8038
      %v8111 = vsel %vm8067, %v8038, %v8040
      %v8112 = vsel %vm8067, %v8040, %v8042
      %v8113 = vsel %vm8067, %v8042, %v8044
      %v8114 = vsel %vm8067, %v8044, %v8046
      %v8115 = vsel %vm8067, %v8046, %v8048
      %v8116 = vsel %vm8067, %v8048, %v8050
      %v8117 = vsel %vm8067, %v8050, %v8052
      %v8118 = vsel %vm8067, %v8052, %v8054
      %v8119 = vsel %vm8067, %v8054, %v8056
      %v8120 = vsel %vm8067, %v8056, %v8058
      %v8121 = vsel %vm8067, %v8058, %v8060
      %v8122 = vsel %vm8067, %v8060, %v8062
      %v8123 = vsel %vm8067, %v8062, %v8064
      %v8124 = vsel %vm8067, %v8064, %v8066
      %8182 = vst [vmem:[#allocation2 + $0xab0] sm:$0xc] %v8068
      %8183 = vst [vmem:[#allocation2 + $0xab8] sm:$0xc] %v8069
      %8184 = vst [vmem:[#allocation2 + $0xac0] sm:$0xc] %v8070
      %8185 = vst [vmem:[#allocation2 + $0xac8] sm:$0xc] %v8071
      %8186 = vst [vmem:[#allocation2 + $0xad0] sm:$0xc] %v8072
      %8187 = vst [vmem:[#allocation2 + $0xad8] sm:$0xc] %v8073
      %8188 = vst [vmem:[#allocation2 + $0xae0] sm:$0xc] %v8074
      %8189 = vst [vmem:[#allocation2 + $0xae8] sm:$0xc] %v8075
      %8190 = vst [vmem:[#allocation2 + $0xaf0] sm:$0xc] %v8076
      %8191 = vst [vmem:[#allocation2 + $0xaf8] sm:$0xc] %v8077
      %8192 = vst [vmem:[#allocation2 + $0xb00] sm:$0xc] %v8078
      %8193 = vst [vmem:[#allocation2 + $0xb08] sm:$0xc] %v8079
      %8194 = vst [vmem:[#allocation2 + $0xb10] sm:$0xc] %v8080
      %8195 = vst [vmem:[#allocation2 + $0xb18] sm:$0xc] %v8081
      %8196 = vst [vmem:[#allocation2 + $0xb20] sm:$0xc] %v8082
      %8197 = vst [vmem:[#allocation2 + $0xb28] sm:$0xc] %v8083
      %8198 = vst [vmem:[#allocation2 + $0xb30] sm:$0xc] %v8084
      %8199 = vst [vmem:[#allocation2 + $0xb38] sm:$0xc] %v8085
      %8200 = vst [vmem:[#allocation2 + $0xb40] sm:$0xc] %v8086
      %8201 = vst [vmem:[#allocation2 + $0xb48] sm:$0xc] %v8087
      %8202 = vst [vmem:[#allocation2 + $0xb50] sm:$0xc] %v8088
      %8203 = vst [vmem:[#allocation2 + $0xb58] sm:$0xc] %v8089
      %8204 = vst [vmem:[#allocation2 + $0xb60] sm:$0xc] %v8090
      %8205 = vst [vmem:[#allocation2 + $0xb68] sm:$0xc] %v8091
      %8206 = vst [vmem:[#allocation2 + $0xb70] sm:$0xc] %v8092
      %8207 = vst [vmem:[#allocation2 + $0xb78] sm:$0xc] %v8093
      %8208 = vst [vmem:[#allocation2 + $0xb80] sm:$0xc] %v8094
      %8209 = vst [vmem:[#allocation2 + $0xb88] sm:$0xc] %v8095
      %8210 = vst [vmem:[#allocation2 + $0xb90] sm:$0xc] %v8096
      %8211 = vst [vmem:[#allocation2 + $0xb98] sm:$0xc] %v8097
      %8212 = vst [vmem:[#allocation2 + $0xba0] sm:$0xc] %v8098
      %8213 = vst [vmem:[#allocation2 + $0xba8] sm:$0xc] %v8099
      %8214 = vst [vmem:[#allocation2 + $0xbb0] sm:$0xc] %v8100
      %8215 = vst [vmem:[#allocation2 + $0xbb8] sm:$0xc] %v8101
      %8216 = vst [vmem:[#allocation2 + $0xbc0] sm:$0xc] %v8102
      %8217 = vst [vmem:[#allocation2 + $0xbc8] sm:$0xc] %v8103
      %8218 = vst [vmem:[#allocation2 + $0xbd0] sm:$0xc] %v8104
      %8219 = vst [vmem:[#allocation2 + $0xbd8] sm:$0xc] %v8105
      %8220 = vst [vmem:[#allocation2 + $0xbe0] sm:$0xc] %v8106
      %8221 = vst [vmem:[#allocation2 + $0xbe8] sm:$0xc] %v8107
      %8222 = vst [vmem:[#allocation2 + $0xbf0] sm:$0xc] %v8108
      %8223 = vst [vmem:[#allocation2 + $0xbf8] sm:$0xc] %v8109
      %8224 = vst [vmem:[#allocation2 + $0xc00] sm:$0xc] %v8110
      %8225 = vst [vmem:[#allocation2 + $0xc08] sm:$0xc] %v8111
      %8226 = vst [vmem:[#allocation2 + $0xc10] sm:$0xc] %v8112
      %8227 = vst [vmem:[#allocation2 + $0xc18] sm:$0xc] %v8113
      %8228 = vst [vmem:[#allocation2 + $0xc20] sm:$0xc] %v8114
      %8229 = vst [vmem:[#allocation2 + $0xc28] sm:$0xc] %v8115
      %8230 = vst [vmem:[#allocation2 + $0xc30] sm:$0xc] %v8116
      %8231 = vst [vmem:[#allocation2 + $0xc38] sm:$0xc] %v8117
      %8232 = vst [vmem:[#allocation2 + $0xc40] sm:$0xc] %v8118
      %8233 = vst [vmem:[#allocation2 + $0xc48] sm:$0xc] %v8119
      %8234 = vst [vmem:[#allocation2 + $0xc50] sm:$0xc] %v8120
      %8235 = vst [vmem:[#allocation2 + $0xc58] sm:$0xc] %v8121
      %8236 = vst [vmem:[#allocation2 + $0xc60] sm:$0xc] %v8122
      %8237 = vst [vmem:[#allocation2 + $0xc68] sm:$0xc] %v8123
      %8238 = vst [vmem:[#allocation2 + $0xc70] sm:$0xc] %v8124
      %8239 = vrot.lane.b32.xlu0 %v1175, 50
      %v8240 = vpop.permute.xlu0 %8239
      %8241 = vrot.lane.b32.xlu0 %v1176, 50
      %v8242 = vpop.permute.xlu0 %8241
      %8243 = vrot.lane.b32.xlu0 %v1177, 50
      %v8244 = vpop.permute.xlu0 %8243
      %8245 = vrot.lane.b32.xlu0 %v1178, 50
      %v8246 = vpop.permute.xlu0 %8245
      %8247 = vrot.lane.b32.xlu0 %v1179, 50
      %v8248 = vpop.permute.xlu0 %8247
      %8249 = vrot.lane.b32.xlu0 %v1180, 50
      %v8250 = vpop.permute.xlu0 %8249
      %8251 = vrot.lane.b32.xlu0 %v1181, 50
      %v8252 = vpop.permute.xlu0 %8251
      %8253 = vrot.lane.b32.xlu0 %v1182, 50
      %v8254 = vpop.permute.xlu0 %8253
      %8255 = vrot.lane.b32.xlu0 %v1183, 50
      %v8256 = vpop.permute.xlu0 %8255
      %8257 = vrot.lane.b32.xlu0 %v1184, 50
      %v8258 = vpop.permute.xlu0 %8257
      %8259 = vrot.lane.b32.xlu0 %v1185, 50
      %v8260 = vpop.permute.xlu0 %8259
      %8261 = vrot.lane.b32.xlu0 %v1186, 50
      %v8262 = vpop.permute.xlu0 %8261
      %8263 = vrot.lane.b32.xlu0 %v1187, 50
      %v8264 = vpop.permute.xlu0 %8263
      %8265 = vrot.lane.b32.xlu0 %v1188, 50
      %v8266 = vpop.permute.xlu0 %8265
      %8267 = vrot.lane.b32.xlu0 %v1189, 50
      %v8268 = vpop.permute.xlu0 %8267
      %8269 = vrot.lane.b32.xlu0 %v1190, 50
      %v8270 = vpop.permute.xlu0 %8269
      %8271 = vrot.lane.b32.xlu0 %v1191, 50
      %v8272 = vpop.permute.xlu0 %8271
      %8273 = vrot.lane.b32.xlu0 %v1192, 50
      %v8274 = vpop.permute.xlu0 %8273
      %8275 = vrot.lane.b32.xlu0 %v1193, 50
      %v8276 = vpop.permute.xlu0 %8275
      %8277 = vrot.lane.b32.xlu0 %v1194, 50
      %v8278 = vpop.permute.xlu0 %8277
      %8279 = vrot.lane.b32.xlu0 %v1195, 50
      %v8280 = vpop.permute.xlu0 %8279
      %8281 = vrot.lane.b32.xlu0 %v1196, 50
      %v8282 = vpop.permute.xlu0 %8281
      %8283 = vrot.lane.b32.xlu0 %v1197, 50
      %v8284 = vpop.permute.xlu0 %8283
      %8285 = vrot.lane.b32.xlu0 %v1198, 50
      %v8286 = vpop.permute.xlu0 %8285
      %8287 = vrot.lane.b32.xlu0 %v1199, 50
      %v8288 = vpop.permute.xlu0 %8287
      %8289 = vrot.lane.b32.xlu0 %v1200, 50
      %v8290 = vpop.permute.xlu0 %8289
      %8291 = vrot.lane.b32.xlu0 %v1201, 50
      %v8292 = vpop.permute.xlu0 %8291
      %8293 = vrot.lane.b32.xlu0 %v1202, 50
      %v8294 = vpop.permute.xlu0 %8293
      %8295 = vrot.lane.b32.xlu0 %v1203, 50
      %v8296 = vpop.permute.xlu0 %8295
      %8297 = vrot.lane.b32.xlu0 %v1204, 50
      %v8298 = vpop.permute.xlu0 %8297
      %8299 = vrot.lane.b32.xlu0 %v1205, 50
      %v8300 = vpop.permute.xlu0 %8299
      %8301 = vrot.lane.b32.xlu0 %v1206, 50
      %v8302 = vpop.permute.xlu0 %8301
      %8303 = vrot.lane.b32.xlu0 %v1207, 50
      %v8304 = vpop.permute.xlu0 %8303
      %8305 = vrot.lane.b32.xlu0 %v1208, 50
      %v8306 = vpop.permute.xlu0 %8305
      %8307 = vrot.lane.b32.xlu0 %v1209, 50
      %v8308 = vpop.permute.xlu0 %8307
      %8309 = vrot.lane.b32.xlu0 %v1210, 50
      %v8310 = vpop.permute.xlu0 %8309
      %8311 = vrot.lane.b32.xlu0 %v1211, 50
      %v8312 = vpop.permute.xlu0 %8311
      %8313 = vrot.lane.b32.xlu0 %v1212, 50
      %v8314 = vpop.permute.xlu0 %8313
      %8315 = vrot.lane.b32.xlu0 %v1213, 50
      %v8316 = vpop.permute.xlu0 %8315
      %8317 = vrot.lane.b32.xlu0 %v1214, 50
      %v8318 = vpop.permute.xlu0 %8317
      %8319 = vrot.lane.b32.xlu0 %v3586, 50
      %v8320 = vpop.permute.xlu0 %8319
      %8321 = vrot.lane.b32.xlu0 %v3587, 50
      %v8322 = vpop.permute.xlu0 %8321
      %8323 = vrot.lane.b32.xlu0 %v3588, 50
      %v8324 = vpop.permute.xlu0 %8323
      %8325 = vrot.lane.b32.xlu0 %v3589, 50
      %v8326 = vpop.permute.xlu0 %8325
      %8327 = vrot.lane.b32.xlu0 %v3590, 50
      %v8328 = vpop.permute.xlu0 %8327
      %8329 = vrot.lane.b32.xlu0 %v3591, 50
      %v8330 = vpop.permute.xlu0 %8329
      %8331 = vrot.lane.b32.xlu0 %v3592, 50
      %v8332 = vpop.permute.xlu0 %8331
      %8333 = vrot.lane.b32.xlu0 %v3593, 50
      %v8334 = vpop.permute.xlu0 %8333
      %8335 = vrot.lane.b32.xlu0 %v3594, 50
      %v8336 = vpop.permute.xlu0 %8335
      %8337 = vrot.lane.b32.xlu0 %v5908, 50
      %v8338 = vpop.permute.xlu0 %8337
      %8339 = vrot.lane.b32.xlu0 %v5909, 50
      %v8340 = vpop.permute.xlu0 %8339
      %8341 = vrot.lane.b32.xlu0 %v5910, 50
      %v8342 = vpop.permute.xlu0 %8341
      %8343 = vrot.lane.b32.xlu0 %v5911, 50
      %v8344 = vpop.permute.xlu0 %8343
      %8345 = vrot.lane.b32.xlu0 %v5912, 50
      %v8346 = vpop.permute.xlu0 %8345
      %8347 = vrot.lane.b32.xlu0 %v5913, 50
      %v8348 = vpop.permute.xlu0 %8347
      %8349 = vrot.lane.b32.xlu0 %v5914, 50
      %v8350 = vpop.permute.xlu0 %8349
      %8351 = vrot.lane.b32.xlu0 %v5915, 50
      %v8352 = vpop.permute.xlu0 %8351
      %8353 = vrot.lane.b32.xlu0 %v5916, 50
      %v8354 = vpop.permute.xlu0 %8353
      %vm8355 = vcmask 408576
      %v8356 = vsel %vm8355, %v8240, %v8242
      %v8357 = vsel %vm8355, %v8242, %v8244
      %v8358 = vsel %vm8355, %v8244, %v8246
      %v8359 = vsel %vm8355, %v8246, %v8248
      %v8360 = vsel %vm8355, %v8248, %v8250
      %v8361 = vsel %vm8355, %v8250, %v8252
      %v8362 = vsel %vm8355, %v8252, %v8254
      %v8363 = vsel %vm8355, %v8254, %v8256
      %v8364 = vsel %vm8355, %v8256, %v8258
      %v8365 = vsel %vm8355, %v8258, %v8260
      %v8366 = vsel %vm8355, %v8260, %v8262
      %v8367 = vsel %vm8355, %v8262, %v8264
      %v8368 = vsel %vm8355, %v8264, %v8266
      %v8369 = vsel %vm8355, %v8266, %v8268
      %v8370 = vsel %vm8355, %v8268, %v8270
      %v8371 = vsel %vm8355, %v8270, %v8272
      %v8372 = vsel %vm8355, %v8272, %v8274
      %v8373 = vsel %vm8355, %v8274, %v8276
      %v8374 = vsel %vm8355, %v8276, %v8278
      %v8375 = vsel %vm8355, %v8278, %v8280
      %v8376 = vsel %vm8355, %v8280, %v8282
      %v8377 = vsel %vm8355, %v8282, %v8284
      %v8378 = vsel %vm8355, %v8284, %v8286
      %v8379 = vsel %vm8355, %v8286, %v8288
      %v8380 = vsel %vm8355, %v8288, %v8290
      %v8381 = vsel %vm8355, %v8290, %v8292
      %v8382 = vsel %vm8355, %v8292, %v8294
      %v8383 = vsel %vm8355, %v8294, %v8296
      %v8384 = vsel %vm8355, %v8296, %v8298
      %v8385 = vsel %vm8355, %v8298, %v8300
      %v8386 = vsel %vm8355, %v8300, %v8302
      %v8387 = vsel %vm8355, %v8302, %v8304
      %v8388 = vsel %vm8355, %v8304, %v8306
      %v8389 = vsel %vm8355, %v8306, %v8308
      %v8390 = vsel %vm8355, %v8308, %v8310
      %v8391 = vsel %vm8355, %v8310, %v8312
      %v8392 = vsel %vm8355, %v8312, %v8314
      %v8393 = vsel %vm8355, %v8314, %v8316
      %v8394 = vsel %vm8355, %v8316, %v8318
      %v8395 = vsel %vm8355, %v8318, %v8320
      %v8396 = vsel %vm8355, %v8320, %v8322
      %v8397 = vsel %vm8355, %v8322, %v8324
      %v8398 = vsel %vm8355, %v8324, %v8326
      %v8399 = vsel %vm8355, %v8326, %v8328
      %v8400 = vsel %vm8355, %v8328, %v8330
      %v8401 = vsel %vm8355, %v8330, %v8332
      %v8402 = vsel %vm8355, %v8332, %v8334
      %v8403 = vsel %vm8355, %v8334, %v8336
      %v8404 = vsel %vm8355, %v8336, %v8338
      %v8405 = vsel %vm8355, %v8338, %v8340
      %v8406 = vsel %vm8355, %v8340, %v8342
      %v8407 = vsel %vm8355, %v8342, %v8344
      %v8408 = vsel %vm8355, %v8344, %v8346
      %v8409 = vsel %vm8355, %v8346, %v8348
      %v8410 = vsel %vm8355, %v8348, %v8350
      %v8411 = vsel %vm8355, %v8350, %v8352
      %v8412 = vsel %vm8355, %v8352, %v8354
      %8470 = vst [vmem:[#allocation2 + $0xab0] sm:$0x30] %v8356
      %8471 = vst [vmem:[#allocation2 + $0xab8] sm:$0x30] %v8357
      %8472 = vst [vmem:[#allocation2 + $0xac0] sm:$0x30] %v8358
      %8473 = vst [vmem:[#allocation2 + $0xac8] sm:$0x30] %v8359
      %8474 = vst [vmem:[#allocation2 + $0xad0] sm:$0x30] %v8360
      %8475 = vst [vmem:[#allocation2 + $0xad8] sm:$0x30] %v8361
      %8476 = vst [vmem:[#allocation2 + $0xae0] sm:$0x30] %v8362
      %8477 = vst [vmem:[#allocation2 + $0xae8] sm:$0x30] %v8363
      %8478 = vst [vmem:[#allocation2 + $0xaf0] sm:$0x30] %v8364
      %8479 = vst [vmem:[#allocation2 + $0xaf8] sm:$0x30] %v8365
      %8480 = vst [vmem:[#allocation2 + $0xb00] sm:$0x30] %v8366
      %8481 = vst [vmem:[#allocation2 + $0xb08] sm:$0x30] %v8367
      %8482 = vst [vmem:[#allocation2 + $0xb10] sm:$0x30] %v8368
      %8483 = vst [vmem:[#allocation2 + $0xb18] sm:$0x30] %v8369
      %8484 = vst [vmem:[#allocation2 + $0xb20] sm:$0x30] %v8370
      %8485 = vst [vmem:[#allocation2 + $0xb28] sm:$0x30] %v8371
      %8486 = vst [vmem:[#allocation2 + $0xb30] sm:$0x30] %v8372
      %8487 = vst [vmem:[#allocation2 + $0xb38] sm:$0x30] %v8373
      %8488 = vst [vmem:[#allocation2 + $0xb40] sm:$0x30] %v8374
      %8489 = vst [vmem:[#allocation2 + $0xb48] sm:$0x30] %v8375
      %8490 = vst [vmem:[#allocation2 + $0xb50] sm:$0x30] %v8376
      %8491 = vst [vmem:[#allocation2 + $0xb58] sm:$0x30] %v8377
      %8492 = vst [vmem:[#allocation2 + $0xb60] sm:$0x30] %v8378
      %8493 = vst [vmem:[#allocation2 + $0xb68] sm:$0x30] %v8379
      %8494 = vst [vmem:[#allocation2 + $0xb70] sm:$0x30] %v8380
      %8495 = vst [vmem:[#allocation2 + $0xb78] sm:$0x30] %v8381
      %8496 = vst [vmem:[#allocation2 + $0xb80] sm:$0x30] %v8382
      %8497 = vst [vmem:[#allocation2 + $0xb88] sm:$0x30] %v8383
      %8498 = vst [vmem:[#allocation2 + $0xb90] sm:$0x30] %v8384
      %8499 = vst [vmem:[#allocation2 + $0xb98] sm:$0x30] %v8385
      %8500 = vst [vmem:[#allocation2 + $0xba0] sm:$0x30] %v8386
      %8501 = vst [vmem:[#allocation2 + $0xba8] sm:$0x30] %v8387
      %8502 = vst [vmem:[#allocation2 + $0xbb0] sm:$0x30] %v8388
      %8503 = vst [vmem:[#allocation2 + $0xbb8] sm:$0x30] %v8389
      %8504 = vst [vmem:[#allocation2 + $0xbc0] sm:$0x30] %v8390
      %8505 = vst [vmem:[#allocation2 + $0xbc8] sm:$0x30] %v8391
      %8506 = vst [vmem:[#allocation2 + $0xbd0] sm:$0x30] %v8392
      %8507 = vst [vmem:[#allocation2 + $0xbd8] sm:$0x30] %v8393
      %8508 = vst [vmem:[#allocation2 + $0xbe0] sm:$0x30] %v8394
      %8509 = vst [vmem:[#allocation2 + $0xbe8] sm:$0x30] %v8395
      %8510 = vst [vmem:[#allocation2 + $0xbf0] sm:$0x30] %v8396
      %8511 = vst [vmem:[#allocation2 + $0xbf8] sm:$0x30] %v8397
      %8512 = vst [vmem:[#allocation2 + $0xc00] sm:$0x30] %v8398
      %8513 = vst [vmem:[#allocation2 + $0xc08] sm:$0x30] %v8399
      %8514 = vst [vmem:[#allocation2 + $0xc10] sm:$0x30] %v8400
      %8515 = vst [vmem:[#allocation2 + $0xc18] sm:$0x30] %v8401
      %8516 = vst [vmem:[#allocation2 + $0xc20] sm:$0x30] %v8402
      %8517 = vst [vmem:[#allocation2 + $0xc28] sm:$0x30] %v8403
      %8518 = vst [vmem:[#allocation2 + $0xc30] sm:$0x30] %v8404
      %8519 = vst [vmem:[#allocation2 + $0xc38] sm:$0x30] %v8405
      %8520 = vst [vmem:[#allocation2 + $0xc40] sm:$0x30] %v8406
      %8521 = vst [vmem:[#allocation2 + $0xc48] sm:$0x30] %v8407
      %8522 = vst [vmem:[#allocation2 + $0xc50] sm:$0x30] %v8408
      %8523 = vst [vmem:[#allocation2 + $0xc58] sm:$0x30] %v8409
      %8524 = vst [vmem:[#allocation2 + $0xc60] sm:$0x30] %v8410
      %8525 = vst [vmem:[#allocation2 + $0xc68] sm:$0x30] %v8411
      %8526 = vst [vmem:[#allocation2 + $0xc70] sm:$0x30] %v8412
      %8527 = vst [vmem:[#allocation2 + $0xab0] sm:$0xc0] 0
      %8528 = vst [vmem:[#allocation2 + $0xab8] sm:$0xc0] 0
      %8529 = vst [vmem:[#allocation2 + $0xac0] sm:$0xc0] 0
      %8530 = vst [vmem:[#allocation2 + $0xac8] sm:$0xc0] 0
      %8531 = vst [vmem:[#allocation2 + $0xad0] sm:$0xc0] 0
      %8532 = vst [vmem:[#allocation2 + $0xad8] sm:$0xc0] 0
      %8533 = vst [vmem:[#allocation2 + $0xae0] sm:$0xc0] 0
      %8534 = vst [vmem:[#allocation2 + $0xae8] sm:$0xc0] 0
      %8535 = vst [vmem:[#allocation2 + $0xaf0] sm:$0xc0] 0
      %8536 = vst [vmem:[#allocation2 + $0xaf8] sm:$0xc0] 0
      %8537 = vst [vmem:[#allocation2 + $0xb00] sm:$0xc0] 0
      %8538 = vst [vmem:[#allocation2 + $0xb08] sm:$0xc0] 0
      %8539 = vst [vmem:[#allocation2 + $0xb10] sm:$0xc0] 0
      %8540 = vst [vmem:[#allocation2 + $0xb18] sm:$0xc0] 0
      %8541 = vst [vmem:[#allocation2 + $0xb20] sm:$0xc0] 0
      %8542 = vst [vmem:[#allocation2 + $0xb28] sm:$0xc0] 0
      %8543 = vst [vmem:[#allocation2 + $0xb30] sm:$0xc0] 0
      %8544 = vst [vmem:[#allocation2 + $0xb38] sm:$0xc0] 0
      %8545 = vst [vmem:[#allocation2 + $0xb40] sm:$0xc0] 0
      %8546 = vst [vmem:[#allocation2 + $0xb48] sm:$0xc0] 0
      %8547 = vst [vmem:[#allocation2 + $0xb50] sm:$0xc0] 0
      %8548 = vst [vmem:[#allocation2 + $0xb58] sm:$0xc0] 0
      %8549 = vst [vmem:[#allocation2 + $0xb60] sm:$0xc0] 0
      %8550 = vst [vmem:[#allocation2 + $0xb68] sm:$0xc0] 0
      %8551 = vst [vmem:[#allocation2 + $0xb70] sm:$0xc0] 0
      %8552 = vst [vmem:[#allocation2 + $0xb78] sm:$0xc0] 0
      %8553 = vst [vmem:[#allocation2 + $0xb80] sm:$0xc0] 0
      %8554 = vst [vmem:[#allocation2 + $0xb88] sm:$0xc0] 0
      %8555 = vst [vmem:[#allocation2 + $0xb90] sm:$0xc0] 0
      %8556 = vst [vmem:[#allocation2 + $0xb98] sm:$0xc0] 0
      %8557 = vst [vmem:[#allocation2 + $0xba0] sm:$0xc0] 0
      %8558 = vst [vmem:[#allocation2 + $0xba8] sm:$0xc0] 0
      %8559 = vst [vmem:[#allocation2 + $0xbb0] sm:$0xc0] 0
      %8560 = vst [vmem:[#allocation2 + $0xbb8] sm:$0xc0] 0
      %8561 = vst [vmem:[#allocation2 + $0xbc0] sm:$0xc0] 0
      %8562 = vst [vmem:[#allocation2 + $0xbc8] sm:$0xc0] 0
      %8563 = vst [vmem:[#allocation2 + $0xbd0] sm:$0xc0] 0
      %8564 = vst [vmem:[#allocation2 + $0xbd8] sm:$0xc0] 0
      %8565 = vst [vmem:[#allocation2 + $0xbe0] sm:$0xc0] 0
      %8566 = vst [vmem:[#allocation2 + $0xbe8] sm:$0xc0] 0
      %8567 = vst [vmem:[#allocation2 + $0xbf0] sm:$0xc0] 0
      %8568 = vst [vmem:[#allocation2 + $0xbf8] sm:$0xc0] 0
      %8569 = vst [vmem:[#allocation2 + $0xc00] sm:$0xc0] 0
      %8570 = vst [vmem:[#allocation2 + $0xc08] sm:$0xc0] 0
      %8571 = vst [vmem:[#allocation2 + $0xc10] sm:$0xc0] 0
      %8572 = vst [vmem:[#allocation2 + $0xc18] sm:$0xc0] 0
      %8573 = vst [vmem:[#allocation2 + $0xc20] sm:$0xc0] 0
      %8574 = vst [vmem:[#allocation2 + $0xc28] sm:$0xc0] 0
      %8575 = vst [vmem:[#allocation2 + $0xc30] sm:$0xc0] 0
      %8576 = vst [vmem:[#allocation2 + $0xc38] sm:$0xc0] 0
      %8577 = vst [vmem:[#allocation2 + $0xc40] sm:$0xc0] 0
      %8578 = vst [vmem:[#allocation2 + $0xc48] sm:$0xc0] 0
      %8579 = vst [vmem:[#allocation2 + $0xc50] sm:$0xc0] 0
      %8580 = vst [vmem:[#allocation2 + $0xc58] sm:$0xc0] 0
      %8581 = vst [vmem:[#allocation2 + $0xc60] sm:$0xc0] 0
      %8582 = vst [vmem:[#allocation2 + $0xc68] sm:$0xc0] 0
      %8583 = vst [vmem:[#allocation2 + $0xc70] sm:$0xc0] 0
      %v8584 = vld [vmem:[%s2] sm:$0xf]
      %v8585 = vld [vmem:[#allocation2] sm:$0xff]
      %v8586 = vld [vmem:[#allocation2 + $0x8] sm:$0xff]
      %v8587 = vld [vmem:[#allocation2 + $0x10] sm:$0xff]
      %v8588 = vld [vmem:[#allocation2 + $0x18] sm:$0xff]
      %v8589 = vld [vmem:[#allocation2 + $0x20] sm:$0xff]
      %v8590 = vld [vmem:[#allocation2 + $0x28] sm:$0xff]
      %v8591 = vld [vmem:[#allocation2 + $0x30] sm:$0xff]
      %v8592 = vld [vmem:[#allocation2 + $0x38] sm:$0xff]
      %v8593 = vld [vmem:[#allocation2 + $0x40] sm:$0xff]
      %v8594 = vld [vmem:[#allocation2 + $0x48] sm:$0xff]
      %v8595 = vld [vmem:[#allocation2 + $0x50] sm:$0xff]
      %v8596 = vld [vmem:[#allocation2 + $0x58] sm:$0xff]
      %v8597 = vld [vmem:[#allocation2 + $0x60] sm:$0xff]
      %v8598 = vld [vmem:[#allocation2 + $0x68] sm:$0xff]
      %v8599 = vld [vmem:[#allocation2 + $0x70] sm:$0xff]
      %v8600 = vld [vmem:[#allocation2 + $0x78] sm:$0xff]
      %v8601 = vld [vmem:[#allocation2 + $0x80] sm:$0xff]
      %v8602 = vld [vmem:[#allocation2 + $0x88] sm:$0xff]
      %v8603 = vld [vmem:[#allocation2 + $0x90] sm:$0xff]
      %v8604 = vld [vmem:[#allocation2 + $0x98] sm:$0xff]
      %v8605 = vld [vmem:[#allocation2 + $0xa0] sm:$0xff]
      %v8606 = vld [vmem:[#allocation2 + $0xa8] sm:$0xff]
      %v8607 = vld [vmem:[#allocation2 + $0xb0] sm:$0xff]
      %v8608 = vld [vmem:[#allocation2 + $0xb8] sm:$0xff]
      %v8609 = vld [vmem:[#allocation2 + $0xc0] sm:$0xff]
      %v8610 = vld [vmem:[#allocation2 + $0xc8] sm:$0xff]
      %v8611 = vld [vmem:[#allocation2 + $0xd0] sm:$0xff]
      %v8612 = vld [vmem:[#allocation2 + $0xd8] sm:$0xff]
      %v8613 = vld [vmem:[#allocation2 + $0xe0] sm:$0xff]
      %v8614 = vld [vmem:[#allocation2 + $0xe8] sm:$0xff]
      %v8615 = vld [vmem:[#allocation2 + $0xf0] sm:$0xff]
      %v8616 = vld [vmem:[#allocation2 + $0xf8] sm:$0xff]
      %v8617 = vld [vmem:[#allocation2 + $0x100] sm:$0xff]
      %v8618 = vld [vmem:[#allocation2 + $0x108] sm:$0xff]
      %v8619 = vld [vmem:[#allocation2 + $0x110] sm:$0xff]
      %v8620 = vld [vmem:[#allocation2 + $0x118] sm:$0xff]
      %v8621 = vld [vmem:[#allocation2 + $0x120] sm:$0xff]
      %v8622 = vld [vmem:[#allocation2 + $0x128] sm:$0xff]
      %v8623 = vld [vmem:[#allocation2 + $0x130] sm:$0xff]
      %v8624 = vld [vmem:[#allocation2 + $0x138] sm:$0xff]
      %v8625 = vld [vmem:[#allocation2 + $0x140] sm:$0xff]
      %v8626 = vld [vmem:[#allocation2 + $0x148] sm:$0xff]
      %v8627 = vld [vmem:[#allocation2 + $0x150] sm:$0xff]
      %v8628 = vld [vmem:[#allocation2 + $0x158] sm:$0xff]
      %v8629 = vld [vmem:[#allocation2 + $0x160] sm:$0xff]
      %v8630 = vld [vmem:[#allocation2 + $0x168] sm:$0xff]
      %v8631 = vld [vmem:[#allocation2 + $0x170] sm:$0xff]
      %v8632 = vld [vmem:[#allocation2 + $0x178] sm:$0xff]
      %v8633 = vld [vmem:[#allocation2 + $0x180] sm:$0xff]
      %v8634 = vld [vmem:[#allocation2 + $0x188] sm:$0xff]
      %v8635 = vld [vmem:[#allocation2 + $0x190] sm:$0xff]
      %v8636 = vld [vmem:[#allocation2 + $0x198] sm:$0xff]
      %v8637 = vld [vmem:[#allocation2 + $0x1a0] sm:$0xff]
      %v8638 = vld [vmem:[#allocation2 + $0x1a8] sm:$0xff]
      %v8639 = vld [vmem:[#allocation2 + $0x1b0] sm:$0xff]
      %v8640 = vld [vmem:[#allocation2 + $0x1b8] sm:$0xff]
      %v8641 = vld [vmem:[#allocation2 + $0x1c0] sm:$0xff]
      %v8642 = vld [vmem:[#allocation2 + $0x1c8] sm:$0xff]
      %v8643 = vld [vmem:[#allocation2 + $0x1d0] sm:$0xff]
      %v8644 = vld [vmem:[#allocation2 + $0x1d8] sm:$0xff]
      %v8645 = vld [vmem:[#allocation2 + $0x1e0] sm:$0xff]
      %v8646 = vld [vmem:[#allocation2 + $0x1e8] sm:$0xff]
      %v8647 = vld [vmem:[#allocation2 + $0x1f0] sm:$0xff]
      %v8648 = vld [vmem:[#allocation2 + $0x1f8] sm:$0xff]
      %v8649 = vld [vmem:[#allocation2 + $0x200] sm:$0xff]
      %v8650 = vld [vmem:[#allocation2 + $0x208] sm:$0xff]
      %v8651 = vld [vmem:[#allocation2 + $0x210] sm:$0xff]
      %v8652 = vld [vmem:[#allocation2 + $0x218] sm:$0xff]
      %v8653 = vld [vmem:[#allocation2 + $0x220] sm:$0xff]
      %v8654 = vld [vmem:[#allocation2 + $0x228] sm:$0xff]
      %v8655 = vld [vmem:[#allocation2 + $0x230] sm:$0xff]
      %v8656 = vld [vmem:[#allocation2 + $0x238] sm:$0xff]
      %v8657 = vld [vmem:[#allocation2 + $0x240] sm:$0xff]
      %v8658 = vld [vmem:[#allocation2 + $0x248] sm:$0xff]
      %v8659 = vld [vmem:[#allocation2 + $0x250] sm:$0xff]
      %v8660 = vld [vmem:[#allocation2 + $0x258] sm:$0xff]
      %v8661 = vld [vmem:[#allocation2 + $0x260] sm:$0xff]
      %v8662 = vld [vmem:[#allocation2 + $0x268] sm:$0xff]
      %v8663 = vld [vmem:[#allocation2 + $0x270] sm:$0xff]
      %v8664 = vld [vmem:[#allocation2 + $0x278] sm:$0xff]
      %v8665 = vld [vmem:[#allocation2 + $0x280] sm:$0xff]
      %v8666 = vld [vmem:[#allocation2 + $0x288] sm:$0xff]
      %v8667 = vld [vmem:[#allocation2 + $0x290] sm:$0xff]
      %v8668 = vld [vmem:[#allocation2 + $0x298] sm:$0xff]
      %v8669 = vld [vmem:[#allocation2 + $0x2a0] sm:$0xff]
      %v8670 = vld [vmem:[#allocation2 + $0x2a8] sm:$0xff]
      %v8671 = vld [vmem:[#allocation2 + $0x2b0] sm:$0xff]
      %v8672 = vld [vmem:[#allocation2 + $0x2b8] sm:$0xff]
      %v8673 = vld [vmem:[#allocation2 + $0x2c0] sm:$0xff]
      %v8674 = vld [vmem:[#allocation2 + $0x2c8] sm:$0xff]
      %v8675 = vld [vmem:[#allocation2 + $0x2d0] sm:$0xff]
      %v8676 = vld [vmem:[#allocation2 + $0x2d8] sm:$0xff]
      %v8677 = vld [vmem:[#allocation2 + $0x2e0] sm:$0xff]
      %v8678 = vld [vmem:[#allocation2 + $0x2e8] sm:$0xff]
      %v8679 = vld [vmem:[#allocation2 + $0x2f0] sm:$0xff]
      %v8680 = vld [vmem:[#allocation2 + $0x2f8] sm:$0xff]
      %v8681 = vld [vmem:[#allocation2 + $0x300] sm:$0xff]
      %v8682 = vld [vmem:[#allocation2 + $0x308] sm:$0xff]
      %v8683 = vld [vmem:[#allocation2 + $0x310] sm:$0xff]
      %v8684 = vld [vmem:[#allocation2 + $0x318] sm:$0xff]
      %v8685 = vld [vmem:[#allocation2 + $0x320] sm:$0xff]
      %v8686 = vld [vmem:[#allocation2 + $0x328] sm:$0xff]
      %v8687 = vld [vmem:[#allocation2 + $0x330] sm:$0xff]
      %v8688 = vld [vmem:[#allocation2 + $0x338] sm:$0xff]
      %v8689 = vld [vmem:[#allocation2 + $0x340] sm:$0xff]
      %v8690 = vld [vmem:[#allocation2 + $0x348] sm:$0xff]
      %v8691 = vld [vmem:[#allocation2 + $0x350] sm:$0xff]
      %v8692 = vld [vmem:[#allocation2 + $0x358] sm:$0xff]
      %v8693 = vld [vmem:[#allocation2 + $0x360] sm:$0xff]
      %v8694 = vld [vmem:[#allocation2 + $0x368] sm:$0xff]
      %v8695 = vld [vmem:[#allocation2 + $0x370] sm:$0xff]
      %v8696 = vld [vmem:[#allocation2 + $0x378] sm:$0xff]
      %v8697 = vld [vmem:[#allocation2 + $0x380] sm:$0xff]
      %v8698 = vld [vmem:[#allocation2 + $0x388] sm:$0xff]
      %v8699 = vld [vmem:[#allocation2 + $0x390] sm:$0xff]
      %v8700 = vld [vmem:[#allocation2 + $0x398] sm:$0xff]
      %v8701 = vld [vmem:[#allocation2 + $0x3a0] sm:$0xff]
      %v8702 = vld [vmem:[#allocation2 + $0x3a8] sm:$0xff]
      %v8703 = vld [vmem:[#allocation2 + $0x3b0] sm:$0xff]
      %v8704 = vld [vmem:[#allocation2 + $0x3b8] sm:$0xff]
      %v8705 = vld [vmem:[#allocation2 + $0x3c0] sm:$0xff]
      %v8706 = vld [vmem:[#allocation2 + $0x3c8] sm:$0xff]
      %v8707 = vld [vmem:[#allocation2 + $0x3d0] sm:$0xff]
      %v8708 = vld [vmem:[#allocation2 + $0x3d8] sm:$0xff]
      %v8709 = vld [vmem:[#allocation2 + $0x3e0] sm:$0xff]
      %v8710 = vld [vmem:[#allocation2 + $0x3e8] sm:$0xff]
      %v8711 = vld [vmem:[#allocation2 + $0x3f0] sm:$0xff]
      %v8712 = vld [vmem:[#allocation2 + $0x3f8] sm:$0xff]
      %v8713 = vld [vmem:[#allocation2 + $0x400] sm:$0xff]
      %v8714 = vld [vmem:[#allocation2 + $0x408] sm:$0xff]
      %v8715 = vld [vmem:[#allocation2 + $0x410] sm:$0xff]
      %v8716 = vld [vmem:[#allocation2 + $0x418] sm:$0xff]
      %v8717 = vld [vmem:[#allocation2 + $0x420] sm:$0xff]
      %v8718 = vld [vmem:[#allocation2 + $0x428] sm:$0xff]
      %v8719 = vld [vmem:[#allocation2 + $0x430] sm:$0xff]
      %v8720 = vld [vmem:[#allocation2 + $0x438] sm:$0xff]
      %v8721 = vld [vmem:[#allocation2 + $0x440] sm:$0xff]
      %v8722 = vld [vmem:[#allocation2 + $0x448] sm:$0xff]
      %v8723 = vld [vmem:[#allocation2 + $0x450] sm:$0xff]
      %v8724 = vld [vmem:[#allocation2 + $0x458] sm:$0xff]
      %v8725 = vld [vmem:[#allocation2 + $0x460] sm:$0xff]
      %v8726 = vld [vmem:[#allocation2 + $0x468] sm:$0xff]
      %v8727 = vld [vmem:[#allocation2 + $0x470] sm:$0xff]
      %v8728 = vld [vmem:[#allocation2 + $0x478] sm:$0xff]
      %v8729 = vld [vmem:[#allocation2 + $0x480] sm:$0xff]
      %v8730 = vld [vmem:[#allocation2 + $0x488] sm:$0xff]
      %v8731 = vld [vmem:[#allocation2 + $0x490] sm:$0xff]
      %v8732 = vld [vmem:[#allocation2 + $0x498] sm:$0xff]
      %v8733 = vld [vmem:[#allocation2 + $0x4a0] sm:$0xff]
      %v8734 = vld [vmem:[#allocation2 + $0x4a8] sm:$0xff]
      %v8735 = vld [vmem:[#allocation2 + $0x4b0] sm:$0xff]
      %v8736 = vld [vmem:[#allocation2 + $0x4b8] sm:$0xff]
      %v8737 = vld [vmem:[#allocation2 + $0x4c0] sm:$0xff]
      %v8738 = vld [vmem:[#allocation2 + $0x4c8] sm:$0xff]
      %v8739 = vld [vmem:[#allocation2 + $0x4d0] sm:$0xff]
      %v8740 = vld [vmem:[#allocation2 + $0x4d8] sm:$0xff]
      %v8741 = vld [vmem:[#allocation2 + $0x4e0] sm:$0xff]
      %v8742 = vld [vmem:[#allocation2 + $0x4e8] sm:$0xff]
      %v8743 = vld [vmem:[#allocation2 + $0x4f0] sm:$0xff]
      %v8744 = vld [vmem:[#allocation2 + $0x4f8] sm:$0xff]
      %v8745 = vld [vmem:[#allocation2 + $0x500] sm:$0xff]
      %v8746 = vld [vmem:[#allocation2 + $0x508] sm:$0xff]
      %v8747 = vld [vmem:[#allocation2 + $0x510] sm:$0xff]
      %v8748 = vld [vmem:[#allocation2 + $0x518] sm:$0xff]
      %v8749 = vld [vmem:[#allocation2 + $0x520] sm:$0xff]
      %v8750 = vld [vmem:[#allocation2 + $0x528] sm:$0xff]
      %v8751 = vld [vmem:[#allocation2 + $0x530] sm:$0xff]
      %v8752 = vld [vmem:[#allocation2 + $0x538] sm:$0xff]
      %v8753 = vld [vmem:[#allocation2 + $0x540] sm:$0xff]
      %v8754 = vld [vmem:[#allocation2 + $0x548] sm:$0xff]
      %v8755 = vld [vmem:[#allocation2 + $0x550] sm:$0xff]
      %v8756 = vld [vmem:[#allocation2 + $0x558] sm:$0xff]
      %v8757 = vld [vmem:[#allocation2 + $0x560] sm:$0xff]
      %v8758 = vld [vmem:[#allocation2 + $0x568] sm:$0xff]
      %v8759 = vld [vmem:[#allocation2 + $0x570] sm:$0xff]
      %v8760 = vld [vmem:[#allocation2 + $0x578] sm:$0xff]
      %v8761 = vld [vmem:[#allocation2 + $0x580] sm:$0xff]
      %v8762 = vld [vmem:[#allocation2 + $0x588] sm:$0xff]
      %v8763 = vld [vmem:[#allocation2 + $0x590] sm:$0xff]
      %v8764 = vld [vmem:[#allocation2 + $0x598] sm:$0xff]
      %v8765 = vld [vmem:[#allocation2 + $0x5a0] sm:$0xff]
      %v8766 = vld [vmem:[#allocation2 + $0x5a8] sm:$0xff]
      %v8767 = vld [vmem:[#allocation2 + $0x5b0] sm:$0xff]
      %v8768 = vld [vmem:[#allocation2 + $0x5b8] sm:$0xff]
      %v8769 = vld [vmem:[#allocation2 + $0x5c0] sm:$0xff]
      %v8770 = vld [vmem:[#allocation2 + $0x5c8] sm:$0xff]
      %v8771 = vld [vmem:[#allocation2 + $0x5d0] sm:$0xff]
      %v8772 = vld [vmem:[#allocation2 + $0x5d8] sm:$0xff]
      %v8773 = vld [vmem:[#allocation2 + $0x5e0] sm:$0xff]
      %v8774 = vld [vmem:[#allocation2 + $0x5e8] sm:$0xff]
      %v8775 = vld [vmem:[#allocation2 + $0x5f0] sm:$0xff]
      %v8776 = vld [vmem:[#allocation2 + $0x5f8] sm:$0xff]
      %v8777 = vld [vmem:[#allocation2 + $0x600] sm:$0xff]
      %v8778 = vld [vmem:[#allocation2 + $0x608] sm:$0xff]
      %v8779 = vld [vmem:[#allocation2 + $0x610] sm:$0xff]
      %v8780 = vld [vmem:[#allocation2 + $0x618] sm:$0xff]
      %v8781 = vld [vmem:[#allocation2 + $0x620] sm:$0xff]
      %v8782 = vld [vmem:[#allocation2 + $0x628] sm:$0xff]
      %v8783 = vld [vmem:[#allocation2 + $0x630] sm:$0xff]
      %v8784 = vld [vmem:[#allocation2 + $0x638] sm:$0xff]
      %v8785 = vld [vmem:[#allocation2 + $0x640] sm:$0xff]
      %v8786 = vld [vmem:[#allocation2 + $0x648] sm:$0xff]
      %v8787 = vld [vmem:[#allocation2 + $0x650] sm:$0xff]
      %v8788 = vld [vmem:[#allocation2 + $0x658] sm:$0xff]
      %v8789 = vld [vmem:[#allocation2 + $0x660] sm:$0xff]
      %v8790 = vld [vmem:[#allocation2 + $0x668] sm:$0xff]
      %v8791 = vld [vmem:[#allocation2 + $0x670] sm:$0xff]
      %v8792 = vld [vmem:[#allocation2 + $0x678] sm:$0xff]
      %v8793 = vld [vmem:[#allocation2 + $0x680] sm:$0xff]
      %v8794 = vld [vmem:[#allocation2 + $0x688] sm:$0xff]
      %v8795 = vld [vmem:[#allocation2 + $0x690] sm:$0xff]
      %v8796 = vld [vmem:[#allocation2 + $0x698] sm:$0xff]
      %v8797 = vld [vmem:[#allocation2 + $0x6a0] sm:$0xff]
      %v8798 = vld [vmem:[#allocation2 + $0x6a8] sm:$0xff]
      %v8799 = vld [vmem:[#allocation2 + $0x6b0] sm:$0xff]
      %v8800 = vld [vmem:[#allocation2 + $0x6b8] sm:$0xff]
      %v8801 = vld [vmem:[#allocation2 + $0x6c0] sm:$0xff]
      %v8802 = vld [vmem:[#allocation2 + $0x6c8] sm:$0xff]
      %v8803 = vld [vmem:[#allocation2 + $0x6d0] sm:$0xff]
      %v8804 = vld [vmem:[#allocation2 + $0x6d8] sm:$0xff]
      %v8805 = vld [vmem:[#allocation2 + $0x6e0] sm:$0xff]
      %v8806 = vld [vmem:[#allocation2 + $0x6e8] sm:$0xff]
      %v8807 = vld [vmem:[#allocation2 + $0x6f0] sm:$0xff]
      %v8808 = vld [vmem:[#allocation2 + $0x6f8] sm:$0xff]
      %v8809 = vld [vmem:[#allocation2 + $0x700] sm:$0xff]
      %v8810 = vld [vmem:[#allocation2 + $0x708] sm:$0xff]
      %v8811 = vld [vmem:[#allocation2 + $0x710] sm:$0xff]
      %v8812 = vld [vmem:[#allocation2 + $0x718] sm:$0xff]
      %v8813 = vld [vmem:[#allocation2 + $0x720] sm:$0xff]
      %v8814 = vld [vmem:[#allocation2 + $0x728] sm:$0xff]
      %v8815 = vld [vmem:[#allocation2 + $0x730] sm:$0xff]
      %v8816 = vld [vmem:[#allocation2 + $0x738] sm:$0xff]
      %v8817 = vld [vmem:[#allocation2 + $0x740] sm:$0xff]
      %v8818 = vld [vmem:[#allocation2 + $0x748] sm:$0xff]
      %v8819 = vld [vmem:[#allocation2 + $0x750] sm:$0xff]
      %v8820 = vld [vmem:[#allocation2 + $0x758] sm:$0xff]
      %v8821 = vld [vmem:[#allocation2 + $0x760] sm:$0xff]
      %v8822 = vld [vmem:[#allocation2 + $0x768] sm:$0xff]
      %v8823 = vld [vmem:[#allocation2 + $0x770] sm:$0xff]
      %v8824 = vld [vmem:[#allocation2 + $0x778] sm:$0xff]
      %v8825 = vld [vmem:[#allocation2 + $0x780] sm:$0xff]
      %v8826 = vld [vmem:[#allocation2 + $0x788] sm:$0xff]
      %v8827 = vld [vmem:[#allocation2 + $0x790] sm:$0xff]
      %v8828 = vld [vmem:[#allocation2 + $0x798] sm:$0xff]
      %v8829 = vld [vmem:[#allocation2 + $0x7a0] sm:$0xff]
      %v8830 = vld [vmem:[#allocation2 + $0x7a8] sm:$0xff]
      %v8831 = vld [vmem:[#allocation2 + $0x7b0] sm:$0xff]
      %v8832 = vld [vmem:[#allocation2 + $0x7b8] sm:$0xff]
      %v8833 = vld [vmem:[#allocation2 + $0x7c0] sm:$0xff]
      %v8834 = vld [vmem:[#allocation2 + $0x7c8] sm:$0xff]
      %v8835 = vld [vmem:[#allocation2 + $0x7d0] sm:$0xff]
      %v8836 = vld [vmem:[#allocation2 + $0x7d8] sm:$0xff]
      %v8837 = vld [vmem:[#allocation2 + $0x7e0] sm:$0xff]
      %v8838 = vld [vmem:[#allocation2 + $0x7e8] sm:$0xff]
      %v8839 = vld [vmem:[#allocation2 + $0x7f0] sm:$0xff]
      %v8840 = vld [vmem:[#allocation2 + $0x7f8] sm:$0xff]
      %v8841 = vld [vmem:[#allocation2 + $0x800] sm:$0xff]
      %v8842 = vld [vmem:[#allocation2 + $0x808] sm:$0xff]
      %v8843 = vld [vmem:[#allocation2 + $0x810] sm:$0xff]
      %v8844 = vld [vmem:[#allocation2 + $0x818] sm:$0xff]
      %v8845 = vld [vmem:[#allocation2 + $0x820] sm:$0xff]
      %v8846 = vld [vmem:[#allocation2 + $0x828] sm:$0xff]
      %v8847 = vld [vmem:[#allocation2 + $0x830] sm:$0xff]
      %v8848 = vld [vmem:[#allocation2 + $0x838] sm:$0xff]
      %v8849 = vld [vmem:[#allocation2 + $0x840] sm:$0xff]
      %v8850 = vld [vmem:[#allocation2 + $0x848] sm:$0xff]
      %v8851 = vld [vmem:[#allocation2 + $0x850] sm:$0xff]
      %v8852 = vld [vmem:[#allocation2 + $0x858] sm:$0xff]
      %v8853 = vld [vmem:[#allocation2 + $0x860] sm:$0xff]
      %v8854 = vld [vmem:[#allocation2 + $0x868] sm:$0xff]
      %v8855 = vld [vmem:[#allocation2 + $0x870] sm:$0xff]
      %v8856 = vld [vmem:[#allocation2 + $0x878] sm:$0xff]
      %v8857 = vld [vmem:[#allocation2 + $0x880] sm:$0xff]
      %v8858 = vld [vmem:[#allocation2 + $0x888] sm:$0xff]
      %v8859 = vld [vmem:[#allocation2 + $0x890] sm:$0xff]
      %v8860 = vld [vmem:[#allocation2 + $0x898] sm:$0xff]
      %v8861 = vld [vmem:[#allocation2 + $0x8a0] sm:$0xff]
      %v8862 = vld [vmem:[#allocation2 + $0x8a8] sm:$0xff]
      %v8863 = vld [vmem:[#allocation2 + $0x8b0] sm:$0xff]
      %v8864 = vld [vmem:[#allocation2 + $0x8b8] sm:$0xff]
      %v8865 = vld [vmem:[#allocation2 + $0x8c0] sm:$0xff]
      %v8866 = vld [vmem:[#allocation2 + $0x8c8] sm:$0xff]
      %v8867 = vld [vmem:[#allocation2 + $0x8d0] sm:$0xff]
      %v8868 = vld [vmem:[#allocation2 + $0x8d8] sm:$0xff]
      %v8869 = vld [vmem:[#allocation2 + $0x8e0] sm:$0xff]
      %v8870 = vld [vmem:[#allocation2 + $0x8e8] sm:$0xff]
      %v8871 = vld [vmem:[#allocation2 + $0x8f0] sm:$0xff]
      %v8872 = vld [vmem:[#allocation2 + $0x8f8] sm:$0xff]
      %v8873 = vld [vmem:[#allocation2 + $0x900] sm:$0xff]
      %v8874 = vld [vmem:[#allocation2 + $0x908] sm:$0xff]
      %v8875 = vld [vmem:[#allocation2 + $0x910] sm:$0xff]
      %v8876 = vld [vmem:[#allocation2 + $0x918] sm:$0xff]
      %v8877 = vld [vmem:[#allocation2 + $0x920] sm:$0xff]
      %v8878 = vld [vmem:[#allocation2 + $0x928] sm:$0xff]
      %v8879 = vld [vmem:[#allocation2 + $0x930] sm:$0xff]
      %v8880 = vld [vmem:[#allocation2 + $0x938] sm:$0xff]
      %v8881 = vld [vmem:[#allocation2 + $0x940] sm:$0xff]
      %v8882 = vld [vmem:[#allocation2 + $0x948] sm:$0xff]
      %v8883 = vld [vmem:[#allocation2 + $0x950] sm:$0xff]
      %v8884 = vld [vmem:[#allocation2 + $0x958] sm:$0xff]
      %v8885 = vld [vmem:[#allocation2 + $0x960] sm:$0xff]
      %v8886 = vld [vmem:[#allocation2 + $0x968] sm:$0xff]
      %v8887 = vld [vmem:[#allocation2 + $0x970] sm:$0xff]
      %v8888 = vld [vmem:[#allocation2 + $0x978] sm:$0xff]
      %v8889 = vld [vmem:[#allocation2 + $0x980] sm:$0xff]
      %v8890 = vld [vmem:[#allocation2 + $0x988] sm:$0xff]
      %v8891 = vld [vmem:[#allocation2 + $0x990] sm:$0xff]
      %v8892 = vld [vmem:[#allocation2 + $0x998] sm:$0xff]
      %v8893 = vld [vmem:[#allocation2 + $0x9a0] sm:$0xff]
      %v8894 = vld [vmem:[#allocation2 + $0x9a8] sm:$0xff]
      %v8895 = vld [vmem:[#allocation2 + $0x9b0] sm:$0xff]
      %v8896 = vld [vmem:[#allocation2 + $0x9b8] sm:$0xff]
      %v8897 = vld [vmem:[#allocation2 + $0x9c0] sm:$0xff]
      %v8898 = vld [vmem:[#allocation2 + $0x9c8] sm:$0xff]
      %v8899 = vld [vmem:[#allocation2 + $0x9d0] sm:$0xff]
      %v8900 = vld [vmem:[#allocation2 + $0x9d8] sm:$0xff]
      %v8901 = vld [vmem:[#allocation2 + $0x9e0] sm:$0xff]
      %v8902 = vld [vmem:[#allocation2 + $0x9e8] sm:$0xff]
      %v8903 = vld [vmem:[#allocation2 + $0x9f0] sm:$0xff]
      %v8904 = vld [vmem:[#allocation2 + $0x9f8] sm:$0xff]
      %v8905 = vld [vmem:[#allocation2 + $0xa00] sm:$0xff]
      %v8906 = vld [vmem:[#allocation2 + $0xa08] sm:$0xff]
      %v8907 = vld [vmem:[#allocation2 + $0xa10] sm:$0xff]
      %v8908 = vld [vmem:[#allocation2 + $0xa18] sm:$0xff]
      %v8909 = vld [vmem:[#allocation2 + $0xa20] sm:$0xff]
      %v8910 = vld [vmem:[#allocation2 + $0xa28] sm:$0xff]
      %v8911 = vld [vmem:[#allocation2 + $0xa30] sm:$0xff]
      %v8912 = vld [vmem:[#allocation2 + $0xa38] sm:$0xff]
      %v8913 = vld [vmem:[#allocation2 + $0xa40] sm:$0xff]
      %v8914 = vld [vmem:[#allocation2 + $0xa48] sm:$0xff]
      %v8915 = vld [vmem:[#allocation2 + $0xa50] sm:$0xff]
      %v8916 = vld [vmem:[#allocation2 + $0xa58] sm:$0xff]
      %v8917 = vld [vmem:[#allocation2 + $0xa60] sm:$0xff]
      %v8918 = vld [vmem:[#allocation2 + $0xa68] sm:$0xff]
      %v8919 = vld [vmem:[#allocation2 + $0xa70] sm:$0xff]
      %v8920 = vld [vmem:[#allocation2 + $0xa78] sm:$0xff]
      %v8921 = vld [vmem:[#allocation2 + $0xa80] sm:$0xff]
      %v8922 = vld [vmem:[#allocation2 + $0xa88] sm:$0xff]
      %v8923 = vld [vmem:[#allocation2 + $0xa90] sm:$0xff]
      %v8924 = vld [vmem:[#allocation2 + $0xa98] sm:$0xff]
      %v8925 = vld [vmem:[#allocation2 + $0xaa0] sm:$0xff]
      %v8926 = vld [vmem:[#allocation2 + $0xaa8] sm:$0xff]
      %v8927 = vld [vmem:[#allocation2 + $0xab0] sm:$0xff]
      %v8928 = vld [vmem:[#allocation2 + $0xab8] sm:$0xff]
      %v8929 = vld [vmem:[#allocation2 + $0xac0] sm:$0xff]
      %v8930 = vld [vmem:[#allocation2 + $0xac8] sm:$0xff]
      %v8931 = vld [vmem:[#allocation2 + $0xad0] sm:$0xff]
      %v8932 = vld [vmem:[#allocation2 + $0xad8] sm:$0xff]
      %v8933 = vld [vmem:[#allocation2 + $0xae0] sm:$0xff]
      %v8934 = vld [vmem:[#allocation2 + $0xae8] sm:$0xff]
      %v8935 = vld [vmem:[#allocation2 + $0xaf0] sm:$0xff]
      %v8936 = vld [vmem:[#allocation2 + $0xaf8] sm:$0xff]
      %v8937 = vld [vmem:[#allocation2 + $0xb00] sm:$0xff]
      %v8938 = vld [vmem:[#allocation2 + $0xb08] sm:$0xff]
      %v8939 = vld [vmem:[#allocation2 + $0xb10] sm:$0xff]
      %v8940 = vld [vmem:[#allocation2 + $0xb18] sm:$0xff]
      %v8941 = vld [vmem:[#allocation2 + $0xb20] sm:$0xff]
      %v8942 = vld [vmem:[#allocation2 + $0xb28] sm:$0xff]
      %v8943 = vld [vmem:[#allocation2 + $0xb30] sm:$0xff]
      %v8944 = vld [vmem:[#allocation2 + $0xb38] sm:$0xff]
      %v8945 = vld [vmem:[#allocation2 + $0xb40] sm:$0xff]
      %v8946 = vld [vmem:[#allocation2 + $0xb48] sm:$0xff]
      %v8947 = vld [vmem:[#allocation2 + $0xb50] sm:$0xff]
      %v8948 = vld [vmem:[#allocation2 + $0xb58] sm:$0xff]
      %v8949 = vld [vmem:[#allocation2 + $0xb60] sm:$0xff]
      %v8950 = vld [vmem:[#allocation2 + $0xb68] sm:$0xff]
      %v8951 = vld [vmem:[#allocation2 + $0xb70] sm:$0xff]
      %v8952 = vld [vmem:[#allocation2 + $0xb78] sm:$0xff]
      %v8953 = vld [vmem:[#allocation2 + $0xb80] sm:$0xff]
      %v8954 = vld [vmem:[#allocation2 + $0xb88] sm:$0xff]
      %v8955 = vld [vmem:[#allocation2 + $0xb90] sm:$0xff]
      %v8956 = vld [vmem:[#allocation2 + $0xb98] sm:$0xff]
      %v8957 = vld [vmem:[#allocation2 + $0xba0] sm:$0xff]
      %v8958 = vld [vmem:[#allocation2 + $0xba8] sm:$0xff]
      %v8959 = vld [vmem:[#allocation2 + $0xbb0] sm:$0xff]
      %v8960 = vld [vmem:[#allocation2 + $0xbb8] sm:$0xff]
      %v8961 = vld [vmem:[#allocation2 + $0xbc0] sm:$0xff]
      %v8962 = vld [vmem:[#allocation2 + $0xbc8] sm:$0xff]
      %v8963 = vld [vmem:[#allocation2 + $0xbd0] sm:$0xff]
      %v8964 = vld [vmem:[#allocation2 + $0xbd8] sm:$0xff]
      %v8965 = vld [vmem:[#allocation2 + $0xbe0] sm:$0xff]
      %v8966 = vld [vmem:[#allocation2 + $0xbe8] sm:$0xff]
      %v8967 = vld [vmem:[#allocation2 + $0xbf0] sm:$0xff]
      %v8968 = vld [vmem:[#allocation2 + $0xbf8] sm:$0xff]
      %v8969 = vld [vmem:[#allocation2 + $0xc00] sm:$0xff]
      %v8970 = vld [vmem:[#allocation2 + $0xc08] sm:$0xff]
      %v8971 = vld [vmem:[#allocation2 + $0xc10] sm:$0xff]
      %v8972 = vld [vmem:[#allocation2 + $0xc18] sm:$0xff]
      %v8973 = vld [vmem:[#allocation2 + $0xc20] sm:$0xff]
      %v8974 = vld [vmem:[#allocation2 + $0xc28] sm:$0xff]
      %v8975 = vld [vmem:[#allocation2 + $0xc30] sm:$0xff]
      %v8976 = vld [vmem:[#allocation2 + $0xc38] sm:$0xff]
      %v8977 = vld [vmem:[#allocation2 + $0xc40] sm:$0xff]
      %v8978 = vld [vmem:[#allocation2 + $0xc48] sm:$0xff]
      %v8979 = vld [vmem:[#allocation2 + $0xc50] sm:$0xff]
      %v8980 = vld [vmem:[#allocation2 + $0xc58] sm:$0xff]
      %v8981 = vld [vmem:[#allocation2 + $0xc60] sm:$0xff]
      %v8982 = vld [vmem:[#allocation2 + $0xc68] sm:$0xff]
      %v8983 = vld [vmem:[#allocation2 + $0xc70] sm:$0xff]
      %v8984 = vld [vmem:[%s3] sm:$0xff]
      %8986 = vset.pattern.permute.xlu0 0
      %8987 = vperm.xlu0 %8986, %v8984
      %v8988 = vpop.permute.xlu0 %8987
      %vm8990 = vcmask 916480
      %v8992 = vsel %vm8990, %v8584, 0
      %8994 = vmatprep.subr.bf16.mxu0 %v8586
      %8995 = vmatpush1.bf16.msra.mxu0 %v8585
      %8996 = vmatprep.subr.bf16.mxu0 %v8643
      %8997 = vmatpush1.bf16.msra.mxu0 %v8642
      %8998 = vmatprep.subr.bf16.mxu0 %v8700
      %8999 = vmatpush1.bf16.msra.mxu0 %v8699
      %9000 = vmatprep.subr.bf16.mxu0 %v8757
      %9001 = vmatpush1.bf16.msra.mxu0 %v8756
      %9002 = vmatprep.subr.bf16.mxu0 %v8814
      %9003 = vmatpush1.bf16.msra.mxu0 %v8813
      %9004 = vmatprep.subr.bf16.mxu0 %v8871
      %9005 = vmatpush1.bf16.msra.mxu0 %v8870
      %9006 = vmatprep.subr.bf16.mxu0 %v8928
      %9007 = vmatpush1.bf16.msra.mxu0 %v8927
      %9008 = vmatprep.subr.bf16.mxu0 0
      %9009 = vmatpush1.bf16.msra.mxu0 0
      %9010 = vmatprep.subr.bf16.mxu0 0
      %9011 = vmatpush1.bf16.msra.mxu0 0
      %9012 = vmatprep.subr.bf16.mxu0 0
      %9013 = vmatpush1.bf16.msra.mxu0 0
      %9014 = vmatprep.subr.bf16.mxu0 0
      %9015 = vmatpush1.bf16.msra.mxu0 0
      %9016 = vmatprep.subr.bf16.mxu0 0
      %9017 = vmatpush1.bf16.msra.mxu0 0
      %9018 = vmatprep.subr.bf16.mxu0 0
      %9019 = vmatpush1.bf16.msra.mxu0 0
      %9020 = vmatprep.subr.bf16.mxu0 0
      %9021 = vmatpush1.bf16.msra.mxu0 0
      %9022 = vmatprep.subr.bf16.mxu0 0
      %9023 = vmatpush1.bf16.msra.mxu0 0
      %9024 = vmatprep.subr.bf16.mxu0 0
      %9025 = vmatpush1.bf16.msra.mxu0 0
      %9026 = vmatprep.mubr.bf16.mxu0 0
      %9027 = vmatmul.mubr.bf16.gmra.mrb[0].mxu0 %v8992
      %v9028 = vpop.f32.mrb[0].mxu0
      %v9029 = vadd.f32 %v8988, %v9028
      %v9030 = vpop.f32.mrb[0].mxu0
      %v9031 = vadd.f32 %v8988, %v9030
      %v9032 = vpop.f32.mrb[0].mxu0
      %v9033 = vpop.f32.mrb[0].mxu0
      %9034 = vdwg.mxu0
      %9035 = vmatprep.subr.bf16.mxu0 %v8588
      %9036 = vmatpush1.bf16.msra.mxu0 %v8587
      %9037 = vmatprep.subr.bf16.mxu0 %v8645
      %9038 = vmatpush1.bf16.msra.mxu0 %v8644
      %9039 = vmatprep.subr.bf16.mxu0 %v8702
      %9040 = vmatpush1.bf16.msra.mxu0 %v8701
      %9041 = vmatprep.subr.bf16.mxu0 %v8759
      %9042 = vmatpush1.bf16.msra.mxu0 %v8758
      %9043 = vmatprep.subr.bf16.mxu0 %v8816
      %9044 = vmatpush1.bf16.msra.mxu0 %v8815
      %9045 = vmatprep.subr.bf16.mxu0 %v8873
      %9046 = vmatpush1.bf16.msra.mxu0 %v8872
      %9047 = vmatprep.subr.bf16.mxu0 %v8930
      %9048 = vmatpush1.bf16.msra.mxu0 %v8929
      %9049 = vmatprep.subr.bf16.mxu0 0
      %9050 = vmatpush1.bf16.msra.mxu0 0
      %9051 = vmatprep.subr.bf16.mxu0 0
      %9052 = vmatpush1.bf16.msra.mxu0 0
      %9053 = vmatprep.subr.bf16.mxu0 0
      %9054 = vmatpush1.bf16.msra.mxu0 0
      %9055 = vmatprep.subr.bf16.mxu0 0
      %9056 = vmatpush1.bf16.msra.mxu0 0
      %9057 = vmatprep.subr.bf16.mxu0 0
      %9058 = vmatpush1.bf16.msra.mxu0 0
      %9059 = vmatprep.subr.bf16.mxu0 0
      %9060 = vmatpush1.bf16.msra.mxu0 0
      %9061 = vmatprep.subr.bf16.mxu0 0
      %9062 = vmatpush1.bf16.msra.mxu0 0
      %9063 = vmatprep.subr.bf16.mxu0 0
      %9064 = vmatpush1.bf16.msra.mxu0 0
      %9065 = vmatprep.subr.bf16.mxu0 0
      %9066 = vmatpush1.bf16.msra.mxu0 0
      %9067 = vmatprep.mubr.bf16.mxu0 0
      %9068 = vmatmul.mubr.bf16.gmra.mrb[0].mxu0 %v8992
      %v9069 = vpop.f32.mrb[0].mxu0
      %v9070 = vadd.f32 %v8988, %v9069
      %v9071 = vpop.f32.mrb[0].mxu0
      %v9072 = vadd.f32 %v8988, %v9071
      %v9073 = vpop.f32.mrb[0].mxu0
      %v9074 = vpop.f32.mrb[0].mxu0
      %9075 = vdwg.mxu0
      %9076 = vmatprep.subr.bf16.mxu0 %v8590
      %9077 = vmatpush1.bf16.msra.mxu0 %v8589
      %9078 = vmatprep.subr.bf16.mxu0 %v8647
      %9079 = vmatpush1.bf16.msra.mxu0 %v8646
      %9080 = vmatprep.subr.bf16.mxu0 %v8704
      %9081 = vmatpush1.bf16.msra.mxu0 %v8703
      %9082 = vmatprep.subr.bf16.mxu0 %v8761
      %9083 = vmatpush1.bf16.msra.mxu0 %v8760
      %9084 = vmatprep.subr.bf16.mxu0 %v8818
      %9085 = vmatpush1.bf16.msra.mxu0 %v8817
      %9086 = vmatprep.subr.bf16.mxu0 %v8875
      %9087 = vmatpush1.bf16.msra.mxu0 %v8874
      %9088 = vmatprep.subr.bf16.mxu0 %v8932
      %9089 = vmatpush1.bf16.msra.mxu0 %v8931
      %9090 = vmatprep.subr.bf16.mxu0 0
      %9091 = vmatpush1.bf16.msra.mxu0 0
      %9092 = vmatprep.subr.bf16.mxu0 0
      %9093 = vmatpush1.bf16.msra.mxu0 0
      %9094 = vmatprep.subr.bf16.mxu0 0
      %9095 = vmatpush1.bf16.msra.mxu0 0
      %9096 = vmatprep.subr.bf16.mxu0 0
      %9097 = vmatpush1.bf16.msra.mxu0 0
      %9098 = vmatprep.subr.bf16.mxu0 0
      %9099 = vmatpush1.bf16.msra.mxu0 0
      %9100 = vmatprep.subr.bf16.mxu0 0
      %9101 = vmatpush1.bf16.msra.mxu0 0
      %9102 = vmatprep.subr.bf16.mxu0 0
      %9103 = vmatpush1.bf16.msra.mxu0 0
      %9104 = vmatprep.subr.bf16.mxu0 0
      %9105 = vmatpush1.bf16.msra.mxu0 0
      %9106 = vmatprep.subr.bf16.mxu0 0
      %9107 = vmatpush1.bf16.msra.mxu0 0
      %9108 = vmatprep.mubr.bf16.mxu0 0
      %9109 = vmatmul.mubr.bf16.gmra.mrb[0].mxu0 %v8992
      %v9110 = vpop.f32.mrb[0].mxu0
      %v9111 = vadd.f32 %v8988, %v9110
      %v9112 = vpop.f32.mrb[0].mxu0
      %v9113 = vadd.f32 %v8988, %v9112
      %v9114 = vpop.f32.mrb[0].mxu0
      %v9115 = vpop.f32.mrb[0].mxu0
      %9116 = vdwg.mxu0
      %9117 = vmatprep.subr.bf16.mxu0 %v8592
      %9118 = vmatpush1.bf16.msra.mxu0 %v8591
      %9119 = vmatprep.subr.bf16.mxu0 %v8649
      %9120 = vmatpush1.bf16.msra.mxu0 %v8648
      %9121 = vmatprep.subr.bf16.mxu0 %v8706
      %9122 = vmatpush1.bf16.msra.mxu0 %v8705
      %9123 = vmatprep.subr.bf16.mxu0 %v8763
      %9124 = vmatpush1.bf16.msra.mxu0 %v8762
      %9125 = vmatprep.subr.bf16.mxu0 %v8820
      %9126 = vmatpush1.bf16.msra.mxu0 %v8819
      %9127 = vmatprep.subr.bf16.mxu0 %v8877
      %9128 = vmatpush1.bf16.msra.mxu0 %v8876
      %9129 = vmatprep.subr.bf16.mxu0 %v8934
      %9130 = vmatpush1.bf16.msra.mxu0 %v8933
      %9131 = vmatprep.subr.bf16.mxu0 0
      %9132 = vmatpush1.bf16.msra.mxu0 0
      %9133 = vmatprep.subr.bf16.mxu0 0
      %9134 = vmatpush1.bf16.msra.mxu0 0
      %9135 = vmatprep.subr.bf16.mxu0 0
      %9136 = vmatpush1.bf16.msra.mxu0 0
      %9137 = vmatprep.subr.bf16.mxu0 0
      %9138 = vmatpush1.bf16.msra.mxu0 0
      %9139 = vmatprep.subr.bf16.mxu0 0
      %9140 = vmatpush1.bf16.msra.mxu0 0
      %9141 = vmatprep.subr.bf16.mxu0 0
      %9142 = vmatpush1.bf16.msra.mxu0 0
      %9143 = vmatprep.subr.bf16.mxu0 0
      %9144 = vmatpush1.bf16.msra.mxu0 0
      %9145 = vmatprep.subr.bf16.mxu0 0
      %9146 = vmatpush1.bf16.msra.mxu0 0
      %9147 = vmatprep.subr.bf16.mxu0 0
      %9148 = vmatpush1.bf16.msra.mxu0 0
      %9149 = vmatprep.mubr.bf16.mxu0 0
      %9150 = vmatmul.mubr.bf16.gmra.mrb[0].mxu0 %v8992
      %v9151 = vpop.f32.mrb[0].mxu0
      %v9152 = vadd.f32 %v8988, %v9151
      %v9153 = vpop.f32.mrb[0].mxu0
      %v9154 = vadd.f32 %v8988, %v9153
      %v9155 = vpop.f32.mrb[0].mxu0
      %v9156 = vpop.f32.mrb[0].mxu0
      %9157 = vdwg.mxu0
      %9158 = vmatprep.subr.bf16.mxu0 %v8594
      %9159 = vmatpush1.bf16.msra.mxu0 %v8593
      %9160 = vmatprep.subr.bf16.mxu0 %v8651
      %9161 = vmatpush1.bf16.msra.mxu0 %v8650
      %9162 = vmatprep.subr.bf16.mxu0 %v8708
      %9163 = vmatpush1.bf16.msra.mxu0 %v8707
      %9164 = vmatprep.subr.bf16.mxu0 %v8765
      %9165 = vmatpush1.bf16.msra.mxu0 %v8764
      %9166 = vmatprep.subr.bf16.mxu0 %v8822
      %9167 = vmatpush1.bf16.msra.mxu0 %v8821
      %9168 = vmatprep.subr.bf16.mxu0 %v8879
      %9169 = vmatpush1.bf16.msra.mxu0 %v8878
      %9170 = vmatprep.subr.bf16.mxu0 %v8936
      %9171 = vmatpush1.bf16.msra.mxu0 %v8935
      %9172 = vmatprep.subr.bf16.mxu0 0
      %9173 = vmatpush1.bf16.msra.mxu0 0
      %9174 = vmatprep.subr.bf16.mxu0 0
      %9175 = vmatpush1.bf16.msra.mxu0 0
      %9176 = vmatprep.subr.bf16.mxu0 0
      %9177 = vmatpush1.bf16.msra.mxu0 0
      %9178 = vmatprep.subr.bf16.mxu0 0
      %9179 = vmatpush1.bf16.msra.mxu0 0
      %9180 = vmatprep.subr.bf16.mxu0 0
      %9181 = vmatpush1.bf16.msra.mxu0 0
      %9182 = vmatprep.subr.bf16.mxu0 0
      %9183 = vmatpush1.bf16.msra.mxu0 0
      %9184 = vmatprep.subr.bf16.mxu0 0
      %9185 = vmatpush1.bf16.msra.mxu0 0
      %9186 = vmatprep.subr.bf16.mxu0 0
      %9187 = vmatpush1.bf16.msra.mxu0 0
      %9188 = vmatprep.subr.bf16.mxu0 0
      %9189 = vmatpush1.bf16.msra.mxu0 0
      %9190 = vmatprep.mubr.bf16.mxu0 0
      %9191 = vmatmul.mubr.bf16.gmra.mrb[0].mxu0 %v8992
      %v9192 = vpop.f32.mrb[0].mxu0
      %v9193 = vadd.f32 %v8988, %v9192
      %v9194 = vpop.f32.mrb[0].mxu0
      %v9195 = vadd.f32 %v8988, %v9194
      %v9196 = vpop.f32.mrb[0].mxu0
      %v9197 = vpop.f32.mrb[0].mxu0
      %9198 = vdwg.mxu0
      %9199 = vmatprep.subr.bf16.mxu0 %v8596
      %9200 = vmatpush1.bf16.msra.mxu0 %v8595
      %9201 = vmatprep.subr.bf16.mxu0 %v8653
      %9202 = vmatpush1.bf16.msra.mxu0 %v8652
      %9203 = vmatprep.subr.bf16.mxu0 %v8710
      %9204 = vmatpush1.bf16.msra.mxu0 %v8709
      %9205 = vmatprep.subr.bf16.mxu0 %v8767
      %9206 = vmatpush1.bf16.msra.mxu0 %v8766
      %9207 = vmatprep.subr.bf16.mxu0 %v8824
      %9208 = vmatpush1.bf16.msra.mxu0 %v8823
      %9209 = vmatprep.subr.bf16.mxu0 %v8881
      %9210 = vmatpush1.bf16.msra.mxu0 %v8880
      %9211 = vmatprep.subr.bf16.mxu0 %v8938
      %9212 = vmatpush1.bf16.msra.mxu0 %v8937
      %9213 = vmatprep.subr.bf16.mxu0 0
      %9214 = vmatpush1.bf16.msra.mxu0 0
      %9215 = vmatprep.subr.bf16.mxu0 0
      %9216 = vmatpush1.bf16.msra.mxu0 0
      %9217 = vmatprep.subr.bf16.mxu0 0
      %9218 = vmatpush1.bf16.msra.mxu0 0
      %9219 = vmatprep.subr.bf16.mxu0 0
      %9220 = vmatpush1.bf16.msra.mxu0 0
      %9221 = vmatprep.subr.bf16.mxu0 0
      %9222 = vmatpush1.bf16.msra.mxu0 0
      %9223 = vmatprep.subr.bf16.mxu0 0
      %9224 = vmatpush1.bf16.msra.mxu0 0
      %9225 = vmatprep.subr.bf16.mxu0 0
      %9226 = vmatpush1.bf16.msra.mxu0 0
      %9227 = vmatprep.subr.bf16.mxu0 0
      %9228 = vmatpush1.bf16.msra.mxu0 0
      %9229 = vmatprep.subr.bf16.mxu0 0
      %9230 = vmatpush1.bf16.msra.mxu0 0
      %9231 = vmatprep.mubr.bf16.mxu0 0
      %9232 = vmatmul.mubr.bf16.gmra.mrb[0].mxu0 %v8992
      %v9233 = vpop.f32.mrb[0].mxu0
      %v9234 = vadd.f32 %v8988, %v9233
      %v9235 = vpop.f32.mrb[0].mxu0
      %v9236 = vadd.f32 %v8988, %v9235
      %v9237 = vpop.f32.mrb[0].mxu0
      %v9238 = vpop.f32.mrb[0].mxu0
      %9239 = vdwg.mxu0
      %9240 = vmatprep.subr.bf16.mxu0 %v8598
      %9241 = vmatpush1.bf16.msra.mxu0 %v8597
      %9242 = vmatprep.subr.bf16.mxu0 %v8655
      %9243 = vmatpush1.bf16.msra.mxu0 %v8654
      %9244 = vmatprep.subr.bf16.mxu0 %v8712
      %9245 = vmatpush1.bf16.msra.mxu0 %v8711
      %9246 = vmatprep.subr.bf16.mxu0 %v8769
      %9247 = vmatpush1.bf16.msra.mxu0 %v8768
      %9248 = vmatprep.subr.bf16.mxu0 %v8826
      %9249 = vmatpush1.bf16.msra.mxu0 %v8825
      %9250 = vmatprep.subr.bf16.mxu0 %v8883
      %9251 = vmatpush1.bf16.msra.mxu0 %v8882
      %9252 = vmatprep.subr.bf16.mxu0 %v8940
      %9253 = vmatpush1.bf16.msra.mxu0 %v8939
      %9254 = vmatprep.subr.bf16.mxu0 0
      %9255 = vmatpush1.bf16.msra.mxu0 0
      %9256 = vmatprep.subr.bf16.mxu0 0
      %9257 = vmatpush1.bf16.msra.mxu0 0
      %9258 = vmatprep.subr.bf16.mxu0 0
      %9259 = vmatpush1.bf16.msra.mxu0 0
      %9260 = vmatprep.subr.bf16.mxu0 0
      %9261 = vmatpush1.bf16.msra.mxu0 0
      %9262 = vmatprep.subr.bf16.mxu0 0
      %9263 = vmatpush1.bf16.msra.mxu0 0
      %9264 = vmatprep.subr.bf16.mxu0 0
      %9265 = vmatpush1.bf16.msra.mxu0 0
      %9266 = vmatprep.subr.bf16.mxu0 0
      %9267 = vmatpush1.bf16.msra.mxu0 0
      %9268 = vmatprep.subr.bf16.mxu0 0
      %9269 = vmatpush1.bf16.msra.mxu0 0
      %9270 = vmatprep.subr.bf16.mxu0 0
      %9271 = vmatpush1.bf16.msra.mxu0 0
      %9272 = vmatprep.mubr.bf16.mxu0 0
      %9273 = vmatmul.mubr.bf16.gmra.mrb[0].mxu0 %v8992
      %v9274 = vpop.f32.mrb[0].mxu0
      %v9275 = vadd.f32 %v8988, %v9274
      %v9276 = vpop.f32.mrb[0].mxu0
      %v9277 = vadd.f32 %v8988, %v9276
      %v9278 = vpop.f32.mrb[0].mxu0
      %v9279 = vpop.f32.mrb[0].mxu0
      %9280 = vdwg.mxu0
      %9281 = vmatprep.subr.bf16.mxu0 %v8600
      %9282 = vmatpush1.bf16.msra.mxu0 %v8599
      %9283 = vmatprep.subr.bf16.mxu0 %v8657
      %9284 = vmatpush1.bf16.msra.mxu0 %v8656
      %9285 = vmatprep.subr.bf16.mxu0 %v8714
      %9286 = vmatpush1.bf16.msra.mxu0 %v8713
      %9287 = vmatprep.subr.bf16.mxu0 %v8771
      %9288 = vmatpush1.bf16.msra.mxu0 %v8770
      %9289 = vmatprep.subr.bf16.mxu0 %v8828
      %9290 = vmatpush1.bf16.msra.mxu0 %v8827
      %9291 = vmatprep.subr.bf16.mxu0 %v8885
      %9292 = vmatpush1.bf16.msra.mxu0 %v8884
      %9293 = vmatprep.subr.bf16.mxu0 %v8942
      %9294 = vmatpush1.bf16.msra.mxu0 %v8941
      %9295 = vmatprep.subr.bf16.mxu0 0
      %9296 = vmatpush1.bf16.msra.mxu0 0
      %9297 = vmatprep.subr.bf16.mxu0 0
      %9298 = vmatpush1.bf16.msra.mxu0 0
      %9299 = vmatprep.subr.bf16.mxu0 0
      %9300 = vmatpush1.bf16.msra.mxu0 0
      %9301 = vmatprep.subr.bf16.mxu0 0
      %9302 = vmatpush1.bf16.msra.mxu0 0
      %9303 = vmatprep.subr.bf16.mxu0 0
      %9304 = vmatpush1.bf16.msra.mxu0 0
      %9305 = vmatprep.subr.bf16.mxu0 0
      %9306 = vmatpush1.bf16.msra.mxu0 0
      %9307 = vmatprep.subr.bf16.mxu0 0
      %9308 = vmatpush1.bf16.msra.mxu0 0
      %9309 = vmatprep.subr.bf16.mxu0 0
      %9310 = vmatpush1.bf16.msra.mxu0 0
      %9311 = vmatprep.subr.bf16.mxu0 0
      %9312 = vmatpush1.bf16.msra.mxu0 0
      %9313 = vmatprep.mubr.bf16.mxu0 0
      %9314 = vmatmul.mubr.bf16.gmra.mrb[0].mxu0 %v8992
      %v9315 = vpop.f32.mrb[0].mxu0
      %v9316 = vadd.f32 %v8988, %v9315
      %v9317 = vpop.f32.mrb[0].mxu0
      %v9318 = vadd.f32 %v8988, %v9317
      %v9319 = vpop.f32.mrb[0].mxu0
      %v9320 = vpop.f32.mrb[0].mxu0
      %9321 = vdwg.mxu0
      %9322 = vmatprep.subr.bf16.mxu0 %v8602
      %9323 = vmatpush1.bf16.msra.mxu0 %v8601
      %9324 = vmatprep.subr.bf16.mxu0 %v8659
      %9325 = vmatpush1.bf16.msra.mxu0 %v8658
      %9326 = vmatprep.subr.bf16.mxu0 %v8716
      %9327 = vmatpush1.bf16.msra.mxu0 %v8715
      %9328 = vmatprep.subr.bf16.mxu0 %v8773
      %9329 = vmatpush1.bf16.msra.mxu0 %v8772
      %9330 = vmatprep.subr.bf16.mxu0 %v8830
      %9331 = vmatpush1.bf16.msra.mxu0 %v8829
      %9332 = vmatprep.subr.bf16.mxu0 %v8887
      %9333 = vmatpush1.bf16.msra.mxu0 %v8886
      %9334 = vmatprep.subr.bf16.mxu0 %v8944
      %9335 = vmatpush1.bf16.msra.mxu0 %v8943
      %9336 = vmatprep.subr.bf16.mxu0 0
      %9337 = vmatpush1.bf16.msra.mxu0 0
      %9338 = vmatprep.subr.bf16.mxu0 0
      %9339 = vmatpush1.bf16.msra.mxu0 0
      %9340 = vmatprep.subr.bf16.mxu0 0
      %9341 = vmatpush1.bf16.msra.mxu0 0
      %9342 = vmatprep.subr.bf16.mxu0 0
      %9343 = vmatpush1.bf16.msra.mxu0 0
      %9344 = vmatprep.subr.bf16.mxu0 0
      %9345 = vmatpush1.bf16.msra.mxu0 0
      %9346 = vmatprep.subr.bf16.mxu0 0
      %9347 = vmatpush1.bf16.msra.mxu0 0
      %9348 = vmatprep.subr.bf16.mxu0 0
      %9349 = vmatpush1.bf16.msra.mxu0 0
      %9350 = vmatprep.subr.bf16.mxu0 0
      %9351 = vmatpush1.bf16.msra.mxu0 0
      %9352 = vmatprep.subr.bf16.mxu0 0
      %9353 = vmatpush1.bf16.msra.mxu0 0
      %9354 = vmatprep.mubr.bf16.mxu0 0
      %9355 = vmatmul.mubr.bf16.gmra.mrb[0].mxu0 %v8992
      %v9356 = vpop.f32.mrb[0].mxu0
      %v9357 = vadd.f32 %v8988, %v9356
      %v9358 = vpop.f32.mrb[0].mxu0
      %v9359 = vadd.f32 %v8988, %v9358
      %v9360 = vpop.f32.mrb[0].mxu0
      %v9361 = vpop.f32.mrb[0].mxu0
      %9362 = vdwg.mxu0
      %9363 = vmatprep.subr.bf16.mxu0 %v8604
      %9364 = vmatpush1.bf16.msra.mxu0 %v8603
      %9365 = vmatprep.subr.bf16.mxu0 %v8661
      %9366 = vmatpush1.bf16.msra.mxu0 %v8660
      %9367 = vmatprep.subr.bf16.mxu0 %v8718
      %9368 = vmatpush1.bf16.msra.mxu0 %v8717
      %9369 = vmatprep.subr.bf16.mxu0 %v8775
      %9370 = vmatpush1.bf16.msra.mxu0 %v8774
      %9371 = vmatprep.subr.bf16.mxu0 %v8832
      %9372 = vmatpush1.bf16.msra.mxu0 %v8831
      %9373 = vmatprep.subr.bf16.mxu0 %v8889
      %9374 = vmatpush1.bf16.msra.mxu0 %v8888
      %9375 = vmatprep.subr.bf16.mxu0 %v8946
      %9376 = vmatpush1.bf16.msra.mxu0 %v8945
      %9377 = vmatprep.subr.bf16.mxu0 0
      %9378 = vmatpush1.bf16.msra.mxu0 0
      %9379 = vmatprep.subr.bf16.mxu0 0
      %9380 = vmatpush1.bf16.msra.mxu0 0
      %9381 = vmatprep.subr.bf16.mxu0 0
      %9382 = vmatpush1.bf16.msra.mxu0 0
      %9383 = vmatprep.subr.bf16.mxu0 0
      %9384 = vmatpush1.bf16.msra.mxu0 0
      %9385 = vmatprep.subr.bf16.mxu0 0
      %9386 = vmatpush1.bf16.msra.mxu0 0
      %9387 = vmatprep.subr.bf16.mxu0 0
      %9388 = vmatpush1.bf16.msra.mxu0 0
      %9389 = vmatprep.subr.bf16.mxu0 0
      %9390 = vmatpush1.bf16.msra.mxu0 0
      %9391 = vmatprep.subr.bf16.mxu0 0
      %9392 = vmatpush1.bf16.msra.mxu0 0
      %9393 = vmatprep.subr.bf16.mxu0 0
      %9394 = vmatpush1.bf16.msra.mxu0 0
      %9395 = vmatprep.mubr.bf16.mxu0 0
      %9396 = vmatmul.mubr.bf16.gmra.mrb[0].mxu0 %v8992
      %v9397 = vpop.f32.mrb[0].mxu0
      %v9398 = vadd.f32 %v8988, %v9397
      %v9399 = vpop.f32.mrb[0].mxu0
      %v9400 = vadd.f32 %v8988, %v9399
      %v9401 = vpop.f32.mrb[0].mxu0
      %v9402 = vpop.f32.mrb[0].mxu0
      %9403 = vdwg.mxu0
      %9404 = vmatprep.subr.bf16.mxu0 %v8606
      %9405 = vmatpush1.bf16.msra.mxu0 %v8605
      %9406 = vmatprep.subr.bf16.mxu0 %v8663
      %9407 = vmatpush1.bf16.msra.mxu0 %v8662
      %9408 = vmatprep.subr.bf16.mxu0 %v8720
      %9409 = vmatpush1.bf16.msra.mxu0 %v8719
      %9410 = vmatprep.subr.bf16.mxu0 %v8777
      %9411 = vmatpush1.bf16.msra.mxu0 %v8776
      %9412 = vmatprep.subr.bf16.mxu0 %v8834
      %9413 = vmatpush1.bf16.msra.mxu0 %v8833
      %9414 = vmatprep.subr.bf16.mxu0 %v8891
      %9415 = vmatpush1.bf16.msra.mxu0 %v8890
      %9416 = vmatprep.subr.bf16.mxu0 %v8948
      %9417 = vmatpush1.bf16.msra.mxu0 %v8947
      %9418 = vmatprep.subr.bf16.mxu0 0
      %9419 = vmatpush1.bf16.msra.mxu0 0
      %9420 = vmatprep.subr.bf16.mxu0 0
      %9421 = vmatpush1.bf16.msra.mxu0 0
      %9422 = vmatprep.subr.bf16.mxu0 0
      %9423 = vmatpush1.bf16.msra.mxu0 0
      %9424 = vmatprep.subr.bf16.mxu0 0
      %9425 = vmatpush1.bf16.msra.mxu0 0
      %9426 = vmatprep.subr.bf16.mxu0 0
      %9427 = vmatpush1.bf16.msra.mxu0 0
      %9428 = vmatprep.subr.bf16.mxu0 0
      %9429 = vmatpush1.bf16.msra.mxu0 0
      %9430 = vmatprep.subr.bf16.mxu0 0
      %9431 = vmatpush1.bf16.msra.mxu0 0
      %9432 = vmatprep.subr.bf16.mxu0 0
      %9433 = vmatpush1.bf16.msra.mxu0 0
      %9434 = vmatprep.subr.bf16.mxu0 0
      %9435 = vmatpush1.bf16.msra.mxu0 0
      %9436 = vmatprep.mubr.bf16.mxu0 0
      %9437 = vmatmul.mubr.bf16.gmra.mrb[0].mxu0 %v8992
      %v9438 = vpop.f32.mrb[0].mxu0
      %v9439 = vadd.f32 %v8988, %v9438
      %v9440 = vpop.f32.mrb[0].mxu0
      %v9441 = vadd.f32 %v8988, %v9440
      %v9442 = vpop.f32.mrb[0].mxu0
      %v9443 = vpop.f32.mrb[0].mxu0
      %9444 = vdwg.mxu0
      %9445 = vmatprep.subr.bf16.mxu0 %v8608
      %9446 = vmatpush1.bf16.msra.mxu0 %v8607
      %9447 = vmatprep.subr.bf16.mxu0 %v8665
      %9448 = vmatpush1.bf16.msra.mxu0 %v8664
      %9449 = vmatprep.subr.bf16.mxu0 %v8722
      %9450 = vmatpush1.bf16.msra.mxu0 %v8721
      %9451 = vmatprep.subr.bf16.mxu0 %v8779
      %9452 = vmatpush1.bf16.msra.mxu0 %v8778
      %9453 = vmatprep.subr.bf16.mxu0 %v8836
      %9454 = vmatpush1.bf16.msra.mxu0 %v8835
      %9455 = vmatprep.subr.bf16.mxu0 %v8893
      %9456 = vmatpush1.bf16.msra.mxu0 %v8892
      %9457 = vmatprep.subr.bf16.mxu0 %v8950
      %9458 = vmatpush1.bf16.msra.mxu0 %v8949
      %9459 = vmatprep.subr.bf16.mxu0 0
      %9460 = vmatpush1.bf16.msra.mxu0 0
      %9461 = vmatprep.subr.bf16.mxu0 0
      %9462 = vmatpush1.bf16.msra.mxu0 0
      %9463 = vmatprep.subr.bf16.mxu0 0
      %9464 = vmatpush1.bf16.msra.mxu0 0
      %9465 = vmatprep.subr.bf16.mxu0 0
      %9466 = vmatpush1.bf16.msra.mxu0 0
      %9467 = vmatprep.subr.bf16.mxu0 0
      %9468 = vmatpush1.bf16.msra.mxu0 0
      %9469 = vmatprep.subr.bf16.mxu0 0
      %9470 = vmatpush1.bf16.msra.mxu0 0
      %9471 = vmatprep.subr.bf16.mxu0 0
      %9472 = vmatpush1.bf16.msra.mxu0 0
      %9473 = vmatprep.subr.bf16.mxu0 0
      %9474 = vmatpush1.bf16.msra.mxu0 0
      %9475 = vmatprep.subr.bf16.mxu0 0
      %9476 = vmatpush1.bf16.msra.mxu0 0
      %9477 = vmatprep.mubr.bf16.mxu0 0
      %9478 = vmatmul.mubr.bf16.gmra.mrb[0].mxu0 %v8992
      %v9479 = vpop.f32.mrb[0].mxu0
      %v9480 = vadd.f32 %v8988, %v9479
      %v9481 = vpop.f32.mrb[0].mxu0
      %v9482 = vadd.f32 %v8988, %v9481
      %v9483 = vpop.f32.mrb[0].mxu0
      %v9484 = vpop.f32.mrb[0].mxu0
      %9485 = vdwg.mxu0
      %9486 = vmatprep.subr.bf16.mxu0 %v8610
      %9487 = vmatpush1.bf16.msra.mxu0 %v8609
      %9488 = vmatprep.subr.bf16.mxu0 %v8667
      %9489 = vmatpush1.bf16.msra.mxu0 %v8666
      %9490 = vmatprep.subr.bf16.mxu0 %v8724
      %9491 = vmatpush1.bf16.msra.mxu0 %v8723
      %9492 = vmatprep.subr.bf16.mxu0 %v8781
      %9493 = vmatpush1.bf16.msra.mxu0 %v8780
      %9494 = vmatprep.subr.bf16.mxu0 %v8838
      %9495 = vmatpush1.bf16.msra.mxu0 %v8837
      %9496 = vmatprep.subr.bf16.mxu0 %v8895
      %9497 = vmatpush1.bf16.msra.mxu0 %v8894
      %9498 = vmatprep.subr.bf16.mxu0 %v8952
      %9499 = vmatpush1.bf16.msra.mxu0 %v8951
      %9500 = vmatprep.subr.bf16.mxu0 0
      %9501 = vmatpush1.bf16.msra.mxu0 0
      %9502 = vmatprep.subr.bf16.mxu0 0
      %9503 = vmatpush1.bf16.msra.mxu0 0
      %9504 = vmatprep.subr.bf16.mxu0 0
      %9505 = vmatpush1.bf16.msra.mxu0 0
      %9506 = vmatprep.subr.bf16.mxu0 0
      %9507 = vmatpush1.bf16.msra.mxu0 0
      %9508 = vmatprep.subr.bf16.mxu0 0
      %9509 = vmatpush1.bf16.msra.mxu0 0
      %9510 = vmatprep.subr.bf16.mxu0 0
      %9511 = vmatpush1.bf16.msra.mxu0 0
      %9512 = vmatprep.subr.bf16.mxu0 0
      %9513 = vmatpush1.bf16.msra.mxu0 0
      %9514 = vmatprep.subr.bf16.mxu0 0
      %9515 = vmatpush1.bf16.msra.mxu0 0
      %9516 = vmatprep.subr.bf16.mxu0 0
      %9517 = vmatpush1.bf16.msra.mxu0 0
      %9518 = vmatprep.mubr.bf16.mxu0 0
      %9519 = vmatmul.mubr.bf16.gmra.mrb[0].mxu0 %v8992
      %v9520 = vpop.f32.mrb[0].mxu0
      %v9521 = vadd.f32 %v8988, %v9520
      %v9522 = vpop.f32.mrb[0].mxu0
      %v9523 = vadd.f32 %v8988, %v9522
      %v9524 = vpop.f32.mrb[0].mxu0
      %v9525 = vpop.f32.mrb[0].mxu0
      %9526 = vdwg.mxu0
      %9527 = vmatprep.subr.bf16.mxu0 %v8612
      %9528 = vmatpush1.bf16.msra.mxu0 %v8611
      %9529 = vmatprep.subr.bf16.mxu0 %v8669
      %9530 = vmatpush1.bf16.msra.mxu0 %v8668
      %9531 = vmatprep.subr.bf16.mxu0 %v8726
      %9532 = vmatpush1.bf16.msra.mxu0 %v8725
      %9533 = vmatprep.subr.bf16.mxu0 %v8783
      %9534 = vmatpush1.bf16.msra.mxu0 %v8782
      %9535 = vmatprep.subr.bf16.mxu0 %v8840
      %9536 = vmatpush1.bf16.msra.mxu0 %v8839
      %9537 = vmatprep.subr.bf16.mxu0 %v8897
      %9538 = vmatpush1.bf16.msra.mxu0 %v8896
      %9539 = vmatprep.subr.bf16.mxu0 %v8954
      %9540 = vmatpush1.bf16.msra.mxu0 %v8953
      %9541 = vmatprep.subr.bf16.mxu0 0
      %9542 = vmatpush1.bf16.msra.mxu0 0
      %9543 = vmatprep.subr.bf16.mxu0 0
      %9544 = vmatpush1.bf16.msra.mxu0 0
      %9545 = vmatprep.subr.bf16.mxu0 0
      %9546 = vmatpush1.bf16.msra.mxu0 0
      %9547 = vmatprep.subr.bf16.mxu0 0
      %9548 = vmatpush1.bf16.msra.mxu0 0
      %9549 = vmatprep.subr.bf16.mxu0 0
      %9550 = vmatpush1.bf16.msra.mxu0 0
      %9551 = vmatprep.subr.bf16.mxu0 0
      %9552 = vmatpush1.bf16.msra.mxu0 0
      %9553 = vmatprep.subr.bf16.mxu0 0
      %9554 = vmatpush1.bf16.msra.mxu0 0
      %9555 = vmatprep.subr.bf16.mxu0 0
      %9556 = vmatpush1.bf16.msra.mxu0 0
      %9557 = vmatprep.subr.bf16.mxu0 0
      %9558 = vmatpush1.bf16.msra.mxu0 0
      %9559 = vmatprep.mubr.bf16.mxu0 0
      %9560 = vmatmul.mubr.bf16.gmra.mrb[0].mxu0 %v8992
      %v9561 = vpop.f32.mrb[0].mxu0
      %v9562 = vadd.f32 %v8988, %v9561
      %v9563 = vpop.f32.mrb[0].mxu0
      %v9564 = vadd.f32 %v8988, %v9563
      %v9565 = vpop.f32.mrb[0].mxu0
      %v9566 = vpop.f32.mrb[0].mxu0
      %9567 = vdwg.mxu0
      %9568 = vmatprep.subr.bf16.mxu0 %v8614
      %9569 = vmatpush1.bf16.msra.mxu0 %v8613
      %9570 = vmatprep.subr.bf16.mxu0 %v8671
      %9571 = vmatpush1.bf16.msra.mxu0 %v8670
      %9572 = vmatprep.subr.bf16.mxu0 %v8728
      %9573 = vmatpush1.bf16.msra.mxu0 %v8727
      %9574 = vmatprep.subr.bf16.mxu0 %v8785
      %9575 = vmatpush1.bf16.msra.mxu0 %v8784
      %9576 = vmatprep.subr.bf16.mxu0 %v8842
      %9577 = vmatpush1.bf16.msra.mxu0 %v8841
      %9578 = vmatprep.subr.bf16.mxu0 %v8899
      %9579 = vmatpush1.bf16.msra.mxu0 %v8898
      %9580 = vmatprep.subr.bf16.mxu0 %v8956
      %9581 = vmatpush1.bf16.msra.mxu0 %v8955
      %9582 = vmatprep.subr.bf16.mxu0 0
      %9583 = vmatpush1.bf16.msra.mxu0 0
      %9584 = vmatprep.subr.bf16.mxu0 0
      %9585 = vmatpush1.bf16.msra.mxu0 0
      %9586 = vmatprep.subr.bf16.mxu0 0
      %9587 = vmatpush1.bf16.msra.mxu0 0
      %9588 = vmatprep.subr.bf16.mxu0 0
      %9589 = vmatpush1.bf16.msra.mxu0 0
      %9590 = vmatprep.subr.bf16.mxu0 0
      %9591 = vmatpush1.bf16.msra.mxu0 0
      %9592 = vmatprep.subr.bf16.mxu0 0
      %9593 = vmatpush1.bf16.msra.mxu0 0
      %9594 = vmatprep.subr.bf16.mxu0 0
      %9595 = vmatpush1.bf16.msra.mxu0 0
      %9596 = vmatprep.subr.bf16.mxu0 0
      %9597 = vmatpush1.bf16.msra.mxu0 0
      %9598 = vmatprep.subr.bf16.mxu0 0
      %9599 = vmatpush1.bf16.msra.mxu0 0
      %9600 = vmatprep.mubr.bf16.mxu0 0
      %9601 = vmatmul.mubr.bf16.gmra.mrb[0].mxu0 %v8992
      %v9602 = vpop.f32.mrb[0].mxu0
      %v9603 = vadd.f32 %v8988, %v9602
      %v9604 = vpop.f32.mrb[0].mxu0
      %v9605 = vadd.f32 %v8988, %v9604
      %v9606 = vpop.f32.mrb[0].mxu0
      %v9607 = vpop.f32.mrb[0].mxu0
      %9608 = vdwg.mxu0
      %9609 = vmatprep.subr.bf16.mxu0 %v8616
      %9610 = vmatpush1.bf16.msra.mxu0 %v8615
      %9611 = vmatprep.subr.bf16.mxu0 %v8673
      %9612 = vmatpush1.bf16.msra.mxu0 %v8672
      %9613 = vmatprep.subr.bf16.mxu0 %v8730
      %9614 = vmatpush1.bf16.msra.mxu0 %v8729
      %9615 = vmatprep.subr.bf16.mxu0 %v8787
      %9616 = vmatpush1.bf16.msra.mxu0 %v8786
      %9617 = vmatprep.subr.bf16.mxu0 %v8844
      %9618 = vmatpush1.bf16.msra.mxu0 %v8843
      %9619 = vmatprep.subr.bf16.mxu0 %v8901
      %9620 = vmatpush1.bf16.msra.mxu0 %v8900
      %9621 = vmatprep.subr.bf16.mxu0 %v8958
      %9622 = vmatpush1.bf16.msra.mxu0 %v8957
      %9623 = vmatprep.subr.bf16.mxu0 0
      %9624 = vmatpush1.bf16.msra.mxu0 0
      %9625 = vmatprep.subr.bf16.mxu0 0
      %9626 = vmatpush1.bf16.msra.mxu0 0
      %9627 = vmatprep.subr.bf16.mxu0 0
      %9628 = vmatpush1.bf16.msra.mxu0 0
      %9629 = vmatprep.subr.bf16.mxu0 0
      %9630 = vmatpush1.bf16.msra.mxu0 0
      %9631 = vmatprep.subr.bf16.mxu0 0
      %9632 = vmatpush1.bf16.msra.mxu0 0
      %9633 = vmatprep.subr.bf16.mxu0 0
      %9634 = vmatpush1.bf16.msra.mxu0 0
      %9635 = vmatprep.subr.bf16.mxu0 0
      %9636 = vmatpush1.bf16.msra.mxu0 0
      %9637 = vmatprep.subr.bf16.mxu0 0
      %9638 = vmatpush1.bf16.msra.mxu0 0
      %9639 = vmatprep.subr.bf16.mxu0 0
      %9640 = vmatpush1.bf16.msra.mxu0 0
      %9641 = vmatprep.mubr.bf16.mxu0 0
      %9642 = vmatmul.mubr.bf16.gmra.mrb[0].mxu0 %v8992
      %v9643 = vpop.f32.mrb[0].mxu0
      %v9644 = vadd.f32 %v8988, %v9643
      %v9645 = vpop.f32.mrb[0].mxu0
      %v9646 = vadd.f32 %v8988, %v9645
      %v9647 = vpop.f32.mrb[0].mxu0
      %v9648 = vpop.f32.mrb[0].mxu0
      %9649 = vdwg.mxu0
      %9650 = vmatprep.subr.bf16.mxu0 %v8618
      %9651 = vmatpush1.bf16.msra.mxu0 %v8617
      %9652 = vmatprep.subr.bf16.mxu0 %v8675
      %9653 = vmatpush1.bf16.msra.mxu0 %v8674
      %9654 = vmatprep.subr.bf16.mxu0 %v8732
      %9655 = vmatpush1.bf16.msra.mxu0 %v8731
      %9656 = vmatprep.subr.bf16.mxu0 %v8789
      %9657 = vmatpush1.bf16.msra.mxu0 %v8788
      %9658 = vmatprep.subr.bf16.mxu0 %v8846
      %9659 = vmatpush1.bf16.msra.mxu0 %v8845
      %9660 = vmatprep.subr.bf16.mxu0 %v8903
      %9661 = vmatpush1.bf16.msra.mxu0 %v8902
      %9662 = vmatprep.subr.bf16.mxu0 %v8960
      %9663 = vmatpush1.bf16.msra.mxu0 %v8959
      %9664 = vmatprep.subr.bf16.mxu0 0
      %9665 = vmatpush1.bf16.msra.mxu0 0
      %9666 = vmatprep.subr.bf16.mxu0 0
      %9667 = vmatpush1.bf16.msra.mxu0 0
      %9668 = vmatprep.subr.bf16.mxu0 0
      %9669 = vmatpush1.bf16.msra.mxu0 0
      %9670 = vmatprep.subr.bf16.mxu0 0
      %9671 = vmatpush1.bf16.msra.mxu0 0
      %9672 = vmatprep.subr.bf16.mxu0 0
      %9673 = vmatpush1.bf16.msra.mxu0 0
      %9674 = vmatprep.subr.bf16.mxu0 0
      %9675 = vmatpush1.bf16.msra.mxu0 0
      %9676 = vmatprep.subr.bf16.mxu0 0
      %9677 = vmatpush1.bf16.msra.mxu0 0
      %9678 = vmatprep.subr.bf16.mxu0 0
      %9679 = vmatpush1.bf16.msra.mxu0 0
      %9680 = vmatprep.subr.bf16.mxu0 0
      %9681 = vmatpush1.bf16.msra.mxu0 0
      %9682 = vmatprep.mubr.bf16.mxu0 0
      %9683 = vmatmul.mubr.bf16.gmra.mrb[0].mxu0 %v8992
      %v9684 = vpop.f32.mrb[0].mxu0
      %v9685 = vadd.f32 %v8988, %v9684
      %v9686 = vpop.f32.mrb[0].mxu0
      %v9687 = vadd.f32 %v8988, %v9686
      %v9688 = vpop.f32.mrb[0].mxu0
      %v9689 = vpop.f32.mrb[0].mxu0
      %9690 = vdwg.mxu0
      %9691 = vmatprep.subr.bf16.mxu0 %v8620
      %9692 = vmatpush1.bf16.msra.mxu0 %v8619
      %9693 = vmatprep.subr.bf16.mxu0 %v8677
      %9694 = vmatpush1.bf16.msra.mxu0 %v8676
      %9695 = vmatprep.subr.bf16.mxu0 %v8734
      %9696 = vmatpush1.bf16.msra.mxu0 %v8733
      %9697 = vmatprep.subr.bf16.mxu0 %v8791
      %9698 = vmatpush1.bf16.msra.mxu0 %v8790
      %9699 = vmatprep.subr.bf16.mxu0 %v8848
      %9700 = vmatpush1.bf16.msra.mxu0 %v8847
      %9701 = vmatprep.subr.bf16.mxu0 %v8905
      %9702 = vmatpush1.bf16.msra.mxu0 %v8904
      %9703 = vmatprep.subr.bf16.mxu0 %v8962
      %9704 = vmatpush1.bf16.msra.mxu0 %v8961
      %9705 = vmatprep.subr.bf16.mxu0 0
      %9706 = vmatpush1.bf16.msra.mxu0 0
      %9707 = vmatprep.subr.bf16.mxu0 0
      %9708 = vmatpush1.bf16.msra.mxu0 0
      %9709 = vmatprep.subr.bf16.mxu0 0
      %9710 = vmatpush1.bf16.msra.mxu0 0
      %9711 = vmatprep.subr.bf16.mxu0 0
      %9712 = vmatpush1.bf16.msra.mxu0 0
      %9713 = vmatprep.subr.bf16.mxu0 0
      %9714 = vmatpush1.bf16.msra.mxu0 0
      %9715 = vmatprep.subr.bf16.mxu0 0
      %9716 = vmatpush1.bf16.msra.mxu0 0
      %9717 = vmatprep.subr.bf16.mxu0 0
      %9718 = vmatpush1.bf16.msra.mxu0 0
      %9719 = vmatprep.subr.bf16.mxu0 0
      %9720 = vmatpush1.bf16.msra.mxu0 0
      %9721 = vmatprep.subr.bf16.mxu0 0
      %9722 = vmatpush1.bf16.msra.mxu0 0
      %9723 = vmatprep.mubr.bf16.mxu0 0
      %9724 = vmatmul.mubr.bf16.gmra.mrb[0].mxu0 %v8992
      %v9725 = vpop.f32.mrb[0].mxu0
      %v9726 = vadd.f32 %v8988, %v9725
      %v9727 = vpop.f32.mrb[0].mxu0
      %v9728 = vadd.f32 %v8988, %v9727
      %v9729 = vpop.f32.mrb[0].mxu0
      %v9730 = vpop.f32.mrb[0].mxu0
      %9731 = vdwg.mxu0
      %9732 = vmatprep.subr.bf16.mxu0 %v8622
      %9733 = vmatpush1.bf16.msra.mxu0 %v8621
      %9734 = vmatprep.subr.bf16.mxu0 %v8679
      %9735 = vmatpush1.bf16.msra.mxu0 %v8678
      %9736 = vmatprep.subr.bf16.mxu0 %v8736
      %9737 = vmatpush1.bf16.msra.mxu0 %v8735
      %9738 = vmatprep.subr.bf16.mxu0 %v8793
      %9739 = vmatpush1.bf16.msra.mxu0 %v8792
      %9740 = vmatprep.subr.bf16.mxu0 %v8850
      %9741 = vmatpush1.bf16.msra.mxu0 %v8849
      %9742 = vmatprep.subr.bf16.mxu0 %v8907
      %9743 = vmatpush1.bf16.msra.mxu0 %v8906
      %9744 = vmatprep.subr.bf16.mxu0 %v8964
      %9745 = vmatpush1.bf16.msra.mxu0 %v8963
      %9746 = vmatprep.subr.bf16.mxu0 0
      %9747 = vmatpush1.bf16.msra.mxu0 0
      %9748 = vmatprep.subr.bf16.mxu0 0
      %9749 = vmatpush1.bf16.msra.mxu0 0
      %9750 = vmatprep.subr.bf16.mxu0 0
      %9751 = vmatpush1.bf16.msra.mxu0 0
      %9752 = vmatprep.subr.bf16.mxu0 0
      %9753 = vmatpush1.bf16.msra.mxu0 0
      %9754 = vmatprep.subr.bf16.mxu0 0
      %9755 = vmatpush1.bf16.msra.mxu0 0
      %9756 = vmatprep.subr.bf16.mxu0 0
      %9757 = vmatpush1.bf16.msra.mxu0 0
      %9758 = vmatprep.subr.bf16.mxu0 0
      %9759 = vmatpush1.bf16.msra.mxu0 0
      %9760 = vmatprep.subr.bf16.mxu0 0
      %9761 = vmatpush1.bf16.msra.mxu0 0
      %9762 = vmatprep.subr.bf16.mxu0 0
      %9763 = vmatpush1.bf16.msra.mxu0 0
      %9764 = vmatprep.mubr.bf16.mxu0 0
      %9765 = vmatmul.mubr.bf16.gmra.mrb[0].mxu0 %v8992
      %v9766 = vpop.f32.mrb[0].mxu0
      %v9767 = vadd.f32 %v8988, %v9766
      %v9768 = vpop.f32.mrb[0].mxu0
      %v9769 = vadd.f32 %v8988, %v9768
      %v9770 = vpop.f32.mrb[0].mxu0
      %v9771 = vpop.f32.mrb[0].mxu0
      %9772 = vdwg.mxu0
      %9773 = vmatprep.subr.bf16.mxu0 %v8624
      %9774 = vmatpush1.bf16.msra.mxu0 %v8623
      %9775 = vmatprep.subr.bf16.mxu0 %v8681
      %9776 = vmatpush1.bf16.msra.mxu0 %v8680
      %9777 = vmatprep.subr.bf16.mxu0 %v8738
      %9778 = vmatpush1.bf16.msra.mxu0 %v8737
      %9779 = vmatprep.subr.bf16.mxu0 %v8795
      %9780 = vmatpush1.bf16.msra.mxu0 %v8794
      %9781 = vmatprep.subr.bf16.mxu0 %v8852
      %9782 = vmatpush1.bf16.msra.mxu0 %v8851
      %9783 = vmatprep.subr.bf16.mxu0 %v8909
      %9784 = vmatpush1.bf16.msra.mxu0 %v8908
      %9785 = vmatprep.subr.bf16.mxu0 %v8966
      %9786 = vmatpush1.bf16.msra.mxu0 %v8965
      %9787 = vmatprep.subr.bf16.mxu0 0
      %9788 = vmatpush1.bf16.msra.mxu0 0
      %9789 = vmatprep.subr.bf16.mxu0 0
      %9790 = vmatpush1.bf16.msra.mxu0 0
      %9791 = vmatprep.subr.bf16.mxu0 0
      %9792 = vmatpush1.bf16.msra.mxu0 0
      %9793 = vmatprep.subr.bf16.mxu0 0
      %9794 = vmatpush1.bf16.msra.mxu0 0
      %9795 = vmatprep.subr.bf16.mxu0 0
      %9796 = vmatpush1.bf16.msra.mxu0 0
      %9797 = vmatprep.subr.bf16.mxu0 0
      %9798 = vmatpush1.bf16.msra.mxu0 0
      %9799 = vmatprep.subr.bf16.mxu0 0
      %9800 = vmatpush1.bf16.msra.mxu0 0
      %9801 = vmatprep.subr.bf16.mxu0 0
      %9802 = vmatpush1.bf16.msra.mxu0 0
      %9803 = vmatprep.subr.bf16.mxu0 0
      %9804 = vmatpush1.bf16.msra.mxu0 0
      %9805 = vmatprep.mubr.bf16.mxu0 0
      %9806 = vmatmul.mubr.bf16.gmra.mrb[0].mxu0 %v8992
      %v9807 = vpop.f32.mrb[0].mxu0
      %v9808 = vadd.f32 %v8988, %v9807
      %v9809 = vpop.f32.mrb[0].mxu0
      %v9810 = vadd.f32 %v8988, %v9809
      %v9811 = vpop.f32.mrb[0].mxu0
      %v9812 = vpop.f32.mrb[0].mxu0
      %9813 = vdwg.mxu0
      %9814 = vmatprep.subr.bf16.mxu0 %v8626
      %9815 = vmatpush1.bf16.msra.mxu0 %v8625
      %9816 = vmatprep.subr.bf16.mxu0 %v8683
      %9817 = vmatpush1.bf16.msra.mxu0 %v8682
      %9818 = vmatprep.subr.bf16.mxu0 %v8740
      %9819 = vmatpush1.bf16.msra.mxu0 %v8739
      %9820 = vmatprep.subr.bf16.mxu0 %v8797
      %9821 = vmatpush1.bf16.msra.mxu0 %v8796
      %9822 = vmatprep.subr.bf16.mxu0 %v8854
      %9823 = vmatpush1.bf16.msra.mxu0 %v8853
      %9824 = vmatprep.subr.bf16.mxu0 %v8911
      %9825 = vmatpush1.bf16.msra.mxu0 %v8910
      %9826 = vmatprep.subr.bf16.mxu0 %v8968
      %9827 = vmatpush1.bf16.msra.mxu0 %v8967
      %9828 = vmatprep.subr.bf16.mxu0 0
      %9829 = vmatpush1.bf16.msra.mxu0 0
      %9830 = vmatprep.subr.bf16.mxu0 0
      %9831 = vmatpush1.bf16.msra.mxu0 0
      %9832 = vmatprep.subr.bf16.mxu0 0
      %9833 = vmatpush1.bf16.msra.mxu0 0
      %9834 = vmatprep.subr.bf16.mxu0 0
      %9835 = vmatpush1.bf16.msra.mxu0 0
      %9836 = vmatprep.subr.bf16.mxu0 0
      %9837 = vmatpush1.bf16.msra.mxu0 0
      %9838 = vmatprep.subr.bf16.mxu0 0
      %9839 = vmatpush1.bf16.msra.mxu0 0
      %9840 = vmatprep.subr.bf16.mxu0 0
      %9841 = vmatpush1.bf16.msra.mxu0 0
      %9842 = vmatprep.subr.bf16.mxu0 0
      %9843 = vmatpush1.bf16.msra.mxu0 0
      %9844 = vmatprep.subr.bf16.mxu0 0
      %9845 = vmatpush1.bf16.msra.mxu0 0
      %9846 = vmatprep.mubr.bf16.mxu0 0
      %9847 = vmatmul.mubr.bf16.gmra.mrb[0].mxu0 %v8992
      %v9848 = vpop.f32.mrb[0].mxu0
      %v9849 = vadd.f32 %v8988, %v9848
      %v9850 = vpop.f32.mrb[0].mxu0
      %v9851 = vadd.f32 %v8988, %v9850
      %v9852 = vpop.f32.mrb[0].mxu0
      %v9853 = vpop.f32.mrb[0].mxu0
      %9854 = vdwg.mxu0
      %9855 = vmatprep.subr.bf16.mxu0 %v8628
      %9856 = vmatpush1.bf16.msra.mxu0 %v8627
      %9857 = vmatprep.subr.bf16.mxu0 %v8685
      %9858 = vmatpush1.bf16.msra.mxu0 %v8684
      %9859 = vmatprep.subr.bf16.mxu0 %v8742
      %9860 = vmatpush1.bf16.msra.mxu0 %v8741
      %9861 = vmatprep.subr.bf16.mxu0 %v8799
      %9862 = vmatpush1.bf16.msra.mxu0 %v8798
      %9863 = vmatprep.subr.bf16.mxu0 %v8856
      %9864 = vmatpush1.bf16.msra.mxu0 %v8855
      %9865 = vmatprep.subr.bf16.mxu0 %v8913
      %9866 = vmatpush1.bf16.msra.mxu0 %v8912
      %9867 = vmatprep.subr.bf16.mxu0 %v8970
      %9868 = vmatpush1.bf16.msra.mxu0 %v8969
      %9869 = vmatprep.subr.bf16.mxu0 0
      %9870 = vmatpush1.bf16.msra.mxu0 0
      %9871 = vmatprep.subr.bf16.mxu0 0
      %9872 = vmatpush1.bf16.msra.mxu0 0
      %9873 = vmatprep.subr.bf16.mxu0 0
      %9874 = vmatpush1.bf16.msra.mxu0 0
      %9875 = vmatprep.subr.bf16.mxu0 0
      %9876 = vmatpush1.bf16.msra.mxu0 0
      %9877 = vmatprep.subr.bf16.mxu0 0
      %9878 = vmatpush1.bf16.msra.mxu0 0
      %9879 = vmatprep.subr.bf16.mxu0 0
      %9880 = vmatpush1.bf16.msra.mxu0 0
      %9881 = vmatprep.subr.bf16.mxu0 0
      %9882 = vmatpush1.bf16.msra.mxu0 0
      %9883 = vmatprep.subr.bf16.mxu0 0
      %9884 = vmatpush1.bf16.msra.mxu0 0
      %9885 = vmatprep.subr.bf16.mxu0 0
      %9886 = vmatpush1.bf16.msra.mxu0 0
      %9887 = vmatprep.mubr.bf16.mxu0 0
      %9888 = vmatmul.mubr.bf16.gmra.mrb[0].mxu0 %v8992
      %v9889 = vpop.f32.mrb[0].mxu0
      %v9890 = vadd.f32 %v8988, %v9889
      %v9891 = vpop.f32.mrb[0].mxu0
      %v9892 = vadd.f32 %v8988, %v9891
      %v9893 = vpop.f32.mrb[0].mxu0
      %v9894 = vpop.f32.mrb[0].mxu0
      %9895 = vdwg.mxu0
      %9896 = vmatprep.subr.bf16.mxu0 %v8630
      %9897 = vmatpush1.bf16.msra.mxu0 %v8629
      %9898 = vmatprep.subr.bf16.mxu0 %v8687
      %9899 = vmatpush1.bf16.msra.mxu0 %v8686
      %9900 = vmatprep.subr.bf16.mxu0 %v8744
      %9901 = vmatpush1.bf16.msra.mxu0 %v8743
      %9902 = vmatprep.subr.bf16.mxu0 %v8801
      %9903 = vmatpush1.bf16.msra.mxu0 %v8800
      %9904 = vmatprep.subr.bf16.mxu0 %v8858
      %9905 = vmatpush1.bf16.msra.mxu0 %v8857
      %9906 = vmatprep.subr.bf16.mxu0 %v8915
      %9907 = vmatpush1.bf16.msra.mxu0 %v8914
      %9908 = vmatprep.subr.bf16.mxu0 %v8972
      %9909 = vmatpush1.bf16.msra.mxu0 %v8971
      %9910 = vmatprep.subr.bf16.mxu0 0
      %9911 = vmatpush1.bf16.msra.mxu0 0
      %9912 = vmatprep.subr.bf16.mxu0 0
      %9913 = vmatpush1.bf16.msra.mxu0 0
      %9914 = vmatprep.subr.bf16.mxu0 0
      %9915 = vmatpush1.bf16.msra.mxu0 0
      %9916 = vmatprep.subr.bf16.mxu0 0
      %9917 = vmatpush1.bf16.msra.mxu0 0
      %9918 = vmatprep.subr.bf16.mxu0 0
      %9919 = vmatpush1.bf16.msra.mxu0 0
      %9920 = vmatprep.subr.bf16.mxu0 0
      %9921 = vmatpush1.bf16.msra.mxu0 0
      %9922 = vmatprep.subr.bf16.mxu0 0
      %9923 = vmatpush1.bf16.msra.mxu0 0
      %9924 = vmatprep.subr.bf16.mxu0 0
      %9925 = vmatpush1.bf16.msra.mxu0 0
      %9926 = vmatprep.subr.bf16.mxu0 0
      %9927 = vmatpush1.bf16.msra.mxu0 0
      %9928 = vmatprep.mubr.bf16.mxu0 0
      %9929 = vmatmul.mubr.bf16.gmra.mrb[0].mxu0 %v8992
      %v9930 = vpop.f32.mrb[0].mxu0
      %v9931 = vadd.f32 %v8988, %v9930
      %v9932 = vpop.f32.mrb[0].mxu0
      %v9933 = vadd.f32 %v8988, %v9932
      %v9934 = vpop.f32.mrb[0].mxu0
      %v9935 = vpop.f32.mrb[0].mxu0
      %9936 = vdwg.mxu0
      %9937 = vmatprep.subr.bf16.mxu0 %v8632
      %9938 = vmatpush1.bf16.msra.mxu0 %v8631
      %9939 = vmatprep.subr.bf16.mxu0 %v8689
      %9940 = vmatpush1.bf16.msra.mxu0 %v8688
      %9941 = vmatprep.subr.bf16.mxu0 %v8746
      %9942 = vmatpush1.bf16.msra.mxu0 %v8745
      %9943 = vmatprep.subr.bf16.mxu0 %v8803
      %9944 = vmatpush1.bf16.msra.mxu0 %v8802
      %9945 = vmatprep.subr.bf16.mxu0 %v8860
      %9946 = vmatpush1.bf16.msra.mxu0 %v8859
      %9947 = vmatprep.subr.bf16.mxu0 %v8917
      %9948 = vmatpush1.bf16.msra.mxu0 %v8916
      %9949 = vmatprep.subr.bf16.mxu0 %v8974
      %9950 = vmatpush1.bf16.msra.mxu0 %v8973
      %9951 = vmatprep.subr.bf16.mxu0 0
      %9952 = vmatpush1.bf16.msra.mxu0 0
      %9953 = vmatprep.subr.bf16.mxu0 0
      %9954 = vmatpush1.bf16.msra.mxu0 0
      %9955 = vmatprep.subr.bf16.mxu0 0
      %9956 = vmatpush1.bf16.msra.mxu0 0
      %9957 = vmatprep.subr.bf16.mxu0 0
      %9958 = vmatpush1.bf16.msra.mxu0 0
      %9959 = vmatprep.subr.bf16.mxu0 0
      %9960 = vmatpush1.bf16.msra.mxu0 0
      %9961 = vmatprep.subr.bf16.mxu0 0
      %9962 = vmatpush1.bf16.msra.mxu0 0
      %9963 = vmatprep.subr.bf16.mxu0 0
      %9964 = vmatpush1.bf16.msra.mxu0 0
      %9965 = vmatprep.subr.bf16.mxu0 0
      %9966 = vmatpush1.bf16.msra.mxu0 0
      %9967 = vmatprep.subr.bf16.mxu0 0
      %9968 = vmatpush1.bf16.msra.mxu0 0
      %9969 = vmatprep.mubr.bf16.mxu0 0
      %9970 = vmatmul.mubr.bf16.gmra.mrb[0].mxu0 %v8992
      %v9971 = vpop.f32.mrb[0].mxu0
      %v9972 = vadd.f32 %v8988, %v9971
      %v9973 = vpop.f32.mrb[0].mxu0
      %v9974 = vadd.f32 %v8988, %v9973
      %v9975 = vpop.f32.mrb[0].mxu0
      %v9976 = vpop.f32.mrb[0].mxu0
      %9977 = vdwg.mxu0
      %9978 = vmatprep.subr.bf16.mxu0 %v8634
      %9979 = vmatpush1.bf16.msra.mxu0 %v8633
      %9980 = vmatprep.subr.bf16.mxu0 %v8691
      %9981 = vmatpush1.bf16.msra.mxu0 %v8690
      %9982 = vmatprep.subr.bf16.mxu0 %v8748
      %9983 = vmatpush1.bf16.msra.mxu0 %v8747
      %9984 = vmatprep.subr.bf16.mxu0 %v8805
      %9985 = vmatpush1.bf16.msra.mxu0 %v8804
      %9986 = vmatprep.subr.bf16.mxu0 %v8862
      %9987 = vmatpush1.bf16.msra.mxu0 %v8861
      %9988 = vmatprep.subr.bf16.mxu0 %v8919
      %9989 = vmatpush1.bf16.msra.mxu0 %v8918
      %9990 = vmatprep.subr.bf16.mxu0 %v8976
      %9991 = vmatpush1.bf16.msra.mxu0 %v8975
      %9992 = vmatprep.subr.bf16.mxu0 0
      %9993 = vmatpush1.bf16.msra.mxu0 0
      %9994 = vmatprep.subr.bf16.mxu0 0
      %9995 = vmatpush1.bf16.msra.mxu0 0
      %9996 = vmatprep.subr.bf16.mxu0 0
      %9997 = vmatpush1.bf16.msra.mxu0 0
      %9998 = vmatprep.subr.bf16.mxu0 0
      %9999 = vmatpush1.bf16.msra.mxu0 0
      %10000 = vmatprep.subr.bf16.mxu0 0
      %10001 = vmatpush1.bf16.msra.mxu0 0
      %10002 = vmatprep.subr.bf16.mxu0 0
      %10003 = vmatpush1.bf16.msra.mxu0 0
      %10004 = vmatprep.subr.bf16.mxu0 0
      %10005 = vmatpush1.bf16.msra.mxu0 0
      %10006 = vmatprep.subr.bf16.mxu0 0
      %10007 = vmatpush1.bf16.msra.mxu0 0
      %10008 = vmatprep.subr.bf16.mxu0 0
      %10009 = vmatpush1.bf16.msra.mxu0 0
      %10010 = vmatprep.mubr.bf16.mxu0 0
      %10011 = vmatmul.mubr.bf16.gmra.mrb[0].mxu0 %v8992
      %v10012 = vpop.f32.mrb[0].mxu0
      %v10013 = vadd.f32 %v8988, %v10012
      %v10014 = vpop.f32.mrb[0].mxu0
      %v10015 = vadd.f32 %v8988, %v10014
      %v10016 = vpop.f32.mrb[0].mxu0
      %v10017 = vpop.f32.mrb[0].mxu0
      %10018 = vdwg.mxu0
      %10019 = vmatprep.subr.bf16.mxu0 %v8636
      %10020 = vmatpush1.bf16.msra.mxu0 %v8635
      %10021 = vmatprep.subr.bf16.mxu0 %v8693
      %10022 = vmatpush1.bf16.msra.mxu0 %v8692
      %10023 = vmatprep.subr.bf16.mxu0 %v8750
      %10024 = vmatpush1.bf16.msra.mxu0 %v8749
      %10025 = vmatprep.subr.bf16.mxu0 %v8807
      %10026 = vmatpush1.bf16.msra.mxu0 %v8806
      %10027 = vmatprep.subr.bf16.mxu0 %v8864
      %10028 = vmatpush1.bf16.msra.mxu0 %v8863
      %10029 = vmatprep.subr.bf16.mxu0 %v8921
      %10030 = vmatpush1.bf16.msra.mxu0 %v8920
      %10031 = vmatprep.subr.bf16.mxu0 %v8978
      %10032 = vmatpush1.bf16.msra.mxu0 %v8977
      %10033 = vmatprep.subr.bf16.mxu0 0
      %10034 = vmatpush1.bf16.msra.mxu0 0
      %10035 = vmatprep.subr.bf16.mxu0 0
      %10036 = vmatpush1.bf16.msra.mxu0 0
      %10037 = vmatprep.subr.bf16.mxu0 0
      %10038 = vmatpush1.bf16.msra.mxu0 0
      %10039 = vmatprep.subr.bf16.mxu0 0
      %10040 = vmatpush1.bf16.msra.mxu0 0
      %10041 = vmatprep.subr.bf16.mxu0 0
      %10042 = vmatpush1.bf16.msra.mxu0 0
      %10043 = vmatprep.subr.bf16.mxu0 0
      %10044 = vmatpush1.bf16.msra.mxu0 0
      %10045 = vmatprep.subr.bf16.mxu0 0
      %10046 = vmatpush1.bf16.msra.mxu0 0
      %10047 = vmatprep.subr.bf16.mxu0 0
      %10048 = vmatpush1.bf16.msra.mxu0 0
      %10049 = vmatprep.subr.bf16.mxu0 0
      %10050 = vmatpush1.bf16.msra.mxu0 0
      %10051 = vmatprep.mubr.bf16.mxu0 0
      %10052 = vmatmul.mubr.bf16.gmra.mrb[0].mxu0 %v8992
      %v10053 = vpop.f32.mrb[0].mxu0
      %v10054 = vadd.f32 %v8988, %v10053
      %v10055 = vpop.f32.mrb[0].mxu0
      %v10056 = vadd.f32 %v8988, %v10055
      %v10057 = vpop.f32.mrb[0].mxu0
      %v10058 = vpop.f32.mrb[0].mxu0
      %10059 = vdwg.mxu0
      %10060 = vmatprep.subr.bf16.mxu0 %v8638
      %10061 = vmatpush1.bf16.msra.mxu0 %v8637
      %10062 = vmatprep.subr.bf16.mxu0 %v8695
      %10063 = vmatpush1.bf16.msra.mxu0 %v8694
      %10064 = vmatprep.subr.bf16.mxu0 %v8752
      %10065 = vmatpush1.bf16.msra.mxu0 %v8751
      %10066 = vmatprep.subr.bf16.mxu0 %v8809
      %10067 = vmatpush1.bf16.msra.mxu0 %v8808
      %10068 = vmatprep.subr.bf16.mxu0 %v8866
      %10069 = vmatpush1.bf16.msra.mxu0 %v8865
      %10070 = vmatprep.subr.bf16.mxu0 %v8923
      %10071 = vmatpush1.bf16.msra.mxu0 %v8922
      %10072 = vmatprep.subr.bf16.mxu0 %v8980
      %10073 = vmatpush1.bf16.msra.mxu0 %v8979
      %10074 = vmatprep.subr.bf16.mxu0 0
      %10075 = vmatpush1.bf16.msra.mxu0 0
      %10076 = vmatprep.subr.bf16.mxu0 0
      %10077 = vmatpush1.bf16.msra.mxu0 0
      %10078 = vmatprep.subr.bf16.mxu0 0
      %10079 = vmatpush1.bf16.msra.mxu0 0
      %10080 = vmatprep.subr.bf16.mxu0 0
      %10081 = vmatpush1.bf16.msra.mxu0 0
      %10082 = vmatprep.subr.bf16.mxu0 0
      %10083 = vmatpush1.bf16.msra.mxu0 0
      %10084 = vmatprep.subr.bf16.mxu0 0
      %10085 = vmatpush1.bf16.msra.mxu0 0
      %10086 = vmatprep.subr.bf16.mxu0 0
      %10087 = vmatpush1.bf16.msra.mxu0 0
      %10088 = vmatprep.subr.bf16.mxu0 0
      %10089 = vmatpush1.bf16.msra.mxu0 0
      %10090 = vmatprep.subr.bf16.mxu0 0
      %10091 = vmatpush1.bf16.msra.mxu0 0
      %10092 = vmatprep.mubr.bf16.mxu0 0
      %10093 = vmatmul.mubr.bf16.gmra.mrb[0].mxu0 %v8992
      %v10094 = vpop.f32.mrb[0].mxu0
      %v10095 = vadd.f32 %v8988, %v10094
      %v10096 = vpop.f32.mrb[0].mxu0
      %v10097 = vadd.f32 %v8988, %v10096
      %v10098 = vpop.f32.mrb[0].mxu0
      %v10099 = vpop.f32.mrb[0].mxu0
      %10100 = vdwg.mxu0
      %10101 = vmatprep.subr.bf16.mxu0 %v8640
      %10102 = vmatpush1.bf16.msra.mxu0 %v8639
      %10103 = vmatprep.subr.bf16.mxu0 %v8697
      %10104 = vmatpush1.bf16.msra.mxu0 %v8696
      %10105 = vmatprep.subr.bf16.mxu0 %v8754
      %10106 = vmatpush1.bf16.msra.mxu0 %v8753
      %10107 = vmatprep.subr.bf16.mxu0 %v8811
      %10108 = vmatpush1.bf16.msra.mxu0 %v8810
      %10109 = vmatprep.subr.bf16.mxu0 %v8868
      %10110 = vmatpush1.bf16.msra.mxu0 %v8867
      %10111 = vmatprep.subr.bf16.mxu0 %v8925
      %10112 = vmatpush1.bf16.msra.mxu0 %v8924
      %10113 = vmatprep.subr.bf16.mxu0 %v8982
      %10114 = vmatpush1.bf16.msra.mxu0 %v8981
      %10115 = vmatprep.subr.bf16.mxu0 0
      %10116 = vmatpush1.bf16.msra.mxu0 0
      %10117 = vmatprep.subr.bf16.mxu0 0
      %10118 = vmatpush1.bf16.msra.mxu0 0
      %10119 = vmatprep.subr.bf16.mxu0 0
      %10120 = vmatpush1.bf16.msra.mxu0 0
      %10121 = vmatprep.subr.bf16.mxu0 0
      %10122 = vmatpush1.bf16.msra.mxu0 0
      %10123 = vmatprep.subr.bf16.mxu0 0
      %10124 = vmatpush1.bf16.msra.mxu0 0
      %10125 = vmatprep.subr.bf16.mxu0 0
      %10126 = vmatpush1.bf16.msra.mxu0 0
      %10127 = vmatprep.subr.bf16.mxu0 0
      %10128 = vmatpush1.bf16.msra.mxu0 0
      %10129 = vmatprep.subr.bf16.mxu0 0
      %10130 = vmatpush1.bf16.msra.mxu0 0
      %10131 = vmatprep.subr.bf16.mxu0 0
      %10132 = vmatpush1.bf16.msra.mxu0 0
      %10133 = vmatprep.mubr.bf16.mxu0 0
      %10134 = vmatmul.mubr.bf16.gmra.mrb[0].mxu0 %v8992
      %v10135 = vpop.f32.mrb[0].mxu0
      %v10136 = vadd.f32 %v8988, %v10135
      %v10137 = vpop.f32.mrb[0].mxu0
      %v10138 = vadd.f32 %v8988, %v10137
      %v10139 = vpop.f32.mrb[0].mxu0
      %v10140 = vpop.f32.mrb[0].mxu0
      %10141 = vdwg.mxu0
      %10142 = vmatprep.subr.bf16.mxu0 0
      %10143 = vmatpush1.bf16.msra.mxu0 %v8641
      %10144 = vmatprep.subr.bf16.mxu0 0
      %10145 = vmatpush1.bf16.msra.mxu0 %v8698
      %10146 = vmatprep.subr.bf16.mxu0 0
      %10147 = vmatpush1.bf16.msra.mxu0 %v8755
      %10148 = vmatprep.subr.bf16.mxu0 0
      %10149 = vmatpush1.bf16.msra.mxu0 %v8812
      %10150 = vmatprep.subr.bf16.mxu0 0
      %10151 = vmatpush1.bf16.msra.mxu0 %v8869
      %10152 = vmatprep.subr.bf16.mxu0 0
      %10153 = vmatpush1.bf16.msra.mxu0 %v8926
      %10154 = vmatprep.subr.bf16.mxu0 0
      %10155 = vmatpush1.bf16.msra.mxu0 %v8983
      %10156 = vmatprep.subr.bf16.mxu0 0
      %10157 = vmatpush1.bf16.msra.mxu0 0
      %10158 = vmatprep.subr.bf16.mxu0 0
      %10159 = vmatpush1.bf16.msra.mxu0 0
      %10160 = vmatprep.subr.bf16.mxu0 0
      %10161 = vmatpush1.bf16.msra.mxu0 0
      %10162 = vmatprep.subr.bf16.mxu0 0
      %10163 = vmatpush1.bf16.msra.mxu0 0
      %10164 = vmatprep.subr.bf16.mxu0 0
      %10165 = vmatpush1.bf16.msra.mxu0 0
      %10166 = vmatprep.subr.bf16.mxu0 0
      %10167 = vmatpush1.bf16.msra.mxu0 0
      %10168 = vmatprep.subr.bf16.mxu0 0
      %10169 = vmatpush1.bf16.msra.mxu0 0
      %10170 = vmatprep.subr.bf16.mxu0 0
      %10171 = vmatpush1.bf16.msra.mxu0 0
      %10172 = vmatprep.subr.bf16.mxu0 0
      %10173 = vmatpush1.bf16.msra.mxu0 0
      %10174 = vmatprep.mubr.bf16.mxu0 0
      %10175 = vmatmul.mubr.bf16.gmra.mrb[0].mxu0 %v8992
      %v10176 = vpop.f32.mrb[0].mxu0
      %v10177 = vadd.f32 %v8988, %v10176
      %v10178 = vpop.f32.mrb[0].mxu0
      %v10179 = vpop.f32.mrb[0].mxu0
      %v10180 = vpop.f32.mrb[0].mxu0
      %10181 = vdwg.mxu0
      %10182 = vst [vmem:[%s325] sm:$0xff] %v9029
      %10183 = vst [vmem:[%s325 + $0x8] sm:$0xff] %v9031
      %10184 = vst [vmem:[%s325 + $0x10] sm:$0xff] %v9070
      %10185 = vst [vmem:[%s325 + $0x18] sm:$0xff] %v9072
      %10186 = vst [vmem:[%s325 + $0x20] sm:$0xff] %v9111
      %10187 = vst [vmem:[%s325 + $0x28] sm:$0xff] %v9113
      %10188 = vst [vmem:[%s325 + $0x30] sm:$0xff] %v9152
      %10189 = vst [vmem:[%s325 + $0x38] sm:$0xff] %v9154
      %10190 = vst [vmem:[%s325 + $0x40] sm:$0xff] %v9193
      %10191 = vst [vmem:[%s325 + $0x48] sm:$0xff] %v9195
      %10192 = vst [vmem:[%s325 + $0x50] sm:$0xff] %v9234
      %10193 = vst [vmem:[%s325 + $0x58] sm:$0xff] %v9236
      %10194 = vst [vmem:[%s325 + $0x60] sm:$0xff] %v9275
      %10195 = vst [vmem:[%s325 + $0x68] sm:$0xff] %v9277
      %10196 = vst [vmem:[%s325 + $0x70] sm:$0xff] %v9316
      %10197 = vst [vmem:[%s325 + $0x78] sm:$0xff] %v9318
      %10198 = vst [vmem:[%s325 + $0x80] sm:$0xff] %v9357
      %10199 = vst [vmem:[%s325 + $0x88] sm:$0xff] %v9359
      %10200 = vst [vmem:[%s325 + $0x90] sm:$0xff] %v9398
      %10201 = vst [vmem:[%s325 + $0x98] sm:$0xff] %v9400
      %10202 = vst [vmem:[%s325 + $0xa0] sm:$0xff] %v9439
      %10203 = vst [vmem:[%s325 + $0xa8] sm:$0xff] %v9441
      %10204 = vst [vmem:[%s325 + $0xb0] sm:$0xff] %v9480
      %10205 = vst [vmem:[%s325 + $0xb8] sm:$0xff] %v9482
      %10206 = vst [vmem:[%s325 + $0xc0] sm:$0xff] %v9521
      %10207 = vst [vmem:[%s325 + $0xc8] sm:$0xff] %v9523
      %10208 = vst [vmem:[%s325 + $0xd0] sm:$0xff] %v9562
      %10209 = vst [vmem:[%s325 + $0xd8] sm:$0xff] %v9564
      %10210 = vst [vmem:[%s325 + $0xe0] sm:$0xff] %v9603
      %10211 = vst [vmem:[%s325 + $0xe8] sm:$0xff] %v9605
      %10212 = vst [vmem:[%s325 + $0xf0] sm:$0xff] %v9644
      %10213 = vst [vmem:[%s325 + $0xf8] sm:$0xff] %v9646
      %10214 = vst [vmem:[%s325 + $0x100] sm:$0xff] %v9685
      %10215 = vst [vmem:[%s325 + $0x108] sm:$0xff] %v9687
      %10216 = vst [vmem:[%s325 + $0x110] sm:$0xff] %v9726
      %10217 = vst [vmem:[%s325 + $0x118] sm:$0xff] %v9728
      %10218 = vst [vmem:[%s325 + $0x120] sm:$0xff] %v9767
      %10219 = vst [vmem:[%s325 + $0x128] sm:$0xff] %v9769
      %10220 = vst [vmem:[%s325 + $0x130] sm:$0xff] %v9808
      %10221 = vst [vmem:[%s325 + $0x138] sm:$0xff] %v9810
      %10222 = vst [vmem:[%s325 + $0x140] sm:$0xff] %v9849
      %10223 = vst [vmem:[%s325 + $0x148] sm:$0xff] %v9851
      %10224 = vst [vmem:[%s325 + $0x150] sm:$0xff] %v9890
      %10225 = vst [vmem:[%s325 + $0x158] sm:$0xff] %v9892
      %10226 = vst [vmem:[%s325 + $0x160] sm:$0xff] %v9931
      %10227 = vst [vmem:[%s325 + $0x168] sm:$0xff] %v9933
      %10228 = vst [vmem:[%s325 + $0x170] sm:$0xff] %v9972
      %10229 = vst [vmem:[%s325 + $0x178] sm:$0xff] %v9974
      %10230 = vst [vmem:[%s325 + $0x180] sm:$0xff] %v10013
      %10231 = vst [vmem:[%s325 + $0x188] sm:$0xff] %v10015
      %10232 = vst [vmem:[%s325 + $0x190] sm:$0xff] %v10054
      %10233 = vst [vmem:[%s325 + $0x198] sm:$0xff] %v10056
      %10234 = vst [vmem:[%s325 + $0x1a0] sm:$0xff] %v10095
      %10235 = vst [vmem:[%s325 + $0x1a8] sm:$0xff] %v10097
      %10236 = vst [vmem:[%s325 + $0x1b0] sm:$0xff] %v10136
      %10237 = vst [vmem:[%s325 + $0x1b8] sm:$0xff] %v10138
      %10238 = vst [vmem:[%s325 + $0x1c0] sm:$0xff] %v10177
      %s10239 = smul.u32 57, %s20
      %p10240 = scmp.lt.s32.totalorder %s19, 1
      %s10241 = scalar_select %p10240, %s19, 1
      %p10242 = scmp.lt.s32.totalorder %s10239, 341
      %s10243 = scalar_select %p10242, %s10239, 341
      %s10244 = smul.addr %s10241, 342
      %s10245 = sadd.s32 %s10243, %s10244
      %s10246 = smul.addr %s10245, 8
      %s10247 = scalar_lea.vmem %s4, %s10246
      // Predicated region
      $region37: #{resize_conv_nearest.1} parent=35 // pred_check
        %p10248 = pneg %p149
      $region38: #{resize_conv_nearest.1} parent=35 // pred_check_branch
        %10250 = sbr.rel (%p10248) target = $region40
      $region39: #{resize_conv_nearest.1} parent=35 // pred_region
        %s10251 = smul.u32 57, %s20
      $region40: #{resize_conv_nearest.1} parent=35 // pred_fallthru
        _
    $region36: #{resize_conv_nearest.1} parent=5 // pred_fallthru
      _
    %p10252 = scmp.le.s32.totalorder 2, %s10
    // Predicated region
    $region41: #{resize_conv_nearest.1} parent=5 // pred_check
      %p10253 = pneg %p10252
    $region42: #{resize_conv_nearest.1} parent=5 // pred_check_branch
      %10255 = sbr.rel (%p10253) target = $region44
    $region43: #{resize_conv_nearest.1} parent=5 // pred_region
      %s10256 = ssub.s32 %s10, 2
      // Predicated region
      $region45: #{resize_conv_nearest.1} parent=43 // pred_check
        %p10257 = pneg %p155
      $region46: #{resize_conv_nearest.1} parent=43 // pred_check_branch
        %10259 = sbr.rel (%p10257) target = $region48
      $region47: #{resize_conv_nearest.1} parent=43 // pred_region
        %s10260 = smul.u32 57, %s22
        %p10261 = scmp.lt.s32.totalorder %s21, 1
        %s10262 = scalar_select %p10261, %s21, 1
        %p10263 = scmp.lt.s32.totalorder %s10260, 341
        %s10264 = scalar_select %p10263, %s10260, 341
        %s10265 = smul.addr %s10262, 342
        %s10266 = sadd.s32 %s10264, %s10265
        %s10267 = smul.addr %s10266, 8
        %s10268 = scalar_lea.vmem %s4, %s10267
      $region48: #{resize_conv_nearest.1} parent=43 // pred_fallthru
        _
    $region44: #{resize_conv_nearest.1} parent=5 // pred_fallthru
      _
  $region6: #{resize_conv_nearest.1} parent=0 // loop_footer
    %s14 = sadd.s32 1, %s10
  $region7: #{resize_conv_nearest.1} parent=0 // loop_footer_branch
    %9 = sbr.rel target = $region3
  $region8: #{resize_conv_nearest.1} parent=0 // loop_exit
    _

</llo_original>
